<compile_context>
chip_gen: v5e
topology: v5e:2x2
jax: 0.10.0
libtpu: 0.0.40
codegen_flags: <defaults>
</compile_context>

<pallas_src>
import functools

import numpy as np
import jax
import jax.numpy as jnp
from jax.experimental import pallas as pl
from jax.experimental.pallas import tpu as pltpu


LANES = 128


# --------------------------------------------------------------------------- padding helpers
def _round_up(c, m=LANES):
    return ((c + m - 1) // m) * m


def _pad_last(a, to):
    pad = to - a.shape[-1]
    if pad == 0:
        return a
    cfg = [(0, 0)] * (a.ndim - 1) + [(0, pad)]
    return jnp.pad(a, cfg)


def _pad_mat(a, rows, cols):
    return jnp.pad(a, ((0, rows - a.shape[0]), (0, cols - a.shape[1])))


# --------------------------------------------------------------------------- kernel helpers
def _pool_sum(v, H, W, stride):
    """(H*W, C) -> (Ho*Wo, C) window SUMS (the 1/stride^2 is folded into weights)."""
    if stride == 1:
        return v
    C = v.shape[-1]
    Ho, Wo = H // stride, W // stride
    t = v.reshape(Ho, stride, W, C)
    rowsum = t[:, 0]
    for di in range(1, stride):
        rowsum = rowsum + t[:, di]                 # (Ho, W, C)
    t2 = rowsum.reshape(Ho * Wo, stride, C)
    out = t2[:, 0]
    for dj in range(1, stride):
        out = out + t2[:, dj]
    return out                                     # (Ho*Wo, C)


# --------------------------------------------------------------------------- fused kernel
def _bottleneck_kernel(x_ref, w1_ref, b1_ref, w2_ref, b2_ref, w3_ref, b3_ref,
                       o_ref, hp_ref, xcat_ref, *, stride, has_downsample):
    _, H, W, Cinp = x_ref.shape
    Cp = hp_ref.shape[-1]
    _, Ho, Wo, Coutp = o_ref.shape

    # ---- conv1 (1x1, BN scale folded into weight) + bias + ReLU into halo interior.
    # Zero ONLY the 4 border strips (interior is fully overwritten below); borders
    # are re-zeroed every grid step so megacore "parallel" sharding stays safe.
    hp_ref[0] = jnp.zeros((W + 2, Cp), hp_ref.dtype)
    hp_ref[H + 1] = jnp.zeros((W + 2, Cp), hp_ref.dtype)
    hp_ref[:, pl.ds(0, 1), :] = jnp.zeros((H + 2, 1, Cp), hp_ref.dtype)
    hp_ref[:, pl.ds(W + 1, 1), :] = jnp.zeros((H + 2, 1, Cp), hp_ref.dtype)

    x2d = x_ref[0].reshape(H * W, Cinp)                                 # bf16
    h1 = jnp.dot(x2d, w1_ref[...], preferred_element_type=jnp.float32)
    h1 = jnp.maximum(h1 + b1_ref[...], 0.0)
    hp_ref[pl.ds(1, H), pl.ds(1, W), :] = h1.reshape(H, W, Cp).astype(hp_ref.dtype)

    # ---- conv2 (3x3, padding=1): 3 accumulating MXU dots with K = 3*Cp.
    # Per dh, gather only the 3 dw-shifted windows (no value reshape on the store).
    h2 = None
    for dh in range(3):
        for dw in range(3):
            xcat_ref[:, :, pl.ds(dw * Cp, Cp)] = hp_ref[pl.ds(dh, H), pl.ds(dw, W), :]
        part = jnp.dot(xcat_ref[...].reshape(H * W, 3 * Cp),
                       w2_ref[pl.ds(dh * 3 * Cp, 3 * Cp), :],
                       preferred_element_type=jnp.float32)
        h2 = part if h2 is None else h2 + part
    h2 = jnp.maximum(h2 + b2_ref[...], 0.0)                             # (H*W, Cp) f32

    # ---- fused AvgPool(stride): plain window sums (scale folded into conv3/ds).
    pooled = _pool_sum(h2, H, W, stride).astype(jnp.bfloat16)           # (Ho*Wo, Cp)

    # ---- conv3 (+ merged downsample conv) + bias, residual add, final ReLU.
    if has_downsample:
        ident = _pool_sum(x2d, H, W, stride)                            # bf16 sums
        lhs = jnp.concatenate([pooled, ident], axis=-1)                 # K = Cp + Cinp
        y = jnp.dot(lhs, w3_ref[...], preferred_element_type=jnp.float32) + b3_ref[...]
    else:
        # no downsample => stride == 1 and Cin == Cout (module invariant)
        y = jnp.dot(pooled, w3_ref[...], preferred_element_type=jnp.float32) + b3_ref[...]
        y = y + x2d.astype(jnp.float32)
    y = jnp.maximum(y, 0.0)
    o_ref[0] = y.reshape(Ho, Wo, Coutp).astype(o_ref.dtype)


# --------------------------------------------------------------------------- packing (init-time)
def pack_bottleneck_params(p, stride):
    """Fold BN scales + pool scale into bf16 weights, pad channels to 128. Do ONCE at init."""
    cin, planes = p['w1'].shape
    cout = p['w3'].shape[1]
    has_ds = 'wd' in p
    if not has_ds:
        assert stride == 1 and cin == cout
    cinp, cp, coutp = _round_up(cin), _round_up(planes), _round_up(cout)
    inv_pool = 1.0 / float(stride * stride)

    w1 = _pad_mat(p['w1'] * p['s1'][None, :], cinp, cp).astype(jnp.bfloat16)
    b1 = _pad_last(p['b1'].reshape(1, -1), cp)
    w2 = p['w2'] * p['s2'][None, None, :]                       # (9, planes, planes)
    w2 = jnp.pad(w2, ((0, 0), (0, cp - planes), (0, cp - planes)))
    w2 = w2.reshape(9 * cp, cp).astype(jnp.bfloat16)            # rows ordered (dh, dw, cin)
    b2 = _pad_last(p['b2'].reshape(1, -1), cp)
    w3 = _pad_mat(p['w3'] * (p['s3'][None, :] * inv_pool), cp, coutp).astype(jnp.bfloat16)
    b3 = p['b3']
    if has_ds:
        wd = _pad_mat(p['wd'] * (p['sd'][None, :] * inv_pool), cinp, coutp).astype(jnp.bfloat16)
        w3 = jnp.concatenate([w3, wd], axis=0)                  # stacked: one merged dot
        b3 = b3 + p['bd']
    b3 = _pad_last(b3.reshape(1, -1), coutp)
    return dict(w1=w1, b1=b1, w2=w2, b2=b2, w3=w3, b3=b3,
                stride=stride, has_ds=has_ds,
                cin=cin, cout=cout, cinp=cinp, cp=cp, coutp=coutp)


def pack_input(x, cinp):
    """Channel-pad + bf16-cast activations once; chained blocks keep this layout."""
    return _pad_last(x, cinp).astype(jnp.bfloat16)


# --------------------------------------------------------------------------- VMEM budget
def _vmem_budget(h, w, cinp, cp, coutp, kdim):
    bf = 2
    scratch = (h + 2) * (w + 2) * cp * bf + h * w * 3 * cp * bf
    io_blocks = 2 * h * w * cinp * bf + 2 * h * w * coutp * bf          # double-buffered x / out
    weights = (cinp * cp + 9 * cp * cp + kdim * coutp) * bf + (2 * cp + coutp) * 4
    temps = 8 * h * w * max(cp, coutp) * 4                              # f32 intermediates
    need = scratch + io_blocks + weights + temps
    return int(min(max(need * 3 // 2, 16 * 1024 * 1024), 100 * 1024 * 1024))


# --------------------------------------------------------------------------- apply (per call)
def _const_spec(shape):
    zeros = (0,) * len(shape)
    idx = lambda i, _z=zeros: _z
    try:   # single-buffer grid-invariant weight/bias blocks
        return pl.BlockSpec(shape, idx, pipeline_mode=pl.Buffered(1))
    except TypeError:
        return pl.BlockSpec(shape, idx)


def bottleneck_apply(xp, pk):
    """xp: (N, H, W, Cinp) bf16 channel-padded NHWC. Returns (N, H/s, W/s, Coutp) bf16."""
    n, h, w, cinp = xp.shape
    stride = pk['stride']
    assert cinp == pk['cinp'] and h % stride == 0 and w % stride == 0
    ho, wo = h // stride, w // stride
    cp, coutp = pk['cp'], pk['coutp']
    kdim = pk['w3'].shape[0]

    kernel = functools.partial(_bottleneck_kernel, stride=stride,
                               has_downsample=pk['has_ds'])
    return pl.pallas_call(
        kernel,
        out_shape=jax.ShapeDtypeStruct((n, ho, wo, coutp), jnp.bfloat16),
        grid=(n,),
        in_specs=[
            pl.BlockSpec((1, h, w, cinp), lambda i: (i, 0, 0, 0)),
            _const_spec((cinp, cp)), _const_spec((1, cp)),        # w1*s1, b1
            _const_spec((9 * cp, cp)), _const_spec((1, cp)),      # w2*s2, b2
            _const_spec((kdim, coutp)), _const_spec((1, coutp)),  # [w3*s3 ; wd*sd]/s^2, b3(+bd)
        ],
        out_specs=pl.BlockSpec((1, ho, wo, coutp), lambda i: (i, 0, 0, 0)),
        scratch_shapes=[
            pltpu.VMEM((h + 2, w + 2, cp), jnp.bfloat16),   # zero-bordered conv1 output (halo)
            pltpu.VMEM((h, w, 3 * cp), jnp.bfloat16),       # per-dh gather of 3 dw windows
        ],
        compiler_params=pltpu.CompilerParams(
            dimension_semantics=("parallel",),
            vmem_limit_bytes=_vmem_budget(h, w, cinp, cp, coutp, kdim),
        ),
    )(xp, pk['w1'], pk['b1'], pk['w2'], pk['b2'], pk['w3'], pk['b3'])


# --------------------------------------------------------------------- pure-JAX reference
def _ref_pool(x, s):
    if s == 1:
        return x
    n, h, w, c = x.shape
    return x.reshape(n, h // s, s, w // s, s, c).mean(axis=(2, 4))


def ref_forward(x, p, stride):
    planes = p['w1'].shape[1]

    def c1(t, w):
        return jnp.einsum('nhwc,cd->nhwd', t, w)

    h = jax.nn.relu(c1(x, p['w1']) * p['s1'] + p['b1'])
    w2 = p['w2'].reshape(3, 3, planes, planes)
    h = jax.lax.conv_general_dilated(h, w2, (1, 1), ((1, 1), (1, 1)),
                                     dimension_numbers=('NHWC', 'HWIO', 'NHWC'))
    h = jax.nn.relu(h * p['s2'] + p['b2'])
    h = _ref_pool(h, stride)
    out = c1(h, p['w3']) * p['s3'] + p['b3']
    if 'wd' in p:
        idn = _ref_pool(x, stride)
        idn = c1(idn, p['wd']) * p['sd'] + p['bd']
    else:
        idn = x
    return jax.nn.relu(out + idn)


# --------------------------------------------------------------------------- param setup
def make_params(key, inplanes, planes, stride):
    cout = planes * 4
    keys = iter(jax.random.split(key, 32))

    def conv_w(shape, fan_in):
        return jax.random.normal(next(keys), shape, jnp.float32) / np.sqrt(fan_in)

    def bn_sb(c):
        gamma = 1.0 + 0.1 * jax.random.normal(next(keys), (c,), jnp.float32)
        beta = 0.1 * jax.random.normal(next(keys), (c,), jnp.float32)
        mean = 0.1 * jax.random.normal(next(keys), (c,), jnp.float32)
        var = 0.9 + 0.2 * jax.random.uniform(next(keys), (c,), jnp.float32)
        scale = gamma * jax.lax.rsqrt(var + 1e-5)
        return scale, beta - mean * scale

    p = {}
    p['w1'] = conv_w((inplanes, planes), inplanes)
    p['s1'], p['b1'] = bn_sb(planes)
    p['w2'] = conv_w((9, planes, planes), 9 * planes)          # (kh*3+kw, Cin, Cout)
    p['s2'], p['b2'] = bn_sb(planes)
    p['w3'] = conv_w((planes, cout), planes)
    p['s3'], p['b3'] = bn_sb(cout)
    if stride > 1 or inplanes != cout:
        p['wd'] = conv_w((inplanes, cout), inplanes)
        p['sd'], p['bd'] = bn_sb(cout)
    return p


# --------------------------------------------------------------------------------- main
if __name__ == "__main__":
    key = jax.random.PRNGKey(0)
    k1, k2, kx1, kx2 = jax.random.split(key, 4)

    # Case 1: stride=2, downsample path (inplanes=16, planes=8 -> out channels 32)
    inplanes, planes, stride = 16, 8, 2
    x1 = jax.random.normal(kx1, (2, 16, 16, inplanes), jnp.float32)   # NHWC
    params1 = make_params(k1, inplanes, planes, stride)
    packed1 = pack_bottleneck_params(params1, stride)                  # once, at "init"
    xp1 = pack_input(x1, packed1['cinp'])
    y1 = jax.block_until_ready(bottleneck_apply(xp1, packed1))
    y1 = np.asarray(y1[..., :packed1['cout']].astype(jnp.float32))
    r1 = np.asarray(ref_forward(x1, params1, stride))
    np.testing.assert_allclose(y1, r1, rtol=6e-2, atol=6e-2)

    # Case 2: stride=1, pure identity path (inplanes == planes*4)
    inplanes2, planes2, stride2 = 32, 8, 1
    x2 = jax.random.normal(kx2, (2, 8, 8, inplanes2), jnp.float32)
    params2 = make_params(k2, inplanes2, planes2, stride2)
    packed2 = pack_bottleneck_params(params2, stride2)
    xp2 = pack_input(x2, packed2['cinp'])
    y2 = jax.block_until_ready(bottleneck_apply(xp2, packed2))
    y2 = np.asarray(y2[..., :packed2['cout']].astype(jnp.float32))
    r2 = np.asarray(ref_forward(x2, params2, stride2))
    np.testing.assert_allclose(y2, r2, rtol=6e-2, atol=6e-2)

    print("KERNEL_OK")
</pallas_src>

<mosaic_0001>
module attributes {stable_mosaic.version = 11 : i64} {
  func.func @_bottleneck_kernel(%arg0: i32, %arg1: memref<1x16x16x128xbf16, #tpu.memory_space<vmem>>, %arg2: memref<128x128xbf16, #tpu.memory_space<vmem>>, %arg3: memref<1x128xf32, #tpu.memory_space<vmem>>, %arg4: memref<1152x128xbf16, #tpu.memory_space<vmem>>, %arg5: memref<1x128xf32, #tpu.memory_space<vmem>>, %arg6: memref<256x128xbf16, #tpu.memory_space<vmem>>, %arg7: memref<1x128xf32, #tpu.memory_space<vmem>>, %arg8: memref<1x8x8x128xbf16, #tpu.memory_space<vmem>>, %arg9: memref<18x18x128xbf16, #tpu.memory_space<vmem>>, %arg10: memref<16x16x384xbf16, #tpu.memory_space<vmem>>) attributes {dimension_semantics = [#tpu.dimension_semantics<parallel>], iteration_bounds = array<i64: 2>, scalar_prefetch = 0 : i64, scratch_operands = 2 : i64, tpu.core_type = #tpu.core_type<tc>, window_params = [{transform_indices = @transform_0, window_bounds = array<i64: 1, 16, 16, 128>}, {pipeline_mode = #tpu.pipeline_mode<synchronous>, transform_indices = @transform_1, window_bounds = array<i64: 128, 128>}, {pipeline_mode = #tpu.pipeline_mode<synchronous>, transform_indices = @transform_2, window_bounds = array<i64: 1, 128>}, {pipeline_mode = #tpu.pipeline_mode<synchronous>, transform_indices = @transform_3, window_bounds = array<i64: 1152, 128>}, {pipeline_mode = #tpu.pipeline_mode<synchronous>, transform_indices = @transform_4, window_bounds = array<i64: 1, 128>}, {pipeline_mode = #tpu.pipeline_mode<synchronous>, transform_indices = @transform_5, window_bounds = array<i64: 256, 128>}, {pipeline_mode = #tpu.pipeline_mode<synchronous>, transform_indices = @transform_6, window_bounds = array<i64: 1, 128>}, {transform_indices = @transform_7, window_bounds = array<i64: 1, 8, 8, 128>}]} {
    %cst = arith.constant 0.000000e+00 : bf16
    %0 = vector.broadcast %cst : bf16 to vector<18x128xbf16>
    %c0 = arith.constant 0 : index
    %c0_0 = arith.constant 0 : index
    %c0_1 = arith.constant 0 : index
    %1 = vector.load %arg9[%c0, %c0_0, %c0_1] : memref<18x18x128xbf16, #tpu.memory_space<vmem>>, vector<1x18x128xbf16>
    %2 = vector.shape_cast %1 : vector<1x18x128xbf16> to vector<18x128xbf16>
    %3 = vector.shape_cast %0 : vector<18x128xbf16> to vector<1x18x128xbf16>
    tpu.vector_store %arg9[%c0, %c0_0, %c0_1], %3 {strides = array<i32>} : memref<18x18x128xbf16, #tpu.memory_space<vmem>>, vector<1x18x128xbf16>,
    %cst_2 = arith.constant 0.000000e+00 : bf16
    %4 = vector.broadcast %cst_2 : bf16 to vector<18x128xbf16>
    %c17 = arith.constant 17 : index
    %c0_3 = arith.constant 0 : index
    %c0_4 = arith.constant 0 : index
    %5 = vector.load %arg9[%c17, %c0_3, %c0_4] : memref<18x18x128xbf16, #tpu.memory_space<vmem>>, vector<1x18x128xbf16>
    %6 = vector.shape_cast %5 : vector<1x18x128xbf16> to vector<18x128xbf16>
    %7 = vector.shape_cast %4 : vector<18x128xbf16> to vector<1x18x128xbf16>
    tpu.vector_store %arg9[%c17, %c0_3, %c0_4], %7 {strides = array<i32>} : memref<18x18x128xbf16, #tpu.memory_space<vmem>>, vector<1x18x128xbf16>,
    %cst_5 = arith.constant 0.000000e+00 : bf16
    %8 = vector.broadcast %cst_5 : bf16 to vector<18x1x128xbf16>
    %c0_6 = arith.constant 0 : index
    %c0_7 = arith.constant 0 : index
    %c0_8 = arith.constant 0 : index
    %9 = vector.load %arg9[%c0_6, %c0_7, %c0_8] : memref<18x18x128xbf16, #tpu.memory_space<vmem>>, vector<18x1x128xbf16>
    tpu.vector_store %arg9[%c0_6, %c0_7, %c0_8], %8 {strides = array<i32>} : memref<18x18x128xbf16, #tpu.memory_space<vmem>>, vector<18x1x128xbf16>,
    %cst_9 = arith.constant 0.000000e+00 : bf16
    %10 = vector.broadcast %cst_9 : bf16 to vector<18x1x128xbf16>
    %c0_10 = arith.constant 0 : index
    %c17_11 = arith.constant 17 : index
    %c0_12 = arith.constant 0 : index
    %11 = vector.load %arg9[%c0_10, %c17_11, %c0_12] : memref<18x18x128xbf16, #tpu.memory_space<vmem>>, vector<18x1x128xbf16>
    tpu.vector_store %arg9[%c0_10, %c17_11, %c0_12], %10 {strides = array<i32>} : memref<18x18x128xbf16, #tpu.memory_space<vmem>>, vector<18x1x128xbf16>,
    %c0_13 = arith.constant 0 : index
    %c0_14 = arith.constant 0 : index
    %c0_15 = arith.constant 0 : index
    %c0_16 = arith.constant 0 : index
    %12 = vector.load %arg1[%c0_13, %c0_14, %c0_15, %c0_16] : memref<1x16x16x128xbf16, #tpu.memory_space<vmem>>, vector<1x16x16x128xbf16>
    %13 = vector.shape_cast %12 : vector<1x16x16x128xbf16> to vector<16x16x128xbf16>
    %14 = vector.shape_cast %13 : vector<16x16x128xbf16> to vector<256x128xbf16>
    %c0_17 = arith.constant 0 : index
    %c0_18 = arith.constant 0 : index
    %15 = vector.load %arg2[%c0_17, %c0_18] : memref<128x128xbf16, #tpu.memory_space<vmem>>, vector<128x128xbf16>
    %cst_19 = arith.constant dense<0.000000e+00> : vector<256x128xf32>
    %16 = tpu.matmul %14, %15, %cst_19 {dimension_numbers = #tpu.dot_dimension_numbers<[1], [0], [0], [1], [0, 0, 1, 1], [], []>} : vector<256x128xbf16>, vector<128x128xbf16>, vector<256x128xf32> -> vector<256x128xf32>
    %c0_20 = arith.constant 0 : index
    %c0_21 = arith.constant 0 : index
    %17 = vector.load %arg3[%c0_20, %c0_21] : memref<1x128xf32, #tpu.memory_space<vmem>>, vector<1x128xf32>
    %18 = vector.broadcast %17 : vector<1x128xf32> to vector<256x128xf32>
    %19 = arith.addf %16, %18 : vector<256x128xf32>
    %cst_22 = arith.constant 0.000000e+00 : f32
    %20 = vector.broadcast %cst_22 : f32 to vector<256x128xf32>
    %21 = arith.maximumf %19, %20 : vector<256x128xf32>
    %22 = vector.shape_cast %21 : vector<256x128xf32> to vector<16x16x128xf32>
    %23 = arith.truncf %22 : vector<16x16x128xf32> to vector<16x16x128xbf16>
    %c1 = arith.constant 1 : index
    %c1_23 = arith.constant 1 : index
    %c0_24 = arith.constant 0 : index
    %24 = vector.load %arg9[%c1, %c1_23, %c0_24] : memref<18x18x128xbf16, #tpu.memory_space<vmem>>, vector<16x16x128xbf16>
    tpu.vector_store %arg9[%c1, %c1_23, %c0_24], %23 {strides = array<i32>} : memref<18x18x128xbf16, #tpu.memory_space<vmem>>, vector<16x16x128xbf16>,
    %c0_25 = arith.constant 0 : index
    %c0_26 = arith.constant 0 : index
    %c0_27 = arith.constant 0 : index
    %25 = vector.load %arg9[%c0_25, %c0_26, %c0_27] : memref<18x18x128xbf16, #tpu.memory_space<vmem>>, vector<16x16x128xbf16>
    %c0_28 = arith.constant 0 : index
    %c0_29 = arith.constant 0 : index
    %c0_30 = arith.constant 0 : index
    %26 = vector.load %arg10[%c0_28, %c0_29, %c0_30] : memref<16x16x384xbf16, #tpu.memory_space<vmem>>, vector<16x16x128xbf16>
    tpu.vector_store %arg10[%c0_28, %c0_29, %c0_30], %25 {strides = array<i32>} : memref<16x16x384xbf16, #tpu.memory_space<vmem>>, vector<16x16x128xbf16>,
    %c0_31 = arith.constant 0 : index
    %c1_32 = arith.constant 1 : index
    %c0_33 = arith.constant 0 : index
    %27 = vector.load %arg9[%c0_31, %c1_32, %c0_33] : memref<18x18x128xbf16, #tpu.memory_space<vmem>>, vector<16x16x128xbf16>
    %c0_34 = arith.constant 0 : index
    %c0_35 = arith.constant 0 : index
    %c128 = arith.constant 128 : index
    %28 = vector.load %arg10[%c0_34, %c0_35, %c128] : memref<16x16x384xbf16, #tpu.memory_space<vmem>>, vector<16x16x128xbf16>
    tpu.vector_store %arg10[%c0_34, %c0_35, %c128], %27 {strides = array<i32>} : memref<16x16x384xbf16, #tpu.memory_space<vmem>>, vector<16x16x128xbf16>,
    %c0_36 = arith.constant 0 : index
    %c2 = arith.constant 2 : index
    %c0_37 = arith.constant 0 : index
    %29 = vector.load %arg9[%c0_36, %c2, %c0_37] : memref<18x18x128xbf16, #tpu.memory_space<vmem>>, vector<16x16x128xbf16>
    %c0_38 = arith.constant 0 : index
    %c0_39 = arith.constant 0 : index
    %c256 = arith.constant 256 : index
    %30 = vector.load %arg10[%c0_38, %c0_39, %c256] : memref<16x16x384xbf16, #tpu.memory_space<vmem>>, vector<16x16x128xbf16>
    tpu.vector_store %arg10[%c0_38, %c0_39, %c256], %29 {strides = array<i32>} : memref<16x16x384xbf16, #tpu.memory_space<vmem>>, vector<16x16x128xbf16>,
    %c0_40 = arith.constant 0 : index
    %c0_41 = arith.constant 0 : index
    %c0_42 = arith.constant 0 : index
    %31 = vector.load %arg10[%c0_40, %c0_41, %c0_42] : memref<16x16x384xbf16, #tpu.memory_space<vmem>>, vector<16x16x384xbf16>
    %32 = vector.shape_cast %31 : vector<16x16x384xbf16> to vector<256x384xbf16>
    %c0_43 = arith.constant 0 : index
    %c0_44 = arith.constant 0 : index
    %33 = vector.load %arg4[%c0_43, %c0_44] : memref<1152x128xbf16, #tpu.memory_space<vmem>>, vector<384x128xbf16>
    %cst_45 = arith.constant dense<0.000000e+00> : vector<256x128xf32>
    %34 = tpu.matmul %32, %33, %cst_45 {dimension_numbers = #tpu.dot_dimension_numbers<[1], [0], [0], [1], [0, 0, 1, 1], [], []>} : vector<256x384xbf16>, vector<384x128xbf16>, vector<256x128xf32> -> vector<256x128xf32>
    %c1_46 = arith.constant 1 : index
    %c0_47 = arith.constant 0 : index
    %c0_48 = arith.constant 0 : index
    %35 = vector.load %arg9[%c1_46, %c0_47, %c0_48] : memref<18x18x128xbf16, #tpu.memory_space<vmem>>, vector<16x16x128xbf16>
    %c0_49 = arith.constant 0 : index
    %c0_50 = arith.constant 0 : index
    %c0_51 = arith.constant 0 : index
    %36 = vector.load %arg10[%c0_49, %c0_50, %c0_51] : memref<16x16x384xbf16, #tpu.memory_space<vmem>>, vector<16x16x128xbf16>
    tpu.vector_store %arg10[%c0_49, %c0_50, %c0_51], %35 {strides = array<i32>} : memref<16x16x384xbf16, #tpu.memory_space<vmem>>, vector<16x16x128xbf16>,
    %c1_52 = arith.constant 1 : index
    %c1_53 = arith.constant 1 : index
    %c0_54 = arith.constant 0 : index
    %37 = vector.load %arg9[%c1_52, %c1_53, %c0_54] : memref<18x18x128xbf16, #tpu.memory_space<vmem>>, vector<16x16x128xbf16>
    %c0_55 = arith.constant 0 : index
    %c0_56 = arith.constant 0 : index
    %c128_57 = arith.constant 128 : index
    %38 = vector.load %arg10[%c0_55, %c0_56, %c128_57] : memref<16x16x384xbf16, #tpu.memory_space<vmem>>, vector<16x16x128xbf16>
    tpu.vector_store %arg10[%c0_55, %c0_56, %c128_57], %37 {strides = array<i32>} : memref<16x16x384xbf16, #tpu.memory_space<vmem>>, vector<16x16x128xbf16>,
    %c1_58 = arith.constant 1 : index
    %c2_59 = arith.constant 2 : index
    %c0_60 = arith.constant 0 : index
    %39 = vector.load %arg9[%c1_58, %c2_59, %c0_60] : memref<18x18x128xbf16, #tpu.memory_space<vmem>>, vector<16x16x128xbf16>
    %c0_61 = arith.constant 0 : index
    %c0_62 = arith.constant 0 : index
    %c256_63 = arith.constant 256 : index
    %40 = vector.load %arg10[%c0_61, %c0_62, %c256_63] : memref<16x16x384xbf16, #tpu.memory_space<vmem>>, vector<16x16x128xbf16>
    tpu.vector_store %arg10[%c0_61, %c0_62, %c256_63], %39 {strides = array<i32>} : memref<16x16x384xbf16, #tpu.memory_space<vmem>>, vector<16x16x128xbf16>,
    %c0_64 = arith.constant 0 : index
    %c0_65 = arith.constant 0 : index
    %c0_66 = arith.constant 0 : index
    %41 = vector.load %arg10[%c0_64, %c0_65, %c0_66] : memref<16x16x384xbf16, #tpu.memory_space<vmem>>, vector<16x16x384xbf16>
    %42 = vector.shape_cast %41 : vector<16x16x384xbf16> to vector<256x384xbf16>
    %c384 = arith.constant 384 : index
    %c0_67 = arith.constant 0 : index
    %43 = vector.load %arg4[%c384, %c0_67] : memref<1152x128xbf16, #tpu.memory_space<vmem>>, vector<384x128xbf16>
    %cst_68 = arith.constant dense<0.000000e+00> : vector<256x128xf32>
    %44 = tpu.matmul %42, %43, %cst_68 {dimension_numbers = #tpu.dot_dimension_numbers<[1], [0], [0], [1], [0, 0, 1, 1], [], []>} : vector<256x384xbf16>, vector<384x128xbf16>, vector<256x128xf32> -> vector<256x128xf32>
    %45 = arith.addf %34, %44 : vector<256x128xf32>
    %c2_69 = arith.constant 2 : index
    %c0_70 = arith.constant 0 : index
    %c0_71 = arith.constant 0 : index
    %46 = vector.load %arg9[%c2_69, %c0_70, %c0_71] : memref<18x18x128xbf16, #tpu.memory_space<vmem>>, vector<16x16x128xbf16>
    %c0_72 = arith.constant 0 : index
    %c0_73 = arith.constant 0 : index
    %c0_74 = arith.constant 0 : index
    %47 = vector.load %arg10[%c0_72, %c0_73, %c0_74] : memref<16x16x384xbf16, #tpu.memory_space<vmem>>, vector<16x16x128xbf16>
    tpu.vector_store %arg10[%c0_72, %c0_73, %c0_74], %46 {strides = array<i32>} : memref<16x16x384xbf16, #tpu.memory_space<vmem>>, vector<16x16x128xbf16>,
    %c2_75 = arith.constant 2 : index
    %c1_76 = arith.constant 1 : index
    %c0_77 = arith.constant 0 : index
    %48 = vector.load %arg9[%c2_75, %c1_76, %c0_77] : memref<18x18x128xbf16, #tpu.memory_space<vmem>>, vector<16x16x128xbf16>
    %c0_78 = arith.constant 0 : index
    %c0_79 = arith.constant 0 : index
    %c128_80 = arith.constant 128 : index
    %49 = vector.load %arg10[%c0_78, %c0_79, %c128_80] : memref<16x16x384xbf16, #tpu.memory_space<vmem>>, vector<16x16x128xbf16>
    tpu.vector_store %arg10[%c0_78, %c0_79, %c128_80], %48 {strides = array<i32>} : memref<16x16x384xbf16, #tpu.memory_space<vmem>>, vector<16x16x128xbf16>,
    %c2_81 = arith.constant 2 : index
    %c2_82 = arith.constant 2 : index
    %c0_83 = arith.constant 0 : index
    %50 = vector.load %arg9[%c2_81, %c2_82, %c0_83] : memref<18x18x128xbf16, #tpu.memory_space<vmem>>, vector<16x16x128xbf16>
    %c0_84 = arith.constant 0 : index
    %c0_85 = arith.constant 0 : index
    %c256_86 = arith.constant 256 : index
    %51 = vector.load %arg10[%c0_84, %c0_85, %c256_86] : memref<16x16x384xbf16, #tpu.memory_space<vmem>>, vector<16x16x128xbf16>
    tpu.vector_store %arg10[%c0_84, %c0_85, %c256_86], %50 {strides = array<i32>} : memref<16x16x384xbf16, #tpu.memory_space<vmem>>, vector<16x16x128xbf16>,
    %c0_87 = arith.constant 0 : index
    %c0_88 = arith.constant 0 : index
    %c0_89 = arith.constant 0 : index
    %52 = vector.load %arg10[%c0_87, %c0_88, %c0_89] : memref<16x16x384xbf16, #tpu.memory_space<vmem>>, vector<16x16x384xbf16>
    %53 = vector.shape_cast %52 : vector<16x16x384xbf16> to vector<256x384xbf16>
    %c768 = arith.constant 768 : index
    %c0_90 = arith.constant 0 : index
    %54 = vector.load %arg4[%c768, %c0_90] : memref<1152x128xbf16, #tpu.memory_space<vmem>>, vector<384x128xbf16>
    %cst_91 = arith.constant dense<0.000000e+00> : vector<256x128xf32>
    %55 = tpu.matmul %53, %54, %cst_91 {dimension_numbers = #tpu.dot_dimension_numbers<[1], [0], [0], [1], [0, 0, 1, 1], [], []>} : vector<256x384xbf16>, vector<384x128xbf16>, vector<256x128xf32> -> vector<256x128xf32>
    %56 = arith.addf %45, %55 : vector<256x128xf32>
    %c0_92 = arith.constant 0 : index
    %c0_93 = arith.constant 0 : index
    %57 = vector.load %arg5[%c0_92, %c0_93] : memref<1x128xf32, #tpu.memory_space<vmem>>, vector<1x128xf32>
    %58 = vector.broadcast %57 : vector<1x128xf32> to vector<256x128xf32>
    %59 = arith.addf %56, %58 : vector<256x128xf32>
    %cst_94 = arith.constant 0.000000e+00 : f32
    %60 = vector.broadcast %cst_94 : f32 to vector<256x128xf32>
    %61 = arith.maximumf %59, %60 : vector<256x128xf32>
    %62 = vector.shape_cast %61 : vector<256x128xf32> to vector<8x2x16x128xf32>
    %63 = vector.extract_strided_slice %62 {offsets = [0, 0, 0, 0], sizes = [8, 1, 16, 128], strides = [1, 1, 1, 1]} : vector<8x2x16x128xf32> to vector<8x1x16x128xf32>
    %64 = vector.shape_cast %63 : vector<8x1x16x128xf32> to vector<8x16x128xf32>
    %65 = vector.extract_strided_slice %62 {offsets = [0, 1, 0, 0], sizes = [8, 1, 16, 128], strides = [1, 1, 1, 1]} : vector<8x2x16x128xf32> to vector<8x1x16x128xf32>
    %66 = vector.shape_cast %65 : vector<8x1x16x128xf32> to vector<8x16x128xf32>
    %67 = arith.addf %64, %66 : vector<8x16x128xf32>
    %68 = vector.shape_cast %67 : vector<8x16x128xf32> to vector<64x2x128xf32>
    %69 = vector.extract_strided_slice %68 {offsets = [0, 0, 0], sizes = [64, 1, 128], strides = [1, 1, 1]} : vector<64x2x128xf32> to vector<64x1x128xf32>
    %70 = vector.shape_cast %69 : vector<64x1x128xf32> to vector<64x128xf32>
    %71 = vector.extract_strided_slice %68 {offsets = [0, 1, 0], sizes = [64, 1, 128], strides = [1, 1, 1]} : vector<64x2x128xf32> to vector<64x1x128xf32>
    %72 = vector.shape_cast %71 : vector<64x1x128xf32> to vector<64x128xf32>
    %73 = arith.addf %70, %72 : vector<64x128xf32>
    %74 = arith.truncf %73 : vector<64x128xf32> to vector<64x128xbf16>
    %75 = vector.shape_cast %14 : vector<256x128xbf16> to vector<8x2x16x128xbf16>
    %76 = vector.extract_strided_slice %75 {offsets = [0, 0, 0, 0], sizes = [8, 1, 16, 128], strides = [1, 1, 1, 1]} : vector<8x2x16x128xbf16> to vector<8x1x16x128xbf16>
    %77 = vector.shape_cast %76 : vector<8x1x16x128xbf16> to vector<8x16x128xbf16>
    %78 = vector.extract_strided_slice %75 {offsets = [0, 1, 0, 0], sizes = [8, 1, 16, 128], strides = [1, 1, 1, 1]} : vector<8x2x16x128xbf16> to vector<8x1x16x128xbf16>
    %79 = vector.shape_cast %78 : vector<8x1x16x128xbf16> to vector<8x16x128xbf16>
    %80 = arith.addf %77, %79 : vector<8x16x128xbf16>
    %81 = vector.shape_cast %80 : vector<8x16x128xbf16> to vector<64x2x128xbf16>
    %82 = vector.extract_strided_slice %81 {offsets = [0, 0, 0], sizes = [64, 1, 128], strides = [1, 1, 1]} : vector<64x2x128xbf16> to vector<64x1x128xbf16>
    %83 = vector.shape_cast %82 : vector<64x1x128xbf16> to vector<64x128xbf16>
    %84 = vector.extract_strided_slice %81 {offsets = [0, 1, 0], sizes = [64, 1, 128], strides = [1, 1, 1]} : vector<64x2x128xbf16> to vector<64x1x128xbf16>
    %85 = vector.shape_cast %84 : vector<64x1x128xbf16> to vector<64x128xbf16>
    %86 = arith.addf %83, %85 : vector<64x128xbf16>
    %87 = tpu.concatenate %74, %86 in 1 : vector<64x128xbf16>, vector<64x128xbf16> -> vector<64x256xbf16>
    %c0_95 = arith.constant 0 : index
    %c0_96 = arith.constant 0 : index
    %88 = vector.load %arg6[%c0_95, %c0_96] : memref<256x128xbf16, #tpu.memory_space<vmem>>, vector<256x128xbf16>
    %cst_97 = arith.constant dense<0.000000e+00> : vector<64x128xf32>
    %89 = tpu.matmul %87, %88, %cst_97 {dimension_numbers = #tpu.dot_dimension_numbers<[1], [0], [0], [1], [0, 0, 1, 1], [], []>} : vector<64x256xbf16>, vector<256x128xbf16>, vector<64x128xf32> -> vector<64x128xf32>
    %c0_98 = arith.constant 0 : index
    %c0_99 = arith.constant 0 : index
    %90 = vector.load %arg7[%c0_98, %c0_99] : memref<1x128xf32, #tpu.memory_space<vmem>>, vector<1x128xf32>
    %91 = vector.broadcast %90 : vector<1x128xf32> to vector<64x128xf32>
    %92 = arith.addf %89, %91 : vector<64x128xf32>
    %cst_100 = arith.constant 0.000000e+00 : f32
    %93 = vector.broadcast %cst_100 : f32 to vector<64x128xf32>
    %94 = arith.maximumf %92, %93 : vector<64x128xf32>
    %95 = vector.shape_cast %94 : vector<64x128xf32> to vector<8x8x128xf32>
    %96 = arith.truncf %95 : vector<8x8x128xf32> to vector<8x8x128xbf16>
    %c0_101 = arith.constant 0 : index
    %c0_102 = arith.constant 0 : index
    %c0_103 = arith.constant 0 : index
    %c0_104 = arith.constant 0 : index
    %97 = vector.load %arg8[%c0_101, %c0_102, %c0_103, %c0_104] : memref<1x8x8x128xbf16, #tpu.memory_space<vmem>>, vector<1x8x8x128xbf16>
    %98 = vector.shape_cast %97 : vector<1x8x8x128xbf16> to vector<8x8x128xbf16>
    %99 = vector.shape_cast %96 : vector<8x8x128xbf16> to vector<1x8x8x128xbf16>
    tpu.vector_store %arg8[%c0_101, %c0_102, %c0_103, %c0_104], %99 {strides = array<i32>} : memref<1x8x8x128xbf16, #tpu.memory_space<vmem>>, vector<1x8x8x128xbf16>,
    return
  }
  func.func @transform_0(%arg0: i32) -> (i32, i32, i32, i32) {
    %c0_i32 = arith.constant 0 : i32
    %c0_i32_0 = arith.constant 0 : i32
    %c0_i32_1 = arith.constant 0 : i32
    %c0_i32_2 = arith.constant 0 : i32
    return %arg0, %c0_i32, %c0_i32_0, %c0_i32_1 : i32, i32, i32, i32
  }
  func.func @transform_1(%arg0: i32) -> (i32, i32) {
    %c0_i32 = arith.constant 0 : i32
    %c0_i32_0 = arith.constant 0 : i32
    %c0_i32_1 = arith.constant 0 : i32
    return %c0_i32, %c0_i32_0 : i32, i32
  }
  func.func @transform_2(%arg0: i32) -> (i32, i32) {
    %c0_i32 = arith.constant 0 : i32
    %c0_i32_0 = arith.constant 0 : i32
    %c0_i32_1 = arith.constant 0 : i32
    return %c0_i32, %c0_i32_0 : i32, i32
  }
  func.func @transform_3(%arg0: i32) -> (i32, i32) {
    %c0_i32 = arith.constant 0 : i32
    %c0_i32_0 = arith.constant 0 : i32
    %c0_i32_1 = arith.constant 0 : i32
    return %c0_i32, %c0_i32_0 : i32, i32
  }
  func.func @transform_4(%arg0: i32) -> (i32, i32) {
    %c0_i32 = arith.constant 0 : i32
    %c0_i32_0 = arith.constant 0 : i32
    %c0_i32_1 = arith.constant 0 : i32
    return %c0_i32, %c0_i32_0 : i32, i32
  }
  func.func @transform_5(%arg0: i32) -> (i32, i32) {
    %c0_i32 = arith.constant 0 : i32
    %c0_i32_0 = arith.constant 0 : i32
    %c0_i32_1 = arith.constant 0 : i32
    return %c0_i32, %c0_i32_0 : i32, i32
  }
  func.func @transform_6(%arg0: i32) -> (i32, i32) {
    %c0_i32 = arith.constant 0 : i32
    %c0_i32_0 = arith.constant 0 : i32
    %c0_i32_1 = arith.constant 0 : i32
    return %c0_i32, %c0_i32_0 : i32, i32
  }
  func.func @transform_7(%arg0: i32) -> (i32, i32, i32, i32) {
    %c0_i32 = arith.constant 0 : i32
    %c0_i32_0 = arith.constant 0 : i32
    %c0_i32_1 = arith.constant 0 : i32
    %c0_i32_2 = arith.constant 0 : i32
    return %arg0, %c0_i32, %c0_i32_0, %c0_i32_1 : i32, i32, i32, i32
  }
}

</mosaic_0001>

<llo_original>
// kernel: tpu_custom_call.1
$region0: #{tpu_custom_call.1}
  #allocation0 [shape = 'u32[]', space=smem, size = 0x4, offset = 0x4, fixed_abs, tag = 'smem constant byte address 0x4 - core index']
  #allocation1 [shape = 'u32[72,128]{1,0:T(1,128)}', space=vmem, size = 0x9000, scoped, tag = 'internal scratch']
  #allocation2 [shape = 'bf16[18,18,128]{2,1,0:T(8,128)(2,1)}', space=vmem, size = 0x1b000, scoped, tag = 'scratch operand']
  #allocation3 [shape = 'bf16[16,16,384]{2,1,0:T(8,128)(2,1)}', space=vmem, size = 0x30000, scoped, tag = 'scratch operand']
  %s0 = inlined_call_operand.hbm [shape: bf16[2,16,16,128], index: 0, kind: input, shape index: {}]
  %s1 = inlined_call_operand.hbm [shape: bf16[128,128], index: 1, kind: input, shape index: {}]
  %s2 = inlined_call_operand.vmem [shape: f32[1,128], index: 2, kind: input, shape index: {}]
  %s3 = inlined_call_operand.hbm [shape: bf16[1152,128], index: 3, kind: input, shape index: {}]
  %s4 = inlined_call_operand.vmem [shape: f32[1,128], index: 4, kind: input, shape index: {}]
  %s5 = inlined_call_operand.hbm [shape: bf16[256,128], index: 5, kind: input, shape index: {}]
  %s6 = inlined_call_operand.vmem [shape: f32[1,128], index: 6, kind: input, shape index: {}]
  %s7 = inlined_call_operand.hbm [shape: bf16[2,8,8,128], index: 7, kind: output, shape index: {}]
  %s8 = sld [smem:[#allocation0]]
  $region77: #{tpu_custom_call.1} parent=0
    _
  %s10 = ssub.s32 1, %s8
  %s11 = scalar_select 0, %s10, %s8
  $region1: #{tpu_custom_call.1} parent=0
    #allocation4 [shape = 'u8[131072]{0}', space=vmem, size = 0x20000, scoped, tag = 'input window, operand 0']
    #allocation5 [shape = 's32[2]{0}', space=sflag, size = 0x8, scoped, tag = 'scoped memory for tpu_custom_call.1']
    #allocation6 [shape = 's32[2]{0}', space=sflag, size = 0x8, scoped, tag = 'scoped memory for tpu_custom_call.1']
    #allocation7 [shape = 'u8[32768]{0}', space=vmem, size = 0x8000, scoped, tag = 'input window, operand 1, single buffered']
    #allocation8 [shape = 's32[1]{0}', space=sflag, size = 0x4, scoped, tag = 'scoped memory for tpu_custom_call.1']
    #allocation9 [shape = 'u8[294912]{0}', space=vmem, size = 0x48000, scoped, tag = 'input window, operand 3, single buffered']
    #allocation10 [shape = 'u8[65536]{0}', space=vmem, size = 0x10000, scoped, tag = 'input window, operand 5, single buffered']
    #allocation11 [shape = 's32[1]{0}', space=sflag, size = 0x4, scoped, tag = 'scoped memory for tpu_custom_call.1']
    #allocation12 [shape = 'u8[32768]{0}', space=vmem, size = 0x8000, scoped, tag = 'output window, operand 0']
    %12 = vsyncpa [#allocation5], 0
    %s13 = scalar_lea.sflag [#allocation5], 1
    %14 = vsyncpa %s13, 0
    %15 = vsyncpa [#allocation8], 0
    %16 = vsyncpa [#allocation11], 0
    %17 = vsyncpa [#allocation6], 0
    %s18 = scalar_lea.sflag [#allocation6], 1
    %19 = vsyncpa %s18, 0
    loop: start=0, step=1, limit=4
    $region2: #{tpu_custom_call.1} parent=1 // loop_pre_header
      _
    $region3: #{tpu_custom_call.1} parent=1 // loop_header
      %s21 = sphi 0, %s25
      %p22 = scmp.ge.s32.totalorder %s21, 4
      %s31 = sphi 0, %s33
      %s34 = sphi 0, %s31
      %s35 = sphi 0, %s34
      %s51 = sphi 0, %s35
      %s55 = sphi 0, %s55
      %s57 = sphi 0, %s55
      %s58 = sphi 0, %s57
      %s72 = sphi 0, %s58
      %s76 = sphi 0, %s76
      %s78 = sphi 0, %s76
      %s79 = sphi 0, %s78
      %s93 = sphi 0, %s79
      %s97 = sphi 0, %s97
      %s99 = sphi 0, %s97
      %s100 = sphi 0, %s99
      %s114 = sphi 0, %s100
      %s118 = sphi 0, %s118
      %s120 = sphi 0, %s118
      %s121 = sphi 0, %s120
      %s135 = sphi 0, %s121
      %s139 = sphi 0, %s139
      %s141 = sphi 0, %s139
      %s142 = sphi 0, %s141
      %s156 = sphi 0, %s142
      %s160 = sphi 0, %s160
      %s162 = sphi 0, %s160
      %s163 = sphi 0, %s162
      %s177 = sphi 0, %s163
      %s183 = sphi 0, %s185
      %s186 = sphi 0, %s183
      %s187 = sphi 0, %s186
      %s203 = sphi 0, %s187
    $region4: #{tpu_custom_call.1} parent=1 // loop_header_branch
      %24 = sbr.rel (%p22) target = $region8
    $region5: #{tpu_custom_call.1} parent=1 // loop_body
      %s26 = ssub.s32 %s21, 1
      %s27 = ssub.s32 %s21, 2
      %s28 = sadd.s32 %s21, 1
      %s29 = ssub.s32 %s21, %s28
      %p30 = scmp.eq.s32.totalorder %s29, 0
      %s32 = sadd.s32 %s31, 1
      %s33 = scalar_select %p30, %s31, %s32
      %p36 = pneg %p30
      %p37 = scmp.eq.s32.totalorder %s21, 1
      %p38 = por %p36, %p37
      %p39 = scmp.ne.s32.totalorder %s31, %s34
      %p40 = scmp.eq.s32.totalorder %s21, 0
      %p41 = por %p39, %p40
      %p42 = scmp.ne.s32.totalorder %s31, %s34
      %p43 = scmp.eq.s32.totalorder %s26, 1
      %p44 = por %p42, %p43
      %p45 = scmp.ne.s32.totalorder %s34, %s35
      %p46 = scmp.eq.s32.totalorder %s26, 0
      %p47 = por %p45, %p46
      %p48 = scmp.ne.s32.totalorder %s34, %s35
      %p49 = scmp.eq.s32.totalorder %s27, 1
      %p50 = por %p48, %p49
      %p52 = scmp.ne.s32.totalorder %s35, %s51
      %p53 = scmp.eq.s32.totalorder %s27, 0
      %p54 = por %p52, %p53
      %s56 = sadd.s32 %s55, 1
      %p59 = scmp.eq.s32.totalorder %s21, 1
      %p60 = scmp.ne.s32.totalorder %s55, %s57
      %p61 = scmp.eq.s32.totalorder %s21, 0
      %p62 = por %p60, %p61
      %p63 = scmp.ne.s32.totalorder %s55, %s57
      %p64 = scmp.eq.s32.totalorder %s26, 1
      %p65 = por %p63, %p64
      %p66 = scmp.ne.s32.totalorder %s57, %s58
      %p67 = scmp.eq.s32.totalorder %s26, 0
      %p68 = por %p66, %p67
      %p69 = scmp.ne.s32.totalorder %s57, %s58
      %p70 = scmp.eq.s32.totalorder %s27, 1
      %p71 = por %p69, %p70
      %p73 = scmp.ne.s32.totalorder %s58, %s72
      %p74 = scmp.eq.s32.totalorder %s27, 0
      %p75 = por %p73, %p74
      %s77 = sadd.s32 %s76, 1
      %p80 = scmp.eq.s32.totalorder %s21, 1
      %p81 = scmp.ne.s32.totalorder %s76, %s78
      %p82 = scmp.eq.s32.totalorder %s21, 0
      %p83 = por %p81, %p82
      %p84 = scmp.ne.s32.totalorder %s76, %s78
      %p85 = scmp.eq.s32.totalorder %s26, 1
      %p86 = por %p84, %p85
      %p87 = scmp.ne.s32.totalorder %s78, %s79
      %p88 = scmp.eq.s32.totalorder %s26, 0
      %p89 = por %p87, %p88
      %p90 = scmp.ne.s32.totalorder %s78, %s79
      %p91 = scmp.eq.s32.totalorder %s27, 1
      %p92 = por %p90, %p91
      %p94 = scmp.ne.s32.totalorder %s79, %s93
      %p95 = scmp.eq.s32.totalorder %s27, 0
      %p96 = por %p94, %p95
      %s98 = sadd.s32 %s97, 1
      %p101 = scmp.eq.s32.totalorder %s21, 1
      %p102 = scmp.ne.s32.totalorder %s97, %s99
      %p103 = scmp.eq.s32.totalorder %s21, 0
      %p104 = por %p102, %p103
      %p105 = scmp.ne.s32.totalorder %s97, %s99
      %p106 = scmp.eq.s32.totalorder %s26, 1
      %p107 = por %p105, %p106
      %p108 = scmp.ne.s32.totalorder %s99, %s100
      %p109 = scmp.eq.s32.totalorder %s26, 0
      %p110 = por %p108, %p109
      %p111 = scmp.ne.s32.totalorder %s99, %s100
      %p112 = scmp.eq.s32.totalorder %s27, 1
      %p113 = por %p111, %p112
      %p115 = scmp.ne.s32.totalorder %s100, %s114
      %p116 = scmp.eq.s32.totalorder %s27, 0
      %p117 = por %p115, %p116
      %s119 = sadd.s32 %s118, 1
      %p122 = scmp.eq.s32.totalorder %s21, 1
      %p123 = scmp.ne.s32.totalorder %s118, %s120
      %p124 = scmp.eq.s32.totalorder %s21, 0
      %p125 = por %p123, %p124
      %p126 = scmp.ne.s32.totalorder %s118, %s120
      %p127 = scmp.eq.s32.totalorder %s26, 1
      %p128 = por %p126, %p127
      %p129 = scmp.ne.s32.totalorder %s120, %s121
      %p130 = scmp.eq.s32.totalorder %s26, 0
      %p131 = por %p129, %p130
      %p132 = scmp.ne.s32.totalorder %s120, %s121
      %p133 = scmp.eq.s32.totalorder %s27, 1
      %p134 = por %p132, %p133
      %p136 = scmp.ne.s32.totalorder %s121, %s135
      %p137 = scmp.eq.s32.totalorder %s27, 0
      %p138 = por %p136, %p137
      %s140 = sadd.s32 %s139, 1
      %p143 = scmp.eq.s32.totalorder %s21, 1
      %p144 = scmp.ne.s32.totalorder %s139, %s141
      %p145 = scmp.eq.s32.totalorder %s21, 0
      %p146 = por %p144, %p145
      %p147 = scmp.ne.s32.totalorder %s139, %s141
      %p148 = scmp.eq.s32.totalorder %s26, 1
      %p149 = por %p147, %p148
      %p150 = scmp.ne.s32.totalorder %s141, %s142
      %p151 = scmp.eq.s32.totalorder %s26, 0
      %p152 = por %p150, %p151
      %p153 = scmp.ne.s32.totalorder %s141, %s142
      %p154 = scmp.eq.s32.totalorder %s27, 1
      %p155 = por %p153, %p154
      %p157 = scmp.ne.s32.totalorder %s142, %s156
      %p158 = scmp.eq.s32.totalorder %s27, 0
      %p159 = por %p157, %p158
      %s161 = sadd.s32 %s160, 1
      %p164 = scmp.eq.s32.totalorder %s21, 1
      %p165 = scmp.ne.s32.totalorder %s160, %s162
      %p166 = scmp.eq.s32.totalorder %s21, 0
      %p167 = por %p165, %p166
      %p168 = scmp.ne.s32.totalorder %s160, %s162
      %p169 = scmp.eq.s32.totalorder %s26, 1
      %p170 = por %p168, %p169
      %p171 = scmp.ne.s32.totalorder %s162, %s163
      %p172 = scmp.eq.s32.totalorder %s26, 0
      %p173 = por %p171, %p172
      %p174 = scmp.ne.s32.totalorder %s162, %s163
      %p175 = scmp.eq.s32.totalorder %s27, 1
      %p176 = por %p174, %p175
      %p178 = scmp.ne.s32.totalorder %s163, %s177
      %p179 = scmp.eq.s32.totalorder %s27, 0
      %p180 = por %p178, %p179
      %s181 = ssub.s32 %s21, %s28
      %p182 = scmp.eq.s32.totalorder %s181, 0
      %s184 = sadd.s32 %s183, 1
      %s185 = scalar_select %p182, %s183, %s184
      %p188 = pneg %p182
      %p189 = scmp.eq.s32.totalorder %s21, 1
      %p190 = por %p188, %p189
      %p191 = scmp.ne.s32.totalorder %s183, %s186
      %p192 = scmp.eq.s32.totalorder %s21, 0
      %p193 = por %p191, %p192
      %p194 = scmp.ne.s32.totalorder %s183, %s186
      %p195 = scmp.eq.s32.totalorder %s26, 1
      %p196 = por %p194, %p195
      %p197 = scmp.ne.s32.totalorder %s186, %s187
      %p198 = scmp.eq.s32.totalorder %s26, 0
      %p199 = por %p197, %p198
      %p200 = scmp.ne.s32.totalorder %s186, %s187
      %p201 = scmp.eq.s32.totalorder %s27, 1
      %p202 = por %p200, %p201
      %p204 = scmp.ne.s32.totalorder %s187, %s203
      %p205 = scmp.eq.s32.totalorder %s27, 0
      %p206 = por %p204, %p205
      %p207 = scmp.le.s32.totalorder 1, %s21
      %p208 = scmp.lt.s32.totalorder %s21, 3
      %p209 = pnand %p207, %p208
      %p210 = pneg %p209
      // Predicated region
      $region9: #{tpu_custom_call.1} parent=5 // pred_check
        _
      $region10: #{tpu_custom_call.1} parent=5 // pred_check_branch
        %212 = sbr.rel (%p209) target = $region12
      $region11: #{tpu_custom_call.1} parent=5 // pred_region
        %s213 = ssub.s32 %s21, 1
        // Predicated region
        $region13: #{tpu_custom_call.1} parent=11 // pred_check
          %p214 = pneg %p68
        $region14: #{tpu_custom_call.1} parent=11 // pred_check_branch
          %216 = sbr.rel (%p214) target = $region16
        $region15: #{tpu_custom_call.1} parent=11 // pred_region
          %218 = vsyncadd [#allocation8], 0
          %s219 = sshll.u32 %s1, 4
          %s220 = int_to_ptr.hbm [resolvable:$true] %s219
          %s221 = sshll.u32 [#allocation7], 4
          %s222 = int_to_ptr.vmem [resolvable:$true] %s221
          %227 = dma.hbm_to_vmem [thread:$0]  %s220, 1024, %s222, [#allocation8], 64, 64, 4
        $region16: #{tpu_custom_call.1} parent=11 // pred_fallthru
          _
        // Predicated region
        $region17: #{tpu_custom_call.1} parent=11 // pred_check
          %p228 = pneg %p89
        $region18: #{tpu_custom_call.1} parent=11 // pred_check_branch
          %230 = sbr.rel (%p228) target = $region20
        $region19: #{tpu_custom_call.1} parent=11 // pred_region
          _
        $region20: #{tpu_custom_call.1} parent=11 // pred_fallthru
          _
        // Predicated region
        $region21: #{tpu_custom_call.1} parent=11 // pred_check
          %p231 = pneg %p110
        $region22: #{tpu_custom_call.1} parent=11 // pred_check_branch
          %233 = sbr.rel (%p231) target = $region24
        $region23: #{tpu_custom_call.1} parent=11 // pred_region
          %235 = vsyncadd [#allocation8], 0
          %s236 = sshll.u32 %s3, 4
          %s237 = int_to_ptr.hbm [resolvable:$true] %s236
          %s238 = sshll.u32 [#allocation9], 4
          %s239 = int_to_ptr.vmem [resolvable:$true] %s238
          %244 = dma.hbm_to_vmem [thread:$0]  %s237, 9216, %s239, [#allocation8], 64, 64, 4
        $region24: #{tpu_custom_call.1} parent=11 // pred_fallthru
          _
        // Predicated region
        $region25: #{tpu_custom_call.1} parent=11 // pred_check
          %p245 = pneg %p131
        $region26: #{tpu_custom_call.1} parent=11 // pred_check_branch
          %247 = sbr.rel (%p245) target = $region28
        $region27: #{tpu_custom_call.1} parent=11 // pred_region
          _
        $region28: #{tpu_custom_call.1} parent=11 // pred_fallthru
          _
        // Predicated region
        $region29: #{tpu_custom_call.1} parent=11 // pred_check
          %p248 = pneg %p152
        $region30: #{tpu_custom_call.1} parent=11 // pred_check_branch
          %250 = sbr.rel (%p248) target = $region32
        $region31: #{tpu_custom_call.1} parent=11 // pred_region
          %252 = vsyncadd [#allocation11], 0
          %s253 = sshll.u32 %s5, 4
          %s254 = int_to_ptr.hbm [resolvable:$true] %s253
          %s255 = sshll.u32 [#allocation10], 4
          %s256 = int_to_ptr.vmem [resolvable:$true] %s255
          %261 = dma.hbm_to_vmem [thread:$0]  %s254, 2048, %s256, [#allocation11], 64, 64, 4
        $region32: #{tpu_custom_call.1} parent=11 // pred_fallthru
          _
        // Predicated region
        $region33: #{tpu_custom_call.1} parent=11 // pred_check
          %p262 = pneg %p173
        $region34: #{tpu_custom_call.1} parent=11 // pred_check_branch
          %264 = sbr.rel (%p262) target = $region36
        $region35: #{tpu_custom_call.1} parent=11 // pred_region
          _
        $region36: #{tpu_custom_call.1} parent=11 // pred_fallthru
          _
      $region12: #{tpu_custom_call.1} parent=5 // pred_fallthru
        _
      %p265 = scmp.lt.s32.totalorder %s21, 2
      // Predicated region
      $region37: #{tpu_custom_call.1} parent=5 // pred_check
        %p266 = pneg %p265
      $region38: #{tpu_custom_call.1} parent=5 // pred_check_branch
        %268 = sbr.rel (%p266) target = $region40
      $region39: #{tpu_custom_call.1} parent=5 // pred_region
        // Predicated region
        $region41: #{tpu_custom_call.1} parent=39 // pred_check
          %p269 = pneg %p41
        $region42: #{tpu_custom_call.1} parent=39 // pred_check_branch
          %271 = sbr.rel (%p269) target = $region44
        $region43: #{tpu_custom_call.1} parent=39 // pred_region
          %s272 = sand.u32 %s31, 1
          %s273 = scalar_lea.sflag [#allocation5], %s272
          %s274 = sand.u32 %s31, 1
          %s275 = smul.addr %s274, 128
          %s276 = scalar_lea.vmem [#allocation4], %s275
          %278 = vsyncadd %s273, 0
          %s279 = smul.addr %s21, 32
          %s280 = smul.addr %s279, 4
          %s281 = scalar_lea.hbm %s0, %s280
          %s282 = sshll.u32 %s281, 4
          %s283 = int_to_ptr.hbm [resolvable:$true] %s282
          %s284 = sshll.u32 %s276, 4
          %s285 = int_to_ptr.vmem [resolvable:$true] %s284
          %290 = dma.hbm_to_vmem [thread:$0]  %s283, 2048, %s285, %s273, 64, 64, 4
        $region44: #{tpu_custom_call.1} parent=39 // pred_fallthru
          _
      $region40: #{tpu_custom_call.1} parent=5 // pred_fallthru
        _
      %p291 = scmp.le.s32.totalorder 1, %s21
      %p292 = scmp.lt.s32.totalorder %s21, 3
      %p293 = pnand %p291, %p292
      %p294 = pneg %p293
      // Predicated region
      $region45: #{tpu_custom_call.1} parent=5 // pred_check
        _
      $region46: #{tpu_custom_call.1} parent=5 // pred_check_branch
        %296 = sbr.rel (%p293) target = $region48
      $region47: #{tpu_custom_call.1} parent=5 // pred_region
        %s297 = ssub.s32 %s21, 1
        %s298 = sand.u32 %s34, 1
        %s299 = scalar_lea.sflag [#allocation5], %s298
        %s300 = sand.u32 %s34, 1
        %s301 = smul.addr %s300, 128
        %s302 = scalar_lea.vmem [#allocation4], %s301
        // Predicated region
        $region49: #{tpu_custom_call.1} parent=47 // pred_check
          %p303 = pneg %p47
        $region50: #{tpu_custom_call.1} parent=47 // pred_check_branch
          %305 = sbr.rel (%p303) target = $region52
        $region51: #{tpu_custom_call.1} parent=47 // pred_region
          %307 = dma.done %s299, 2048
        $region52: #{tpu_custom_call.1} parent=47 // pred_fallthru
          _
        // Predicated region
        $region53: #{tpu_custom_call.1} parent=47 // pred_check
          %p308 = pneg %p68
        $region54: #{tpu_custom_call.1} parent=47 // pred_check_branch
          %310 = sbr.rel (%p308) target = $region56
        $region55: #{tpu_custom_call.1} parent=47 // pred_region
          %312 = dma.done [#allocation8], 1024
        $region56: #{tpu_custom_call.1} parent=47 // pred_fallthru
          _
        // Predicated region
        $region57: #{tpu_custom_call.1} parent=47 // pred_check
          %p313 = pneg %p110
        $region58: #{tpu_custom_call.1} parent=47 // pred_check_branch
          %315 = sbr.rel (%p313) target = $region60
        $region59: #{tpu_custom_call.1} parent=47 // pred_region
          %317 = dma.done [#allocation8], 9216
        $region60: #{tpu_custom_call.1} parent=47 // pred_fallthru
          _
        // Predicated region
        $region61: #{tpu_custom_call.1} parent=47 // pred_check
          %p318 = pneg %p152
        $region62: #{tpu_custom_call.1} parent=47 // pred_check_branch
          %320 = sbr.rel (%p318) target = $region64
        $region63: #{tpu_custom_call.1} parent=47 // pred_region
          %322 = dma.done [#allocation11], 2048
        $region64: #{tpu_custom_call.1} parent=47 // pred_fallthru
          _
        %s323 = sand.u32 %s34, 1
        %s324 = scalar_lea.sflag [#allocation5], %s323
        %s325 = sand.u32 %s34, 1
        %s326 = smul.addr %s325, 128
        %s327 = scalar_lea.vmem [#allocation4], %s326
        %p328 = pneg %p47
        %p329 = pneg %p44
        %p330 = pneg %p68
        %p331 = pneg %p65
        %p332 = pneg %p89
        %p333 = pneg %p86
        %p334 = pneg %p110
        %p335 = pneg %p107
        %p336 = pneg %p131
        %p337 = pneg %p128
        %p338 = pneg %p152
        %p339 = pneg %p149
        %p340 = pneg %p173
        %p341 = pneg %p170
        %p342 = pneg %p199
        %p343 = pneg %p196
        %s344 = sand.u32 %s186, 1
        %s345 = scalar_lea.sflag [#allocation6], %s344
        %s346 = sand.u32 %s186, 1
        %s347 = smul.addr %s346, 32
        %s348 = scalar_lea.vmem [#allocation12], %s347
        %350 = vst [vmem:[#allocation2] sm:$0xf] 0
        %351 = vst [vmem:[#allocation2 + $0x4] sm:$0xf] 0
        %352 = vst [vmem:[#allocation2 + $0x8] sm:$0x1] 0
        %s353 = scalar_lea.vmem [#allocation2], 204
        %354 = vst [vmem:[%s353] sm:$0xf] 0
        %355 = vst [vmem:[%s353 + $0x4] sm:$0xf] 0
        %356 = vst [vmem:[%s353 + $0x8] sm:$0x1] 0
        %vm357 = vcmask 1040384
        %vm358 = vsmask.f32 256
        %vm359 = vmand %vm357, %vm358
        %v360 = vld [vmem:[#allocation2] sm:$0x1]
        %v361 = vsel %vm359, 0, %v360
        %362 = vst [vmem:[#allocation2] sm:$0x1] %v361
        %v363 = vld [vmem:[#allocation2 + $0xc] sm:$0x1]
        %v364 = vsel %vm359, 0, %v363
        %365 = vst [vmem:[#allocation2 + $0xc] sm:$0x1] %v364
        %v366 = vld [vmem:[#allocation2 + $0x18] sm:$0x1]
        %v367 = vsel %vm359, 0, %v366
        %368 = vst [vmem:[#allocation2 + $0x18] sm:$0x1] %v367
        %v369 = vld [vmem:[#allocation2 + $0x24] sm:$0x1]
        %v370 = vsel %vm359, 0, %v369
        %371 = vst [vmem:[#allocation2 + $0x24] sm:$0x1] %v370
        %v372 = vld [vmem:[#allocation2 + $0x30] sm:$0x1]
        %v373 = vsel %vm359, 0, %v372
        %374 = vst [vmem:[#allocation2 + $0x30] sm:$0x1] %v373
        %v375 = vld [vmem:[#allocation2 + $0x3c] sm:$0x1]
        %v376 = vsel %vm359, 0, %v375
        %377 = vst [vmem:[#allocation2 + $0x3c] sm:$0x1] %v376
        %v378 = vld [vmem:[#allocation2 + $0x48] sm:$0x1]
        %v379 = vsel %vm359, 0, %v378
        %380 = vst [vmem:[#allocation2 + $0x48] sm:$0x1] %v379
        %v381 = vld [vmem:[#allocation2 + $0x54] sm:$0x1]
        %v382 = vsel %vm359, 0, %v381
        %383 = vst [vmem:[#allocation2 + $0x54] sm:$0x1] %v382
        %v384 = vld [vmem:[#allocation2 + $0x60] sm:$0x1]
        %v385 = vsel %vm359, 0, %v384
        %386 = vst [vmem:[#allocation2 + $0x60] sm:$0x1] %v385
        %v387 = vld [vmem:[#allocation2 + $0x6c] sm:$0x1]
        %v388 = vsel %vm359, 0, %v387
        %389 = vst [vmem:[#allocation2 + $0x6c] sm:$0x1] %v388
        %v390 = vld [vmem:[#allocation2 + $0x78] sm:$0x1]
        %v391 = vsel %vm359, 0, %v390
        %392 = vst [vmem:[#allocation2 + $0x78] sm:$0x1] %v391
        %v393 = vld [vmem:[#allocation2 + $0x84] sm:$0x1]
        %v394 = vsel %vm359, 0, %v393
        %395 = vst [vmem:[#allocation2 + $0x84] sm:$0x1] %v394
        %v396 = vld [vmem:[#allocation2 + $0x90] sm:$0x1]
        %v397 = vsel %vm359, 0, %v396
        %398 = vst [vmem:[#allocation2 + $0x90] sm:$0x1] %v397
        %v399 = vld [vmem:[#allocation2 + $0x9c] sm:$0x1]
        %v400 = vsel %vm359, 0, %v399
        %401 = vst [vmem:[#allocation2 + $0x9c] sm:$0x1] %v400
        %v402 = vld [vmem:[#allocation2 + $0xa8] sm:$0x1]
        %v403 = vsel %vm359, 0, %v402
        %404 = vst [vmem:[#allocation2 + $0xa8] sm:$0x1] %v403
        %v405 = vld [vmem:[#allocation2 + $0xb4] sm:$0x1]
        %v406 = vsel %vm359, 0, %v405
        %407 = vst [vmem:[#allocation2 + $0xb4] sm:$0x1] %v406
        %v408 = vld [vmem:[#allocation2 + $0xc0] sm:$0x1]
        %v409 = vsel %vm359, 0, %v408
        %410 = vst [vmem:[#allocation2 + $0xc0] sm:$0x1] %v409
        %v411 = vld [vmem:[#allocation2 + $0xcc] sm:$0x1]
        %v412 = vsel %vm359, 0, %v411
        %413 = vst [vmem:[#allocation2 + $0xcc] sm:$0x1] %v412
        %vm414 = vsmask.f32 7938
        %vm415 = vmand %vm357, %vm414
        %v416 = vld [vmem:[#allocation2 + $0x8] sm:$0x1]
        %v417 = vsel %vm415, 0, %v416
        %418 = vst [vmem:[#allocation2 + $0x8] sm:$0x1] %v417
        %v419 = vld [vmem:[#allocation2 + $0x14] sm:$0x1]
        %v420 = vsel %vm415, 0, %v419
        %421 = vst [vmem:[#allocation2 + $0x14] sm:$0x1] %v420
        %v422 = vld [vmem:[#allocation2 + $0x20] sm:$0x1]
        %v423 = vsel %vm415, 0, %v422
        %424 = vst [vmem:[#allocation2 + $0x20] sm:$0x1] %v423
        %v425 = vld [vmem:[#allocation2 + $0x2c] sm:$0x1]
        %v426 = vsel %vm415, 0, %v425
        %427 = vst [vmem:[#allocation2 + $0x2c] sm:$0x1] %v426
        %v428 = vld [vmem:[#allocation2 + $0x38] sm:$0x1]
        %v429 = vsel %vm415, 0, %v428
        %430 = vst [vmem:[#allocation2 + $0x38] sm:$0x1] %v429
        %v431 = vld [vmem:[#allocation2 + $0x44] sm:$0x1]
        %v432 = vsel %vm415, 0, %v431
        %433 = vst [vmem:[#allocation2 + $0x44] sm:$0x1] %v432
        %v434 = vld [vmem:[#allocation2 + $0x50] sm:$0x1]
        %v435 = vsel %vm415, 0, %v434
        %436 = vst [vmem:[#allocation2 + $0x50] sm:$0x1] %v435
        %v437 = vld [vmem:[#allocation2 + $0x5c] sm:$0x1]
        %v438 = vsel %vm415, 0, %v437
        %439 = vst [vmem:[#allocation2 + $0x5c] sm:$0x1] %v438
        %v440 = vld [vmem:[#allocation2 + $0x68] sm:$0x1]
        %v441 = vsel %vm415, 0, %v440
        %442 = vst [vmem:[#allocation2 + $0x68] sm:$0x1] %v441
        %v443 = vld [vmem:[#allocation2 + $0x74] sm:$0x1]
        %v444 = vsel %vm415, 0, %v443
        %445 = vst [vmem:[#allocation2 + $0x74] sm:$0x1] %v444
        %v446 = vld [vmem:[#allocation2 + $0x80] sm:$0x1]
        %v447 = vsel %vm415, 0, %v446
        %448 = vst [vmem:[#allocation2 + $0x80] sm:$0x1] %v447
        %v449 = vld [vmem:[#allocation2 + $0x8c] sm:$0x1]
        %v450 = vsel %vm415, 0, %v449
        %451 = vst [vmem:[#allocation2 + $0x8c] sm:$0x1] %v450
        %v452 = vld [vmem:[#allocation2 + $0x98] sm:$0x1]
        %v453 = vsel %vm415, 0, %v452
        %454 = vst [vmem:[#allocation2 + $0x98] sm:$0x1] %v453
        %v455 = vld [vmem:[#allocation2 + $0xa4] sm:$0x1]
        %v456 = vsel %vm415, 0, %v455
        %457 = vst [vmem:[#allocation2 + $0xa4] sm:$0x1] %v456
        %v458 = vld [vmem:[#allocation2 + $0xb0] sm:$0x1]
        %v459 = vsel %vm415, 0, %v458
        %460 = vst [vmem:[#allocation2 + $0xb0] sm:$0x1] %v459
        %v461 = vld [vmem:[#allocation2 + $0xbc] sm:$0x1]
        %v462 = vsel %vm415, 0, %v461
        %463 = vst [vmem:[#allocation2 + $0xbc] sm:$0x1] %v462
        %v464 = vld [vmem:[#allocation2 + $0xc8] sm:$0x1]
        %v465 = vsel %vm415, 0, %v464
        %466 = vst [vmem:[#allocation2 + $0xc8] sm:$0x1] %v465
        %v467 = vld [vmem:[#allocation2 + $0xd4] sm:$0x1]
        %v468 = vsel %vm415, 0, %v467
        %469 = vst [vmem:[#allocation2 + $0xd4] sm:$0x1] %v468
        %v470 = vld [vmem:[%s302] sm:$0xf]
        %v471 = vld [vmem:[%s302 + $0x4] sm:$0xf]
        %v472 = vld [vmem:[%s302 + $0x8] sm:$0xf]
        %v473 = vld [vmem:[%s302 + $0xc] sm:$0xf]
        %v474 = vld [vmem:[%s302 + $0x10] sm:$0xf]
        %v475 = vld [vmem:[%s302 + $0x14] sm:$0xf]
        %v476 = vld [vmem:[%s302 + $0x18] sm:$0xf]
        %v477 = vld [vmem:[%s302 + $0x1c] sm:$0xf]
        %v478 = vld [vmem:[%s302 + $0x20] sm:$0xf]
        %v479 = vld [vmem:[%s302 + $0x24] sm:$0xf]
        %v480 = vld [vmem:[%s302 + $0x28] sm:$0xf]
        %v481 = vld [vmem:[%s302 + $0x2c] sm:$0xf]
        %v482 = vld [vmem:[%s302 + $0x30] sm:$0xf]
        %v483 = vld [vmem:[%s302 + $0x34] sm:$0xf]
        %v484 = vld [vmem:[%s302 + $0x38] sm:$0xf]
        %v485 = vld [vmem:[%s302 + $0x3c] sm:$0xf]
        %v486 = vld [vmem:[%s302 + $0x40] sm:$0xf]
        %v487 = vld [vmem:[%s302 + $0x44] sm:$0xf]
        %v488 = vld [vmem:[%s302 + $0x48] sm:$0xf]
        %v489 = vld [vmem:[%s302 + $0x4c] sm:$0xf]
        %v490 = vld [vmem:[%s302 + $0x50] sm:$0xf]
        %v491 = vld [vmem:[%s302 + $0x54] sm:$0xf]
        %v492 = vld [vmem:[%s302 + $0x58] sm:$0xf]
        %v493 = vld [vmem:[%s302 + $0x5c] sm:$0xf]
        %v494 = vld [vmem:[%s302 + $0x60] sm:$0xf]
        %v495 = vld [vmem:[%s302 + $0x64] sm:$0xf]
        %v496 = vld [vmem:[%s302 + $0x68] sm:$0xf]
        %v497 = vld [vmem:[%s302 + $0x6c] sm:$0xf]
        %v498 = vld [vmem:[%s302 + $0x70] sm:$0xf]
        %v499 = vld [vmem:[%s302 + $0x74] sm:$0xf]
        %v500 = vld [vmem:[%s302 + $0x78] sm:$0xf]
        %v501 = vld [vmem:[%s302 + $0x7c] sm:$0xf]
        %v502 = vld [vmem:[#allocation7] sm:$0xf]
        %v503 = vld [vmem:[#allocation7 + $0x4] sm:$0xf]
        %v504 = vld [vmem:[#allocation7 + $0x8] sm:$0xf]
        %v505 = vld [vmem:[#allocation7 + $0xc] sm:$0xf]
        %v506 = vld [vmem:[#allocation7 + $0x10] sm:$0xf]
        %v507 = vld [vmem:[#allocation7 + $0x14] sm:$0xf]
        %v508 = vld [vmem:[#allocation7 + $0x18] sm:$0xf]
        %v509 = vld [vmem:[#allocation7 + $0x1c] sm:$0xf]
        %v510 = vld [vmem:[#allocation7 + $0x20] sm:$0xf]
        %v511 = vld [vmem:[#allocation7 + $0x24] sm:$0xf]
        %v512 = vld [vmem:[#allocation7 + $0x28] sm:$0xf]
        %v513 = vld [vmem:[#allocation7 + $0x2c] sm:$0xf]
        %v514 = vld [vmem:[#allocation7 + $0x30] sm:$0xf]
        %v515 = vld [vmem:[#allocation7 + $0x34] sm:$0xf]
        %v516 = vld [vmem:[#allocation7 + $0x38] sm:$0xf]
        %v517 = vld [vmem:[#allocation7 + $0x3c] sm:$0xf]
        %v518 = vld [vmem:[%s2] sm:$0x1]
        %v520 = vperm.slane %v518, 0
        %v554 = vunpack.c.l.b16 %v470
        %v555 = vunpack.c.l.b16 %v471
        %v556 = vunpack.c.l.b16 %v472
        %v557 = vunpack.c.l.b16 %v473
        %v558 = vunpack.c.l.b16 %v474
        %v559 = vunpack.c.l.b16 %v475
        %v560 = vunpack.c.l.b16 %v476
        %v561 = vunpack.c.l.b16 %v477
        %v562 = vunpack.c.l.b16 %v478
        %v563 = vunpack.c.l.b16 %v479
        %v564 = vunpack.c.l.b16 %v480
        %v565 = vunpack.c.l.b16 %v481
        %v566 = vunpack.c.l.b16 %v482
        %v567 = vunpack.c.l.b16 %v483
        %v568 = vunpack.c.l.b16 %v484
        %v569 = vunpack.c.l.b16 %v485
        %v570 = vunpack.c.l.b16 %v486
        %v571 = vunpack.c.l.b16 %v487
        %v572 = vunpack.c.l.b16 %v488
        %v573 = vunpack.c.l.b16 %v489
        %v574 = vunpack.c.l.b16 %v490
        %v575 = vunpack.c.l.b16 %v491
        %v576 = vunpack.c.l.b16 %v492
        %v577 = vunpack.c.l.b16 %v493
        %v578 = vunpack.c.l.b16 %v494
        %v579 = vunpack.c.l.b16 %v495
        %v580 = vunpack.c.l.b16 %v496
        %v581 = vunpack.c.l.b16 %v497
        %v582 = vunpack.c.l.b16 %v498
        %v583 = vunpack.c.l.b16 %v499
        %v584 = vunpack.c.l.b16 %v500
        %v585 = vunpack.c.l.b16 %v501
        %v586 = vpack.c.b16 %v555, %v554
        %v587 = vpack.c.b16 %v557, %v556
        %v588 = vpack.c.b16 %v559, %v558
        %v589 = vpack.c.b16 %v561, %v560
        %v590 = vpack.c.b16 %v563, %v562
        %v591 = vpack.c.b16 %v565, %v564
        %v592 = vpack.c.b16 %v567, %v566
        %v593 = vpack.c.b16 %v569, %v568
        %v594 = vpack.c.b16 %v571, %v570
        %v595 = vpack.c.b16 %v573, %v572
        %v596 = vpack.c.b16 %v575, %v574
        %v597 = vpack.c.b16 %v577, %v576
        %v598 = vpack.c.b16 %v579, %v578
        %v599 = vpack.c.b16 %v581, %v580
        %v600 = vpack.c.b16 %v583, %v582
        %v601 = vpack.c.b16 %v585, %v584
        %v634 = vunpack.c.l.b16 %v502
        %v635 = vunpack.c.l.b16 %v503
        %v636 = vunpack.c.l.b16 %v504
        %v637 = vunpack.c.l.b16 %v505
        %v638 = vunpack.c.l.b16 %v506
        %v639 = vunpack.c.l.b16 %v507
        %v640 = vunpack.c.l.b16 %v508
        %v641 = vunpack.c.l.b16 %v509
        %v642 = vunpack.c.l.b16 %v510
        %v643 = vunpack.c.l.b16 %v511
        %v644 = vunpack.c.l.b16 %v512
        %v645 = vunpack.c.l.b16 %v513
        %v646 = vunpack.c.l.b16 %v514
        %v647 = vunpack.c.l.b16 %v515
        %v648 = vunpack.c.l.b16 %v516
        %v649 = vunpack.c.l.b16 %v517
        %v650 = vpack.c.b16 %v635, %v634
        %v651 = vpack.c.b16 %v637, %v636
        %v652 = vpack.c.b16 %v639, %v638
        %v653 = vpack.c.b16 %v641, %v640
        %v654 = vpack.c.b16 %v643, %v642
        %v655 = vpack.c.b16 %v645, %v644
        %v656 = vpack.c.b16 %v647, %v646
        %v657 = vpack.c.b16 %v649, %v648
        %666 = vmatpush.bf16.msra.mxu0 %v657
        %667 = vmatpush.bf16.msra.mxu0 %v656
        %668 = vmatpush.bf16.msra.mxu0 %v655
        %669 = vmatpush.bf16.msra.mxu0 %v654
        %670 = vmatpush.bf16.msra.mxu0 %v653
        %671 = vmatpush.bf16.msra.mxu0 %v652
        %672 = vmatpush.bf16.msra.mxu0 %v651
        %673 = vmatpush.bf16.msra.mxu0 %v650
        %674 = vmatmul.bf16.gmra.mxu0 %v586
        %v675 = vpop.f32.mrf.mxu0
        %v676 = vadd.f32 %v520, %v675
        %v677 = vpop.f32.mrf.mxu0
        %v678 = vadd.f32 %v520, %v677
        %679 = vmatmul.bf16.gmra.mxu0 %v587
        %v680 = vpop.f32.mrf.mxu0
        %v681 = vadd.f32 %v520, %v680
        %v682 = vpop.f32.mrf.mxu0
        %v683 = vadd.f32 %v520, %v682
        %684 = vmatmul.bf16.gmra.mxu0 %v588
        %v685 = vpop.f32.mrf.mxu0
        %v686 = vadd.f32 %v520, %v685
        %v687 = vpop.f32.mrf.mxu0
        %v688 = vadd.f32 %v520, %v687
        %689 = vmatmul.bf16.gmra.mxu0 %v589
        %v690 = vpop.f32.mrf.mxu0
        %v691 = vadd.f32 %v520, %v690
        %v692 = vpop.f32.mrf.mxu0
        %v693 = vadd.f32 %v520, %v692
        %694 = vmatmul.bf16.gmra.mxu0 %v590
        %v695 = vpop.f32.mrf.mxu0
        %v696 = vadd.f32 %v520, %v695
        %v697 = vpop.f32.mrf.mxu0
        %v698 = vadd.f32 %v520, %v697
        %699 = vmatmul.bf16.gmra.mxu0 %v591
        %v700 = vpop.f32.mrf.mxu0
        %v701 = vadd.f32 %v520, %v700
        %v702 = vpop.f32.mrf.mxu0
        %v703 = vadd.f32 %v520, %v702
        %704 = vmatmul.bf16.gmra.mxu0 %v592
        %v705 = vpop.f32.mrf.mxu0
        %v706 = vadd.f32 %v520, %v705
        %v707 = vpop.f32.mrf.mxu0
        %v708 = vadd.f32 %v520, %v707
        %709 = vmatmul.bf16.gmra.mxu0 %v593
        %v710 = vpop.f32.mrf.mxu0
        %v711 = vadd.f32 %v520, %v710
        %v712 = vpop.f32.mrf.mxu0
        %v713 = vadd.f32 %v520, %v712
        %714 = vmatmul.bf16.gmra.mxu0 %v594
        %v715 = vpop.f32.mrf.mxu0
        %v716 = vadd.f32 %v520, %v715
        %v717 = vpop.f32.mrf.mxu0
        %v718 = vadd.f32 %v520, %v717
        %719 = vmatmul.bf16.gmra.mxu0 %v595
        %v720 = vpop.f32.mrf.mxu0
        %v721 = vadd.f32 %v520, %v720
        %v722 = vpop.f32.mrf.mxu0
        %v723 = vadd.f32 %v520, %v722
        %724 = vmatmul.bf16.gmra.mxu0 %v596
        %v725 = vpop.f32.mrf.mxu0
        %v726 = vadd.f32 %v520, %v725
        %v727 = vpop.f32.mrf.mxu0
        %v728 = vadd.f32 %v520, %v727
        %729 = vmatmul.bf16.gmra.mxu0 %v597
        %v730 = vpop.f32.mrf.mxu0
        %v731 = vadd.f32 %v520, %v730
        %v732 = vpop.f32.mrf.mxu0
        %v733 = vadd.f32 %v520, %v732
        %734 = vmatmul.bf16.gmra.mxu0 %v598
        %v735 = vpop.f32.mrf.mxu0
        %v736 = vadd.f32 %v520, %v735
        %v737 = vpop.f32.mrf.mxu0
        %v738 = vadd.f32 %v520, %v737
        %739 = vmatmul.bf16.gmra.mxu0 %v599
        %v740 = vpop.f32.mrf.mxu0
        %v741 = vadd.f32 %v520, %v740
        %v742 = vpop.f32.mrf.mxu0
        %v743 = vadd.f32 %v520, %v742
        %744 = vmatmul.bf16.gmra.mxu0 %v600
        %v745 = vpop.f32.mrf.mxu0
        %v746 = vadd.f32 %v520, %v745
        %v747 = vpop.f32.mrf.mxu0
        %v748 = vadd.f32 %v520, %v747
        %749 = vmatmul.bf16.gmra.mxu0 %v601
        %v750 = vpop.f32.mrf.mxu0
        %v751 = vadd.f32 %v520, %v750
        %v752 = vpop.f32.mrf.mxu0
        %v753 = vadd.f32 %v520, %v752
        %754 = vdwg.mxu0
        %v755 = vmax.f32 %v676, 0.0
        %v756 = vmax.f32 %v678, 0.0
        %v757 = vmax.f32 %v681, 0.0
        %v758 = vmax.f32 %v683, 0.0
        %v759 = vmax.f32 %v686, 0.0
        %v760 = vmax.f32 %v688, 0.0
        %v761 = vmax.f32 %v691, 0.0
        %v762 = vmax.f32 %v693, 0.0
        %v763 = vmax.f32 %v696, 0.0
        %v764 = vmax.f32 %v698, 0.0
        %v765 = vmax.f32 %v701, 0.0
        %v766 = vmax.f32 %v703, 0.0
        %v767 = vmax.f32 %v706, 0.0
        %v768 = vmax.f32 %v708, 0.0
        %v769 = vmax.f32 %v711, 0.0
        %v770 = vmax.f32 %v713, 0.0
        %v771 = vmax.f32 %v716, 0.0
        %v772 = vmax.f32 %v718, 0.0
        %v773 = vmax.f32 %v721, 0.0
        %v774 = vmax.f32 %v723, 0.0
        %v775 = vmax.f32 %v726, 0.0
        %v776 = vmax.f32 %v728, 0.0
        %v777 = vmax.f32 %v731, 0.0
        %v778 = vmax.f32 %v733, 0.0
        %v779 = vmax.f32 %v736, 0.0
        %v780 = vmax.f32 %v738, 0.0
        %v781 = vmax.f32 %v741, 0.0
        %v782 = vmax.f32 %v743, 0.0
        %v783 = vmax.f32 %v746, 0.0
        %v784 = vmax.f32 %v748, 0.0
        %v785 = vmax.f32 %v751, 0.0
        %v786 = vmax.f32 %v753, 0.0
        %v787 = vpack.c.bf16 %v755, %v755
        %v788 = vpack.c.bf16 %v756, %v756
        %v789 = vpack.c.bf16 %v757, %v757
        %v790 = vpack.c.bf16 %v758, %v758
        %v791 = vpack.c.bf16 %v759, %v759
        %v792 = vpack.c.bf16 %v760, %v760
        %v793 = vpack.c.bf16 %v761, %v761
        %v794 = vpack.c.bf16 %v762, %v762
        %v795 = vpack.c.bf16 %v763, %v763
        %v796 = vpack.c.bf16 %v764, %v764
        %v797 = vpack.c.bf16 %v765, %v765
        %v798 = vpack.c.bf16 %v766, %v766
        %v799 = vpack.c.bf16 %v767, %v767
        %v800 = vpack.c.bf16 %v768, %v768
        %v801 = vpack.c.bf16 %v769, %v769
        %v802 = vpack.c.bf16 %v770, %v770
        %v803 = vpack.c.bf16 %v771, %v771
        %v804 = vpack.c.bf16 %v772, %v772
        %v805 = vpack.c.bf16 %v773, %v773
        %v806 = vpack.c.bf16 %v774, %v774
        %v807 = vpack.c.bf16 %v775, %v775
        %v808 = vpack.c.bf16 %v776, %v776
        %v809 = vpack.c.bf16 %v777, %v777
        %v810 = vpack.c.bf16 %v778, %v778
        %v811 = vpack.c.bf16 %v779, %v779
        %v812 = vpack.c.bf16 %v780, %v780
        %v813 = vpack.c.bf16 %v781, %v781
        %v814 = vpack.c.bf16 %v782, %v782
        %v815 = vpack.c.bf16 %v783, %v783
        %v816 = vpack.c.bf16 %v784, %v784
        %v817 = vpack.c.bf16 %v785, %v785
        %v818 = vpack.c.bf16 %v786, %v786
        %vm819 = vsmask.f32 4368
        %vm820 = vmor %vm358, %vm819
        %v822 = vshrl.u32 %v787, 16
        %v824 = vrot.slane %v822, 7
        %v825 = vshll.u32 %v787, 16
        %v827 = vor.u32 %v824, %v825
        %v828 = vrot.slane %v824, 4
        %v830 = vshrl.u32 %v788, 16
        %v832 = vrot.slane %v830, 7
        %v833 = vshll.u32 %v788, 16
        %v835 = vor.u32 %v832, %v833
        %v836 = vsel %vm820, %v828, %v835
        %v837 = vrot.slane %v832, 4
        %v839 = vshrl.u32 %v789, 16
        %v841 = vrot.slane %v839, 7
        %v842 = vshll.u32 %v789, 16
        %v844 = vor.u32 %v841, %v842
        %v845 = vrot.slane %v841, 4
        %v847 = vshrl.u32 %v790, 16
        %v849 = vrot.slane %v847, 7
        %v850 = vshll.u32 %v790, 16
        %v852 = vor.u32 %v849, %v850
        %v853 = vsel %vm820, %v845, %v852
        %v854 = vrot.slane %v849, 4
        %v856 = vshrl.u32 %v791, 16
        %v858 = vrot.slane %v856, 7
        %v859 = vshll.u32 %v791, 16
        %v861 = vor.u32 %v858, %v859
        %v862 = vrot.slane %v858, 4
        %v864 = vshrl.u32 %v792, 16
        %v866 = vrot.slane %v864, 7
        %v867 = vshll.u32 %v792, 16
        %v869 = vor.u32 %v866, %v867
        %v870 = vsel %vm820, %v862, %v869
        %v871 = vrot.slane %v866, 4
        %v873 = vshrl.u32 %v793, 16
        %v875 = vrot.slane %v873, 7
        %v876 = vshll.u32 %v793, 16
        %v878 = vor.u32 %v875, %v876
        %v879 = vrot.slane %v875, 4
        %v881 = vshrl.u32 %v794, 16
        %v883 = vrot.slane %v881, 7
        %v884 = vshll.u32 %v794, 16
        %v886 = vor.u32 %v883, %v884
        %v887 = vsel %vm820, %v879, %v886
        %v888 = vrot.slane %v883, 4
        %v890 = vshrl.u32 %v795, 16
        %v892 = vrot.slane %v890, 7
        %v893 = vshll.u32 %v795, 16
        %v895 = vor.u32 %v892, %v893
        %v896 = vrot.slane %v892, 4
        %v898 = vshrl.u32 %v796, 16
        %v900 = vrot.slane %v898, 7
        %v901 = vshll.u32 %v796, 16
        %v903 = vor.u32 %v900, %v901
        %v904 = vsel %vm820, %v896, %v903
        %v905 = vrot.slane %v900, 4
        %v907 = vshrl.u32 %v797, 16
        %v909 = vrot.slane %v907, 7
        %v910 = vshll.u32 %v797, 16
        %v912 = vor.u32 %v909, %v910
        %v913 = vrot.slane %v909, 4
        %v915 = vshrl.u32 %v798, 16
        %v917 = vrot.slane %v915, 7
        %v918 = vshll.u32 %v798, 16
        %v920 = vor.u32 %v917, %v918
        %v921 = vsel %vm820, %v913, %v920
        %v922 = vrot.slane %v917, 4
        %v924 = vshrl.u32 %v799, 16
        %v926 = vrot.slane %v924, 7
        %v927 = vshll.u32 %v799, 16
        %v929 = vor.u32 %v926, %v927
        %v930 = vrot.slane %v926, 4
        %v932 = vshrl.u32 %v800, 16
        %v934 = vrot.slane %v932, 7
        %v935 = vshll.u32 %v800, 16
        %v937 = vor.u32 %v934, %v935
        %v938 = vsel %vm820, %v930, %v937
        %v939 = vrot.slane %v934, 4
        %v941 = vshrl.u32 %v801, 16
        %v943 = vrot.slane %v941, 7
        %v944 = vshll.u32 %v801, 16
        %v946 = vor.u32 %v943, %v944
        %v947 = vrot.slane %v943, 4
        %v949 = vshrl.u32 %v802, 16
        %v951 = vrot.slane %v949, 7
        %v952 = vshll.u32 %v802, 16
        %v954 = vor.u32 %v951, %v952
        %v955 = vsel %vm820, %v947, %v954
        %v956 = vrot.slane %v951, 4
        %v958 = vshrl.u32 %v803, 16
        %v960 = vrot.slane %v958, 7
        %v961 = vshll.u32 %v803, 16
        %v963 = vor.u32 %v960, %v961
        %v964 = vrot.slane %v960, 4
        %v966 = vshrl.u32 %v804, 16
        %v968 = vrot.slane %v966, 7
        %v969 = vshll.u32 %v804, 16
        %v971 = vor.u32 %v968, %v969
        %v972 = vsel %vm820, %v964, %v971
        %v973 = vrot.slane %v968, 4
        %v975 = vshrl.u32 %v805, 16
        %v977 = vrot.slane %v975, 7
        %v978 = vshll.u32 %v805, 16
        %v980 = vor.u32 %v977, %v978
        %v981 = vrot.slane %v977, 4
        %v983 = vshrl.u32 %v806, 16
        %v985 = vrot.slane %v983, 7
        %v986 = vshll.u32 %v806, 16
        %v988 = vor.u32 %v985, %v986
        %v989 = vsel %vm820, %v981, %v988
        %v990 = vrot.slane %v985, 4
        %v992 = vshrl.u32 %v807, 16
        %v994 = vrot.slane %v992, 7
        %v995 = vshll.u32 %v807, 16
        %v997 = vor.u32 %v994, %v995
        %v998 = vrot.slane %v994, 4
        %v1000 = vshrl.u32 %v808, 16
        %v1002 = vrot.slane %v1000, 7
        %v1003 = vshll.u32 %v808, 16
        %v1005 = vor.u32 %v1002, %v1003
        %v1006 = vsel %vm820, %v998, %v1005
        %v1007 = vrot.slane %v1002, 4
        %v1009 = vshrl.u32 %v809, 16
        %v1011 = vrot.slane %v1009, 7
        %v1012 = vshll.u32 %v809, 16
        %v1014 = vor.u32 %v1011, %v1012
        %v1015 = vrot.slane %v1011, 4
        %v1017 = vshrl.u32 %v810, 16
        %v1019 = vrot.slane %v1017, 7
        %v1020 = vshll.u32 %v810, 16
        %v1022 = vor.u32 %v1019, %v1020
        %v1023 = vsel %vm820, %v1015, %v1022
        %v1024 = vrot.slane %v1019, 4
        %v1026 = vshrl.u32 %v811, 16
        %v1028 = vrot.slane %v1026, 7
        %v1029 = vshll.u32 %v811, 16
        %v1031 = vor.u32 %v1028, %v1029
        %v1032 = vrot.slane %v1028, 4
        %v1034 = vshrl.u32 %v812, 16
        %v1036 = vrot.slane %v1034, 7
        %v1037 = vshll.u32 %v812, 16
        %v1039 = vor.u32 %v1036, %v1037
        %v1040 = vsel %vm820, %v1032, %v1039
        %v1041 = vrot.slane %v1036, 4
        %v1043 = vshrl.u32 %v813, 16
        %v1045 = vrot.slane %v1043, 7
        %v1046 = vshll.u32 %v813, 16
        %v1048 = vor.u32 %v1045, %v1046
        %v1049 = vrot.slane %v1045, 4
        %v1051 = vshrl.u32 %v814, 16
        %v1053 = vrot.slane %v1051, 7
        %v1054 = vshll.u32 %v814, 16
        %v1056 = vor.u32 %v1053, %v1054
        %v1057 = vsel %vm820, %v1049, %v1056
        %v1058 = vrot.slane %v1053, 4
        %v1060 = vshrl.u32 %v815, 16
        %v1062 = vrot.slane %v1060, 7
        %v1063 = vshll.u32 %v815, 16
        %v1065 = vor.u32 %v1062, %v1063
        %v1066 = vrot.slane %v1062, 4
        %v1068 = vshrl.u32 %v816, 16
        %v1070 = vrot.slane %v1068, 7
        %v1071 = vshll.u32 %v816, 16
        %v1073 = vor.u32 %v1070, %v1071
        %v1074 = vsel %vm820, %v1066, %v1073
        %v1075 = vrot.slane %v1070, 4
        %v1077 = vshrl.u32 %v817, 16
        %v1079 = vrot.slane %v1077, 7
        %v1080 = vshll.u32 %v817, 16
        %v1082 = vor.u32 %v1079, %v1080
        %v1083 = vrot.slane %v1079, 4
        %v1085 = vshrl.u32 %v818, 16
        %v1087 = vrot.slane %v1085, 7
        %v1088 = vshll.u32 %v818, 16
        %v1090 = vor.u32 %v1087, %v1088
        %v1091 = vsel %vm820, %v1083, %v1090
        %v1092 = vrot.slane %v1087, 4
        %s1141 = scalar_lea.vmem [#allocation2], 12
        %vm1142 = vcmask 1043456
        %vm1143 = vmand %vm1142, %vm414
        %v1144 = vld [vmem:[%s1141] sm:$0xf]
        %v1145 = vsel %vm1143, %v827, %v1144
        %1146 = vst [vmem:[%s1141] sm:$0xf] %v1145
        %1147 = vst [vmem:[%s1141 + $0x4] sm:$0xf] %v836
        %v1148 = vld [vmem:[%s1141 + $0x8] sm:$0x1]
        %v1149 = vsel %vm359, %v837, %v1148
        %1150 = vst [vmem:[%s1141 + $0x8] sm:$0x1] %v1149
        %v1151 = vld [vmem:[%s1141 + $0xc] sm:$0xf]
        %v1152 = vsel %vm1143, %v844, %v1151
        %1153 = vst [vmem:[%s1141 + $0xc] sm:$0xf] %v1152
        %1154 = vst [vmem:[%s1141 + $0x10] sm:$0xf] %v853
        %v1155 = vld [vmem:[%s1141 + $0x14] sm:$0x1]
        %v1156 = vsel %vm359, %v854, %v1155
        %1157 = vst [vmem:[%s1141 + $0x14] sm:$0x1] %v1156
        %v1158 = vld [vmem:[%s1141 + $0x18] sm:$0xf]
        %v1159 = vsel %vm1143, %v861, %v1158
        %1160 = vst [vmem:[%s1141 + $0x18] sm:$0xf] %v1159
        %1161 = vst [vmem:[%s1141 + $0x1c] sm:$0xf] %v870
        %v1162 = vld [vmem:[%s1141 + $0x20] sm:$0x1]
        %v1163 = vsel %vm359, %v871, %v1162
        %1164 = vst [vmem:[%s1141 + $0x20] sm:$0x1] %v1163
        %v1165 = vld [vmem:[%s1141 + $0x24] sm:$0xf]
        %v1166 = vsel %vm1143, %v878, %v1165
        %1167 = vst [vmem:[%s1141 + $0x24] sm:$0xf] %v1166
        %1168 = vst [vmem:[%s1141 + $0x28] sm:$0xf] %v887
        %v1169 = vld [vmem:[%s1141 + $0x2c] sm:$0x1]
        %v1170 = vsel %vm359, %v888, %v1169
        %1171 = vst [vmem:[%s1141 + $0x2c] sm:$0x1] %v1170
        %v1172 = vld [vmem:[%s1141 + $0x30] sm:$0xf]
        %v1173 = vsel %vm1143, %v895, %v1172
        %1174 = vst [vmem:[%s1141 + $0x30] sm:$0xf] %v1173
        %1175 = vst [vmem:[%s1141 + $0x34] sm:$0xf] %v904
        %v1176 = vld [vmem:[%s1141 + $0x38] sm:$0x1]
        %v1177 = vsel %vm359, %v905, %v1176
        %1178 = vst [vmem:[%s1141 + $0x38] sm:$0x1] %v1177
        %v1179 = vld [vmem:[%s1141 + $0x3c] sm:$0xf]
        %v1180 = vsel %vm1143, %v912, %v1179
        %1181 = vst [vmem:[%s1141 + $0x3c] sm:$0xf] %v1180
        %1182 = vst [vmem:[%s1141 + $0x40] sm:$0xf] %v921
        %v1183 = vld [vmem:[%s1141 + $0x44] sm:$0x1]
        %v1184 = vsel %vm359, %v922, %v1183
        %1185 = vst [vmem:[%s1141 + $0x44] sm:$0x1] %v1184
        %v1186 = vld [vmem:[%s1141 + $0x48] sm:$0xf]
        %v1187 = vsel %vm1143, %v929, %v1186
        %1188 = vst [vmem:[%s1141 + $0x48] sm:$0xf] %v1187
        %1189 = vst [vmem:[%s1141 + $0x4c] sm:$0xf] %v938
        %v1190 = vld [vmem:[%s1141 + $0x50] sm:$0x1]
        %v1191 = vsel %vm359, %v939, %v1190
        %1192 = vst [vmem:[%s1141 + $0x50] sm:$0x1] %v1191
        %v1193 = vld [vmem:[%s1141 + $0x54] sm:$0xf]
        %v1194 = vsel %vm1143, %v946, %v1193
        %1195 = vst [vmem:[%s1141 + $0x54] sm:$0xf] %v1194
        %1196 = vst [vmem:[%s1141 + $0x58] sm:$0xf] %v955
        %v1197 = vld [vmem:[%s1141 + $0x5c] sm:$0x1]
        %v1198 = vsel %vm359, %v956, %v1197
        %1199 = vst [vmem:[%s1141 + $0x5c] sm:$0x1] %v1198
        %v1200 = vld [vmem:[%s1141 + $0x60] sm:$0xf]
        %v1201 = vsel %vm1143, %v963, %v1200
        %1202 = vst [vmem:[%s1141 + $0x60] sm:$0xf] %v1201
        %1203 = vst [vmem:[%s1141 + $0x64] sm:$0xf] %v972
        %v1204 = vld [vmem:[%s1141 + $0x68] sm:$0x1]
        %v1205 = vsel %vm359, %v973, %v1204
        %1206 = vst [vmem:[%s1141 + $0x68] sm:$0x1] %v1205
        %v1207 = vld [vmem:[%s1141 + $0x6c] sm:$0xf]
        %v1208 = vsel %vm1143, %v980, %v1207
        %1209 = vst [vmem:[%s1141 + $0x6c] sm:$0xf] %v1208
        %1210 = vst [vmem:[%s1141 + $0x70] sm:$0xf] %v989
        %v1211 = vld [vmem:[%s1141 + $0x74] sm:$0x1]
        %v1212 = vsel %vm359, %v990, %v1211
        %1213 = vst [vmem:[%s1141 + $0x74] sm:$0x1] %v1212
        %v1214 = vld [vmem:[%s1141 + $0x78] sm:$0xf]
        %v1215 = vsel %vm1143, %v997, %v1214
        %1216 = vst [vmem:[%s1141 + $0x78] sm:$0xf] %v1215
        %1217 = vst [vmem:[%s1141 + $0x7c] sm:$0xf] %v1006
        %v1218 = vld [vmem:[%s1141 + $0x80] sm:$0x1]
        %v1219 = vsel %vm359, %v1007, %v1218
        %1220 = vst [vmem:[%s1141 + $0x80] sm:$0x1] %v1219
        %v1221 = vld [vmem:[%s1141 + $0x84] sm:$0xf]
        %v1222 = vsel %vm1143, %v1014, %v1221
        %1223 = vst [vmem:[%s1141 + $0x84] sm:$0xf] %v1222
        %1224 = vst [vmem:[%s1141 + $0x88] sm:$0xf] %v1023
        %v1225 = vld [vmem:[%s1141 + $0x8c] sm:$0x1]
        %v1226 = vsel %vm359, %v1024, %v1225
        %1227 = vst [vmem:[%s1141 + $0x8c] sm:$0x1] %v1226
        %v1228 = vld [vmem:[%s1141 + $0x90] sm:$0xf]
        %v1229 = vsel %vm1143, %v1031, %v1228
        %1230 = vst [vmem:[%s1141 + $0x90] sm:$0xf] %v1229
        %1231 = vst [vmem:[%s1141 + $0x94] sm:$0xf] %v1040
        %v1232 = vld [vmem:[%s1141 + $0x98] sm:$0x1]
        %v1233 = vsel %vm359, %v1041, %v1232
        %1234 = vst [vmem:[%s1141 + $0x98] sm:$0x1] %v1233
        %v1235 = vld [vmem:[%s1141 + $0x9c] sm:$0xf]
        %v1236 = vsel %vm1143, %v1048, %v1235
        %1237 = vst [vmem:[%s1141 + $0x9c] sm:$0xf] %v1236
        %1238 = vst [vmem:[%s1141 + $0xa0] sm:$0xf] %v1057
        %v1239 = vld [vmem:[%s1141 + $0xa4] sm:$0x1]
        %v1240 = vsel %vm359, %v1058, %v1239
        %1241 = vst [vmem:[%s1141 + $0xa4] sm:$0x1] %v1240
        %v1242 = vld [vmem:[%s1141 + $0xa8] sm:$0xf]
        %v1243 = vsel %vm1143, %v1065, %v1242
        %1244 = vst [vmem:[%s1141 + $0xa8] sm:$0xf] %v1243
        %1245 = vst [vmem:[%s1141 + $0xac] sm:$0xf] %v1074
        %v1246 = vld [vmem:[%s1141 + $0xb0] sm:$0x1]
        %v1247 = vsel %vm359, %v1075, %v1246
        %1248 = vst [vmem:[%s1141 + $0xb0] sm:$0x1] %v1247
        %v1249 = vld [vmem:[%s1141 + $0xb4] sm:$0xf]
        %v1250 = vsel %vm1143, %v1082, %v1249
        %1251 = vst [vmem:[%s1141 + $0xb4] sm:$0xf] %v1250
        %1252 = vst [vmem:[%s1141 + $0xb8] sm:$0xf] %v1091
        %v1253 = vld [vmem:[%s1141 + $0xbc] sm:$0x1]
        %v1254 = vsel %vm359, %v1092, %v1253
        %1255 = vst [vmem:[%s1141 + $0xbc] sm:$0x1] %v1254
        %v1256 = vld [vmem:[#allocation2] sm:$0xf]
        %v1257 = vld [vmem:[#allocation2 + $0x4] sm:$0xf]
        %v1258 = vld [vmem:[#allocation2 + $0xc] sm:$0xf]
        %v1259 = vld [vmem:[#allocation2 + $0x10] sm:$0xf]
        %v1260 = vld [vmem:[#allocation2 + $0x18] sm:$0xf]
        %v1261 = vld [vmem:[#allocation2 + $0x1c] sm:$0xf]
        %v1262 = vld [vmem:[#allocation2 + $0x24] sm:$0xf]
        %v1263 = vld [vmem:[#allocation2 + $0x28] sm:$0xf]
        %v1264 = vld [vmem:[#allocation2 + $0x30] sm:$0xf]
        %v1265 = vld [vmem:[#allocation2 + $0x34] sm:$0xf]
        %v1266 = vld [vmem:[#allocation2 + $0x3c] sm:$0xf]
        %v1267 = vld [vmem:[#allocation2 + $0x40] sm:$0xf]
        %v1268 = vld [vmem:[#allocation2 + $0x48] sm:$0xf]
        %v1269 = vld [vmem:[#allocation2 + $0x4c] sm:$0xf]
        %v1270 = vld [vmem:[#allocation2 + $0x54] sm:$0xf]
        %v1271 = vld [vmem:[#allocation2 + $0x58] sm:$0xf]
        %v1272 = vld [vmem:[#allocation2 + $0x60] sm:$0xf]
        %v1273 = vld [vmem:[#allocation2 + $0x64] sm:$0xf]
        %v1274 = vld [vmem:[#allocation2 + $0x6c] sm:$0xf]
        %v1275 = vld [vmem:[#allocation2 + $0x70] sm:$0xf]
        %v1276 = vld [vmem:[#allocation2 + $0x78] sm:$0xf]
        %v1277 = vld [vmem:[#allocation2 + $0x7c] sm:$0xf]
        %v1278 = vld [vmem:[#allocation2 + $0x84] sm:$0xf]
        %v1279 = vld [vmem:[#allocation2 + $0x88] sm:$0xf]
        %v1280 = vld [vmem:[#allocation2 + $0x90] sm:$0xf]
        %v1281 = vld [vmem:[#allocation2 + $0x94] sm:$0xf]
        %v1282 = vld [vmem:[#allocation2 + $0x9c] sm:$0xf]
        %v1283 = vld [vmem:[#allocation2 + $0xa0] sm:$0xf]
        %v1284 = vld [vmem:[#allocation2 + $0xa8] sm:$0xf]
        %v1285 = vld [vmem:[#allocation2 + $0xac] sm:$0xf]
        %v1286 = vld [vmem:[#allocation2 + $0xb4] sm:$0xf]
        %v1287 = vld [vmem:[#allocation2 + $0xb8] sm:$0xf]
        %1288 = vst [vmem:[#allocation3] sm:$0xf] %v1256
        %1289 = vst [vmem:[#allocation3 + $0xc] sm:$0xf] %v1257
        %1290 = vst [vmem:[#allocation3 + $0x18] sm:$0xf] %v1258
        %1291 = vst [vmem:[#allocation3 + $0x24] sm:$0xf] %v1259
        %1292 = vst [vmem:[#allocation3 + $0x30] sm:$0xf] %v1260
        %1293 = vst [vmem:[#allocation3 + $0x3c] sm:$0xf] %v1261
        %1294 = vst [vmem:[#allocation3 + $0x48] sm:$0xf] %v1262
        %1295 = vst [vmem:[#allocation3 + $0x54] sm:$0xf] %v1263
        %1296 = vst [vmem:[#allocation3 + $0x60] sm:$0xf] %v1264
        %1297 = vst [vmem:[#allocation3 + $0x6c] sm:$0xf] %v1265
        %1298 = vst [vmem:[#allocation3 + $0x78] sm:$0xf] %v1266
        %1299 = vst [vmem:[#allocation3 + $0x84] sm:$0xf] %v1267
        %1300 = vst [vmem:[#allocation3 + $0x90] sm:$0xf] %v1268
        %1301 = vst [vmem:[#allocation3 + $0x9c] sm:$0xf] %v1269
        %1302 = vst [vmem:[#allocation3 + $0xa8] sm:$0xf] %v1270
        %1303 = vst [vmem:[#allocation3 + $0xb4] sm:$0xf] %v1271
        %1304 = vst [vmem:[#allocation3 + $0xc0] sm:$0xf] %v1272
        %1305 = vst [vmem:[#allocation3 + $0xcc] sm:$0xf] %v1273
        %1306 = vst [vmem:[#allocation3 + $0xd8] sm:$0xf] %v1274
        %1307 = vst [vmem:[#allocation3 + $0xe4] sm:$0xf] %v1275
        %1308 = vst [vmem:[#allocation3 + $0xf0] sm:$0xf] %v1276
        %1309 = vst [vmem:[#allocation3 + $0xfc] sm:$0xf] %v1277
        %1310 = vst [vmem:[#allocation3 + $0x108] sm:$0xf] %v1278
        %1311 = vst [vmem:[#allocation3 + $0x114] sm:$0xf] %v1279
        %1312 = vst [vmem:[#allocation3 + $0x120] sm:$0xf] %v1280
        %1313 = vst [vmem:[#allocation3 + $0x12c] sm:$0xf] %v1281
        %1314 = vst [vmem:[#allocation3 + $0x138] sm:$0xf] %v1282
        %1315 = vst [vmem:[#allocation3 + $0x144] sm:$0xf] %v1283
        %1316 = vst [vmem:[#allocation3 + $0x150] sm:$0xf] %v1284
        %1317 = vst [vmem:[#allocation3 + $0x15c] sm:$0xf] %v1285
        %1318 = vst [vmem:[#allocation3 + $0x168] sm:$0xf] %v1286
        %1319 = vst [vmem:[#allocation3 + $0x174] sm:$0xf] %v1287
        %v1320 = vld [vmem:[#allocation2] sm:$0xf]
        %v1321 = vld [vmem:[#allocation2 + $0x4] sm:$0xf]
        %v1322 = vld [vmem:[#allocation2 + $0x8] sm:$0x1]
        %v1323 = vld [vmem:[#allocation2 + $0xc] sm:$0xf]
        %v1324 = vld [vmem:[#allocation2 + $0x10] sm:$0xf]
        %v1325 = vld [vmem:[#allocation2 + $0x14] sm:$0x1]
        %v1326 = vld [vmem:[#allocation2 + $0x18] sm:$0xf]
        %v1327 = vld [vmem:[#allocation2 + $0x1c] sm:$0xf]
        %v1328 = vld [vmem:[#allocation2 + $0x20] sm:$0x1]
        %v1329 = vld [vmem:[#allocation2 + $0x24] sm:$0xf]
        %v1330 = vld [vmem:[#allocation2 + $0x28] sm:$0xf]
        %v1331 = vld [vmem:[#allocation2 + $0x2c] sm:$0x1]
        %v1332 = vld [vmem:[#allocation2 + $0x30] sm:$0xf]
        %v1333 = vld [vmem:[#allocation2 + $0x34] sm:$0xf]
        %v1334 = vld [vmem:[#allocation2 + $0x38] sm:$0x1]
        %v1335 = vld [vmem:[#allocation2 + $0x3c] sm:$0xf]
        %v1336 = vld [vmem:[#allocation2 + $0x40] sm:$0xf]
        %v1337 = vld [vmem:[#allocation2 + $0x44] sm:$0x1]
        %v1338 = vld [vmem:[#allocation2 + $0x48] sm:$0xf]
        %v1339 = vld [vmem:[#allocation2 + $0x4c] sm:$0xf]
        %v1340 = vld [vmem:[#allocation2 + $0x50] sm:$0x1]
        %v1341 = vld [vmem:[#allocation2 + $0x54] sm:$0xf]
        %v1342 = vld [vmem:[#allocation2 + $0x58] sm:$0xf]
        %v1343 = vld [vmem:[#allocation2 + $0x5c] sm:$0x1]
        %v1344 = vld [vmem:[#allocation2 + $0x60] sm:$0xf]
        %v1345 = vld [vmem:[#allocation2 + $0x64] sm:$0xf]
        %v1346 = vld [vmem:[#allocation2 + $0x68] sm:$0x1]
        %v1347 = vld [vmem:[#allocation2 + $0x6c] sm:$0xf]
        %v1348 = vld [vmem:[#allocation2 + $0x70] sm:$0xf]
        %v1349 = vld [vmem:[#allocation2 + $0x74] sm:$0x1]
        %v1350 = vld [vmem:[#allocation2 + $0x78] sm:$0xf]
        %v1351 = vld [vmem:[#allocation2 + $0x7c] sm:$0xf]
        %v1352 = vld [vmem:[#allocation2 + $0x80] sm:$0x1]
        %v1353 = vld [vmem:[#allocation2 + $0x84] sm:$0xf]
        %v1354 = vld [vmem:[#allocation2 + $0x88] sm:$0xf]
        %v1355 = vld [vmem:[#allocation2 + $0x8c] sm:$0x1]
        %v1356 = vld [vmem:[#allocation2 + $0x90] sm:$0xf]
        %v1357 = vld [vmem:[#allocation2 + $0x94] sm:$0xf]
        %v1358 = vld [vmem:[#allocation2 + $0x98] sm:$0x1]
        %v1359 = vld [vmem:[#allocation2 + $0x9c] sm:$0xf]
        %v1360 = vld [vmem:[#allocation2 + $0xa0] sm:$0xf]
        %v1361 = vld [vmem:[#allocation2 + $0xa4] sm:$0x1]
        %v1362 = vld [vmem:[#allocation2 + $0xa8] sm:$0xf]
        %v1363 = vld [vmem:[#allocation2 + $0xac] sm:$0xf]
        %v1364 = vld [vmem:[#allocation2 + $0xb0] sm:$0x1]
        %v1365 = vld [vmem:[#allocation2 + $0xb4] sm:$0xf]
        %v1366 = vld [vmem:[#allocation2 + $0xb8] sm:$0xf]
        %v1367 = vld [vmem:[#allocation2 + $0xbc] sm:$0x1]
        %vm1368 = vsmask.f32 3328
        %vm1369 = vsmask.f32 7440
        %vm1370 = vmor %vm1368, %vm1369
        %v1372 = vshrl.u32 %v1320, 16
        %v1374 = vrot.slane %v1372, 4
        %v1375 = vshll.u32 %v1320, 16
        %v1377 = vrot.slane %v1375, 5
        %v1378 = vor.u32 %v1374, %v1377
        %v1379 = vrot.slane %v1378, 4
        %v1381 = vshll.u32 %v1321, 16
        %v1383 = vrot.slane %v1381, 5
        %v1384 = vsel %vm1370, %v1379, %v1383
        %v1385 = vshrl.u32 %v1321, 16
        %v1387 = vrot.slane %v1385, 4
        %v1388 = vor.u32 %v1387, %v1383
        %v1389 = vrot.slane %v1388, 4
        %v1391 = vshll.u32 %v1322, 16
        %v1393 = vrot.slane %v1391, 5
        %v1394 = vsel %vm1370, %v1389, %v1393
        %v1396 = vshrl.u32 %v1323, 16
        %v1398 = vrot.slane %v1396, 4
        %v1399 = vshll.u32 %v1323, 16
        %v1401 = vrot.slane %v1399, 5
        %v1402 = vor.u32 %v1398, %v1401
        %v1403 = vrot.slane %v1402, 4
        %v1405 = vshll.u32 %v1324, 16
        %v1407 = vrot.slane %v1405, 5
        %v1408 = vsel %vm1370, %v1403, %v1407
        %v1409 = vshrl.u32 %v1324, 16
        %v1411 = vrot.slane %v1409, 4
        %v1412 = vor.u32 %v1411, %v1407
        %v1413 = vrot.slane %v1412, 4
        %v1415 = vshll.u32 %v1325, 16
        %v1417 = vrot.slane %v1415, 5
        %v1418 = vsel %vm1370, %v1413, %v1417
        %v1420 = vshrl.u32 %v1326, 16
        %v1422 = vrot.slane %v1420, 4
        %v1423 = vshll.u32 %v1326, 16
        %v1425 = vrot.slane %v1423, 5
        %v1426 = vor.u32 %v1422, %v1425
        %v1427 = vrot.slane %v1426, 4
        %v1429 = vshll.u32 %v1327, 16
        %v1431 = vrot.slane %v1429, 5
        %v1432 = vsel %vm1370, %v1427, %v1431
        %v1433 = vshrl.u32 %v1327, 16
        %v1435 = vrot.slane %v1433, 4
        %v1436 = vor.u32 %v1435, %v1431
        %v1437 = vrot.slane %v1436, 4
        %v1439 = vshll.u32 %v1328, 16
        %v1441 = vrot.slane %v1439, 5
        %v1442 = vsel %vm1370, %v1437, %v1441
        %v1444 = vshrl.u32 %v1329, 16
        %v1446 = vrot.slane %v1444, 4
        %v1447 = vshll.u32 %v1329, 16
        %v1449 = vrot.slane %v1447, 5
        %v1450 = vor.u32 %v1446, %v1449
        %v1451 = vrot.slane %v1450, 4
        %v1453 = vshll.u32 %v1330, 16
        %v1455 = vrot.slane %v1453, 5
        %v1456 = vsel %vm1370, %v1451, %v1455
        %v1457 = vshrl.u32 %v1330, 16
        %v1459 = vrot.slane %v1457, 4
        %v1460 = vor.u32 %v1459, %v1455
        %v1461 = vrot.slane %v1460, 4
        %v1463 = vshll.u32 %v1331, 16
        %v1465 = vrot.slane %v1463, 5
        %v1466 = vsel %vm1370, %v1461, %v1465
        %v1468 = vshrl.u32 %v1332, 16
        %v1470 = vrot.slane %v1468, 4
        %v1471 = vshll.u32 %v1332, 16
        %v1473 = vrot.slane %v1471, 5
        %v1474 = vor.u32 %v1470, %v1473
        %v1475 = vrot.slane %v1474, 4
        %v1477 = vshll.u32 %v1333, 16
        %v1479 = vrot.slane %v1477, 5
        %v1480 = vsel %vm1370, %v1475, %v1479
        %v1481 = vshrl.u32 %v1333, 16
        %v1483 = vrot.slane %v1481, 4
        %v1484 = vor.u32 %v1483, %v1479
        %v1485 = vrot.slane %v1484, 4
        %v1487 = vshll.u32 %v1334, 16
        %v1489 = vrot.slane %v1487, 5
        %v1490 = vsel %vm1370, %v1485, %v1489
        %v1492 = vshrl.u32 %v1335, 16
        %v1494 = vrot.slane %v1492, 4
        %v1495 = vshll.u32 %v1335, 16
        %v1497 = vrot.slane %v1495, 5
        %v1498 = vor.u32 %v1494, %v1497
        %v1499 = vrot.slane %v1498, 4
        %v1501 = vshll.u32 %v1336, 16
        %v1503 = vrot.slane %v1501, 5
        %v1504 = vsel %vm1370, %v1499, %v1503
        %v1505 = vshrl.u32 %v1336, 16
        %v1507 = vrot.slane %v1505, 4
        %v1508 = vor.u32 %v1507, %v1503
        %v1509 = vrot.slane %v1508, 4
        %v1511 = vshll.u32 %v1337, 16
        %v1513 = vrot.slane %v1511, 5
        %v1514 = vsel %vm1370, %v1509, %v1513
        %v1516 = vshrl.u32 %v1338, 16
        %v1518 = vrot.slane %v1516, 4
        %v1519 = vshll.u32 %v1338, 16
        %v1521 = vrot.slane %v1519, 5
        %v1522 = vor.u32 %v1518, %v1521
        %v1523 = vrot.slane %v1522, 4
        %v1525 = vshll.u32 %v1339, 16
        %v1527 = vrot.slane %v1525, 5
        %v1528 = vsel %vm1370, %v1523, %v1527
        %v1529 = vshrl.u32 %v1339, 16
        %v1531 = vrot.slane %v1529, 4
        %v1532 = vor.u32 %v1531, %v1527
        %v1533 = vrot.slane %v1532, 4
        %v1535 = vshll.u32 %v1340, 16
        %v1537 = vrot.slane %v1535, 5
        %v1538 = vsel %vm1370, %v1533, %v1537
        %v1540 = vshrl.u32 %v1341, 16
        %v1542 = vrot.slane %v1540, 4
        %v1543 = vshll.u32 %v1341, 16
        %v1545 = vrot.slane %v1543, 5
        %v1546 = vor.u32 %v1542, %v1545
        %v1547 = vrot.slane %v1546, 4
        %v1549 = vshll.u32 %v1342, 16
        %v1551 = vrot.slane %v1549, 5
        %v1552 = vsel %vm1370, %v1547, %v1551
        %v1553 = vshrl.u32 %v1342, 16
        %v1555 = vrot.slane %v1553, 4
        %v1556 = vor.u32 %v1555, %v1551
        %v1557 = vrot.slane %v1556, 4
        %v1559 = vshll.u32 %v1343, 16
        %v1561 = vrot.slane %v1559, 5
        %v1562 = vsel %vm1370, %v1557, %v1561
        %v1564 = vshrl.u32 %v1344, 16
        %v1566 = vrot.slane %v1564, 4
        %v1567 = vshll.u32 %v1344, 16
        %v1569 = vrot.slane %v1567, 5
        %v1570 = vor.u32 %v1566, %v1569
        %v1571 = vrot.slane %v1570, 4
        %v1573 = vshll.u32 %v1345, 16
        %v1575 = vrot.slane %v1573, 5
        %v1576 = vsel %vm1370, %v1571, %v1575
        %v1577 = vshrl.u32 %v1345, 16
        %v1579 = vrot.slane %v1577, 4
        %v1580 = vor.u32 %v1579, %v1575
        %v1581 = vrot.slane %v1580, 4
        %v1583 = vshll.u32 %v1346, 16
        %v1585 = vrot.slane %v1583, 5
        %v1586 = vsel %vm1370, %v1581, %v1585
        %v1588 = vshrl.u32 %v1347, 16
        %v1590 = vrot.slane %v1588, 4
        %v1591 = vshll.u32 %v1347, 16
        %v1593 = vrot.slane %v1591, 5
        %v1594 = vor.u32 %v1590, %v1593
        %v1595 = vrot.slane %v1594, 4
        %v1597 = vshll.u32 %v1348, 16
        %v1599 = vrot.slane %v1597, 5
        %v1600 = vsel %vm1370, %v1595, %v1599
        %v1601 = vshrl.u32 %v1348, 16
        %v1603 = vrot.slane %v1601, 4
        %v1604 = vor.u32 %v1603, %v1599
        %v1605 = vrot.slane %v1604, 4
        %v1607 = vshll.u32 %v1349, 16
        %v1609 = vrot.slane %v1607, 5
        %v1610 = vsel %vm1370, %v1605, %v1609
        %v1612 = vshrl.u32 %v1350, 16
        %v1614 = vrot.slane %v1612, 4
        %v1615 = vshll.u32 %v1350, 16
        %v1617 = vrot.slane %v1615, 5
        %v1618 = vor.u32 %v1614, %v1617
        %v1619 = vrot.slane %v1618, 4
        %v1621 = vshll.u32 %v1351, 16
        %v1623 = vrot.slane %v1621, 5
        %v1624 = vsel %vm1370, %v1619, %v1623
        %v1625 = vshrl.u32 %v1351, 16
        %v1627 = vrot.slane %v1625, 4
        %v1628 = vor.u32 %v1627, %v1623
        %v1629 = vrot.slane %v1628, 4
        %v1631 = vshll.u32 %v1352, 16
        %v1633 = vrot.slane %v1631, 5
        %v1634 = vsel %vm1370, %v1629, %v1633
        %v1636 = vshrl.u32 %v1353, 16
        %v1638 = vrot.slane %v1636, 4
        %v1639 = vshll.u32 %v1353, 16
        %v1641 = vrot.slane %v1639, 5
        %v1642 = vor.u32 %v1638, %v1641
        %v1643 = vrot.slane %v1642, 4
        %v1645 = vshll.u32 %v1354, 16
        %v1647 = vrot.slane %v1645, 5
        %v1648 = vsel %vm1370, %v1643, %v1647
        %v1649 = vshrl.u32 %v1354, 16
        %v1651 = vrot.slane %v1649, 4
        %v1652 = vor.u32 %v1651, %v1647
        %v1653 = vrot.slane %v1652, 4
        %v1655 = vshll.u32 %v1355, 16
        %v1657 = vrot.slane %v1655, 5
        %v1658 = vsel %vm1370, %v1653, %v1657
        %v1660 = vshrl.u32 %v1356, 16
        %v1662 = vrot.slane %v1660, 4
        %v1663 = vshll.u32 %v1356, 16
        %v1665 = vrot.slane %v1663, 5
        %v1666 = vor.u32 %v1662, %v1665
        %v1667 = vrot.slane %v1666, 4
        %v1669 = vshll.u32 %v1357, 16
        %v1671 = vrot.slane %v1669, 5
        %v1672 = vsel %vm1370, %v1667, %v1671
        %v1673 = vshrl.u32 %v1357, 16
        %v1675 = vrot.slane %v1673, 4
        %v1676 = vor.u32 %v1675, %v1671
        %v1677 = vrot.slane %v1676, 4
        %v1679 = vshll.u32 %v1358, 16
        %v1681 = vrot.slane %v1679, 5
        %v1682 = vsel %vm1370, %v1677, %v1681
        %v1684 = vshrl.u32 %v1359, 16
        %v1686 = vrot.slane %v1684, 4
        %v1687 = vshll.u32 %v1359, 16
        %v1689 = vrot.slane %v1687, 5
        %v1690 = vor.u32 %v1686, %v1689
        %v1691 = vrot.slane %v1690, 4
        %v1693 = vshll.u32 %v1360, 16
        %v1695 = vrot.slane %v1693, 5
        %v1696 = vsel %vm1370, %v1691, %v1695
        %v1697 = vshrl.u32 %v1360, 16
        %v1699 = vrot.slane %v1697, 4
        %v1700 = vor.u32 %v1699, %v1695
        %v1701 = vrot.slane %v1700, 4
        %v1703 = vshll.u32 %v1361, 16
        %v1705 = vrot.slane %v1703, 5
        %v1706 = vsel %vm1370, %v1701, %v1705
        %v1708 = vshrl.u32 %v1362, 16
        %v1710 = vrot.slane %v1708, 4
        %v1711 = vshll.u32 %v1362, 16
        %v1713 = vrot.slane %v1711, 5
        %v1714 = vor.u32 %v1710, %v1713
        %v1715 = vrot.slane %v1714, 4
        %v1717 = vshll.u32 %v1363, 16
        %v1719 = vrot.slane %v1717, 5
        %v1720 = vsel %vm1370, %v1715, %v1719
        %v1721 = vshrl.u32 %v1363, 16
        %v1723 = vrot.slane %v1721, 4
        %v1724 = vor.u32 %v1723, %v1719
        %v1725 = vrot.slane %v1724, 4
        %v1727 = vshll.u32 %v1364, 16
        %v1729 = vrot.slane %v1727, 5
        %v1730 = vsel %vm1370, %v1725, %v1729
        %v1732 = vshrl.u32 %v1365, 16
        %v1734 = vrot.slane %v1732, 4
        %v1735 = vshll.u32 %v1365, 16
        %v1737 = vrot.slane %v1735, 5
        %v1738 = vor.u32 %v1734, %v1737
        %v1739 = vrot.slane %v1738, 4
        %v1741 = vshll.u32 %v1366, 16
        %v1743 = vrot.slane %v1741, 5
        %v1744 = vsel %vm1370, %v1739, %v1743
        %v1745 = vshrl.u32 %v1366, 16
        %v1747 = vrot.slane %v1745, 4
        %v1748 = vor.u32 %v1747, %v1743
        %v1749 = vrot.slane %v1748, 4
        %v1751 = vshll.u32 %v1367, 16
        %v1753 = vrot.slane %v1751, 5
        %v1754 = vsel %vm1370, %v1749, %v1753
        %1787 = vst [vmem:[#allocation3 + $0x4] sm:$0xf] %v1384
        %1788 = vst [vmem:[#allocation3 + $0x10] sm:$0xf] %v1394
        %1789 = vst [vmem:[#allocation3 + $0x1c] sm:$0xf] %v1408
        %1790 = vst [vmem:[#allocation3 + $0x28] sm:$0xf] %v1418
        %1791 = vst [vmem:[#allocation3 + $0x34] sm:$0xf] %v1432
        %1792 = vst [vmem:[#allocation3 + $0x40] sm:$0xf] %v1442
        %1793 = vst [vmem:[#allocation3 + $0x4c] sm:$0xf] %v1456
        %1794 = vst [vmem:[#allocation3 + $0x58] sm:$0xf] %v1466
        %1795 = vst [vmem:[#allocation3 + $0x64] sm:$0xf] %v1480
        %1796 = vst [vmem:[#allocation3 + $0x70] sm:$0xf] %v1490
        %1797 = vst [vmem:[#allocation3 + $0x7c] sm:$0xf] %v1504
        %1798 = vst [vmem:[#allocation3 + $0x88] sm:$0xf] %v1514
        %1799 = vst [vmem:[#allocation3 + $0x94] sm:$0xf] %v1528
        %1800 = vst [vmem:[#allocation3 + $0xa0] sm:$0xf] %v1538
        %1801 = vst [vmem:[#allocation3 + $0xac] sm:$0xf] %v1552
        %1802 = vst [vmem:[#allocation3 + $0xb8] sm:$0xf] %v1562
        %1803 = vst [vmem:[#allocation3 + $0xc4] sm:$0xf] %v1576
        %1804 = vst [vmem:[#allocation3 + $0xd0] sm:$0xf] %v1586
        %1805 = vst [vmem:[#allocation3 + $0xdc] sm:$0xf] %v1600
        %1806 = vst [vmem:[#allocation3 + $0xe8] sm:$0xf] %v1610
        %1807 = vst [vmem:[#allocation3 + $0xf4] sm:$0xf] %v1624
        %1808 = vst [vmem:[#allocation3 + $0x100] sm:$0xf] %v1634
        %1809 = vst [vmem:[#allocation3 + $0x10c] sm:$0xf] %v1648
        %1810 = vst [vmem:[#allocation3 + $0x118] sm:$0xf] %v1658
        %1811 = vst [vmem:[#allocation3 + $0x124] sm:$0xf] %v1672
        %1812 = vst [vmem:[#allocation3 + $0x130] sm:$0xf] %v1682
        %1813 = vst [vmem:[#allocation3 + $0x13c] sm:$0xf] %v1696
        %1814 = vst [vmem:[#allocation3 + $0x148] sm:$0xf] %v1706
        %1815 = vst [vmem:[#allocation3 + $0x154] sm:$0xf] %v1720
        %1816 = vst [vmem:[#allocation3 + $0x160] sm:$0xf] %v1730
        %1817 = vst [vmem:[#allocation3 + $0x16c] sm:$0xf] %v1744
        %1818 = vst [vmem:[#allocation3 + $0x178] sm:$0xf] %v1754
        %v1819 = vld [vmem:[#allocation2] sm:$0xe]
        %v1820 = vld [vmem:[#allocation2 + $0x4] sm:$0xf]
        %v1821 = vld [vmem:[#allocation2 + $0x8] sm:$0x1]
        %v1822 = vld [vmem:[#allocation2 + $0xc] sm:$0xe]
        %v1823 = vld [vmem:[#allocation2 + $0x10] sm:$0xf]
        %v1824 = vld [vmem:[#allocation2 + $0x14] sm:$0x1]
        %v1825 = vld [vmem:[#allocation2 + $0x18] sm:$0xe]
        %v1826 = vld [vmem:[#allocation2 + $0x1c] sm:$0xf]
        %v1827 = vld [vmem:[#allocation2 + $0x20] sm:$0x1]
        %v1828 = vld [vmem:[#allocation2 + $0x24] sm:$0xe]
        %v1829 = vld [vmem:[#allocation2 + $0x28] sm:$0xf]
        %v1830 = vld [vmem:[#allocation2 + $0x2c] sm:$0x1]
        %v1831 = vld [vmem:[#allocation2 + $0x30] sm:$0xe]
        %v1832 = vld [vmem:[#allocation2 + $0x34] sm:$0xf]
        %v1833 = vld [vmem:[#allocation2 + $0x38] sm:$0x1]
        %v1834 = vld [vmem:[#allocation2 + $0x3c] sm:$0xe]
        %v1835 = vld [vmem:[#allocation2 + $0x40] sm:$0xf]
        %v1836 = vld [vmem:[#allocation2 + $0x44] sm:$0x1]
        %v1837 = vld [vmem:[#allocation2 + $0x48] sm:$0xe]
        %v1838 = vld [vmem:[#allocation2 + $0x4c] sm:$0xf]
        %v1839 = vld [vmem:[#allocation2 + $0x50] sm:$0x1]
        %v1840 = vld [vmem:[#allocation2 + $0x54] sm:$0xe]
        %v1841 = vld [vmem:[#allocation2 + $0x58] sm:$0xf]
        %v1842 = vld [vmem:[#allocation2 + $0x5c] sm:$0x1]
        %v1843 = vld [vmem:[#allocation2 + $0x60] sm:$0xe]
        %v1844 = vld [vmem:[#allocation2 + $0x64] sm:$0xf]
        %v1845 = vld [vmem:[#allocation2 + $0x68] sm:$0x1]
        %v1846 = vld [vmem:[#allocation2 + $0x6c] sm:$0xe]
        %v1847 = vld [vmem:[#allocation2 + $0x70] sm:$0xf]
        %v1848 = vld [vmem:[#allocation2 + $0x74] sm:$0x1]
        %v1849 = vld [vmem:[#allocation2 + $0x78] sm:$0xe]
        %v1850 = vld [vmem:[#allocation2 + $0x7c] sm:$0xf]
        %v1851 = vld [vmem:[#allocation2 + $0x80] sm:$0x1]
        %v1852 = vld [vmem:[#allocation2 + $0x84] sm:$0xe]
        %v1853 = vld [vmem:[#allocation2 + $0x88] sm:$0xf]
        %v1854 = vld [vmem:[#allocation2 + $0x8c] sm:$0x1]
        %v1855 = vld [vmem:[#allocation2 + $0x90] sm:$0xe]
        %v1856 = vld [vmem:[#allocation2 + $0x94] sm:$0xf]
        %v1857 = vld [vmem:[#allocation2 + $0x98] sm:$0x1]
        %v1858 = vld [vmem:[#allocation2 + $0x9c] sm:$0xe]
        %v1859 = vld [vmem:[#allocation2 + $0xa0] sm:$0xf]
        %v1860 = vld [vmem:[#allocation2 + $0xa4] sm:$0x1]
        %v1861 = vld [vmem:[#allocation2 + $0xa8] sm:$0xe]
        %v1862 = vld [vmem:[#allocation2 + $0xac] sm:$0xf]
        %v1863 = vld [vmem:[#allocation2 + $0xb0] sm:$0x1]
        %v1864 = vld [vmem:[#allocation2 + $0xb4] sm:$0xe]
        %v1865 = vld [vmem:[#allocation2 + $0xb8] sm:$0xf]
        %v1866 = vld [vmem:[#allocation2 + $0xbc] sm:$0x1]
        %vm1915 = vcmask 1042432
        %vm1916 = vcmask 1046532
        %vm1917 = vmor %vm1915, %vm1916
        %v1918 = vrot.slane %v1819, 5
        %v1919 = vrot.slane %v1918, 4
        %v1920 = vrot.slane %v1820, 5
        %v1921 = vsel %vm1917, %v1919, %v1920
        %v1922 = vrot.slane %v1920, 4
        %v1923 = vrot.slane %v1821, 5
        %v1924 = vsel %vm1917, %v1922, %v1923
        %v1925 = vrot.slane %v1822, 5
        %v1926 = vrot.slane %v1925, 4
        %v1927 = vrot.slane %v1823, 5
        %v1928 = vsel %vm1917, %v1926, %v1927
        %v1929 = vrot.slane %v1927, 4
        %v1930 = vrot.slane %v1824, 5
        %v1931 = vsel %vm1917, %v1929, %v1930
        %v1932 = vrot.slane %v1825, 5
        %v1933 = vrot.slane %v1932, 4
        %v1934 = vrot.slane %v1826, 5
        %v1935 = vsel %vm1917, %v1933, %v1934
        %v1936 = vrot.slane %v1934, 4
        %v1937 = vrot.slane %v1827, 5
        %v1938 = vsel %vm1917, %v1936, %v1937
        %v1939 = vrot.slane %v1828, 5
        %v1940 = vrot.slane %v1939, 4
        %v1941 = vrot.slane %v1829, 5
        %v1942 = vsel %vm1917, %v1940, %v1941
        %v1943 = vrot.slane %v1941, 4
        %v1944 = vrot.slane %v1830, 5
        %v1945 = vsel %vm1917, %v1943, %v1944
        %v1946 = vrot.slane %v1831, 5
        %v1947 = vrot.slane %v1946, 4
        %v1948 = vrot.slane %v1832, 5
        %v1949 = vsel %vm1917, %v1947, %v1948
        %v1950 = vrot.slane %v1948, 4
        %v1951 = vrot.slane %v1833, 5
        %v1952 = vsel %vm1917, %v1950, %v1951
        %v1953 = vrot.slane %v1834, 5
        %v1954 = vrot.slane %v1953, 4
        %v1955 = vrot.slane %v1835, 5
        %v1956 = vsel %vm1917, %v1954, %v1955
        %v1957 = vrot.slane %v1955, 4
        %v1958 = vrot.slane %v1836, 5
        %v1959 = vsel %vm1917, %v1957, %v1958
        %v1960 = vrot.slane %v1837, 5
        %v1961 = vrot.slane %v1960, 4
        %v1962 = vrot.slane %v1838, 5
        %v1963 = vsel %vm1917, %v1961, %v1962
        %v1964 = vrot.slane %v1962, 4
        %v1965 = vrot.slane %v1839, 5
        %v1966 = vsel %vm1917, %v1964, %v1965
        %v1967 = vrot.slane %v1840, 5
        %v1968 = vrot.slane %v1967, 4
        %v1969 = vrot.slane %v1841, 5
        %v1970 = vsel %vm1917, %v1968, %v1969
        %v1971 = vrot.slane %v1969, 4
        %v1972 = vrot.slane %v1842, 5
        %v1973 = vsel %vm1917, %v1971, %v1972
        %v1974 = vrot.slane %v1843, 5
        %v1975 = vrot.slane %v1974, 4
        %v1976 = vrot.slane %v1844, 5
        %v1977 = vsel %vm1917, %v1975, %v1976
        %v1978 = vrot.slane %v1976, 4
        %v1979 = vrot.slane %v1845, 5
        %v1980 = vsel %vm1917, %v1978, %v1979
        %v1981 = vrot.slane %v1846, 5
        %v1982 = vrot.slane %v1981, 4
        %v1983 = vrot.slane %v1847, 5
        %v1984 = vsel %vm1917, %v1982, %v1983
        %v1985 = vrot.slane %v1983, 4
        %v1986 = vrot.slane %v1848, 5
        %v1987 = vsel %vm1917, %v1985, %v1986
        %v1988 = vrot.slane %v1849, 5
        %v1989 = vrot.slane %v1988, 4
        %v1990 = vrot.slane %v1850, 5
        %v1991 = vsel %vm1917, %v1989, %v1990
        %v1992 = vrot.slane %v1990, 4
        %v1993 = vrot.slane %v1851, 5
        %v1994 = vsel %vm1917, %v1992, %v1993
        %v1995 = vrot.slane %v1852, 5
        %v1996 = vrot.slane %v1995, 4
        %v1997 = vrot.slane %v1853, 5
        %v1998 = vsel %vm1917, %v1996, %v1997
        %v1999 = vrot.slane %v1997, 4
        %v2000 = vrot.slane %v1854, 5
        %v2001 = vsel %vm1917, %v1999, %v2000
        %v2002 = vrot.slane %v1855, 5
        %v2003 = vrot.slane %v2002, 4
        %v2004 = vrot.slane %v1856, 5
        %v2005 = vsel %vm1917, %v2003, %v2004
        %v2006 = vrot.slane %v2004, 4
        %v2007 = vrot.slane %v1857, 5
        %v2008 = vsel %vm1917, %v2006, %v2007
        %v2009 = vrot.slane %v1858, 5
        %v2010 = vrot.slane %v2009, 4
        %v2011 = vrot.slane %v1859, 5
        %v2012 = vsel %vm1917, %v2010, %v2011
        %v2013 = vrot.slane %v2011, 4
        %v2014 = vrot.slane %v1860, 5
        %v2015 = vsel %vm1917, %v2013, %v2014
        %v2016 = vrot.slane %v1861, 5
        %v2017 = vrot.slane %v2016, 4
        %v2018 = vrot.slane %v1862, 5
        %v2019 = vsel %vm1917, %v2017, %v2018
        %v2020 = vrot.slane %v2018, 4
        %v2021 = vrot.slane %v1863, 5
        %v2022 = vsel %vm1917, %v2020, %v2021
        %v2023 = vrot.slane %v1864, 5
        %v2024 = vrot.slane %v2023, 4
        %v2025 = vrot.slane %v1865, 5
        %v2026 = vsel %vm1917, %v2024, %v2025
        %v2027 = vrot.slane %v2025, 4
        %v2028 = vrot.slane %v1866, 5
        %v2029 = vsel %vm1917, %v2027, %v2028
        %2062 = vst [vmem:[#allocation3 + $0x8] sm:$0xf] %v1921
        %2063 = vst [vmem:[#allocation3 + $0x14] sm:$0xf] %v1924
        %2064 = vst [vmem:[#allocation3 + $0x20] sm:$0xf] %v1928
        %2065 = vst [vmem:[#allocation3 + $0x2c] sm:$0xf] %v1931
        %2066 = vst [vmem:[#allocation3 + $0x38] sm:$0xf] %v1935
        %2067 = vst [vmem:[#allocation3 + $0x44] sm:$0xf] %v1938
        %2068 = vst [vmem:[#allocation3 + $0x50] sm:$0xf] %v1942
        %2069 = vst [vmem:[#allocation3 + $0x5c] sm:$0xf] %v1945
        %2070 = vst [vmem:[#allocation3 + $0x68] sm:$0xf] %v1949
        %2071 = vst [vmem:[#allocation3 + $0x74] sm:$0xf] %v1952
        %2072 = vst [vmem:[#allocation3 + $0x80] sm:$0xf] %v1956
        %2073 = vst [vmem:[#allocation3 + $0x8c] sm:$0xf] %v1959
        %2074 = vst [vmem:[#allocation3 + $0x98] sm:$0xf] %v1963
        %2075 = vst [vmem:[#allocation3 + $0xa4] sm:$0xf] %v1966
        %2076 = vst [vmem:[#allocation3 + $0xb0] sm:$0xf] %v1970
        %2077 = vst [vmem:[#allocation3 + $0xbc] sm:$0xf] %v1973
        %2078 = vst [vmem:[#allocation3 + $0xc8] sm:$0xf] %v1977
        %2079 = vst [vmem:[#allocation3 + $0xd4] sm:$0xf] %v1980
        %2080 = vst [vmem:[#allocation3 + $0xe0] sm:$0xf] %v1984
        %2081 = vst [vmem:[#allocation3 + $0xec] sm:$0xf] %v1987
        %2082 = vst [vmem:[#allocation3 + $0xf8] sm:$0xf] %v1991
        %2083 = vst [vmem:[#allocation3 + $0x104] sm:$0xf] %v1994
        %2084 = vst [vmem:[#allocation3 + $0x110] sm:$0xf] %v1998
        %2085 = vst [vmem:[#allocation3 + $0x11c] sm:$0xf] %v2001
        %2086 = vst [vmem:[#allocation3 + $0x128] sm:$0xf] %v2005
        %2087 = vst [vmem:[#allocation3 + $0x134] sm:$0xf] %v2008
        %2088 = vst [vmem:[#allocation3 + $0x140] sm:$0xf] %v2012
        %2089 = vst [vmem:[#allocation3 + $0x14c] sm:$0xf] %v2015
        %2090 = vst [vmem:[#allocation3 + $0x158] sm:$0xf] %v2019
        %2091 = vst [vmem:[#allocation3 + $0x164] sm:$0xf] %v2022
        %2092 = vst [vmem:[#allocation3 + $0x170] sm:$0xf] %v2026
        %2093 = vst [vmem:[#allocation3 + $0x17c] sm:$0xf] %v2029
        %v2094 = vld [vmem:[#allocation3] sm:$0xff]
        %v2095 = vld [vmem:[#allocation3 + $0x8] sm:$0xf]
        %v2096 = vld [vmem:[#allocation3 + $0xc] sm:$0xff]
        %v2097 = vld [vmem:[#allocation3 + $0x14] sm:$0xf]
        %v2098 = vld [vmem:[#allocation3 + $0x18] sm:$0xff]
        %v2099 = vld [vmem:[#allocation3 + $0x20] sm:$0xf]
        %v2100 = vld [vmem:[#allocation3 + $0x24] sm:$0xff]
        %v2101 = vld [vmem:[#allocation3 + $0x2c] sm:$0xf]
        %v2102 = vld [vmem:[#allocation3 + $0x30] sm:$0xff]
        %v2103 = vld [vmem:[#allocation3 + $0x38] sm:$0xf]
        %v2104 = vld [vmem:[#allocation3 + $0x3c] sm:$0xff]
        %v2105 = vld [vmem:[#allocation3 + $0x44] sm:$0xf]
        %v2106 = vld [vmem:[#allocation3 + $0x48] sm:$0xff]
        %v2107 = vld [vmem:[#allocation3 + $0x50] sm:$0xf]
        %v2108 = vld [vmem:[#allocation3 + $0x54] sm:$0xff]
        %v2109 = vld [vmem:[#allocation3 + $0x5c] sm:$0xf]
        %v2110 = vld [vmem:[#allocation3 + $0x60] sm:$0xff]
        %v2111 = vld [vmem:[#allocation3 + $0x68] sm:$0xf]
        %v2112 = vld [vmem:[#allocation3 + $0x6c] sm:$0xff]
        %v2113 = vld [vmem:[#allocation3 + $0x74] sm:$0xf]
        %v2114 = vld [vmem:[#allocation3 + $0x78] sm:$0xff]
        %v2115 = vld [vmem:[#allocation3 + $0x80] sm:$0xf]
        %v2116 = vld [vmem:[#allocation3 + $0x84] sm:$0xff]
        %v2117 = vld [vmem:[#allocation3 + $0x8c] sm:$0xf]
        %v2118 = vld [vmem:[#allocation3 + $0x90] sm:$0xff]
        %v2119 = vld [vmem:[#allocation3 + $0x98] sm:$0xf]
        %v2120 = vld [vmem:[#allocation3 + $0x9c] sm:$0xff]
        %v2121 = vld [vmem:[#allocation3 + $0xa4] sm:$0xf]
        %v2122 = vld [vmem:[#allocation3 + $0xa8] sm:$0xff]
        %v2123 = vld [vmem:[#allocation3 + $0xb0] sm:$0xf]
        %v2124 = vld [vmem:[#allocation3 + $0xb4] sm:$0xff]
        %v2125 = vld [vmem:[#allocation3 + $0xbc] sm:$0xf]
        %v2126 = vld [vmem:[#allocation3 + $0xc0] sm:$0xff]
        %v2127 = vld [vmem:[#allocation3 + $0xc8] sm:$0xf]
        %v2128 = vld [vmem:[#allocation3 + $0xcc] sm:$0xff]
        %v2129 = vld [vmem:[#allocation3 + $0xd4] sm:$0xf]
        %v2130 = vld [vmem:[#allocation3 + $0xd8] sm:$0xff]
        %v2131 = vld [vmem:[#allocation3 + $0xe0] sm:$0xf]
        %v2132 = vld [vmem:[#allocation3 + $0xe4] sm:$0xff]
        %v2133 = vld [vmem:[#allocation3 + $0xec] sm:$0xf]
        %v2134 = vld [vmem:[#allocation3 + $0xf0] sm:$0xff]
        %v2135 = vld [vmem:[#allocation3 + $0xf8] sm:$0xf]
        %v2136 = vld [vmem:[#allocation3 + $0xfc] sm:$0xff]
        %v2137 = vld [vmem:[#allocation3 + $0x104] sm:$0xf]
        %v2138 = vld [vmem:[#allocation3 + $0x108] sm:$0xff]
        %v2139 = vld [vmem:[#allocation3 + $0x110] sm:$0xf]
        %v2140 = vld [vmem:[#allocation3 + $0x114] sm:$0xff]
        %v2141 = vld [vmem:[#allocation3 + $0x11c] sm:$0xf]
        %v2142 = vld [vmem:[#allocation3 + $0x120] sm:$0xff]
        %v2143 = vld [vmem:[#allocation3 + $0x128] sm:$0xf]
        %v2144 = vld [vmem:[#allocation3 + $0x12c] sm:$0xff]
        %v2145 = vld [vmem:[#allocation3 + $0x134] sm:$0xf]
        %v2146 = vld [vmem:[#allocation3 + $0x138] sm:$0xff]
        %v2147 = vld [vmem:[#allocation3 + $0x140] sm:$0xf]
        %v2148 = vld [vmem:[#allocation3 + $0x144] sm:$0xff]
        %v2149 = vld [vmem:[#allocation3 + $0x14c] sm:$0xf]
        %v2150 = vld [vmem:[#allocation3 + $0x150] sm:$0xff]
        %v2151 = vld [vmem:[#allocation3 + $0x158] sm:$0xf]
        %v2152 = vld [vmem:[#allocation3 + $0x15c] sm:$0xff]
        %v2153 = vld [vmem:[#allocation3 + $0x164] sm:$0xf]
        %v2154 = vld [vmem:[#allocation3 + $0x168] sm:$0xff]
        %v2155 = vld [vmem:[#allocation3 + $0x170] sm:$0xf]
        %v2156 = vld [vmem:[#allocation3 + $0x174] sm:$0xff]
        %v2157 = vld [vmem:[#allocation3 + $0x17c] sm:$0xf]
        %v2158 = vld [vmem:[#allocation9] sm:$0xf]
        %v2159 = vld [vmem:[#allocation9 + $0x4] sm:$0xf]
        %v2160 = vld [vmem:[#allocation9 + $0x8] sm:$0xf]
        %v2161 = vld [vmem:[#allocation9 + $0xc] sm:$0xf]
        %v2162 = vld [vmem:[#allocation9 + $0x10] sm:$0xf]
        %v2163 = vld [vmem:[#allocation9 + $0x14] sm:$0xf]
        %v2164 = vld [vmem:[#allocation9 + $0x18] sm:$0xf]
        %v2165 = vld [vmem:[#allocation9 + $0x1c] sm:$0xf]
        %v2166 = vld [vmem:[#allocation9 + $0x20] sm:$0xf]
        %v2167 = vld [vmem:[#allocation9 + $0x24] sm:$0xf]
        %v2168 = vld [vmem:[#allocation9 + $0x28] sm:$0xf]
        %v2169 = vld [vmem:[#allocation9 + $0x2c] sm:$0xf]
        %v2170 = vld [vmem:[#allocation9 + $0x30] sm:$0xf]
        %v2171 = vld [vmem:[#allocation9 + $0x34] sm:$0xf]
        %v2172 = vld [vmem:[#allocation9 + $0x38] sm:$0xf]
        %v2173 = vld [vmem:[#allocation9 + $0x3c] sm:$0xf]
        %v2174 = vld [vmem:[#allocation9 + $0x40] sm:$0xf]
        %v2175 = vld [vmem:[#allocation9 + $0x44] sm:$0xf]
        %v2176 = vld [vmem:[#allocation9 + $0x48] sm:$0xf]
        %v2177 = vld [vmem:[#allocation9 + $0x4c] sm:$0xf]
        %v2178 = vld [vmem:[#allocation9 + $0x50] sm:$0xf]
        %v2179 = vld [vmem:[#allocation9 + $0x54] sm:$0xf]
        %v2180 = vld [vmem:[#allocation9 + $0x58] sm:$0xf]
        %v2181 = vld [vmem:[#allocation9 + $0x5c] sm:$0xf]
        %v2182 = vld [vmem:[#allocation9 + $0x60] sm:$0xf]
        %v2183 = vld [vmem:[#allocation9 + $0x64] sm:$0xf]
        %v2184 = vld [vmem:[#allocation9 + $0x68] sm:$0xf]
        %v2185 = vld [vmem:[#allocation9 + $0x6c] sm:$0xf]
        %v2186 = vld [vmem:[#allocation9 + $0x70] sm:$0xf]
        %v2187 = vld [vmem:[#allocation9 + $0x74] sm:$0xf]
        %v2188 = vld [vmem:[#allocation9 + $0x78] sm:$0xf]
        %v2189 = vld [vmem:[#allocation9 + $0x7c] sm:$0xf]
        %v2190 = vld [vmem:[#allocation9 + $0x80] sm:$0xf]
        %v2191 = vld [vmem:[#allocation9 + $0x84] sm:$0xf]
        %v2192 = vld [vmem:[#allocation9 + $0x88] sm:$0xf]
        %v2193 = vld [vmem:[#allocation9 + $0x8c] sm:$0xf]
        %v2194 = vld [vmem:[#allocation9 + $0x90] sm:$0xf]
        %v2195 = vld [vmem:[#allocation9 + $0x94] sm:$0xf]
        %v2196 = vld [vmem:[#allocation9 + $0x98] sm:$0xf]
        %v2197 = vld [vmem:[#allocation9 + $0x9c] sm:$0xf]
        %v2198 = vld [vmem:[#allocation9 + $0xa0] sm:$0xf]
        %v2199 = vld [vmem:[#allocation9 + $0xa4] sm:$0xf]
        %v2200 = vld [vmem:[#allocation9 + $0xa8] sm:$0xf]
        %v2201 = vld [vmem:[#allocation9 + $0xac] sm:$0xf]
        %v2202 = vld [vmem:[#allocation9 + $0xb0] sm:$0xf]
        %v2203 = vld [vmem:[#allocation9 + $0xb4] sm:$0xf]
        %v2204 = vld [vmem:[#allocation9 + $0xb8] sm:$0xf]
        %v2205 = vld [vmem:[#allocation9 + $0xbc] sm:$0xf]
        %v2206 = vld [vmem:[%s1141] sm:$0xf]
        %v2207 = vld [vmem:[%s1141 + $0x4] sm:$0xf]
        %v2208 = vld [vmem:[%s1141 + $0xc] sm:$0xf]
        %v2209 = vld [vmem:[%s1141 + $0x10] sm:$0xf]
        %v2210 = vld [vmem:[%s1141 + $0x18] sm:$0xf]
        %v2211 = vld [vmem:[%s1141 + $0x1c] sm:$0xf]
        %v2212 = vld [vmem:[%s1141 + $0x24] sm:$0xf]
        %v2213 = vld [vmem:[%s1141 + $0x28] sm:$0xf]
        %v2214 = vld [vmem:[%s1141 + $0x30] sm:$0xf]
        %v2215 = vld [vmem:[%s1141 + $0x34] sm:$0xf]
        %v2216 = vld [vmem:[%s1141 + $0x3c] sm:$0xf]
        %v2217 = vld [vmem:[%s1141 + $0x40] sm:$0xf]
        %v2218 = vld [vmem:[%s1141 + $0x48] sm:$0xf]
        %v2219 = vld [vmem:[%s1141 + $0x4c] sm:$0xf]
        %v2220 = vld [vmem:[%s1141 + $0x54] sm:$0xf]
        %v2221 = vld [vmem:[%s1141 + $0x58] sm:$0xf]
        %v2222 = vld [vmem:[%s1141 + $0x60] sm:$0xf]
        %v2223 = vld [vmem:[%s1141 + $0x64] sm:$0xf]
        %v2224 = vld [vmem:[%s1141 + $0x6c] sm:$0xf]
        %v2225 = vld [vmem:[%s1141 + $0x70] sm:$0xf]
        %v2226 = vld [vmem:[%s1141 + $0x78] sm:$0xf]
        %v2227 = vld [vmem:[%s1141 + $0x7c] sm:$0xf]
        %v2228 = vld [vmem:[%s1141 + $0x84] sm:$0xf]
        %v2229 = vld [vmem:[%s1141 + $0x88] sm:$0xf]
        %v2230 = vld [vmem:[%s1141 + $0x90] sm:$0xf]
        %v2231 = vld [vmem:[%s1141 + $0x94] sm:$0xf]
        %v2232 = vld [vmem:[%s1141 + $0x9c] sm:$0xf]
        %v2233 = vld [vmem:[%s1141 + $0xa0] sm:$0xf]
        %v2234 = vld [vmem:[%s1141 + $0xa8] sm:$0xf]
        %v2235 = vld [vmem:[%s1141 + $0xac] sm:$0xf]
        %v2236 = vld [vmem:[%s1141 + $0xb4] sm:$0xf]
        %v2237 = vld [vmem:[%s1141 + $0xb8] sm:$0xf]
        %2238 = vst [vmem:[#allocation3] sm:$0xf] %v2206
        %2239 = vst [vmem:[#allocation3 + $0xc] sm:$0xf] %v2207
        %2240 = vst [vmem:[#allocation3 + $0x18] sm:$0xf] %v2208
        %2241 = vst [vmem:[#allocation3 + $0x24] sm:$0xf] %v2209
        %2242 = vst [vmem:[#allocation3 + $0x30] sm:$0xf] %v2210
        %2243 = vst [vmem:[#allocation3 + $0x3c] sm:$0xf] %v2211
        %2244 = vst [vmem:[#allocation3 + $0x48] sm:$0xf] %v2212
        %2245 = vst [vmem:[#allocation3 + $0x54] sm:$0xf] %v2213
        %2246 = vst [vmem:[#allocation3 + $0x60] sm:$0xf] %v2214
        %2247 = vst [vmem:[#allocation3 + $0x6c] sm:$0xf] %v2215
        %2248 = vst [vmem:[#allocation3 + $0x78] sm:$0xf] %v2216
        %2249 = vst [vmem:[#allocation3 + $0x84] sm:$0xf] %v2217
        %2250 = vst [vmem:[#allocation3 + $0x90] sm:$0xf] %v2218
        %2251 = vst [vmem:[#allocation3 + $0x9c] sm:$0xf] %v2219
        %2252 = vst [vmem:[#allocation3 + $0xa8] sm:$0xf] %v2220
        %2253 = vst [vmem:[#allocation3 + $0xb4] sm:$0xf] %v2221
        %2254 = vst [vmem:[#allocation3 + $0xc0] sm:$0xf] %v2222
        %2255 = vst [vmem:[#allocation3 + $0xcc] sm:$0xf] %v2223
        %2256 = vst [vmem:[#allocation3 + $0xd8] sm:$0xf] %v2224
        %2257 = vst [vmem:[#allocation3 + $0xe4] sm:$0xf] %v2225
        %2258 = vst [vmem:[#allocation3 + $0xf0] sm:$0xf] %v2226
        %2259 = vst [vmem:[#allocation3 + $0xfc] sm:$0xf] %v2227
        %2260 = vst [vmem:[#allocation3 + $0x108] sm:$0xf] %v2228
        %2261 = vst [vmem:[#allocation3 + $0x114] sm:$0xf] %v2229
        %2262 = vst [vmem:[#allocation3 + $0x120] sm:$0xf] %v2230
        %2263 = vst [vmem:[#allocation3 + $0x12c] sm:$0xf] %v2231
        %2264 = vst [vmem:[#allocation3 + $0x138] sm:$0xf] %v2232
        %2265 = vst [vmem:[#allocation3 + $0x144] sm:$0xf] %v2233
        %2266 = vst [vmem:[#allocation3 + $0x150] sm:$0xf] %v2234
        %2267 = vst [vmem:[#allocation3 + $0x15c] sm:$0xf] %v2235
        %2268 = vst [vmem:[#allocation3 + $0x168] sm:$0xf] %v2236
        %2269 = vst [vmem:[#allocation3 + $0x174] sm:$0xf] %v2237
        %v2270 = vld [vmem:[%s1141] sm:$0xf]
        %v2271 = vld [vmem:[%s1141 + $0x4] sm:$0xf]
        %v2272 = vld [vmem:[%s1141 + $0x8] sm:$0x1]
        %v2273 = vld [vmem:[%s1141 + $0xc] sm:$0xf]
        %v2274 = vld [vmem:[%s1141 + $0x10] sm:$0xf]
        %v2275 = vld [vmem:[%s1141 + $0x14] sm:$0x1]
        %v2276 = vld [vmem:[%s1141 + $0x18] sm:$0xf]
        %v2277 = vld [vmem:[%s1141 + $0x1c] sm:$0xf]
        %v2278 = vld [vmem:[%s1141 + $0x20] sm:$0x1]
        %v2279 = vld [vmem:[%s1141 + $0x24] sm:$0xf]
        %v2280 = vld [vmem:[%s1141 + $0x28] sm:$0xf]
        %v2281 = vld [vmem:[%s1141 + $0x2c] sm:$0x1]
        %v2282 = vld [vmem:[%s1141 + $0x30] sm:$0xf]
        %v2283 = vld [vmem:[%s1141 + $0x34] sm:$0xf]
        %v2284 = vld [vmem:[%s1141 + $0x38] sm:$0x1]
        %v2285 = vld [vmem:[%s1141 + $0x3c] sm:$0xf]
        %v2286 = vld [vmem:[%s1141 + $0x40] sm:$0xf]
        %v2287 = vld [vmem:[%s1141 + $0x44] sm:$0x1]
        %v2288 = vld [vmem:[%s1141 + $0x48] sm:$0xf]
        %v2289 = vld [vmem:[%s1141 + $0x4c] sm:$0xf]
        %v2290 = vld [vmem:[%s1141 + $0x50] sm:$0x1]
        %v2291 = vld [vmem:[%s1141 + $0x54] sm:$0xf]
        %v2292 = vld [vmem:[%s1141 + $0x58] sm:$0xf]
        %v2293 = vld [vmem:[%s1141 + $0x5c] sm:$0x1]
        %v2294 = vld [vmem:[%s1141 + $0x60] sm:$0xf]
        %v2295 = vld [vmem:[%s1141 + $0x64] sm:$0xf]
        %v2296 = vld [vmem:[%s1141 + $0x68] sm:$0x1]
        %v2297 = vld [vmem:[%s1141 + $0x6c] sm:$0xf]
        %v2298 = vld [vmem:[%s1141 + $0x70] sm:$0xf]
        %v2299 = vld [vmem:[%s1141 + $0x74] sm:$0x1]
        %v2300 = vld [vmem:[%s1141 + $0x78] sm:$0xf]
        %v2301 = vld [vmem:[%s1141 + $0x7c] sm:$0xf]
        %v2302 = vld [vmem:[%s1141 + $0x80] sm:$0x1]
        %v2303 = vld [vmem:[%s1141 + $0x84] sm:$0xf]
        %v2304 = vld [vmem:[%s1141 + $0x88] sm:$0xf]
        %v2305 = vld [vmem:[%s1141 + $0x8c] sm:$0x1]
        %v2306 = vld [vmem:[%s1141 + $0x90] sm:$0xf]
        %v2307 = vld [vmem:[%s1141 + $0x94] sm:$0xf]
        %v2308 = vld [vmem:[%s1141 + $0x98] sm:$0x1]
        %v2309 = vld [vmem:[%s1141 + $0x9c] sm:$0xf]
        %v2310 = vld [vmem:[%s1141 + $0xa0] sm:$0xf]
        %v2311 = vld [vmem:[%s1141 + $0xa4] sm:$0x1]
        %v2312 = vld [vmem:[%s1141 + $0xa8] sm:$0xf]
        %v2313 = vld [vmem:[%s1141 + $0xac] sm:$0xf]
        %v2314 = vld [vmem:[%s1141 + $0xb0] sm:$0x1]
        %v2315 = vld [vmem:[%s1141 + $0xb4] sm:$0xf]
        %v2316 = vld [vmem:[%s1141 + $0xb8] sm:$0xf]
        %v2317 = vld [vmem:[%s1141 + $0xbc] sm:$0x1]
        %v2319 = vshrl.u32 %v2270, 16
        %v2321 = vrot.slane %v2319, 4
        %v2322 = vshll.u32 %v2270, 16
        %v2324 = vrot.slane %v2322, 5
        %v2325 = vor.u32 %v2321, %v2324
        %v2326 = vrot.slane %v2325, 4
        %v2328 = vshll.u32 %v2271, 16
        %v2330 = vrot.slane %v2328, 5
        %v2331 = vsel %vm1370, %v2326, %v2330
        %v2332 = vshrl.u32 %v2271, 16
        %v2334 = vrot.slane %v2332, 4
        %v2335 = vor.u32 %v2334, %v2330
        %v2336 = vrot.slane %v2335, 4
        %v2338 = vshll.u32 %v2272, 16
        %v2340 = vrot.slane %v2338, 5
        %v2341 = vsel %vm1370, %v2336, %v2340
        %v2343 = vshrl.u32 %v2273, 16
        %v2345 = vrot.slane %v2343, 4
        %v2346 = vshll.u32 %v2273, 16
        %v2348 = vrot.slane %v2346, 5
        %v2349 = vor.u32 %v2345, %v2348
        %v2350 = vrot.slane %v2349, 4
        %v2352 = vshll.u32 %v2274, 16
        %v2354 = vrot.slane %v2352, 5
        %v2355 = vsel %vm1370, %v2350, %v2354
        %v2356 = vshrl.u32 %v2274, 16
        %v2358 = vrot.slane %v2356, 4
        %v2359 = vor.u32 %v2358, %v2354
        %v2360 = vrot.slane %v2359, 4
        %v2362 = vshll.u32 %v2275, 16
        %v2364 = vrot.slane %v2362, 5
        %v2365 = vsel %vm1370, %v2360, %v2364
        %v2367 = vshrl.u32 %v2276, 16
        %v2369 = vrot.slane %v2367, 4
        %v2370 = vshll.u32 %v2276, 16
        %v2372 = vrot.slane %v2370, 5
        %v2373 = vor.u32 %v2369, %v2372
        %v2374 = vrot.slane %v2373, 4
        %v2376 = vshll.u32 %v2277, 16
        %v2378 = vrot.slane %v2376, 5
        %v2379 = vsel %vm1370, %v2374, %v2378
        %v2380 = vshrl.u32 %v2277, 16
        %v2382 = vrot.slane %v2380, 4
        %v2383 = vor.u32 %v2382, %v2378
        %v2384 = vrot.slane %v2383, 4
        %v2386 = vshll.u32 %v2278, 16
        %v2388 = vrot.slane %v2386, 5
        %v2389 = vsel %vm1370, %v2384, %v2388
        %v2391 = vshrl.u32 %v2279, 16
        %v2393 = vrot.slane %v2391, 4
        %v2394 = vshll.u32 %v2279, 16
        %v2396 = vrot.slane %v2394, 5
        %v2397 = vor.u32 %v2393, %v2396
        %v2398 = vrot.slane %v2397, 4
        %v2400 = vshll.u32 %v2280, 16
        %v2402 = vrot.slane %v2400, 5
        %v2403 = vsel %vm1370, %v2398, %v2402
        %v2404 = vshrl.u32 %v2280, 16
        %v2406 = vrot.slane %v2404, 4
        %v2407 = vor.u32 %v2406, %v2402
        %v2408 = vrot.slane %v2407, 4
        %v2410 = vshll.u32 %v2281, 16
        %v2412 = vrot.slane %v2410, 5
        %v2413 = vsel %vm1370, %v2408, %v2412
        %v2415 = vshrl.u32 %v2282, 16
        %v2417 = vrot.slane %v2415, 4
        %v2418 = vshll.u32 %v2282, 16
        %v2420 = vrot.slane %v2418, 5
        %v2421 = vor.u32 %v2417, %v2420
        %v2422 = vrot.slane %v2421, 4
        %v2424 = vshll.u32 %v2283, 16
        %v2426 = vrot.slane %v2424, 5
        %v2427 = vsel %vm1370, %v2422, %v2426
        %v2428 = vshrl.u32 %v2283, 16
        %v2430 = vrot.slane %v2428, 4
        %v2431 = vor.u32 %v2430, %v2426
        %v2432 = vrot.slane %v2431, 4
        %v2434 = vshll.u32 %v2284, 16
        %v2436 = vrot.slane %v2434, 5
        %v2437 = vsel %vm1370, %v2432, %v2436
        %v2439 = vshrl.u32 %v2285, 16
        %v2441 = vrot.slane %v2439, 4
        %v2442 = vshll.u32 %v2285, 16
        %v2444 = vrot.slane %v2442, 5
        %v2445 = vor.u32 %v2441, %v2444
        %v2446 = vrot.slane %v2445, 4
        %v2448 = vshll.u32 %v2286, 16
        %v2450 = vrot.slane %v2448, 5
        %v2451 = vsel %vm1370, %v2446, %v2450
        %v2452 = vshrl.u32 %v2286, 16
        %v2454 = vrot.slane %v2452, 4
        %v2455 = vor.u32 %v2454, %v2450
        %v2456 = vrot.slane %v2455, 4
        %v2458 = vshll.u32 %v2287, 16
        %v2460 = vrot.slane %v2458, 5
        %v2461 = vsel %vm1370, %v2456, %v2460
        %v2463 = vshrl.u32 %v2288, 16
        %v2465 = vrot.slane %v2463, 4
        %v2466 = vshll.u32 %v2288, 16
        %v2468 = vrot.slane %v2466, 5
        %v2469 = vor.u32 %v2465, %v2468
        %v2470 = vrot.slane %v2469, 4
        %v2472 = vshll.u32 %v2289, 16
        %v2474 = vrot.slane %v2472, 5
        %v2475 = vsel %vm1370, %v2470, %v2474
        %v2476 = vshrl.u32 %v2289, 16
        %v2478 = vrot.slane %v2476, 4
        %v2479 = vor.u32 %v2478, %v2474
        %v2480 = vrot.slane %v2479, 4
        %v2482 = vshll.u32 %v2290, 16
        %v2484 = vrot.slane %v2482, 5
        %v2485 = vsel %vm1370, %v2480, %v2484
        %v2487 = vshrl.u32 %v2291, 16
        %v2489 = vrot.slane %v2487, 4
        %v2490 = vshll.u32 %v2291, 16
        %v2492 = vrot.slane %v2490, 5
        %v2493 = vor.u32 %v2489, %v2492
        %v2494 = vrot.slane %v2493, 4
        %v2496 = vshll.u32 %v2292, 16
        %v2498 = vrot.slane %v2496, 5
        %v2499 = vsel %vm1370, %v2494, %v2498
        %v2500 = vshrl.u32 %v2292, 16
        %v2502 = vrot.slane %v2500, 4
        %v2503 = vor.u32 %v2502, %v2498
        %v2504 = vrot.slane %v2503, 4
        %v2506 = vshll.u32 %v2293, 16
        %v2508 = vrot.slane %v2506, 5
        %v2509 = vsel %vm1370, %v2504, %v2508
        %v2511 = vshrl.u32 %v2294, 16
        %v2513 = vrot.slane %v2511, 4
        %v2514 = vshll.u32 %v2294, 16
        %v2516 = vrot.slane %v2514, 5
        %v2517 = vor.u32 %v2513, %v2516
        %v2518 = vrot.slane %v2517, 4
        %v2520 = vshll.u32 %v2295, 16
        %v2522 = vrot.slane %v2520, 5
        %v2523 = vsel %vm1370, %v2518, %v2522
        %v2524 = vshrl.u32 %v2295, 16
        %v2526 = vrot.slane %v2524, 4
        %v2527 = vor.u32 %v2526, %v2522
        %v2528 = vrot.slane %v2527, 4
        %v2530 = vshll.u32 %v2296, 16
        %v2532 = vrot.slane %v2530, 5
        %v2533 = vsel %vm1370, %v2528, %v2532
        %v2535 = vshrl.u32 %v2297, 16
        %v2537 = vrot.slane %v2535, 4
        %v2538 = vshll.u32 %v2297, 16
        %v2540 = vrot.slane %v2538, 5
        %v2541 = vor.u32 %v2537, %v2540
        %v2542 = vrot.slane %v2541, 4
        %v2544 = vshll.u32 %v2298, 16
        %v2546 = vrot.slane %v2544, 5
        %v2547 = vsel %vm1370, %v2542, %v2546
        %v2548 = vshrl.u32 %v2298, 16
        %v2550 = vrot.slane %v2548, 4
        %v2551 = vor.u32 %v2550, %v2546
        %v2552 = vrot.slane %v2551, 4
        %v2554 = vshll.u32 %v2299, 16
        %v2556 = vrot.slane %v2554, 5
        %v2557 = vsel %vm1370, %v2552, %v2556
        %v2559 = vshrl.u32 %v2300, 16
        %v2561 = vrot.slane %v2559, 4
        %v2562 = vshll.u32 %v2300, 16
        %v2564 = vrot.slane %v2562, 5
        %v2565 = vor.u32 %v2561, %v2564
        %v2566 = vrot.slane %v2565, 4
        %v2568 = vshll.u32 %v2301, 16
        %v2570 = vrot.slane %v2568, 5
        %v2571 = vsel %vm1370, %v2566, %v2570
        %v2572 = vshrl.u32 %v2301, 16
        %v2574 = vrot.slane %v2572, 4
        %v2575 = vor.u32 %v2574, %v2570
        %v2576 = vrot.slane %v2575, 4
        %v2578 = vshll.u32 %v2302, 16
        %v2580 = vrot.slane %v2578, 5
        %v2581 = vsel %vm1370, %v2576, %v2580
        %v2583 = vshrl.u32 %v2303, 16
        %v2585 = vrot.slane %v2583, 4
        %v2586 = vshll.u32 %v2303, 16
        %v2588 = vrot.slane %v2586, 5
        %v2589 = vor.u32 %v2585, %v2588
        %v2590 = vrot.slane %v2589, 4
        %v2592 = vshll.u32 %v2304, 16
        %v2594 = vrot.slane %v2592, 5
        %v2595 = vsel %vm1370, %v2590, %v2594
        %v2596 = vshrl.u32 %v2304, 16
        %v2598 = vrot.slane %v2596, 4
        %v2599 = vor.u32 %v2598, %v2594
        %v2600 = vrot.slane %v2599, 4
        %v2602 = vshll.u32 %v2305, 16
        %v2604 = vrot.slane %v2602, 5
        %v2605 = vsel %vm1370, %v2600, %v2604
        %v2607 = vshrl.u32 %v2306, 16
        %v2609 = vrot.slane %v2607, 4
        %v2610 = vshll.u32 %v2306, 16
        %v2612 = vrot.slane %v2610, 5
        %v2613 = vor.u32 %v2609, %v2612
        %v2614 = vrot.slane %v2613, 4
        %v2616 = vshll.u32 %v2307, 16
        %v2618 = vrot.slane %v2616, 5
        %v2619 = vsel %vm1370, %v2614, %v2618
        %v2620 = vshrl.u32 %v2307, 16
        %v2622 = vrot.slane %v2620, 4
        %v2623 = vor.u32 %v2622, %v2618
        %v2624 = vrot.slane %v2623, 4
        %v2626 = vshll.u32 %v2308, 16
        %v2628 = vrot.slane %v2626, 5
        %v2629 = vsel %vm1370, %v2624, %v2628
        %v2631 = vshrl.u32 %v2309, 16
        %v2633 = vrot.slane %v2631, 4
        %v2634 = vshll.u32 %v2309, 16
        %v2636 = vrot.slane %v2634, 5
        %v2637 = vor.u32 %v2633, %v2636
        %v2638 = vrot.slane %v2637, 4
        %v2640 = vshll.u32 %v2310, 16
        %v2642 = vrot.slane %v2640, 5
        %v2643 = vsel %vm1370, %v2638, %v2642
        %v2644 = vshrl.u32 %v2310, 16
        %v2646 = vrot.slane %v2644, 4
        %v2647 = vor.u32 %v2646, %v2642
        %v2648 = vrot.slane %v2647, 4
        %v2650 = vshll.u32 %v2311, 16
        %v2652 = vrot.slane %v2650, 5
        %v2653 = vsel %vm1370, %v2648, %v2652
        %v2655 = vshrl.u32 %v2312, 16
        %v2657 = vrot.slane %v2655, 4
        %v2658 = vshll.u32 %v2312, 16
        %v2660 = vrot.slane %v2658, 5
        %v2661 = vor.u32 %v2657, %v2660
        %v2662 = vrot.slane %v2661, 4
        %v2664 = vshll.u32 %v2313, 16
        %v2666 = vrot.slane %v2664, 5
        %v2667 = vsel %vm1370, %v2662, %v2666
        %v2668 = vshrl.u32 %v2313, 16
        %v2670 = vrot.slane %v2668, 4
        %v2671 = vor.u32 %v2670, %v2666
        %v2672 = vrot.slane %v2671, 4
        %v2674 = vshll.u32 %v2314, 16
        %v2676 = vrot.slane %v2674, 5
        %v2677 = vsel %vm1370, %v2672, %v2676
        %v2679 = vshrl.u32 %v2315, 16
        %v2681 = vrot.slane %v2679, 4
        %v2682 = vshll.u32 %v2315, 16
        %v2684 = vrot.slane %v2682, 5
        %v2685 = vor.u32 %v2681, %v2684
        %v2686 = vrot.slane %v2685, 4
        %v2688 = vshll.u32 %v2316, 16
        %v2690 = vrot.slane %v2688, 5
        %v2691 = vsel %vm1370, %v2686, %v2690
        %v2692 = vshrl.u32 %v2316, 16
        %v2694 = vrot.slane %v2692, 4
        %v2695 = vor.u32 %v2694, %v2690
        %v2696 = vrot.slane %v2695, 4
        %v2698 = vshll.u32 %v2317, 16
        %v2700 = vrot.slane %v2698, 5
        %v2701 = vsel %vm1370, %v2696, %v2700
        %2734 = vst [vmem:[#allocation3 + $0x4] sm:$0xf] %v2331
        %2735 = vst [vmem:[#allocation3 + $0x10] sm:$0xf] %v2341
        %2736 = vst [vmem:[#allocation3 + $0x1c] sm:$0xf] %v2355
        %2737 = vst [vmem:[#allocation3 + $0x28] sm:$0xf] %v2365
        %2738 = vst [vmem:[#allocation3 + $0x34] sm:$0xf] %v2379
        %2739 = vst [vmem:[#allocation3 + $0x40] sm:$0xf] %v2389
        %2740 = vst [vmem:[#allocation3 + $0x4c] sm:$0xf] %v2403
        %2741 = vst [vmem:[#allocation3 + $0x58] sm:$0xf] %v2413
        %2742 = vst [vmem:[#allocation3 + $0x64] sm:$0xf] %v2427
        %2743 = vst [vmem:[#allocation3 + $0x70] sm:$0xf] %v2437
        %2744 = vst [vmem:[#allocation3 + $0x7c] sm:$0xf] %v2451
        %2745 = vst [vmem:[#allocation3 + $0x88] sm:$0xf] %v2461
        %2746 = vst [vmem:[#allocation3 + $0x94] sm:$0xf] %v2475
        %2747 = vst [vmem:[#allocation3 + $0xa0] sm:$0xf] %v2485
        %2748 = vst [vmem:[#allocation3 + $0xac] sm:$0xf] %v2499
        %2749 = vst [vmem:[#allocation3 + $0xb8] sm:$0xf] %v2509
        %2750 = vst [vmem:[#allocation3 + $0xc4] sm:$0xf] %v2523
        %2751 = vst [vmem:[#allocation3 + $0xd0] sm:$0xf] %v2533
        %2752 = vst [vmem:[#allocation3 + $0xdc] sm:$0xf] %v2547
        %2753 = vst [vmem:[#allocation3 + $0xe8] sm:$0xf] %v2557
        %2754 = vst [vmem:[#allocation3 + $0xf4] sm:$0xf] %v2571
        %2755 = vst [vmem:[#allocation3 + $0x100] sm:$0xf] %v2581
        %2756 = vst [vmem:[#allocation3 + $0x10c] sm:$0xf] %v2595
        %2757 = vst [vmem:[#allocation3 + $0x118] sm:$0xf] %v2605
        %2758 = vst [vmem:[#allocation3 + $0x124] sm:$0xf] %v2619
        %2759 = vst [vmem:[#allocation3 + $0x130] sm:$0xf] %v2629
        %2760 = vst [vmem:[#allocation3 + $0x13c] sm:$0xf] %v2643
        %2761 = vst [vmem:[#allocation3 + $0x148] sm:$0xf] %v2653
        %2762 = vst [vmem:[#allocation3 + $0x154] sm:$0xf] %v2667
        %2763 = vst [vmem:[#allocation3 + $0x160] sm:$0xf] %v2677
        %2764 = vst [vmem:[#allocation3 + $0x16c] sm:$0xf] %v2691
        %2765 = vst [vmem:[#allocation3 + $0x178] sm:$0xf] %v2701
        %v2766 = vld [vmem:[%s1141] sm:$0xe]
        %v2767 = vld [vmem:[%s1141 + $0x4] sm:$0xf]
        %v2768 = vld [vmem:[%s1141 + $0x8] sm:$0x1]
        %v2769 = vld [vmem:[%s1141 + $0xc] sm:$0xe]
        %v2770 = vld [vmem:[%s1141 + $0x10] sm:$0xf]
        %v2771 = vld [vmem:[%s1141 + $0x14] sm:$0x1]
        %v2772 = vld [vmem:[%s1141 + $0x18] sm:$0xe]
        %v2773 = vld [vmem:[%s1141 + $0x1c] sm:$0xf]
        %v2774 = vld [vmem:[%s1141 + $0x20] sm:$0x1]
        %v2775 = vld [vmem:[%s1141 + $0x24] sm:$0xe]
        %v2776 = vld [vmem:[%s1141 + $0x28] sm:$0xf]
        %v2777 = vld [vmem:[%s1141 + $0x2c] sm:$0x1]
        %v2778 = vld [vmem:[%s1141 + $0x30] sm:$0xe]
        %v2779 = vld [vmem:[%s1141 + $0x34] sm:$0xf]
        %v2780 = vld [vmem:[%s1141 + $0x38] sm:$0x1]
        %v2781 = vld [vmem:[%s1141 + $0x3c] sm:$0xe]
        %v2782 = vld [vmem:[%s1141 + $0x40] sm:$0xf]
        %v2783 = vld [vmem:[%s1141 + $0x44] sm:$0x1]
        %v2784 = vld [vmem:[%s1141 + $0x48] sm:$0xe]
        %v2785 = vld [vmem:[%s1141 + $0x4c] sm:$0xf]
        %v2786 = vld [vmem:[%s1141 + $0x50] sm:$0x1]
        %v2787 = vld [vmem:[%s1141 + $0x54] sm:$0xe]
        %v2788 = vld [vmem:[%s1141 + $0x58] sm:$0xf]
        %v2789 = vld [vmem:[%s1141 + $0x5c] sm:$0x1]
        %v2790 = vld [vmem:[%s1141 + $0x60] sm:$0xe]
        %v2791 = vld [vmem:[%s1141 + $0x64] sm:$0xf]
        %v2792 = vld [vmem:[%s1141 + $0x68] sm:$0x1]
        %v2793 = vld [vmem:[%s1141 + $0x6c] sm:$0xe]
        %v2794 = vld [vmem:[%s1141 + $0x70] sm:$0xf]
        %v2795 = vld [vmem:[%s1141 + $0x74] sm:$0x1]
        %v2796 = vld [vmem:[%s1141 + $0x78] sm:$0xe]
        %v2797 = vld [vmem:[%s1141 + $0x7c] sm:$0xf]
        %v2798 = vld [vmem:[%s1141 + $0x80] sm:$0x1]
        %v2799 = vld [vmem:[%s1141 + $0x84] sm:$0xe]
        %v2800 = vld [vmem:[%s1141 + $0x88] sm:$0xf]
        %v2801 = vld [vmem:[%s1141 + $0x8c] sm:$0x1]
        %v2802 = vld [vmem:[%s1141 + $0x90] sm:$0xe]
        %v2803 = vld [vmem:[%s1141 + $0x94] sm:$0xf]
        %v2804 = vld [vmem:[%s1141 + $0x98] sm:$0x1]
        %v2805 = vld [vmem:[%s1141 + $0x9c] sm:$0xe]
        %v2806 = vld [vmem:[%s1141 + $0xa0] sm:$0xf]
        %v2807 = vld [vmem:[%s1141 + $0xa4] sm:$0x1]
        %v2808 = vld [vmem:[%s1141 + $0xa8] sm:$0xe]
        %v2809 = vld [vmem:[%s1141 + $0xac] sm:$0xf]
        %v2810 = vld [vmem:[%s1141 + $0xb0] sm:$0x1]
        %v2811 = vld [vmem:[%s1141 + $0xb4] sm:$0xe]
        %v2812 = vld [vmem:[%s1141 + $0xb8] sm:$0xf]
        %v2813 = vld [vmem:[%s1141 + $0xbc] sm:$0x1]
        %v2862 = vrot.slane %v2766, 5
        %v2863 = vrot.slane %v2862, 4
        %v2864 = vrot.slane %v2767, 5
        %v2865 = vsel %vm1917, %v2863, %v2864
        %v2866 = vrot.slane %v2864, 4
        %v2867 = vrot.slane %v2768, 5
        %v2868 = vsel %vm1917, %v2866, %v2867
        %v2869 = vrot.slane %v2769, 5
        %v2870 = vrot.slane %v2869, 4
        %v2871 = vrot.slane %v2770, 5
        %v2872 = vsel %vm1917, %v2870, %v2871
        %v2873 = vrot.slane %v2871, 4
        %v2874 = vrot.slane %v2771, 5
        %v2875 = vsel %vm1917, %v2873, %v2874
        %v2876 = vrot.slane %v2772, 5
        %v2877 = vrot.slane %v2876, 4
        %v2878 = vrot.slane %v2773, 5
        %v2879 = vsel %vm1917, %v2877, %v2878
        %v2880 = vrot.slane %v2878, 4
        %v2881 = vrot.slane %v2774, 5
        %v2882 = vsel %vm1917, %v2880, %v2881
        %v2883 = vrot.slane %v2775, 5
        %v2884 = vrot.slane %v2883, 4
        %v2885 = vrot.slane %v2776, 5
        %v2886 = vsel %vm1917, %v2884, %v2885
        %v2887 = vrot.slane %v2885, 4
        %v2888 = vrot.slane %v2777, 5
        %v2889 = vsel %vm1917, %v2887, %v2888
        %v2890 = vrot.slane %v2778, 5
        %v2891 = vrot.slane %v2890, 4
        %v2892 = vrot.slane %v2779, 5
        %v2893 = vsel %vm1917, %v2891, %v2892
        %v2894 = vrot.slane %v2892, 4
        %v2895 = vrot.slane %v2780, 5
        %v2896 = vsel %vm1917, %v2894, %v2895
        %v2897 = vrot.slane %v2781, 5
        %v2898 = vrot.slane %v2897, 4
        %v2899 = vrot.slane %v2782, 5
        %v2900 = vsel %vm1917, %v2898, %v2899
        %v2901 = vrot.slane %v2899, 4
        %v2902 = vrot.slane %v2783, 5
        %v2903 = vsel %vm1917, %v2901, %v2902
        %v2904 = vrot.slane %v2784, 5
        %v2905 = vrot.slane %v2904, 4
        %v2906 = vrot.slane %v2785, 5
        %v2907 = vsel %vm1917, %v2905, %v2906
        %v2908 = vrot.slane %v2906, 4
        %v2909 = vrot.slane %v2786, 5
        %v2910 = vsel %vm1917, %v2908, %v2909
        %v2911 = vrot.slane %v2787, 5
        %v2912 = vrot.slane %v2911, 4
        %v2913 = vrot.slane %v2788, 5
        %v2914 = vsel %vm1917, %v2912, %v2913
        %v2915 = vrot.slane %v2913, 4
        %v2916 = vrot.slane %v2789, 5
        %v2917 = vsel %vm1917, %v2915, %v2916
        %v2918 = vrot.slane %v2790, 5
        %v2919 = vrot.slane %v2918, 4
        %v2920 = vrot.slane %v2791, 5
        %v2921 = vsel %vm1917, %v2919, %v2920
        %v2922 = vrot.slane %v2920, 4
        %v2923 = vrot.slane %v2792, 5
        %v2924 = vsel %vm1917, %v2922, %v2923
        %v2925 = vrot.slane %v2793, 5
        %v2926 = vrot.slane %v2925, 4
        %v2927 = vrot.slane %v2794, 5
        %v2928 = vsel %vm1917, %v2926, %v2927
        %v2929 = vrot.slane %v2927, 4
        %v2930 = vrot.slane %v2795, 5
        %v2931 = vsel %vm1917, %v2929, %v2930
        %v2932 = vrot.slane %v2796, 5
        %v2933 = vrot.slane %v2932, 4
        %v2934 = vrot.slane %v2797, 5
        %v2935 = vsel %vm1917, %v2933, %v2934
        %v2936 = vrot.slane %v2934, 4
        %v2937 = vrot.slane %v2798, 5
        %v2938 = vsel %vm1917, %v2936, %v2937
        %v2939 = vrot.slane %v2799, 5
        %v2940 = vrot.slane %v2939, 4
        %v2941 = vrot.slane %v2800, 5
        %v2942 = vsel %vm1917, %v2940, %v2941
        %v2943 = vrot.slane %v2941, 4
        %v2944 = vrot.slane %v2801, 5
        %v2945 = vsel %vm1917, %v2943, %v2944
        %v2946 = vrot.slane %v2802, 5
        %v2947 = vrot.slane %v2946, 4
        %v2948 = vrot.slane %v2803, 5
        %v2949 = vsel %vm1917, %v2947, %v2948
        %v2950 = vrot.slane %v2948, 4
        %v2951 = vrot.slane %v2804, 5
        %v2952 = vsel %vm1917, %v2950, %v2951
        %v2953 = vrot.slane %v2805, 5
        %v2954 = vrot.slane %v2953, 4
        %v2955 = vrot.slane %v2806, 5
        %v2956 = vsel %vm1917, %v2954, %v2955
        %v2957 = vrot.slane %v2955, 4
        %v2958 = vrot.slane %v2807, 5
        %v2959 = vsel %vm1917, %v2957, %v2958
        %v2960 = vrot.slane %v2808, 5
        %v2961 = vrot.slane %v2960, 4
        %v2962 = vrot.slane %v2809, 5
        %v2963 = vsel %vm1917, %v2961, %v2962
        %v2964 = vrot.slane %v2962, 4
        %v2965 = vrot.slane %v2810, 5
        %v2966 = vsel %vm1917, %v2964, %v2965
        %v2967 = vrot.slane %v2811, 5
        %v2968 = vrot.slane %v2967, 4
        %v2969 = vrot.slane %v2812, 5
        %v2970 = vsel %vm1917, %v2968, %v2969
        %v2971 = vrot.slane %v2969, 4
        %v2972 = vrot.slane %v2813, 5
        %v2973 = vsel %vm1917, %v2971, %v2972
        %3006 = vst [vmem:[#allocation3 + $0x8] sm:$0xf] %v2865
        %3007 = vst [vmem:[#allocation3 + $0x14] sm:$0xf] %v2868
        %3008 = vst [vmem:[#allocation3 + $0x20] sm:$0xf] %v2872
        %3009 = vst [vmem:[#allocation3 + $0x2c] sm:$0xf] %v2875
        %3010 = vst [vmem:[#allocation3 + $0x38] sm:$0xf] %v2879
        %3011 = vst [vmem:[#allocation3 + $0x44] sm:$0xf] %v2882
        %3012 = vst [vmem:[#allocation3 + $0x50] sm:$0xf] %v2886
        %3013 = vst [vmem:[#allocation3 + $0x5c] sm:$0xf] %v2889
        %3014 = vst [vmem:[#allocation3 + $0x68] sm:$0xf] %v2893
        %3015 = vst [vmem:[#allocation3 + $0x74] sm:$0xf] %v2896
        %3016 = vst [vmem:[#allocation3 + $0x80] sm:$0xf] %v2900
        %3017 = vst [vmem:[#allocation3 + $0x8c] sm:$0xf] %v2903
        %3018 = vst [vmem:[#allocation3 + $0x98] sm:$0xf] %v2907
        %3019 = vst [vmem:[#allocation3 + $0xa4] sm:$0xf] %v2910
        %3020 = vst [vmem:[#allocation3 + $0xb0] sm:$0xf] %v2914
        %3021 = vst [vmem:[#allocation3 + $0xbc] sm:$0xf] %v2917
        %3022 = vst [vmem:[#allocation3 + $0xc8] sm:$0xf] %v2921
        %3023 = vst [vmem:[#allocation3 + $0xd4] sm:$0xf] %v2924
        %3024 = vst [vmem:[#allocation3 + $0xe0] sm:$0xf] %v2928
        %3025 = vst [vmem:[#allocation3 + $0xec] sm:$0xf] %v2931
        %3026 = vst [vmem:[#allocation3 + $0xf8] sm:$0xf] %v2935
        %3027 = vst [vmem:[#allocation3 + $0x104] sm:$0xf] %v2938
        %3028 = vst [vmem:[#allocation3 + $0x110] sm:$0xf] %v2942
        %3029 = vst [vmem:[#allocation3 + $0x11c] sm:$0xf] %v2945
        %3030 = vst [vmem:[#allocation3 + $0x128] sm:$0xf] %v2949
        %3031 = vst [vmem:[#allocation3 + $0x134] sm:$0xf] %v2952
        %3032 = vst [vmem:[#allocation3 + $0x140] sm:$0xf] %v2956
        %3033 = vst [vmem:[#allocation3 + $0x14c] sm:$0xf] %v2959
        %3034 = vst [vmem:[#allocation3 + $0x158] sm:$0xf] %v2963
        %3035 = vst [vmem:[#allocation3 + $0x164] sm:$0xf] %v2966
        %3036 = vst [vmem:[#allocation3 + $0x170] sm:$0xf] %v2970
        %3037 = vst [vmem:[#allocation3 + $0x17c] sm:$0xf] %v2973
        %v3038 = vld [vmem:[#allocation3] sm:$0xff]
        %v3039 = vld [vmem:[#allocation3 + $0x8] sm:$0xf]
        %v3040 = vld [vmem:[#allocation3 + $0xc] sm:$0xff]
        %v3041 = vld [vmem:[#allocation3 + $0x14] sm:$0xf]
        %v3042 = vld [vmem:[#allocation3 + $0x18] sm:$0xff]
        %v3043 = vld [vmem:[#allocation3 + $0x20] sm:$0xf]
        %v3044 = vld [vmem:[#allocation3 + $0x24] sm:$0xff]
        %v3045 = vld [vmem:[#allocation3 + $0x2c] sm:$0xf]
        %v3046 = vld [vmem:[#allocation3 + $0x30] sm:$0xff]
        %v3047 = vld [vmem:[#allocation3 + $0x38] sm:$0xf]
        %v3048 = vld [vmem:[#allocation3 + $0x3c] sm:$0xff]
        %v3049 = vld [vmem:[#allocation3 + $0x44] sm:$0xf]
        %v3050 = vld [vmem:[#allocation3 + $0x48] sm:$0xff]
        %v3051 = vld [vmem:[#allocation3 + $0x50] sm:$0xf]
        %v3052 = vld [vmem:[#allocation3 + $0x54] sm:$0xff]
        %v3053 = vld [vmem:[#allocation3 + $0x5c] sm:$0xf]
        %v3054 = vld [vmem:[#allocation3 + $0x60] sm:$0xff]
        %v3055 = vld [vmem:[#allocation3 + $0x68] sm:$0xf]
        %v3056 = vld [vmem:[#allocation3 + $0x6c] sm:$0xff]
        %v3057 = vld [vmem:[#allocation3 + $0x74] sm:$0xf]
        %v3058 = vld [vmem:[#allocation3 + $0x78] sm:$0xff]
        %v3059 = vld [vmem:[#allocation3 + $0x80] sm:$0xf]
        %v3060 = vld [vmem:[#allocation3 + $0x84] sm:$0xff]
        %v3061 = vld [vmem:[#allocation3 + $0x8c] sm:$0xf]
        %v3062 = vld [vmem:[#allocation3 + $0x90] sm:$0xff]
        %v3063 = vld [vmem:[#allocation3 + $0x98] sm:$0xf]
        %v3064 = vld [vmem:[#allocation3 + $0x9c] sm:$0xff]
        %v3065 = vld [vmem:[#allocation3 + $0xa4] sm:$0xf]
        %v3066 = vld [vmem:[#allocation3 + $0xa8] sm:$0xff]
        %v3067 = vld [vmem:[#allocation3 + $0xb0] sm:$0xf]
        %v3068 = vld [vmem:[#allocation3 + $0xb4] sm:$0xff]
        %v3069 = vld [vmem:[#allocation3 + $0xbc] sm:$0xf]
        %v3070 = vld [vmem:[#allocation3 + $0xc0] sm:$0xff]
        %v3071 = vld [vmem:[#allocation3 + $0xc8] sm:$0xf]
        %v3072 = vld [vmem:[#allocation3 + $0xcc] sm:$0xff]
        %v3073 = vld [vmem:[#allocation3 + $0xd4] sm:$0xf]
        %v3074 = vld [vmem:[#allocation3 + $0xd8] sm:$0xff]
        %v3075 = vld [vmem:[#allocation3 + $0xe0] sm:$0xf]
        %v3076 = vld [vmem:[#allocation3 + $0xe4] sm:$0xff]
        %v3077 = vld [vmem:[#allocation3 + $0xec] sm:$0xf]
        %v3078 = vld [vmem:[#allocation3 + $0xf0] sm:$0xff]
        %v3079 = vld [vmem:[#allocation3 + $0xf8] sm:$0xf]
        %v3080 = vld [vmem:[#allocation3 + $0xfc] sm:$0xff]
        %v3081 = vld [vmem:[#allocation3 + $0x104] sm:$0xf]
        %v3082 = vld [vmem:[#allocation3 + $0x108] sm:$0xff]
        %v3083 = vld [vmem:[#allocation3 + $0x110] sm:$0xf]
        %v3084 = vld [vmem:[#allocation3 + $0x114] sm:$0xff]
        %v3085 = vld [vmem:[#allocation3 + $0x11c] sm:$0xf]
        %v3086 = vld [vmem:[#allocation3 + $0x120] sm:$0xff]
        %v3087 = vld [vmem:[#allocation3 + $0x128] sm:$0xf]
        %v3088 = vld [vmem:[#allocation3 + $0x12c] sm:$0xff]
        %v3089 = vld [vmem:[#allocation3 + $0x134] sm:$0xf]
        %v3090 = vld [vmem:[#allocation3 + $0x138] sm:$0xff]
        %v3091 = vld [vmem:[#allocation3 + $0x140] sm:$0xf]
        %v3092 = vld [vmem:[#allocation3 + $0x144] sm:$0xff]
        %v3093 = vld [vmem:[#allocation3 + $0x14c] sm:$0xf]
        %v3094 = vld [vmem:[#allocation3 + $0x150] sm:$0xff]
        %v3095 = vld [vmem:[#allocation3 + $0x158] sm:$0xf]
        %v3096 = vld [vmem:[#allocation3 + $0x15c] sm:$0xff]
        %v3097 = vld [vmem:[#allocation3 + $0x164] sm:$0xf]
        %v3098 = vld [vmem:[#allocation3 + $0x168] sm:$0xff]
        %v3099 = vld [vmem:[#allocation3 + $0x170] sm:$0xf]
        %v3100 = vld [vmem:[#allocation3 + $0x174] sm:$0xff]
        %v3101 = vld [vmem:[#allocation3 + $0x17c] sm:$0xf]
        %v3102 = vld [vmem:[#allocation9 + $0xc0] sm:$0xf]
        %v3103 = vld [vmem:[#allocation9 + $0xc4] sm:$0xf]
        %v3104 = vld [vmem:[#allocation9 + $0xc8] sm:$0xf]
        %v3105 = vld [vmem:[#allocation9 + $0xcc] sm:$0xf]
        %v3106 = vld [vmem:[#allocation9 + $0xd0] sm:$0xf]
        %v3107 = vld [vmem:[#allocation9 + $0xd4] sm:$0xf]
        %v3108 = vld [vmem:[#allocation9 + $0xd8] sm:$0xf]
        %v3109 = vld [vmem:[#allocation9 + $0xdc] sm:$0xf]
        %v3110 = vld [vmem:[#allocation9 + $0xe0] sm:$0xf]
        %v3111 = vld [vmem:[#allocation9 + $0xe4] sm:$0xf]
        %v3112 = vld [vmem:[#allocation9 + $0xe8] sm:$0xf]
        %v3113 = vld [vmem:[#allocation9 + $0xec] sm:$0xf]
        %v3114 = vld [vmem:[#allocation9 + $0xf0] sm:$0xf]
        %v3115 = vld [vmem:[#allocation9 + $0xf4] sm:$0xf]
        %v3116 = vld [vmem:[#allocation9 + $0xf8] sm:$0xf]
        %v3117 = vld [vmem:[#allocation9 + $0xfc] sm:$0xf]
        %v3118 = vld [vmem:[#allocation9 + $0x100] sm:$0xf]
        %v3119 = vld [vmem:[#allocation9 + $0x104] sm:$0xf]
        %v3120 = vld [vmem:[#allocation9 + $0x108] sm:$0xf]
        %v3121 = vld [vmem:[#allocation9 + $0x10c] sm:$0xf]
        %v3122 = vld [vmem:[#allocation9 + $0x110] sm:$0xf]
        %v3123 = vld [vmem:[#allocation9 + $0x114] sm:$0xf]
        %v3124 = vld [vmem:[#allocation9 + $0x118] sm:$0xf]
        %v3125 = vld [vmem:[#allocation9 + $0x11c] sm:$0xf]
        %v3126 = vld [vmem:[#allocation9 + $0x120] sm:$0xf]
        %v3127 = vld [vmem:[#allocation9 + $0x124] sm:$0xf]
        %v3128 = vld [vmem:[#allocation9 + $0x128] sm:$0xf]
        %v3129 = vld [vmem:[#allocation9 + $0x12c] sm:$0xf]
        %v3130 = vld [vmem:[#allocation9 + $0x130] sm:$0xf]
        %v3131 = vld [vmem:[#allocation9 + $0x134] sm:$0xf]
        %v3132 = vld [vmem:[#allocation9 + $0x138] sm:$0xf]
        %v3133 = vld [vmem:[#allocation9 + $0x13c] sm:$0xf]
        %v3134 = vld [vmem:[#allocation9 + $0x140] sm:$0xf]
        %v3135 = vld [vmem:[#allocation9 + $0x144] sm:$0xf]
        %v3136 = vld [vmem:[#allocation9 + $0x148] sm:$0xf]
        %v3137 = vld [vmem:[#allocation9 + $0x14c] sm:$0xf]
        %v3138 = vld [vmem:[#allocation9 + $0x150] sm:$0xf]
        %v3139 = vld [vmem:[#allocation9 + $0x154] sm:$0xf]
        %v3140 = vld [vmem:[#allocation9 + $0x158] sm:$0xf]
        %v3141 = vld [vmem:[#allocation9 + $0x15c] sm:$0xf]
        %v3142 = vld [vmem:[#allocation9 + $0x160] sm:$0xf]
        %v3143 = vld [vmem:[#allocation9 + $0x164] sm:$0xf]
        %v3144 = vld [vmem:[#allocation9 + $0x168] sm:$0xf]
        %v3145 = vld [vmem:[#allocation9 + $0x16c] sm:$0xf]
        %v3146 = vld [vmem:[#allocation9 + $0x170] sm:$0xf]
        %v3147 = vld [vmem:[#allocation9 + $0x174] sm:$0xf]
        %v3148 = vld [vmem:[#allocation9 + $0x178] sm:$0xf]
        %v3149 = vld [vmem:[#allocation9 + $0x17c] sm:$0xf]
        %v3214 = vunpack.c.l.b16 %v3038
        %v3215 = vunpack.c.h.b16 %v3038
        %v3216 = vunpack.c.l.b16 %v3039
        %v3217 = vunpack.c.l.b16 %v3040
        %v3218 = vunpack.c.h.b16 %v3040
        %v3219 = vunpack.c.l.b16 %v3041
        %v3220 = vunpack.c.l.b16 %v3042
        %v3221 = vunpack.c.h.b16 %v3042
        %v3222 = vunpack.c.l.b16 %v3043
        %v3223 = vunpack.c.l.b16 %v3044
        %v3224 = vunpack.c.h.b16 %v3044
        %v3225 = vunpack.c.l.b16 %v3045
        %v3226 = vunpack.c.l.b16 %v3046
        %v3227 = vunpack.c.h.b16 %v3046
        %v3228 = vunpack.c.l.b16 %v3047
        %v3229 = vunpack.c.l.b16 %v3048
        %v3230 = vunpack.c.h.b16 %v3048
        %v3231 = vunpack.c.l.b16 %v3049
        %v3232 = vunpack.c.l.b16 %v3050
        %v3233 = vunpack.c.h.b16 %v3050
        %v3234 = vunpack.c.l.b16 %v3051
        %v3235 = vunpack.c.l.b16 %v3052
        %v3236 = vunpack.c.h.b16 %v3052
        %v3237 = vunpack.c.l.b16 %v3053
        %v3238 = vunpack.c.l.b16 %v3054
        %v3239 = vunpack.c.h.b16 %v3054
        %v3240 = vunpack.c.l.b16 %v3055
        %v3241 = vunpack.c.l.b16 %v3056
        %v3242 = vunpack.c.h.b16 %v3056
        %v3243 = vunpack.c.l.b16 %v3057
        %v3244 = vunpack.c.l.b16 %v3058
        %v3245 = vunpack.c.h.b16 %v3058
        %v3246 = vunpack.c.l.b16 %v3059
        %v3247 = vunpack.c.l.b16 %v3060
        %v3248 = vunpack.c.h.b16 %v3060
        %v3249 = vunpack.c.l.b16 %v3061
        %v3250 = vunpack.c.l.b16 %v3062
        %v3251 = vunpack.c.h.b16 %v3062
        %v3252 = vunpack.c.l.b16 %v3063
        %v3253 = vunpack.c.l.b16 %v3064
        %v3254 = vunpack.c.h.b16 %v3064
        %v3255 = vunpack.c.l.b16 %v3065
        %v3256 = vunpack.c.l.b16 %v3066
        %v3257 = vunpack.c.h.b16 %v3066
        %v3258 = vunpack.c.l.b16 %v3067
        %v3259 = vunpack.c.l.b16 %v3068
        %v3260 = vunpack.c.h.b16 %v3068
        %v3261 = vunpack.c.l.b16 %v3069
        %v3262 = vunpack.c.l.b16 %v3070
        %v3263 = vunpack.c.h.b16 %v3070
        %v3264 = vunpack.c.l.b16 %v3071
        %v3265 = vunpack.c.l.b16 %v3072
        %v3266 = vunpack.c.h.b16 %v3072
        %v3267 = vunpack.c.l.b16 %v3073
        %v3268 = vunpack.c.l.b16 %v3074
        %v3269 = vunpack.c.h.b16 %v3074
        %v3270 = vunpack.c.l.b16 %v3075
        %v3271 = vunpack.c.l.b16 %v3076
        %v3272 = vunpack.c.h.b16 %v3076
        %v3273 = vunpack.c.l.b16 %v3077
        %v3274 = vunpack.c.l.b16 %v3078
        %v3275 = vunpack.c.h.b16 %v3078
        %v3276 = vunpack.c.l.b16 %v3079
        %v3277 = vunpack.c.l.b16 %v3080
        %v3278 = vunpack.c.h.b16 %v3080
        %v3279 = vunpack.c.l.b16 %v3081
        %v3280 = vunpack.c.l.b16 %v3082
        %v3281 = vunpack.c.h.b16 %v3082
        %v3282 = vunpack.c.l.b16 %v3083
        %v3283 = vunpack.c.l.b16 %v3084
        %v3284 = vunpack.c.h.b16 %v3084
        %v3285 = vunpack.c.l.b16 %v3085
        %v3286 = vunpack.c.l.b16 %v3086
        %v3287 = vunpack.c.h.b16 %v3086
        %v3288 = vunpack.c.l.b16 %v3087
        %v3289 = vunpack.c.l.b16 %v3088
        %v3290 = vunpack.c.h.b16 %v3088
        %v3291 = vunpack.c.l.b16 %v3089
        %v3292 = vunpack.c.l.b16 %v3090
        %v3293 = vunpack.c.h.b16 %v3090
        %v3294 = vunpack.c.l.b16 %v3091
        %v3295 = vunpack.c.l.b16 %v3092
        %v3296 = vunpack.c.h.b16 %v3092
        %v3297 = vunpack.c.l.b16 %v3093
        %v3298 = vunpack.c.l.b16 %v3094
        %v3299 = vunpack.c.h.b16 %v3094
        %v3300 = vunpack.c.l.b16 %v3095
        %v3301 = vunpack.c.l.b16 %v3096
        %v3302 = vunpack.c.h.b16 %v3096
        %v3303 = vunpack.c.l.b16 %v3097
        %v3304 = vunpack.c.l.b16 %v3098
        %v3305 = vunpack.c.h.b16 %v3098
        %v3306 = vunpack.c.l.b16 %v3099
        %v3307 = vunpack.c.l.b16 %v3100
        %v3308 = vunpack.c.h.b16 %v3100
        %v3309 = vunpack.c.l.b16 %v3101
        %v3310 = vpack.c.b16 %v3217, %v3214
        %v3311 = vpack.c.b16 %v3218, %v3215
        %v3312 = vpack.c.b16 %v3219, %v3216
        %v3313 = vpack.c.b16 %v3223, %v3220
        %v3314 = vpack.c.b16 %v3224, %v3221
        %v3315 = vpack.c.b16 %v3225, %v3222
        %v3316 = vpack.c.b16 %v3229, %v3226
        %v3317 = vpack.c.b16 %v3230, %v3227
        %v3318 = vpack.c.b16 %v3231, %v3228
        %v3319 = vpack.c.b16 %v3235, %v3232
        %v3320 = vpack.c.b16 %v3236, %v3233
        %v3321 = vpack.c.b16 %v3237, %v3234
        %v3322 = vpack.c.b16 %v3241, %v3238
        %v3323 = vpack.c.b16 %v3242, %v3239
        %v3324 = vpack.c.b16 %v3243, %v3240
        %v3325 = vpack.c.b16 %v3247, %v3244
        %v3326 = vpack.c.b16 %v3248, %v3245
        %v3327 = vpack.c.b16 %v3249, %v3246
        %v3328 = vpack.c.b16 %v3253, %v3250
        %v3329 = vpack.c.b16 %v3254, %v3251
        %v3330 = vpack.c.b16 %v3255, %v3252
        %v3331 = vpack.c.b16 %v3259, %v3256
        %v3332 = vpack.c.b16 %v3260, %v3257
        %v3333 = vpack.c.b16 %v3261, %v3258
        %v3334 = vpack.c.b16 %v3265, %v3262
        %v3335 = vpack.c.b16 %v3266, %v3263
        %v3336 = vpack.c.b16 %v3267, %v3264
        %v3337 = vpack.c.b16 %v3271, %v3268
        %v3338 = vpack.c.b16 %v3272, %v3269
        %v3339 = vpack.c.b16 %v3273, %v3270
        %v3340 = vpack.c.b16 %v3277, %v3274
        %v3341 = vpack.c.b16 %v3278, %v3275
        %v3342 = vpack.c.b16 %v3279, %v3276
        %v3343 = vpack.c.b16 %v3283, %v3280
        %v3344 = vpack.c.b16 %v3284, %v3281
        %v3345 = vpack.c.b16 %v3285, %v3282
        %v3346 = vpack.c.b16 %v3289, %v3286
        %v3347 = vpack.c.b16 %v3290, %v3287
        %v3348 = vpack.c.b16 %v3291, %v3288
        %v3349 = vpack.c.b16 %v3295, %v3292
        %v3350 = vpack.c.b16 %v3296, %v3293
        %v3351 = vpack.c.b16 %v3297, %v3294
        %v3352 = vpack.c.b16 %v3301, %v3298
        %v3353 = vpack.c.b16 %v3302, %v3299
        %v3354 = vpack.c.b16 %v3303, %v3300
        %v3355 = vpack.c.b16 %v3307, %v3304
        %v3356 = vpack.c.b16 %v3308, %v3305
        %v3357 = vpack.c.b16 %v3309, %v3306
        %v3454 = vunpack.c.l.b16 %v3102
        %v3455 = vunpack.c.l.b16 %v3103
        %v3456 = vunpack.c.l.b16 %v3104
        %v3457 = vunpack.c.l.b16 %v3105
        %v3458 = vunpack.c.l.b16 %v3106
        %v3459 = vunpack.c.l.b16 %v3107
        %v3460 = vunpack.c.l.b16 %v3108
        %v3461 = vunpack.c.l.b16 %v3109
        %v3462 = vunpack.c.l.b16 %v3110
        %v3463 = vunpack.c.l.b16 %v3111
        %v3464 = vunpack.c.l.b16 %v3112
        %v3465 = vunpack.c.l.b16 %v3113
        %v3466 = vunpack.c.l.b16 %v3114
        %v3467 = vunpack.c.l.b16 %v3115
        %v3468 = vunpack.c.l.b16 %v3116
        %v3469 = vunpack.c.l.b16 %v3117
        %v3470 = vunpack.c.l.b16 %v3118
        %v3471 = vunpack.c.l.b16 %v3119
        %v3472 = vunpack.c.l.b16 %v3120
        %v3473 = vunpack.c.l.b16 %v3121
        %v3474 = vunpack.c.l.b16 %v3122
        %v3475 = vunpack.c.l.b16 %v3123
        %v3476 = vunpack.c.l.b16 %v3124
        %v3477 = vunpack.c.l.b16 %v3125
        %v3478 = vunpack.c.l.b16 %v3126
        %v3479 = vunpack.c.l.b16 %v3127
        %v3480 = vunpack.c.l.b16 %v3128
        %v3481 = vunpack.c.l.b16 %v3129
        %v3482 = vunpack.c.l.b16 %v3130
        %v3483 = vunpack.c.l.b16 %v3131
        %v3484 = vunpack.c.l.b16 %v3132
        %v3485 = vunpack.c.l.b16 %v3133
        %v3486 = vunpack.c.l.b16 %v3134
        %v3487 = vunpack.c.l.b16 %v3135
        %v3488 = vunpack.c.l.b16 %v3136
        %v3489 = vunpack.c.l.b16 %v3137
        %v3490 = vunpack.c.l.b16 %v3138
        %v3491 = vunpack.c.l.b16 %v3139
        %v3492 = vunpack.c.l.b16 %v3140
        %v3493 = vunpack.c.l.b16 %v3141
        %v3494 = vunpack.c.l.b16 %v3142
        %v3495 = vunpack.c.l.b16 %v3143
        %v3496 = vunpack.c.l.b16 %v3144
        %v3497 = vunpack.c.l.b16 %v3145
        %v3498 = vunpack.c.l.b16 %v3146
        %v3499 = vunpack.c.l.b16 %v3147
        %v3500 = vunpack.c.l.b16 %v3148
        %v3501 = vunpack.c.l.b16 %v3149
        %v3502 = vpack.c.b16 %v3455, %v3454
        %v3503 = vpack.c.b16 %v3457, %v3456
        %v3504 = vpack.c.b16 %v3459, %v3458
        %v3505 = vpack.c.b16 %v3461, %v3460
        %v3506 = vpack.c.b16 %v3463, %v3462
        %v3507 = vpack.c.b16 %v3465, %v3464
        %v3508 = vpack.c.b16 %v3467, %v3466
        %v3509 = vpack.c.b16 %v3469, %v3468
        %v3510 = vpack.c.b16 %v3471, %v3470
        %v3511 = vpack.c.b16 %v3473, %v3472
        %v3512 = vpack.c.b16 %v3475, %v3474
        %v3513 = vpack.c.b16 %v3477, %v3476
        %v3514 = vpack.c.b16 %v3479, %v3478
        %v3515 = vpack.c.b16 %v3481, %v3480
        %v3516 = vpack.c.b16 %v3483, %v3482
        %v3517 = vpack.c.b16 %v3485, %v3484
        %v3518 = vpack.c.b16 %v3487, %v3486
        %v3519 = vpack.c.b16 %v3489, %v3488
        %v3520 = vpack.c.b16 %v3491, %v3490
        %v3521 = vpack.c.b16 %v3493, %v3492
        %v3522 = vpack.c.b16 %v3495, %v3494
        %v3523 = vpack.c.b16 %v3497, %v3496
        %v3524 = vpack.c.b16 %v3499, %v3498
        %v3525 = vpack.c.b16 %v3501, %v3500
        %3550 = vmatpush.bf16.msra.mxu0 %v3509
        %3551 = vmatpush.bf16.msra.mxu0 %v3508
        %3552 = vmatpush.bf16.msra.mxu0 %v3507
        %3553 = vmatpush.bf16.msra.mxu0 %v3506
        %3554 = vmatpush.bf16.msra.mxu0 %v3505
        %3555 = vmatpush.bf16.msra.mxu0 %v3504
        %3556 = vmatpush.bf16.msra.mxu0 %v3503
        %3557 = vmatpush.bf16.msra.mxu0 %v3502
        %3558 = vmatmul.bf16.gmra.mxu0 %v3310
        %v3559 = vpop.f32.mrf.mxu0
        %v3560 = vadd.f32 0.0, %v3559
        %v3561 = vpop.f32.mrf.mxu0
        %v3562 = vadd.f32 0.0, %v3561
        %3563 = vmatmul.bf16.gmra.mxu0 %v3313
        %v3564 = vpop.f32.mrf.mxu0
        %v3565 = vadd.f32 0.0, %v3564
        %v3566 = vpop.f32.mrf.mxu0
        %v3567 = vadd.f32 0.0, %v3566
        %3568 = vmatmul.bf16.gmra.mxu0 %v3316
        %v3569 = vpop.f32.mrf.mxu0
        %v3570 = vadd.f32 0.0, %v3569
        %v3571 = vpop.f32.mrf.mxu0
        %v3572 = vadd.f32 0.0, %v3571
        %3573 = vmatmul.bf16.gmra.mxu0 %v3319
        %v3574 = vpop.f32.mrf.mxu0
        %v3575 = vadd.f32 0.0, %v3574
        %v3576 = vpop.f32.mrf.mxu0
        %v3577 = vadd.f32 0.0, %v3576
        %3578 = vmatmul.bf16.gmra.mxu0 %v3322
        %v3579 = vpop.f32.mrf.mxu0
        %v3580 = vadd.f32 0.0, %v3579
        %v3581 = vpop.f32.mrf.mxu0
        %v3582 = vadd.f32 0.0, %v3581
        %3583 = vmatmul.bf16.gmra.mxu0 %v3325
        %v3584 = vpop.f32.mrf.mxu0
        %v3585 = vadd.f32 0.0, %v3584
        %v3586 = vpop.f32.mrf.mxu0
        %v3587 = vadd.f32 0.0, %v3586
        %3588 = vmatmul.bf16.gmra.mxu0 %v3328
        %v3589 = vpop.f32.mrf.mxu0
        %v3590 = vadd.f32 0.0, %v3589
        %v3591 = vpop.f32.mrf.mxu0
        %v3592 = vadd.f32 0.0, %v3591
        %3593 = vmatmul.bf16.gmra.mxu0 %v3331
        %v3594 = vpop.f32.mrf.mxu0
        %v3595 = vadd.f32 0.0, %v3594
        %v3596 = vpop.f32.mrf.mxu0
        %v3597 = vadd.f32 0.0, %v3596
        %3598 = vmatmul.bf16.gmra.mxu0 %v3334
        %v3599 = vpop.f32.mrf.mxu0
        %v3600 = vadd.f32 0.0, %v3599
        %v3601 = vpop.f32.mrf.mxu0
        %v3602 = vadd.f32 0.0, %v3601
        %3603 = vmatmul.bf16.gmra.mxu0 %v3337
        %v3604 = vpop.f32.mrf.mxu0
        %v3605 = vadd.f32 0.0, %v3604
        %v3606 = vpop.f32.mrf.mxu0
        %v3607 = vadd.f32 0.0, %v3606
        %3608 = vmatmul.bf16.gmra.mxu0 %v3340
        %v3609 = vpop.f32.mrf.mxu0
        %v3610 = vadd.f32 0.0, %v3609
        %v3611 = vpop.f32.mrf.mxu0
        %v3612 = vadd.f32 0.0, %v3611
        %3613 = vmatmul.bf16.gmra.mxu0 %v3343
        %v3614 = vpop.f32.mrf.mxu0
        %v3615 = vadd.f32 0.0, %v3614
        %v3616 = vpop.f32.mrf.mxu0
        %v3617 = vadd.f32 0.0, %v3616
        %3618 = vmatmul.bf16.gmra.mxu0 %v3346
        %v3619 = vpop.f32.mrf.mxu0
        %v3620 = vadd.f32 0.0, %v3619
        %v3621 = vpop.f32.mrf.mxu0
        %v3622 = vadd.f32 0.0, %v3621
        %3623 = vmatmul.bf16.gmra.mxu0 %v3349
        %v3624 = vpop.f32.mrf.mxu0
        %v3625 = vadd.f32 0.0, %v3624
        %v3626 = vpop.f32.mrf.mxu0
        %v3627 = vadd.f32 0.0, %v3626
        %3628 = vmatmul.bf16.gmra.mxu0 %v3352
        %v3629 = vpop.f32.mrf.mxu0
        %v3630 = vadd.f32 0.0, %v3629
        %v3631 = vpop.f32.mrf.mxu0
        %v3632 = vadd.f32 0.0, %v3631
        %3633 = vmatmul.bf16.gmra.mxu0 %v3355
        %v3634 = vpop.f32.mrf.mxu0
        %v3635 = vadd.f32 0.0, %v3634
        %v3636 = vpop.f32.mrf.mxu0
        %v3637 = vadd.f32 0.0, %v3636
        %3638 = vdwg.mxu0
        %3639 = vmatpush.bf16.msra.mxu0 %v3517
        %3640 = vmatpush.bf16.msra.mxu0 %v3516
        %3641 = vmatpush.bf16.msra.mxu0 %v3515
        %3642 = vmatpush.bf16.msra.mxu0 %v3514
        %3643 = vmatpush.bf16.msra.mxu0 %v3513
        %3644 = vmatpush.bf16.msra.mxu0 %v3512
        %3645 = vmatpush.bf16.msra.mxu0 %v3511
        %3646 = vmatpush.bf16.msra.mxu0 %v3510
        %3647 = vmatmul.bf16.gmra.mxu0 %v3311
        %v3648 = vpop.f32.mrf.mxu0
        %v3649 = vadd.f32 %v3560, %v3648
        %v3650 = vpop.f32.mrf.mxu0
        %v3651 = vadd.f32 %v3562, %v3650
        %3652 = vmatmul.bf16.gmra.mxu0 %v3314
        %v3653 = vpop.f32.mrf.mxu0
        %v3654 = vadd.f32 %v3565, %v3653
        %v3655 = vpop.f32.mrf.mxu0
        %v3656 = vadd.f32 %v3567, %v3655
        %3657 = vmatmul.bf16.gmra.mxu0 %v3317
        %v3658 = vpop.f32.mrf.mxu0
        %v3659 = vadd.f32 %v3570, %v3658
        %v3660 = vpop.f32.mrf.mxu0
        %v3661 = vadd.f32 %v3572, %v3660
        %3662 = vmatmul.bf16.gmra.mxu0 %v3320
        %v3663 = vpop.f32.mrf.mxu0
        %v3664 = vadd.f32 %v3575, %v3663
        %v3665 = vpop.f32.mrf.mxu0
        %v3666 = vadd.f32 %v3577, %v3665
        %3667 = vmatmul.bf16.gmra.mxu0 %v3323
        %v3668 = vpop.f32.mrf.mxu0
        %v3669 = vadd.f32 %v3580, %v3668
        %v3670 = vpop.f32.mrf.mxu0
        %v3671 = vadd.f32 %v3582, %v3670
        %3672 = vmatmul.bf16.gmra.mxu0 %v3326
        %v3673 = vpop.f32.mrf.mxu0
        %v3674 = vadd.f32 %v3585, %v3673
        %v3675 = vpop.f32.mrf.mxu0
        %v3676 = vadd.f32 %v3587, %v3675
        %3677 = vmatmul.bf16.gmra.mxu0 %v3329
        %v3678 = vpop.f32.mrf.mxu0
        %v3679 = vadd.f32 %v3590, %v3678
        %v3680 = vpop.f32.mrf.mxu0
        %v3681 = vadd.f32 %v3592, %v3680
        %3682 = vmatmul.bf16.gmra.mxu0 %v3332
        %v3683 = vpop.f32.mrf.mxu0
        %v3684 = vadd.f32 %v3595, %v3683
        %v3685 = vpop.f32.mrf.mxu0
        %v3686 = vadd.f32 %v3597, %v3685
        %3687 = vmatmul.bf16.gmra.mxu0 %v3335
        %v3688 = vpop.f32.mrf.mxu0
        %v3689 = vadd.f32 %v3600, %v3688
        %v3690 = vpop.f32.mrf.mxu0
        %v3691 = vadd.f32 %v3602, %v3690
        %3692 = vmatmul.bf16.gmra.mxu0 %v3338
        %v3693 = vpop.f32.mrf.mxu0
        %v3694 = vadd.f32 %v3605, %v3693
        %v3695 = vpop.f32.mrf.mxu0
        %v3696 = vadd.f32 %v3607, %v3695
        %3697 = vmatmul.bf16.gmra.mxu0 %v3341
        %v3698 = vpop.f32.mrf.mxu0
        %v3699 = vadd.f32 %v3610, %v3698
        %v3700 = vpop.f32.mrf.mxu0
        %v3701 = vadd.f32 %v3612, %v3700
        %3702 = vmatmul.bf16.gmra.mxu0 %v3344
        %v3703 = vpop.f32.mrf.mxu0
        %v3704 = vadd.f32 %v3615, %v3703
        %v3705 = vpop.f32.mrf.mxu0
        %v3706 = vadd.f32 %v3617, %v3705
        %3707 = vmatmul.bf16.gmra.mxu0 %v3347
        %v3708 = vpop.f32.mrf.mxu0
        %v3709 = vadd.f32 %v3620, %v3708
        %v3710 = vpop.f32.mrf.mxu0
        %v3711 = vadd.f32 %v3622, %v3710
        %3712 = vmatmul.bf16.gmra.mxu0 %v3350
        %v3713 = vpop.f32.mrf.mxu0
        %v3714 = vadd.f32 %v3625, %v3713
        %v3715 = vpop.f32.mrf.mxu0
        %v3716 = vadd.f32 %v3627, %v3715
        %3717 = vmatmul.bf16.gmra.mxu0 %v3353
        %v3718 = vpop.f32.mrf.mxu0
        %v3719 = vadd.f32 %v3630, %v3718
        %v3720 = vpop.f32.mrf.mxu0
        %v3721 = vadd.f32 %v3632, %v3720
        %3722 = vmatmul.bf16.gmra.mxu0 %v3356
        %v3723 = vpop.f32.mrf.mxu0
        %v3724 = vadd.f32 %v3635, %v3723
        %v3725 = vpop.f32.mrf.mxu0
        %v3726 = vadd.f32 %v3637, %v3725
        %3727 = vdwg.mxu0
        %3728 = vmatpush.bf16.msra.mxu0 %v3525
        %3729 = vmatpush.bf16.msra.mxu0 %v3524
        %3730 = vmatpush.bf16.msra.mxu0 %v3523
        %3731 = vmatpush.bf16.msra.mxu0 %v3522
        %3732 = vmatpush.bf16.msra.mxu0 %v3521
        %3733 = vmatpush.bf16.msra.mxu0 %v3520
        %3734 = vmatpush.bf16.msra.mxu0 %v3519
        %3735 = vmatpush.bf16.msra.mxu0 %v3518
        %3736 = vmatmul.bf16.gmra.mxu0 %v3312
        %v3737 = vpop.f32.mrf.mxu0
        %v3738 = vadd.f32 %v3649, %v3737
        %v3739 = vpop.f32.mrf.mxu0
        %v3740 = vadd.f32 %v3651, %v3739
        %3741 = vmatmul.bf16.gmra.mxu0 %v3315
        %v3742 = vpop.f32.mrf.mxu0
        %v3743 = vadd.f32 %v3654, %v3742
        %v3744 = vpop.f32.mrf.mxu0
        %v3745 = vadd.f32 %v3656, %v3744
        %3746 = vmatmul.bf16.gmra.mxu0 %v3318
        %v3747 = vpop.f32.mrf.mxu0
        %v3748 = vadd.f32 %v3659, %v3747
        %v3749 = vpop.f32.mrf.mxu0
        %v3750 = vadd.f32 %v3661, %v3749
        %3751 = vmatmul.bf16.gmra.mxu0 %v3321
        %v3752 = vpop.f32.mrf.mxu0
        %v3753 = vadd.f32 %v3664, %v3752
        %v3754 = vpop.f32.mrf.mxu0
        %v3755 = vadd.f32 %v3666, %v3754
        %3756 = vmatmul.bf16.gmra.mxu0 %v3324
        %v3757 = vpop.f32.mrf.mxu0
        %v3758 = vadd.f32 %v3669, %v3757
        %v3759 = vpop.f32.mrf.mxu0
        %v3760 = vadd.f32 %v3671, %v3759
        %3761 = vmatmul.bf16.gmra.mxu0 %v3327
        %v3762 = vpop.f32.mrf.mxu0
        %v3763 = vadd.f32 %v3674, %v3762
        %v3764 = vpop.f32.mrf.mxu0
        %v3765 = vadd.f32 %v3676, %v3764
        %3766 = vmatmul.bf16.gmra.mxu0 %v3330
        %v3767 = vpop.f32.mrf.mxu0
        %v3768 = vadd.f32 %v3679, %v3767
        %v3769 = vpop.f32.mrf.mxu0
        %v3770 = vadd.f32 %v3681, %v3769
        %3771 = vmatmul.bf16.gmra.mxu0 %v3333
        %v3772 = vpop.f32.mrf.mxu0
        %v3773 = vadd.f32 %v3684, %v3772
        %v3774 = vpop.f32.mrf.mxu0
        %v3775 = vadd.f32 %v3686, %v3774
        %3776 = vmatmul.bf16.gmra.mxu0 %v3336
        %v3777 = vpop.f32.mrf.mxu0
        %v3778 = vadd.f32 %v3689, %v3777
        %v3779 = vpop.f32.mrf.mxu0
        %v3780 = vadd.f32 %v3691, %v3779
        %3781 = vmatmul.bf16.gmra.mxu0 %v3339
        %v3782 = vpop.f32.mrf.mxu0
        %v3783 = vadd.f32 %v3694, %v3782
        %v3784 = vpop.f32.mrf.mxu0
        %v3785 = vadd.f32 %v3696, %v3784
        %3786 = vmatmul.bf16.gmra.mxu0 %v3342
        %v3787 = vpop.f32.mrf.mxu0
        %v3788 = vadd.f32 %v3699, %v3787
        %v3789 = vpop.f32.mrf.mxu0
        %v3790 = vadd.f32 %v3701, %v3789
        %3791 = vmatmul.bf16.gmra.mxu0 %v3345
        %v3792 = vpop.f32.mrf.mxu0
        %v3793 = vadd.f32 %v3704, %v3792
        %v3794 = vpop.f32.mrf.mxu0
        %v3795 = vadd.f32 %v3706, %v3794
        %3796 = vmatmul.bf16.gmra.mxu0 %v3348
        %v3797 = vpop.f32.mrf.mxu0
        %v3798 = vadd.f32 %v3709, %v3797
        %v3799 = vpop.f32.mrf.mxu0
        %v3800 = vadd.f32 %v3711, %v3799
        %3801 = vmatmul.bf16.gmra.mxu0 %v3351
        %v3802 = vpop.f32.mrf.mxu0
        %v3803 = vadd.f32 %v3714, %v3802
        %v3804 = vpop.f32.mrf.mxu0
        %v3805 = vadd.f32 %v3716, %v3804
        %3806 = vmatmul.bf16.gmra.mxu0 %v3354
        %v3807 = vpop.f32.mrf.mxu0
        %v3808 = vadd.f32 %v3719, %v3807
        %v3809 = vpop.f32.mrf.mxu0
        %v3810 = vadd.f32 %v3721, %v3809
        %3811 = vmatmul.bf16.gmra.mxu0 %v3357
        %v3812 = vpop.f32.mrf.mxu0
        %v3813 = vadd.f32 %v3724, %v3812
        %v3814 = vpop.f32.mrf.mxu0
        %v3815 = vadd.f32 %v3726, %v3814
        %3816 = vdwg.mxu0
        %v3881 = vunpack.c.l.b16 %v2094
        %v3882 = vunpack.c.h.b16 %v2094
        %v3883 = vunpack.c.l.b16 %v2095
        %v3884 = vunpack.c.l.b16 %v2096
        %v3885 = vunpack.c.h.b16 %v2096
        %v3886 = vunpack.c.l.b16 %v2097
        %v3887 = vunpack.c.l.b16 %v2098
        %v3888 = vunpack.c.h.b16 %v2098
        %v3889 = vunpack.c.l.b16 %v2099
        %v3890 = vunpack.c.l.b16 %v2100
        %v3891 = vunpack.c.h.b16 %v2100
        %v3892 = vunpack.c.l.b16 %v2101
        %v3893 = vunpack.c.l.b16 %v2102
        %v3894 = vunpack.c.h.b16 %v2102
        %v3895 = vunpack.c.l.b16 %v2103
        %v3896 = vunpack.c.l.b16 %v2104
        %v3897 = vunpack.c.h.b16 %v2104
        %v3898 = vunpack.c.l.b16 %v2105
        %v3899 = vunpack.c.l.b16 %v2106
        %v3900 = vunpack.c.h.b16 %v2106
        %v3901 = vunpack.c.l.b16 %v2107
        %v3902 = vunpack.c.l.b16 %v2108
        %v3903 = vunpack.c.h.b16 %v2108
        %v3904 = vunpack.c.l.b16 %v2109
        %v3905 = vunpack.c.l.b16 %v2110
        %v3906 = vunpack.c.h.b16 %v2110
        %v3907 = vunpack.c.l.b16 %v2111
        %v3908 = vunpack.c.l.b16 %v2112
        %v3909 = vunpack.c.h.b16 %v2112
        %v3910 = vunpack.c.l.b16 %v2113
        %v3911 = vunpack.c.l.b16 %v2114
        %v3912 = vunpack.c.h.b16 %v2114
        %v3913 = vunpack.c.l.b16 %v2115
        %v3914 = vunpack.c.l.b16 %v2116
        %v3915 = vunpack.c.h.b16 %v2116
        %v3916 = vunpack.c.l.b16 %v2117
        %v3917 = vunpack.c.l.b16 %v2118
        %v3918 = vunpack.c.h.b16 %v2118
        %v3919 = vunpack.c.l.b16 %v2119
        %v3920 = vunpack.c.l.b16 %v2120
        %v3921 = vunpack.c.h.b16 %v2120
        %v3922 = vunpack.c.l.b16 %v2121
        %v3923 = vunpack.c.l.b16 %v2122
        %v3924 = vunpack.c.h.b16 %v2122
        %v3925 = vunpack.c.l.b16 %v2123
        %v3926 = vunpack.c.l.b16 %v2124
        %v3927 = vunpack.c.h.b16 %v2124
        %v3928 = vunpack.c.l.b16 %v2125
        %v3929 = vunpack.c.l.b16 %v2126
        %v3930 = vunpack.c.h.b16 %v2126
        %v3931 = vunpack.c.l.b16 %v2127
        %v3932 = vunpack.c.l.b16 %v2128
        %v3933 = vunpack.c.h.b16 %v2128
        %v3934 = vunpack.c.l.b16 %v2129
        %v3935 = vunpack.c.l.b16 %v2130
        %v3936 = vunpack.c.h.b16 %v2130
        %v3937 = vunpack.c.l.b16 %v2131
        %v3938 = vunpack.c.l.b16 %v2132
        %v3939 = vunpack.c.h.b16 %v2132
        %v3940 = vunpack.c.l.b16 %v2133
        %v3941 = vunpack.c.l.b16 %v2134
        %v3942 = vunpack.c.h.b16 %v2134
        %v3943 = vunpack.c.l.b16 %v2135
        %v3944 = vunpack.c.l.b16 %v2136
        %v3945 = vunpack.c.h.b16 %v2136
        %v3946 = vunpack.c.l.b16 %v2137
        %v3947 = vunpack.c.l.b16 %v2138
        %v3948 = vunpack.c.h.b16 %v2138
        %v3949 = vunpack.c.l.b16 %v2139
        %v3950 = vunpack.c.l.b16 %v2140
        %v3951 = vunpack.c.h.b16 %v2140
        %v3952 = vunpack.c.l.b16 %v2141
        %v3953 = vunpack.c.l.b16 %v2142
        %v3954 = vunpack.c.h.b16 %v2142
        %v3955 = vunpack.c.l.b16 %v2143
        %v3956 = vunpack.c.l.b16 %v2144
        %v3957 = vunpack.c.h.b16 %v2144
        %v3958 = vunpack.c.l.b16 %v2145
        %v3959 = vunpack.c.l.b16 %v2146
        %v3960 = vunpack.c.h.b16 %v2146
        %v3961 = vunpack.c.l.b16 %v2147
        %v3962 = vunpack.c.l.b16 %v2148
        %v3963 = vunpack.c.h.b16 %v2148
        %v3964 = vunpack.c.l.b16 %v2149
        %v3965 = vunpack.c.l.b16 %v2150
        %v3966 = vunpack.c.h.b16 %v2150
        %v3967 = vunpack.c.l.b16 %v2151
        %v3968 = vunpack.c.l.b16 %v2152
        %v3969 = vunpack.c.h.b16 %v2152
        %v3970 = vunpack.c.l.b16 %v2153
        %v3971 = vunpack.c.l.b16 %v2154
        %v3972 = vunpack.c.h.b16 %v2154
        %v3973 = vunpack.c.l.b16 %v2155
        %v3974 = vunpack.c.l.b16 %v2156
        %v3975 = vunpack.c.h.b16 %v2156
        %v3976 = vunpack.c.l.b16 %v2157
        %v3977 = vpack.c.b16 %v3884, %v3881
        %v3978 = vpack.c.b16 %v3885, %v3882
        %v3979 = vpack.c.b16 %v3886, %v3883
        %v3980 = vpack.c.b16 %v3890, %v3887
        %v3981 = vpack.c.b16 %v3891, %v3888
        %v3982 = vpack.c.b16 %v3892, %v3889
        %v3983 = vpack.c.b16 %v3896, %v3893
        %v3984 = vpack.c.b16 %v3897, %v3894
        %v3985 = vpack.c.b16 %v3898, %v3895
        %v3986 = vpack.c.b16 %v3902, %v3899
        %v3987 = vpack.c.b16 %v3903, %v3900
        %v3988 = vpack.c.b16 %v3904, %v3901
        %v3989 = vpack.c.b16 %v3908, %v3905
        %v3990 = vpack.c.b16 %v3909, %v3906
        %v3991 = vpack.c.b16 %v3910, %v3907
        %v3992 = vpack.c.b16 %v3914, %v3911
        %v3993 = vpack.c.b16 %v3915, %v3912
        %v3994 = vpack.c.b16 %v3916, %v3913
        %v3995 = vpack.c.b16 %v3920, %v3917
        %v3996 = vpack.c.b16 %v3921, %v3918
        %v3997 = vpack.c.b16 %v3922, %v3919
        %v3998 = vpack.c.b16 %v3926, %v3923
        %v3999 = vpack.c.b16 %v3927, %v3924
        %v4000 = vpack.c.b16 %v3928, %v3925
        %v4001 = vpack.c.b16 %v3932, %v3929
        %v4002 = vpack.c.b16 %v3933, %v3930
        %v4003 = vpack.c.b16 %v3934, %v3931
        %v4004 = vpack.c.b16 %v3938, %v3935
        %v4005 = vpack.c.b16 %v3939, %v3936
        %v4006 = vpack.c.b16 %v3940, %v3937
        %v4007 = vpack.c.b16 %v3944, %v3941
        %v4008 = vpack.c.b16 %v3945, %v3942
        %v4009 = vpack.c.b16 %v3946, %v3943
        %v4010 = vpack.c.b16 %v3950, %v3947
        %v4011 = vpack.c.b16 %v3951, %v3948
        %v4012 = vpack.c.b16 %v3952, %v3949
        %v4013 = vpack.c.b16 %v3956, %v3953
        %v4014 = vpack.c.b16 %v3957, %v3954
        %v4015 = vpack.c.b16 %v3958, %v3955
        %v4016 = vpack.c.b16 %v3962, %v3959
        %v4017 = vpack.c.b16 %v3963, %v3960
        %v4018 = vpack.c.b16 %v3964, %v3961
        %v4019 = vpack.c.b16 %v3968, %v3965
        %v4020 = vpack.c.b16 %v3969, %v3966
        %v4021 = vpack.c.b16 %v3970, %v3967
        %v4022 = vpack.c.b16 %v3974, %v3971
        %v4023 = vpack.c.b16 %v3975, %v3972
        %v4024 = vpack.c.b16 %v3976, %v3973
        %v4121 = vunpack.c.l.b16 %v2158
        %v4122 = vunpack.c.l.b16 %v2159
        %v4123 = vunpack.c.l.b16 %v2160
        %v4124 = vunpack.c.l.b16 %v2161
        %v4125 = vunpack.c.l.b16 %v2162
        %v4126 = vunpack.c.l.b16 %v2163
        %v4127 = vunpack.c.l.b16 %v2164
        %v4128 = vunpack.c.l.b16 %v2165
        %v4129 = vunpack.c.l.b16 %v2166
        %v4130 = vunpack.c.l.b16 %v2167
        %v4131 = vunpack.c.l.b16 %v2168
        %v4132 = vunpack.c.l.b16 %v2169
        %v4133 = vunpack.c.l.b16 %v2170
        %v4134 = vunpack.c.l.b16 %v2171
        %v4135 = vunpack.c.l.b16 %v2172
        %v4136 = vunpack.c.l.b16 %v2173
        %v4137 = vunpack.c.l.b16 %v2174
        %v4138 = vunpack.c.l.b16 %v2175
        %v4139 = vunpack.c.l.b16 %v2176
        %v4140 = vunpack.c.l.b16 %v2177
        %v4141 = vunpack.c.l.b16 %v2178
        %v4142 = vunpack.c.l.b16 %v2179
        %v4143 = vunpack.c.l.b16 %v2180
        %v4144 = vunpack.c.l.b16 %v2181
        %v4145 = vunpack.c.l.b16 %v2182
        %v4146 = vunpack.c.l.b16 %v2183
        %v4147 = vunpack.c.l.b16 %v2184
        %v4148 = vunpack.c.l.b16 %v2185
        %v4149 = vunpack.c.l.b16 %v2186
        %v4150 = vunpack.c.l.b16 %v2187
        %v4151 = vunpack.c.l.b16 %v2188
        %v4152 = vunpack.c.l.b16 %v2189
        %v4153 = vunpack.c.l.b16 %v2190
        %v4154 = vunpack.c.l.b16 %v2191
        %v4155 = vunpack.c.l.b16 %v2192
        %v4156 = vunpack.c.l.b16 %v2193
        %v4157 = vunpack.c.l.b16 %v2194
        %v4158 = vunpack.c.l.b16 %v2195
        %v4159 = vunpack.c.l.b16 %v2196
        %v4160 = vunpack.c.l.b16 %v2197
        %v4161 = vunpack.c.l.b16 %v2198
        %v4162 = vunpack.c.l.b16 %v2199
        %v4163 = vunpack.c.l.b16 %v2200
        %v4164 = vunpack.c.l.b16 %v2201
        %v4165 = vunpack.c.l.b16 %v2202
        %v4166 = vunpack.c.l.b16 %v2203
        %v4167 = vunpack.c.l.b16 %v2204
        %v4168 = vunpack.c.l.b16 %v2205
        %v4169 = vpack.c.b16 %v4122, %v4121
        %v4170 = vpack.c.b16 %v4124, %v4123
        %v4171 = vpack.c.b16 %v4126, %v4125
        %v4172 = vpack.c.b16 %v4128, %v4127
        %v4173 = vpack.c.b16 %v4130, %v4129
        %v4174 = vpack.c.b16 %v4132, %v4131
        %v4175 = vpack.c.b16 %v4134, %v4133
        %v4176 = vpack.c.b16 %v4136, %v4135
        %v4177 = vpack.c.b16 %v4138, %v4137
        %v4178 = vpack.c.b16 %v4140, %v4139
        %v4179 = vpack.c.b16 %v4142, %v4141
        %v4180 = vpack.c.b16 %v4144, %v4143
        %v4181 = vpack.c.b16 %v4146, %v4145
        %v4182 = vpack.c.b16 %v4148, %v4147
        %v4183 = vpack.c.b16 %v4150, %v4149
        %v4184 = vpack.c.b16 %v4152, %v4151
        %v4185 = vpack.c.b16 %v4154, %v4153
        %v4186 = vpack.c.b16 %v4156, %v4155
        %v4187 = vpack.c.b16 %v4158, %v4157
        %v4188 = vpack.c.b16 %v4160, %v4159
        %v4189 = vpack.c.b16 %v4162, %v4161
        %v4190 = vpack.c.b16 %v4164, %v4163
        %v4191 = vpack.c.b16 %v4166, %v4165
        %v4192 = vpack.c.b16 %v4168, %v4167
        %4217 = vmatpush.bf16.msra.mxu0 %v4176
        %4218 = vmatpush.bf16.msra.mxu0 %v4175
        %4219 = vmatpush.bf16.msra.mxu0 %v4174
        %4220 = vmatpush.bf16.msra.mxu0 %v4173
        %4221 = vmatpush.bf16.msra.mxu0 %v4172
        %4222 = vmatpush.bf16.msra.mxu0 %v4171
        %4223 = vmatpush.bf16.msra.mxu0 %v4170
        %4224 = vmatpush.bf16.msra.mxu0 %v4169
        %4225 = vmatmul.bf16.gmra.mxu0 %v3977
        %v4226 = vpop.f32.mrf.mxu0
        %v4227 = vadd.f32 %v3738, %v4226
        %v4228 = vpop.f32.mrf.mxu0
        %v4229 = vadd.f32 %v3740, %v4228
        %4230 = vmatmul.bf16.gmra.mxu0 %v3980
        %v4231 = vpop.f32.mrf.mxu0
        %v4232 = vadd.f32 %v3743, %v4231
        %v4233 = vpop.f32.mrf.mxu0
        %v4234 = vadd.f32 %v3745, %v4233
        %4235 = vmatmul.bf16.gmra.mxu0 %v3983
        %v4236 = vpop.f32.mrf.mxu0
        %v4237 = vadd.f32 %v3748, %v4236
        %v4238 = vpop.f32.mrf.mxu0
        %v4239 = vadd.f32 %v3750, %v4238
        %4240 = vmatmul.bf16.gmra.mxu0 %v3986
        %v4241 = vpop.f32.mrf.mxu0
        %v4242 = vadd.f32 %v3753, %v4241
        %v4243 = vpop.f32.mrf.mxu0
        %v4244 = vadd.f32 %v3755, %v4243
        %4245 = vmatmul.bf16.gmra.mxu0 %v3989
        %v4246 = vpop.f32.mrf.mxu0
        %v4247 = vadd.f32 %v3758, %v4246
        %v4248 = vpop.f32.mrf.mxu0
        %v4249 = vadd.f32 %v3760, %v4248
        %4250 = vmatmul.bf16.gmra.mxu0 %v3992
        %v4251 = vpop.f32.mrf.mxu0
        %v4252 = vadd.f32 %v3763, %v4251
        %v4253 = vpop.f32.mrf.mxu0
        %v4254 = vadd.f32 %v3765, %v4253
        %4255 = vmatmul.bf16.gmra.mxu0 %v3995
        %v4256 = vpop.f32.mrf.mxu0
        %v4257 = vadd.f32 %v3768, %v4256
        %v4258 = vpop.f32.mrf.mxu0
        %v4259 = vadd.f32 %v3770, %v4258
        %4260 = vmatmul.bf16.gmra.mxu0 %v3998
        %v4261 = vpop.f32.mrf.mxu0
        %v4262 = vadd.f32 %v3773, %v4261
        %v4263 = vpop.f32.mrf.mxu0
        %v4264 = vadd.f32 %v3775, %v4263
        %4265 = vmatmul.bf16.gmra.mxu0 %v4001
        %v4266 = vpop.f32.mrf.mxu0
        %v4267 = vadd.f32 %v3778, %v4266
        %v4268 = vpop.f32.mrf.mxu0
        %v4269 = vadd.f32 %v3780, %v4268
        %4270 = vmatmul.bf16.gmra.mxu0 %v4004
        %v4271 = vpop.f32.mrf.mxu0
        %v4272 = vadd.f32 %v3783, %v4271
        %v4273 = vpop.f32.mrf.mxu0
        %v4274 = vadd.f32 %v3785, %v4273
        %4275 = vmatmul.bf16.gmra.mxu0 %v4007
        %v4276 = vpop.f32.mrf.mxu0
        %v4277 = vadd.f32 %v3788, %v4276
        %v4278 = vpop.f32.mrf.mxu0
        %v4279 = vadd.f32 %v3790, %v4278
        %4280 = vmatmul.bf16.gmra.mxu0 %v4010
        %v4281 = vpop.f32.mrf.mxu0
        %v4282 = vadd.f32 %v3793, %v4281
        %v4283 = vpop.f32.mrf.mxu0
        %v4284 = vadd.f32 %v3795, %v4283
        %4285 = vmatmul.bf16.gmra.mxu0 %v4013
        %v4286 = vpop.f32.mrf.mxu0
        %v4287 = vadd.f32 %v3798, %v4286
        %v4288 = vpop.f32.mrf.mxu0
        %v4289 = vadd.f32 %v3800, %v4288
        %4290 = vmatmul.bf16.gmra.mxu0 %v4016
        %v4291 = vpop.f32.mrf.mxu0
        %v4292 = vadd.f32 %v3803, %v4291
        %v4293 = vpop.f32.mrf.mxu0
        %v4294 = vadd.f32 %v3805, %v4293
        %4295 = vmatmul.bf16.gmra.mxu0 %v4019
        %v4296 = vpop.f32.mrf.mxu0
        %v4297 = vadd.f32 %v3808, %v4296
        %v4298 = vpop.f32.mrf.mxu0
        %v4299 = vadd.f32 %v3810, %v4298
        %4300 = vmatmul.bf16.gmra.mxu0 %v4022
        %v4301 = vpop.f32.mrf.mxu0
        %v4302 = vadd.f32 %v3813, %v4301
        %v4303 = vpop.f32.mrf.mxu0
        %v4304 = vadd.f32 %v3815, %v4303
        %4305 = vdwg.mxu0
        %4306 = vmatpush.bf16.msra.mxu0 %v4184
        %4307 = vmatpush.bf16.msra.mxu0 %v4183
        %4308 = vmatpush.bf16.msra.mxu0 %v4182
        %4309 = vmatpush.bf16.msra.mxu0 %v4181
        %4310 = vmatpush.bf16.msra.mxu0 %v4180
        %4311 = vmatpush.bf16.msra.mxu0 %v4179
        %4312 = vmatpush.bf16.msra.mxu0 %v4178
        %4313 = vmatpush.bf16.msra.mxu0 %v4177
        %4314 = vmatmul.bf16.gmra.mxu0 %v3978
        %v4315 = vpop.f32.mrf.mxu0
        %v4316 = vadd.f32 %v4227, %v4315
        %v4317 = vpop.f32.mrf.mxu0
        %v4318 = vadd.f32 %v4229, %v4317
        %4319 = vmatmul.bf16.gmra.mxu0 %v3981
        %v4320 = vpop.f32.mrf.mxu0
        %v4321 = vadd.f32 %v4232, %v4320
        %v4322 = vpop.f32.mrf.mxu0
        %v4323 = vadd.f32 %v4234, %v4322
        %4324 = vmatmul.bf16.gmra.mxu0 %v3984
        %v4325 = vpop.f32.mrf.mxu0
        %v4326 = vadd.f32 %v4237, %v4325
        %v4327 = vpop.f32.mrf.mxu0
        %v4328 = vadd.f32 %v4239, %v4327
        %4329 = vmatmul.bf16.gmra.mxu0 %v3987
        %v4330 = vpop.f32.mrf.mxu0
        %v4331 = vadd.f32 %v4242, %v4330
        %v4332 = vpop.f32.mrf.mxu0
        %v4333 = vadd.f32 %v4244, %v4332
        %4334 = vmatmul.bf16.gmra.mxu0 %v3990
        %v4335 = vpop.f32.mrf.mxu0
        %v4336 = vadd.f32 %v4247, %v4335
        %v4337 = vpop.f32.mrf.mxu0
        %v4338 = vadd.f32 %v4249, %v4337
        %4339 = vmatmul.bf16.gmra.mxu0 %v3993
        %v4340 = vpop.f32.mrf.mxu0
        %v4341 = vadd.f32 %v4252, %v4340
        %v4342 = vpop.f32.mrf.mxu0
        %v4343 = vadd.f32 %v4254, %v4342
        %4344 = vmatmul.bf16.gmra.mxu0 %v3996
        %v4345 = vpop.f32.mrf.mxu0
        %v4346 = vadd.f32 %v4257, %v4345
        %v4347 = vpop.f32.mrf.mxu0
        %v4348 = vadd.f32 %v4259, %v4347
        %4349 = vmatmul.bf16.gmra.mxu0 %v3999
        %v4350 = vpop.f32.mrf.mxu0
        %v4351 = vadd.f32 %v4262, %v4350
        %v4352 = vpop.f32.mrf.mxu0
        %v4353 = vadd.f32 %v4264, %v4352
        %4354 = vmatmul.bf16.gmra.mxu0 %v4002
        %v4355 = vpop.f32.mrf.mxu0
        %v4356 = vadd.f32 %v4267, %v4355
        %v4357 = vpop.f32.mrf.mxu0
        %v4358 = vadd.f32 %v4269, %v4357
        %4359 = vmatmul.bf16.gmra.mxu0 %v4005
        %v4360 = vpop.f32.mrf.mxu0
        %v4361 = vadd.f32 %v4272, %v4360
        %v4362 = vpop.f32.mrf.mxu0
        %v4363 = vadd.f32 %v4274, %v4362
        %4364 = vmatmul.bf16.gmra.mxu0 %v4008
        %v4365 = vpop.f32.mrf.mxu0
        %v4366 = vadd.f32 %v4277, %v4365
        %v4367 = vpop.f32.mrf.mxu0
        %v4368 = vadd.f32 %v4279, %v4367
        %4369 = vmatmul.bf16.gmra.mxu0 %v4011
        %v4370 = vpop.f32.mrf.mxu0
        %v4371 = vadd.f32 %v4282, %v4370
        %v4372 = vpop.f32.mrf.mxu0
        %v4373 = vadd.f32 %v4284, %v4372
        %4374 = vmatmul.bf16.gmra.mxu0 %v4014
        %v4375 = vpop.f32.mrf.mxu0
        %v4376 = vadd.f32 %v4287, %v4375
        %v4377 = vpop.f32.mrf.mxu0
        %v4378 = vadd.f32 %v4289, %v4377
        %4379 = vmatmul.bf16.gmra.mxu0 %v4017
        %v4380 = vpop.f32.mrf.mxu0
        %v4381 = vadd.f32 %v4292, %v4380
        %v4382 = vpop.f32.mrf.mxu0
        %v4383 = vadd.f32 %v4294, %v4382
        %4384 = vmatmul.bf16.gmra.mxu0 %v4020
        %v4385 = vpop.f32.mrf.mxu0
        %v4386 = vadd.f32 %v4297, %v4385
        %v4387 = vpop.f32.mrf.mxu0
        %v4388 = vadd.f32 %v4299, %v4387
        %4389 = vmatmul.bf16.gmra.mxu0 %v4023
        %v4390 = vpop.f32.mrf.mxu0
        %v4391 = vadd.f32 %v4302, %v4390
        %v4392 = vpop.f32.mrf.mxu0
        %v4393 = vadd.f32 %v4304, %v4392
        %4394 = vdwg.mxu0
        %4395 = vmatpush.bf16.msra.mxu0 %v4192
        %4396 = vmatpush.bf16.msra.mxu0 %v4191
        %4397 = vmatpush.bf16.msra.mxu0 %v4190
        %4398 = vmatpush.bf16.msra.mxu0 %v4189
        %4399 = vmatpush.bf16.msra.mxu0 %v4188
        %4400 = vmatpush.bf16.msra.mxu0 %v4187
        %4401 = vmatpush.bf16.msra.mxu0 %v4186
        %4402 = vmatpush.bf16.msra.mxu0 %v4185
        %4403 = vmatmul.bf16.gmra.mxu0 %v3979
        %v4404 = vpop.f32.mrf.mxu0
        %v4405 = vadd.f32 %v4316, %v4404
        %v4406 = vpop.f32.mrf.mxu0
        %v4407 = vadd.f32 %v4318, %v4406
        %4408 = vmatmul.bf16.gmra.mxu0 %v3982
        %v4409 = vpop.f32.mrf.mxu0
        %v4410 = vadd.f32 %v4321, %v4409
        %v4411 = vpop.f32.mrf.mxu0
        %v4412 = vadd.f32 %v4323, %v4411
        %4413 = vmatmul.bf16.gmra.mxu0 %v3985
        %v4414 = vpop.f32.mrf.mxu0
        %v4415 = vadd.f32 %v4326, %v4414
        %v4416 = vpop.f32.mrf.mxu0
        %v4417 = vadd.f32 %v4328, %v4416
        %4418 = vmatmul.bf16.gmra.mxu0 %v3988
        %v4419 = vpop.f32.mrf.mxu0
        %v4420 = vadd.f32 %v4331, %v4419
        %v4421 = vpop.f32.mrf.mxu0
        %v4422 = vadd.f32 %v4333, %v4421
        %4423 = vmatmul.bf16.gmra.mxu0 %v3991
        %v4424 = vpop.f32.mrf.mxu0
        %v4425 = vadd.f32 %v4336, %v4424
        %v4426 = vpop.f32.mrf.mxu0
        %v4427 = vadd.f32 %v4338, %v4426
        %4428 = vmatmul.bf16.gmra.mxu0 %v3994
        %v4429 = vpop.f32.mrf.mxu0
        %v4430 = vadd.f32 %v4341, %v4429
        %v4431 = vpop.f32.mrf.mxu0
        %v4432 = vadd.f32 %v4343, %v4431
        %4433 = vmatmul.bf16.gmra.mxu0 %v3997
        %v4434 = vpop.f32.mrf.mxu0
        %v4435 = vadd.f32 %v4346, %v4434
        %v4436 = vpop.f32.mrf.mxu0
        %v4437 = vadd.f32 %v4348, %v4436
        %4438 = vmatmul.bf16.gmra.mxu0 %v4000
        %v4439 = vpop.f32.mrf.mxu0
        %v4440 = vadd.f32 %v4351, %v4439
        %v4441 = vpop.f32.mrf.mxu0
        %v4442 = vadd.f32 %v4353, %v4441
        %4443 = vmatmul.bf16.gmra.mxu0 %v4003
        %v4444 = vpop.f32.mrf.mxu0
        %v4445 = vadd.f32 %v4356, %v4444
        %v4446 = vpop.f32.mrf.mxu0
        %v4447 = vadd.f32 %v4358, %v4446
        %4448 = vmatmul.bf16.gmra.mxu0 %v4006
        %v4449 = vpop.f32.mrf.mxu0
        %v4450 = vadd.f32 %v4361, %v4449
        %v4451 = vpop.f32.mrf.mxu0
        %v4452 = vadd.f32 %v4363, %v4451
        %4453 = vmatmul.bf16.gmra.mxu0 %v4009
        %v4454 = vpop.f32.mrf.mxu0
        %v4455 = vadd.f32 %v4366, %v4454
        %v4456 = vpop.f32.mrf.mxu0
        %v4457 = vadd.f32 %v4368, %v4456
        %4458 = vmatmul.bf16.gmra.mxu0 %v4012
        %v4459 = vpop.f32.mrf.mxu0
        %v4460 = vadd.f32 %v4371, %v4459
        %v4461 = vpop.f32.mrf.mxu0
        %v4462 = vadd.f32 %v4373, %v4461
        %4463 = vmatmul.bf16.gmra.mxu0 %v4015
        %v4464 = vpop.f32.mrf.mxu0
        %v4465 = vadd.f32 %v4376, %v4464
        %v4466 = vpop.f32.mrf.mxu0
        %v4467 = vadd.f32 %v4378, %v4466
        %4468 = vmatmul.bf16.gmra.mxu0 %v4018
        %v4469 = vpop.f32.mrf.mxu0
        %v4470 = vadd.f32 %v4381, %v4469
        %v4471 = vpop.f32.mrf.mxu0
        %v4472 = vadd.f32 %v4383, %v4471
        %4473 = vmatmul.bf16.gmra.mxu0 %v4021
        %v4474 = vpop.f32.mrf.mxu0
        %v4475 = vadd.f32 %v4386, %v4474
        %v4476 = vpop.f32.mrf.mxu0
        %v4477 = vadd.f32 %v4388, %v4476
        %4478 = vmatmul.bf16.gmra.mxu0 %v4024
        %v4479 = vpop.f32.mrf.mxu0
        %v4480 = vadd.f32 %v4391, %v4479
        %v4481 = vpop.f32.mrf.mxu0
        %v4482 = vadd.f32 %v4393, %v4481
        %4483 = vdwg.mxu0
        %s4484 = scalar_lea.vmem [#allocation2], 24
        %v4485 = vld [vmem:[%s4484] sm:$0xf]
        %v4486 = vld [vmem:[%s4484 + $0x4] sm:$0xf]
        %v4487 = vld [vmem:[%s4484 + $0xc] sm:$0xf]
        %v4488 = vld [vmem:[%s4484 + $0x10] sm:$0xf]
        %v4489 = vld [vmem:[%s4484 + $0x18] sm:$0xf]
        %v4490 = vld [vmem:[%s4484 + $0x1c] sm:$0xf]
        %v4491 = vld [vmem:[%s4484 + $0x24] sm:$0xf]
        %v4492 = vld [vmem:[%s4484 + $0x28] sm:$0xf]
        %v4493 = vld [vmem:[%s4484 + $0x30] sm:$0xf]
        %v4494 = vld [vmem:[%s4484 + $0x34] sm:$0xf]
        %v4495 = vld [vmem:[%s4484 + $0x3c] sm:$0xf]
        %v4496 = vld [vmem:[%s4484 + $0x40] sm:$0xf]
        %v4497 = vld [vmem:[%s4484 + $0x48] sm:$0xf]
        %v4498 = vld [vmem:[%s4484 + $0x4c] sm:$0xf]
        %v4499 = vld [vmem:[%s4484 + $0x54] sm:$0xf]
        %v4500 = vld [vmem:[%s4484 + $0x58] sm:$0xf]
        %v4501 = vld [vmem:[%s4484 + $0x60] sm:$0xf]
        %v4502 = vld [vmem:[%s4484 + $0x64] sm:$0xf]
        %v4503 = vld [vmem:[%s4484 + $0x6c] sm:$0xf]
        %v4504 = vld [vmem:[%s4484 + $0x70] sm:$0xf]
        %v4505 = vld [vmem:[%s4484 + $0x78] sm:$0xf]
        %v4506 = vld [vmem:[%s4484 + $0x7c] sm:$0xf]
        %v4507 = vld [vmem:[%s4484 + $0x84] sm:$0xf]
        %v4508 = vld [vmem:[%s4484 + $0x88] sm:$0xf]
        %v4509 = vld [vmem:[%s4484 + $0x90] sm:$0xf]
        %v4510 = vld [vmem:[%s4484 + $0x94] sm:$0xf]
        %v4511 = vld [vmem:[%s4484 + $0x9c] sm:$0xf]
        %v4512 = vld [vmem:[%s4484 + $0xa0] sm:$0xf]
        %v4513 = vld [vmem:[%s4484 + $0xa8] sm:$0xf]
        %v4514 = vld [vmem:[%s4484 + $0xac] sm:$0xf]
        %v4515 = vld [vmem:[%s4484 + $0xb4] sm:$0xf]
        %v4516 = vld [vmem:[%s4484 + $0xb8] sm:$0xf]
        %4517 = vst [vmem:[#allocation3] sm:$0xf] %v4485
        %4518 = vst [vmem:[#allocation3 + $0xc] sm:$0xf] %v4486
        %4519 = vst [vmem:[#allocation3 + $0x18] sm:$0xf] %v4487
        %4520 = vst [vmem:[#allocation3 + $0x24] sm:$0xf] %v4488
        %4521 = vst [vmem:[#allocation3 + $0x30] sm:$0xf] %v4489
        %4522 = vst [vmem:[#allocation3 + $0x3c] sm:$0xf] %v4490
        %4523 = vst [vmem:[#allocation3 + $0x48] sm:$0xf] %v4491
        %4524 = vst [vmem:[#allocation3 + $0x54] sm:$0xf] %v4492
        %4525 = vst [vmem:[#allocation3 + $0x60] sm:$0xf] %v4493
        %4526 = vst [vmem:[#allocation3 + $0x6c] sm:$0xf] %v4494
        %4527 = vst [vmem:[#allocation3 + $0x78] sm:$0xf] %v4495
        %4528 = vst [vmem:[#allocation3 + $0x84] sm:$0xf] %v4496
        %4529 = vst [vmem:[#allocation3 + $0x90] sm:$0xf] %v4497
        %4530 = vst [vmem:[#allocation3 + $0x9c] sm:$0xf] %v4498
        %4531 = vst [vmem:[#allocation3 + $0xa8] sm:$0xf] %v4499
        %4532 = vst [vmem:[#allocation3 + $0xb4] sm:$0xf] %v4500
        %4533 = vst [vmem:[#allocation3 + $0xc0] sm:$0xf] %v4501
        %4534 = vst [vmem:[#allocation3 + $0xcc] sm:$0xf] %v4502
        %4535 = vst [vmem:[#allocation3 + $0xd8] sm:$0xf] %v4503
        %4536 = vst [vmem:[#allocation3 + $0xe4] sm:$0xf] %v4504
        %4537 = vst [vmem:[#allocation3 + $0xf0] sm:$0xf] %v4505
        %4538 = vst [vmem:[#allocation3 + $0xfc] sm:$0xf] %v4506
        %4539 = vst [vmem:[#allocation3 + $0x108] sm:$0xf] %v4507
        %4540 = vst [vmem:[#allocation3 + $0x114] sm:$0xf] %v4508
        %4541 = vst [vmem:[#allocation3 + $0x120] sm:$0xf] %v4509
        %4542 = vst [vmem:[#allocation3 + $0x12c] sm:$0xf] %v4510
        %4543 = vst [vmem:[#allocation3 + $0x138] sm:$0xf] %v4511
        %4544 = vst [vmem:[#allocation3 + $0x144] sm:$0xf] %v4512
        %4545 = vst [vmem:[#allocation3 + $0x150] sm:$0xf] %v4513
        %4546 = vst [vmem:[#allocation3 + $0x15c] sm:$0xf] %v4514
        %4547 = vst [vmem:[#allocation3 + $0x168] sm:$0xf] %v4515
        %4548 = vst [vmem:[#allocation3 + $0x174] sm:$0xf] %v4516
        %v4549 = vld [vmem:[%s4484] sm:$0xf]
        %v4550 = vld [vmem:[%s4484 + $0x4] sm:$0xf]
        %v4551 = vld [vmem:[%s4484 + $0x8] sm:$0x1]
        %v4552 = vld [vmem:[%s4484 + $0xc] sm:$0xf]
        %v4553 = vld [vmem:[%s4484 + $0x10] sm:$0xf]
        %v4554 = vld [vmem:[%s4484 + $0x14] sm:$0x1]
        %v4555 = vld [vmem:[%s4484 + $0x18] sm:$0xf]
        %v4556 = vld [vmem:[%s4484 + $0x1c] sm:$0xf]
        %v4557 = vld [vmem:[%s4484 + $0x20] sm:$0x1]
        %v4558 = vld [vmem:[%s4484 + $0x24] sm:$0xf]
        %v4559 = vld [vmem:[%s4484 + $0x28] sm:$0xf]
        %v4560 = vld [vmem:[%s4484 + $0x2c] sm:$0x1]
        %v4561 = vld [vmem:[%s4484 + $0x30] sm:$0xf]
        %v4562 = vld [vmem:[%s4484 + $0x34] sm:$0xf]
        %v4563 = vld [vmem:[%s4484 + $0x38] sm:$0x1]
        %v4564 = vld [vmem:[%s4484 + $0x3c] sm:$0xf]
        %v4565 = vld [vmem:[%s4484 + $0x40] sm:$0xf]
        %v4566 = vld [vmem:[%s4484 + $0x44] sm:$0x1]
        %v4567 = vld [vmem:[%s4484 + $0x48] sm:$0xf]
        %v4568 = vld [vmem:[%s4484 + $0x4c] sm:$0xf]
        %v4569 = vld [vmem:[%s4484 + $0x50] sm:$0x1]
        %v4570 = vld [vmem:[%s4484 + $0x54] sm:$0xf]
        %v4571 = vld [vmem:[%s4484 + $0x58] sm:$0xf]
        %v4572 = vld [vmem:[%s4484 + $0x5c] sm:$0x1]
        %v4573 = vld [vmem:[%s4484 + $0x60] sm:$0xf]
        %v4574 = vld [vmem:[%s4484 + $0x64] sm:$0xf]
        %v4575 = vld [vmem:[%s4484 + $0x68] sm:$0x1]
        %v4576 = vld [vmem:[%s4484 + $0x6c] sm:$0xf]
        %v4577 = vld [vmem:[%s4484 + $0x70] sm:$0xf]
        %v4578 = vld [vmem:[%s4484 + $0x74] sm:$0x1]
        %v4579 = vld [vmem:[%s4484 + $0x78] sm:$0xf]
        %v4580 = vld [vmem:[%s4484 + $0x7c] sm:$0xf]
        %v4581 = vld [vmem:[%s4484 + $0x80] sm:$0x1]
        %v4582 = vld [vmem:[%s4484 + $0x84] sm:$0xf]
        %v4583 = vld [vmem:[%s4484 + $0x88] sm:$0xf]
        %v4584 = vld [vmem:[%s4484 + $0x8c] sm:$0x1]
        %v4585 = vld [vmem:[%s4484 + $0x90] sm:$0xf]
        %v4586 = vld [vmem:[%s4484 + $0x94] sm:$0xf]
        %v4587 = vld [vmem:[%s4484 + $0x98] sm:$0x1]
        %v4588 = vld [vmem:[%s4484 + $0x9c] sm:$0xf]
        %v4589 = vld [vmem:[%s4484 + $0xa0] sm:$0xf]
        %v4590 = vld [vmem:[%s4484 + $0xa4] sm:$0x1]
        %v4591 = vld [vmem:[%s4484 + $0xa8] sm:$0xf]
        %v4592 = vld [vmem:[%s4484 + $0xac] sm:$0xf]
        %v4593 = vld [vmem:[%s4484 + $0xb0] sm:$0x1]
        %v4594 = vld [vmem:[%s4484 + $0xb4] sm:$0xf]
        %v4595 = vld [vmem:[%s4484 + $0xb8] sm:$0xf]
        %v4596 = vld [vmem:[%s4484 + $0xbc] sm:$0x1]
        %v4598 = vshrl.u32 %v4549, 16
        %v4600 = vrot.slane %v4598, 4
        %v4601 = vshll.u32 %v4549, 16
        %v4603 = vrot.slane %v4601, 5
        %v4604 = vor.u32 %v4600, %v4603
        %v4605 = vrot.slane %v4604, 4
        %v4607 = vshll.u32 %v4550, 16
        %v4609 = vrot.slane %v4607, 5
        %v4610 = vsel %vm1370, %v4605, %v4609
        %v4611 = vshrl.u32 %v4550, 16
        %v4613 = vrot.slane %v4611, 4
        %v4614 = vor.u32 %v4613, %v4609
        %v4615 = vrot.slane %v4614, 4
        %v4617 = vshll.u32 %v4551, 16
        %v4619 = vrot.slane %v4617, 5
        %v4620 = vsel %vm1370, %v4615, %v4619
        %v4622 = vshrl.u32 %v4552, 16
        %v4624 = vrot.slane %v4622, 4
        %v4625 = vshll.u32 %v4552, 16
        %v4627 = vrot.slane %v4625, 5
        %v4628 = vor.u32 %v4624, %v4627
        %v4629 = vrot.slane %v4628, 4
        %v4631 = vshll.u32 %v4553, 16
        %v4633 = vrot.slane %v4631, 5
        %v4634 = vsel %vm1370, %v4629, %v4633
        %v4635 = vshrl.u32 %v4553, 16
        %v4637 = vrot.slane %v4635, 4
        %v4638 = vor.u32 %v4637, %v4633
        %v4639 = vrot.slane %v4638, 4
        %v4641 = vshll.u32 %v4554, 16
        %v4643 = vrot.slane %v4641, 5
        %v4644 = vsel %vm1370, %v4639, %v4643
        %v4646 = vshrl.u32 %v4555, 16
        %v4648 = vrot.slane %v4646, 4
        %v4649 = vshll.u32 %v4555, 16
        %v4651 = vrot.slane %v4649, 5
        %v4652 = vor.u32 %v4648, %v4651
        %v4653 = vrot.slane %v4652, 4
        %v4655 = vshll.u32 %v4556, 16
        %v4657 = vrot.slane %v4655, 5
        %v4658 = vsel %vm1370, %v4653, %v4657
        %v4659 = vshrl.u32 %v4556, 16
        %v4661 = vrot.slane %v4659, 4
        %v4662 = vor.u32 %v4661, %v4657
        %v4663 = vrot.slane %v4662, 4
        %v4665 = vshll.u32 %v4557, 16
        %v4667 = vrot.slane %v4665, 5
        %v4668 = vsel %vm1370, %v4663, %v4667
        %v4670 = vshrl.u32 %v4558, 16
        %v4672 = vrot.slane %v4670, 4
        %v4673 = vshll.u32 %v4558, 16
        %v4675 = vrot.slane %v4673, 5
        %v4676 = vor.u32 %v4672, %v4675
        %v4677 = vrot.slane %v4676, 4
        %v4679 = vshll.u32 %v4559, 16
        %v4681 = vrot.slane %v4679, 5
        %v4682 = vsel %vm1370, %v4677, %v4681
        %v4683 = vshrl.u32 %v4559, 16
        %v4685 = vrot.slane %v4683, 4
        %v4686 = vor.u32 %v4685, %v4681
        %v4687 = vrot.slane %v4686, 4
        %v4689 = vshll.u32 %v4560, 16
        %v4691 = vrot.slane %v4689, 5
        %v4692 = vsel %vm1370, %v4687, %v4691
        %v4694 = vshrl.u32 %v4561, 16
        %v4696 = vrot.slane %v4694, 4
        %v4697 = vshll.u32 %v4561, 16
        %v4699 = vrot.slane %v4697, 5
        %v4700 = vor.u32 %v4696, %v4699
        %v4701 = vrot.slane %v4700, 4
        %v4703 = vshll.u32 %v4562, 16
        %v4705 = vrot.slane %v4703, 5
        %v4706 = vsel %vm1370, %v4701, %v4705
        %v4707 = vshrl.u32 %v4562, 16
        %v4709 = vrot.slane %v4707, 4
        %v4710 = vor.u32 %v4709, %v4705
        %v4711 = vrot.slane %v4710, 4
        %v4713 = vshll.u32 %v4563, 16
        %v4715 = vrot.slane %v4713, 5
        %v4716 = vsel %vm1370, %v4711, %v4715
        %v4718 = vshrl.u32 %v4564, 16
        %v4720 = vrot.slane %v4718, 4
        %v4721 = vshll.u32 %v4564, 16
        %v4723 = vrot.slane %v4721, 5
        %v4724 = vor.u32 %v4720, %v4723
        %v4725 = vrot.slane %v4724, 4
        %v4727 = vshll.u32 %v4565, 16
        %v4729 = vrot.slane %v4727, 5
        %v4730 = vsel %vm1370, %v4725, %v4729
        %v4731 = vshrl.u32 %v4565, 16
        %v4733 = vrot.slane %v4731, 4
        %v4734 = vor.u32 %v4733, %v4729
        %v4735 = vrot.slane %v4734, 4
        %v4737 = vshll.u32 %v4566, 16
        %v4739 = vrot.slane %v4737, 5
        %v4740 = vsel %vm1370, %v4735, %v4739
        %v4742 = vshrl.u32 %v4567, 16
        %v4744 = vrot.slane %v4742, 4
        %v4745 = vshll.u32 %v4567, 16
        %v4747 = vrot.slane %v4745, 5
        %v4748 = vor.u32 %v4744, %v4747
        %v4749 = vrot.slane %v4748, 4
        %v4751 = vshll.u32 %v4568, 16
        %v4753 = vrot.slane %v4751, 5
        %v4754 = vsel %vm1370, %v4749, %v4753
        %v4755 = vshrl.u32 %v4568, 16
        %v4757 = vrot.slane %v4755, 4
        %v4758 = vor.u32 %v4757, %v4753
        %v4759 = vrot.slane %v4758, 4
        %v4761 = vshll.u32 %v4569, 16
        %v4763 = vrot.slane %v4761, 5
        %v4764 = vsel %vm1370, %v4759, %v4763
        %v4766 = vshrl.u32 %v4570, 16
        %v4768 = vrot.slane %v4766, 4
        %v4769 = vshll.u32 %v4570, 16
        %v4771 = vrot.slane %v4769, 5
        %v4772 = vor.u32 %v4768, %v4771
        %v4773 = vrot.slane %v4772, 4
        %v4775 = vshll.u32 %v4571, 16
        %v4777 = vrot.slane %v4775, 5
        %v4778 = vsel %vm1370, %v4773, %v4777
        %v4779 = vshrl.u32 %v4571, 16
        %v4781 = vrot.slane %v4779, 4
        %v4782 = vor.u32 %v4781, %v4777
        %v4783 = vrot.slane %v4782, 4
        %v4785 = vshll.u32 %v4572, 16
        %v4787 = vrot.slane %v4785, 5
        %v4788 = vsel %vm1370, %v4783, %v4787
        %v4790 = vshrl.u32 %v4573, 16
        %v4792 = vrot.slane %v4790, 4
        %v4793 = vshll.u32 %v4573, 16
        %v4795 = vrot.slane %v4793, 5
        %v4796 = vor.u32 %v4792, %v4795
        %v4797 = vrot.slane %v4796, 4
        %v4799 = vshll.u32 %v4574, 16
        %v4801 = vrot.slane %v4799, 5
        %v4802 = vsel %vm1370, %v4797, %v4801
        %v4803 = vshrl.u32 %v4574, 16
        %v4805 = vrot.slane %v4803, 4
        %v4806 = vor.u32 %v4805, %v4801
        %v4807 = vrot.slane %v4806, 4
        %v4809 = vshll.u32 %v4575, 16
        %v4811 = vrot.slane %v4809, 5
        %v4812 = vsel %vm1370, %v4807, %v4811
        %v4814 = vshrl.u32 %v4576, 16
        %v4816 = vrot.slane %v4814, 4
        %v4817 = vshll.u32 %v4576, 16
        %v4819 = vrot.slane %v4817, 5
        %v4820 = vor.u32 %v4816, %v4819
        %v4821 = vrot.slane %v4820, 4
        %v4823 = vshll.u32 %v4577, 16
        %v4825 = vrot.slane %v4823, 5
        %v4826 = vsel %vm1370, %v4821, %v4825
        %v4827 = vshrl.u32 %v4577, 16
        %v4829 = vrot.slane %v4827, 4
        %v4830 = vor.u32 %v4829, %v4825
        %v4831 = vrot.slane %v4830, 4
        %v4833 = vshll.u32 %v4578, 16
        %v4835 = vrot.slane %v4833, 5
        %v4836 = vsel %vm1370, %v4831, %v4835
        %v4838 = vshrl.u32 %v4579, 16
        %v4840 = vrot.slane %v4838, 4
        %v4841 = vshll.u32 %v4579, 16
        %v4843 = vrot.slane %v4841, 5
        %v4844 = vor.u32 %v4840, %v4843
        %v4845 = vrot.slane %v4844, 4
        %v4847 = vshll.u32 %v4580, 16
        %v4849 = vrot.slane %v4847, 5
        %v4850 = vsel %vm1370, %v4845, %v4849
        %v4851 = vshrl.u32 %v4580, 16
        %v4853 = vrot.slane %v4851, 4
        %v4854 = vor.u32 %v4853, %v4849
        %v4855 = vrot.slane %v4854, 4
        %v4857 = vshll.u32 %v4581, 16
        %v4859 = vrot.slane %v4857, 5
        %v4860 = vsel %vm1370, %v4855, %v4859
        %v4862 = vshrl.u32 %v4582, 16
        %v4864 = vrot.slane %v4862, 4
        %v4865 = vshll.u32 %v4582, 16
        %v4867 = vrot.slane %v4865, 5
        %v4868 = vor.u32 %v4864, %v4867
        %v4869 = vrot.slane %v4868, 4
        %v4871 = vshll.u32 %v4583, 16
        %v4873 = vrot.slane %v4871, 5
        %v4874 = vsel %vm1370, %v4869, %v4873
        %v4875 = vshrl.u32 %v4583, 16
        %v4877 = vrot.slane %v4875, 4
        %v4878 = vor.u32 %v4877, %v4873
        %v4879 = vrot.slane %v4878, 4
        %v4881 = vshll.u32 %v4584, 16
        %v4883 = vrot.slane %v4881, 5
        %v4884 = vsel %vm1370, %v4879, %v4883
        %v4886 = vshrl.u32 %v4585, 16
        %v4888 = vrot.slane %v4886, 4
        %v4889 = vshll.u32 %v4585, 16
        %v4891 = vrot.slane %v4889, 5
        %v4892 = vor.u32 %v4888, %v4891
        %v4893 = vrot.slane %v4892, 4
        %v4895 = vshll.u32 %v4586, 16
        %v4897 = vrot.slane %v4895, 5
        %v4898 = vsel %vm1370, %v4893, %v4897
        %v4899 = vshrl.u32 %v4586, 16
        %v4901 = vrot.slane %v4899, 4
        %v4902 = vor.u32 %v4901, %v4897
        %v4903 = vrot.slane %v4902, 4
        %v4905 = vshll.u32 %v4587, 16
        %v4907 = vrot.slane %v4905, 5
        %v4908 = vsel %vm1370, %v4903, %v4907
        %v4910 = vshrl.u32 %v4588, 16
        %v4912 = vrot.slane %v4910, 4
        %v4913 = vshll.u32 %v4588, 16
        %v4915 = vrot.slane %v4913, 5
        %v4916 = vor.u32 %v4912, %v4915
        %v4917 = vrot.slane %v4916, 4
        %v4919 = vshll.u32 %v4589, 16
        %v4921 = vrot.slane %v4919, 5
        %v4922 = vsel %vm1370, %v4917, %v4921
        %v4923 = vshrl.u32 %v4589, 16
        %v4925 = vrot.slane %v4923, 4
        %v4926 = vor.u32 %v4925, %v4921
        %v4927 = vrot.slane %v4926, 4
        %v4929 = vshll.u32 %v4590, 16
        %v4931 = vrot.slane %v4929, 5
        %v4932 = vsel %vm1370, %v4927, %v4931
        %v4934 = vshrl.u32 %v4591, 16
        %v4936 = vrot.slane %v4934, 4
        %v4937 = vshll.u32 %v4591, 16
        %v4939 = vrot.slane %v4937, 5
        %v4940 = vor.u32 %v4936, %v4939
        %v4941 = vrot.slane %v4940, 4
        %v4943 = vshll.u32 %v4592, 16
        %v4945 = vrot.slane %v4943, 5
        %v4946 = vsel %vm1370, %v4941, %v4945
        %v4947 = vshrl.u32 %v4592, 16
        %v4949 = vrot.slane %v4947, 4
        %v4950 = vor.u32 %v4949, %v4945
        %v4951 = vrot.slane %v4950, 4
        %v4953 = vshll.u32 %v4593, 16
        %v4955 = vrot.slane %v4953, 5
        %v4956 = vsel %vm1370, %v4951, %v4955
        %v4958 = vshrl.u32 %v4594, 16
        %v4960 = vrot.slane %v4958, 4
        %v4961 = vshll.u32 %v4594, 16
        %v4963 = vrot.slane %v4961, 5
        %v4964 = vor.u32 %v4960, %v4963
        %v4965 = vrot.slane %v4964, 4
        %v4967 = vshll.u32 %v4595, 16
        %v4969 = vrot.slane %v4967, 5
        %v4970 = vsel %vm1370, %v4965, %v4969
        %v4971 = vshrl.u32 %v4595, 16
        %v4973 = vrot.slane %v4971, 4
        %v4974 = vor.u32 %v4973, %v4969
        %v4975 = vrot.slane %v4974, 4
        %v4977 = vshll.u32 %v4596, 16
        %v4979 = vrot.slane %v4977, 5
        %v4980 = vsel %vm1370, %v4975, %v4979
        %5013 = vst [vmem:[#allocation3 + $0x4] sm:$0xf] %v4610
        %5014 = vst [vmem:[#allocation3 + $0x10] sm:$0xf] %v4620
        %5015 = vst [vmem:[#allocation3 + $0x1c] sm:$0xf] %v4634
        %5016 = vst [vmem:[#allocation3 + $0x28] sm:$0xf] %v4644
        %5017 = vst [vmem:[#allocation3 + $0x34] sm:$0xf] %v4658
        %5018 = vst [vmem:[#allocation3 + $0x40] sm:$0xf] %v4668
        %5019 = vst [vmem:[#allocation3 + $0x4c] sm:$0xf] %v4682
        %5020 = vst [vmem:[#allocation3 + $0x58] sm:$0xf] %v4692
        %5021 = vst [vmem:[#allocation3 + $0x64] sm:$0xf] %v4706
        %5022 = vst [vmem:[#allocation3 + $0x70] sm:$0xf] %v4716
        %5023 = vst [vmem:[#allocation3 + $0x7c] sm:$0xf] %v4730
        %5024 = vst [vmem:[#allocation3 + $0x88] sm:$0xf] %v4740
        %5025 = vst [vmem:[#allocation3 + $0x94] sm:$0xf] %v4754
        %5026 = vst [vmem:[#allocation3 + $0xa0] sm:$0xf] %v4764
        %5027 = vst [vmem:[#allocation3 + $0xac] sm:$0xf] %v4778
        %5028 = vst [vmem:[#allocation3 + $0xb8] sm:$0xf] %v4788
        %5029 = vst [vmem:[#allocation3 + $0xc4] sm:$0xf] %v4802
        %5030 = vst [vmem:[#allocation3 + $0xd0] sm:$0xf] %v4812
        %5031 = vst [vmem:[#allocation3 + $0xdc] sm:$0xf] %v4826
        %5032 = vst [vmem:[#allocation3 + $0xe8] sm:$0xf] %v4836
        %5033 = vst [vmem:[#allocation3 + $0xf4] sm:$0xf] %v4850
        %5034 = vst [vmem:[#allocation3 + $0x100] sm:$0xf] %v4860
        %5035 = vst [vmem:[#allocation3 + $0x10c] sm:$0xf] %v4874
        %5036 = vst [vmem:[#allocation3 + $0x118] sm:$0xf] %v4884
        %5037 = vst [vmem:[#allocation3 + $0x124] sm:$0xf] %v4898
        %5038 = vst [vmem:[#allocation3 + $0x130] sm:$0xf] %v4908
        %5039 = vst [vmem:[#allocation3 + $0x13c] sm:$0xf] %v4922
        %5040 = vst [vmem:[#allocation3 + $0x148] sm:$0xf] %v4932
        %5041 = vst [vmem:[#allocation3 + $0x154] sm:$0xf] %v4946
        %5042 = vst [vmem:[#allocation3 + $0x160] sm:$0xf] %v4956
        %5043 = vst [vmem:[#allocation3 + $0x16c] sm:$0xf] %v4970
        %5044 = vst [vmem:[#allocation3 + $0x178] sm:$0xf] %v4980
        %v5045 = vld [vmem:[%s4484] sm:$0xe]
        %v5046 = vld [vmem:[%s4484 + $0x4] sm:$0xf]
        %v5047 = vld [vmem:[%s4484 + $0x8] sm:$0x1]
        %v5048 = vld [vmem:[%s4484 + $0xc] sm:$0xe]
        %v5049 = vld [vmem:[%s4484 + $0x10] sm:$0xf]
        %v5050 = vld [vmem:[%s4484 + $0x14] sm:$0x1]
        %v5051 = vld [vmem:[%s4484 + $0x18] sm:$0xe]
        %v5052 = vld [vmem:[%s4484 + $0x1c] sm:$0xf]
        %v5053 = vld [vmem:[%s4484 + $0x20] sm:$0x1]
        %v5054 = vld [vmem:[%s4484 + $0x24] sm:$0xe]
        %v5055 = vld [vmem:[%s4484 + $0x28] sm:$0xf]
        %v5056 = vld [vmem:[%s4484 + $0x2c] sm:$0x1]
        %v5057 = vld [vmem:[%s4484 + $0x30] sm:$0xe]
        %v5058 = vld [vmem:[%s4484 + $0x34] sm:$0xf]
        %v5059 = vld [vmem:[%s4484 + $0x38] sm:$0x1]
        %v5060 = vld [vmem:[%s4484 + $0x3c] sm:$0xe]
        %v5061 = vld [vmem:[%s4484 + $0x40] sm:$0xf]
        %v5062 = vld [vmem:[%s4484 + $0x44] sm:$0x1]
        %v5063 = vld [vmem:[%s4484 + $0x48] sm:$0xe]
        %v5064 = vld [vmem:[%s4484 + $0x4c] sm:$0xf]
        %v5065 = vld [vmem:[%s4484 + $0x50] sm:$0x1]
        %v5066 = vld [vmem:[%s4484 + $0x54] sm:$0xe]
        %v5067 = vld [vmem:[%s4484 + $0x58] sm:$0xf]
        %v5068 = vld [vmem:[%s4484 + $0x5c] sm:$0x1]
        %v5069 = vld [vmem:[%s4484 + $0x60] sm:$0xe]
        %v5070 = vld [vmem:[%s4484 + $0x64] sm:$0xf]
        %v5071 = vld [vmem:[%s4484 + $0x68] sm:$0x1]
        %v5072 = vld [vmem:[%s4484 + $0x6c] sm:$0xe]
        %v5073 = vld [vmem:[%s4484 + $0x70] sm:$0xf]
        %v5074 = vld [vmem:[%s4484 + $0x74] sm:$0x1]
        %v5075 = vld [vmem:[%s4484 + $0x78] sm:$0xe]
        %v5076 = vld [vmem:[%s4484 + $0x7c] sm:$0xf]
        %v5077 = vld [vmem:[%s4484 + $0x80] sm:$0x1]
        %v5078 = vld [vmem:[%s4484 + $0x84] sm:$0xe]
        %v5079 = vld [vmem:[%s4484 + $0x88] sm:$0xf]
        %v5080 = vld [vmem:[%s4484 + $0x8c] sm:$0x1]
        %v5081 = vld [vmem:[%s4484 + $0x90] sm:$0xe]
        %v5082 = vld [vmem:[%s4484 + $0x94] sm:$0xf]
        %v5083 = vld [vmem:[%s4484 + $0x98] sm:$0x1]
        %v5084 = vld [vmem:[%s4484 + $0x9c] sm:$0xe]
        %v5085 = vld [vmem:[%s4484 + $0xa0] sm:$0xf]
        %v5086 = vld [vmem:[%s4484 + $0xa4] sm:$0x1]
        %v5087 = vld [vmem:[%s4484 + $0xa8] sm:$0xe]
        %v5088 = vld [vmem:[%s4484 + $0xac] sm:$0xf]
        %v5089 = vld [vmem:[%s4484 + $0xb0] sm:$0x1]
        %v5090 = vld [vmem:[%s4484 + $0xb4] sm:$0xe]
        %v5091 = vld [vmem:[%s4484 + $0xb8] sm:$0xf]
        %v5092 = vld [vmem:[%s4484 + $0xbc] sm:$0x1]
        %v5141 = vrot.slane %v5045, 5
        %v5142 = vrot.slane %v5141, 4
        %v5143 = vrot.slane %v5046, 5
        %v5144 = vsel %vm1917, %v5142, %v5143
        %v5145 = vrot.slane %v5143, 4
        %v5146 = vrot.slane %v5047, 5
        %v5147 = vsel %vm1917, %v5145, %v5146
        %v5148 = vrot.slane %v5048, 5
        %v5149 = vrot.slane %v5148, 4
        %v5150 = vrot.slane %v5049, 5
        %v5151 = vsel %vm1917, %v5149, %v5150
        %v5152 = vrot.slane %v5150, 4
        %v5153 = vrot.slane %v5050, 5
        %v5154 = vsel %vm1917, %v5152, %v5153
        %v5155 = vrot.slane %v5051, 5
        %v5156 = vrot.slane %v5155, 4
        %v5157 = vrot.slane %v5052, 5
        %v5158 = vsel %vm1917, %v5156, %v5157
        %v5159 = vrot.slane %v5157, 4
        %v5160 = vrot.slane %v5053, 5
        %v5161 = vsel %vm1917, %v5159, %v5160
        %v5162 = vrot.slane %v5054, 5
        %v5163 = vrot.slane %v5162, 4
        %v5164 = vrot.slane %v5055, 5
        %v5165 = vsel %vm1917, %v5163, %v5164
        %v5166 = vrot.slane %v5164, 4
        %v5167 = vrot.slane %v5056, 5
        %v5168 = vsel %vm1917, %v5166, %v5167
        %v5169 = vrot.slane %v5057, 5
        %v5170 = vrot.slane %v5169, 4
        %v5171 = vrot.slane %v5058, 5
        %v5172 = vsel %vm1917, %v5170, %v5171
        %v5173 = vrot.slane %v5171, 4
        %v5174 = vrot.slane %v5059, 5
        %v5175 = vsel %vm1917, %v5173, %v5174
        %v5176 = vrot.slane %v5060, 5
        %v5177 = vrot.slane %v5176, 4
        %v5178 = vrot.slane %v5061, 5
        %v5179 = vsel %vm1917, %v5177, %v5178
        %v5180 = vrot.slane %v5178, 4
        %v5181 = vrot.slane %v5062, 5
        %v5182 = vsel %vm1917, %v5180, %v5181
        %v5183 = vrot.slane %v5063, 5
        %v5184 = vrot.slane %v5183, 4
        %v5185 = vrot.slane %v5064, 5
        %v5186 = vsel %vm1917, %v5184, %v5185
        %v5187 = vrot.slane %v5185, 4
        %v5188 = vrot.slane %v5065, 5
        %v5189 = vsel %vm1917, %v5187, %v5188
        %v5190 = vrot.slane %v5066, 5
        %v5191 = vrot.slane %v5190, 4
        %v5192 = vrot.slane %v5067, 5
        %v5193 = vsel %vm1917, %v5191, %v5192
        %v5194 = vrot.slane %v5192, 4
        %v5195 = vrot.slane %v5068, 5
        %v5196 = vsel %vm1917, %v5194, %v5195
        %v5197 = vrot.slane %v5069, 5
        %v5198 = vrot.slane %v5197, 4
        %v5199 = vrot.slane %v5070, 5
        %v5200 = vsel %vm1917, %v5198, %v5199
        %v5201 = vrot.slane %v5199, 4
        %v5202 = vrot.slane %v5071, 5
        %v5203 = vsel %vm1917, %v5201, %v5202
        %v5204 = vrot.slane %v5072, 5
        %v5205 = vrot.slane %v5204, 4
        %v5206 = vrot.slane %v5073, 5
        %v5207 = vsel %vm1917, %v5205, %v5206
        %v5208 = vrot.slane %v5206, 4
        %v5209 = vrot.slane %v5074, 5
        %v5210 = vsel %vm1917, %v5208, %v5209
        %v5211 = vrot.slane %v5075, 5
        %v5212 = vrot.slane %v5211, 4
        %v5213 = vrot.slane %v5076, 5
        %v5214 = vsel %vm1917, %v5212, %v5213
        %v5215 = vrot.slane %v5213, 4
        %v5216 = vrot.slane %v5077, 5
        %v5217 = vsel %vm1917, %v5215, %v5216
        %v5218 = vrot.slane %v5078, 5
        %v5219 = vrot.slane %v5218, 4
        %v5220 = vrot.slane %v5079, 5
        %v5221 = vsel %vm1917, %v5219, %v5220
        %v5222 = vrot.slane %v5220, 4
        %v5223 = vrot.slane %v5080, 5
        %v5224 = vsel %vm1917, %v5222, %v5223
        %v5225 = vrot.slane %v5081, 5
        %v5226 = vrot.slane %v5225, 4
        %v5227 = vrot.slane %v5082, 5
        %v5228 = vsel %vm1917, %v5226, %v5227
        %v5229 = vrot.slane %v5227, 4
        %v5230 = vrot.slane %v5083, 5
        %v5231 = vsel %vm1917, %v5229, %v5230
        %v5232 = vrot.slane %v5084, 5
        %v5233 = vrot.slane %v5232, 4
        %v5234 = vrot.slane %v5085, 5
        %v5235 = vsel %vm1917, %v5233, %v5234
        %v5236 = vrot.slane %v5234, 4
        %v5237 = vrot.slane %v5086, 5
        %v5238 = vsel %vm1917, %v5236, %v5237
        %v5239 = vrot.slane %v5087, 5
        %v5240 = vrot.slane %v5239, 4
        %v5241 = vrot.slane %v5088, 5
        %v5242 = vsel %vm1917, %v5240, %v5241
        %v5243 = vrot.slane %v5241, 4
        %v5244 = vrot.slane %v5089, 5
        %v5245 = vsel %vm1917, %v5243, %v5244
        %v5246 = vrot.slane %v5090, 5
        %v5247 = vrot.slane %v5246, 4
        %v5248 = vrot.slane %v5091, 5
        %v5249 = vsel %vm1917, %v5247, %v5248
        %v5250 = vrot.slane %v5248, 4
        %v5251 = vrot.slane %v5092, 5
        %v5252 = vsel %vm1917, %v5250, %v5251
        %5285 = vst [vmem:[#allocation3 + $0x8] sm:$0xf] %v5144
        %5286 = vst [vmem:[#allocation3 + $0x14] sm:$0xf] %v5147
        %5287 = vst [vmem:[#allocation3 + $0x20] sm:$0xf] %v5151
        %5288 = vst [vmem:[#allocation3 + $0x2c] sm:$0xf] %v5154
        %5289 = vst [vmem:[#allocation3 + $0x38] sm:$0xf] %v5158
        %5290 = vst [vmem:[#allocation3 + $0x44] sm:$0xf] %v5161
        %5291 = vst [vmem:[#allocation3 + $0x50] sm:$0xf] %v5165
        %5292 = vst [vmem:[#allocation3 + $0x5c] sm:$0xf] %v5168
        %5293 = vst [vmem:[#allocation3 + $0x68] sm:$0xf] %v5172
        %5294 = vst [vmem:[#allocation3 + $0x74] sm:$0xf] %v5175
        %5295 = vst [vmem:[#allocation3 + $0x80] sm:$0xf] %v5179
        %5296 = vst [vmem:[#allocation3 + $0x8c] sm:$0xf] %v5182
        %5297 = vst [vmem:[#allocation3 + $0x98] sm:$0xf] %v5186
        %5298 = vst [vmem:[#allocation3 + $0xa4] sm:$0xf] %v5189
        %5299 = vst [vmem:[#allocation3 + $0xb0] sm:$0xf] %v5193
        %5300 = vst [vmem:[#allocation3 + $0xbc] sm:$0xf] %v5196
        %5301 = vst [vmem:[#allocation3 + $0xc8] sm:$0xf] %v5200
        %5302 = vst [vmem:[#allocation3 + $0xd4] sm:$0xf] %v5203
        %5303 = vst [vmem:[#allocation3 + $0xe0] sm:$0xf] %v5207
        %5304 = vst [vmem:[#allocation3 + $0xec] sm:$0xf] %v5210
        %5305 = vst [vmem:[#allocation3 + $0xf8] sm:$0xf] %v5214
        %5306 = vst [vmem:[#allocation3 + $0x104] sm:$0xf] %v5217
        %5307 = vst [vmem:[#allocation3 + $0x110] sm:$0xf] %v5221
        %5308 = vst [vmem:[#allocation3 + $0x11c] sm:$0xf] %v5224
        %5309 = vst [vmem:[#allocation3 + $0x128] sm:$0xf] %v5228
        %5310 = vst [vmem:[#allocation3 + $0x134] sm:$0xf] %v5231
        %5311 = vst [vmem:[#allocation3 + $0x140] sm:$0xf] %v5235
        %5312 = vst [vmem:[#allocation3 + $0x14c] sm:$0xf] %v5238
        %5313 = vst [vmem:[#allocation3 + $0x158] sm:$0xf] %v5242
        %5314 = vst [vmem:[#allocation3 + $0x164] sm:$0xf] %v5245
        %5315 = vst [vmem:[#allocation3 + $0x170] sm:$0xf] %v5249
        %5316 = vst [vmem:[#allocation3 + $0x17c] sm:$0xf] %v5252
        %v5317 = vld [vmem:[#allocation3] sm:$0xff]
        %v5318 = vld [vmem:[#allocation3 + $0x8] sm:$0xf]
        %v5319 = vld [vmem:[#allocation3 + $0xc] sm:$0xff]
        %v5320 = vld [vmem:[#allocation3 + $0x14] sm:$0xf]
        %v5321 = vld [vmem:[#allocation3 + $0x18] sm:$0xff]
        %v5322 = vld [vmem:[#allocation3 + $0x20] sm:$0xf]
        %v5323 = vld [vmem:[#allocation3 + $0x24] sm:$0xff]
        %v5324 = vld [vmem:[#allocation3 + $0x2c] sm:$0xf]
        %v5325 = vld [vmem:[#allocation3 + $0x30] sm:$0xff]
        %v5326 = vld [vmem:[#allocation3 + $0x38] sm:$0xf]
        %v5327 = vld [vmem:[#allocation3 + $0x3c] sm:$0xff]
        %v5328 = vld [vmem:[#allocation3 + $0x44] sm:$0xf]
        %v5329 = vld [vmem:[#allocation3 + $0x48] sm:$0xff]
        %v5330 = vld [vmem:[#allocation3 + $0x50] sm:$0xf]
        %v5331 = vld [vmem:[#allocation3 + $0x54] sm:$0xff]
        %v5332 = vld [vmem:[#allocation3 + $0x5c] sm:$0xf]
        %v5333 = vld [vmem:[#allocation3 + $0x60] sm:$0xff]
        %v5334 = vld [vmem:[#allocation3 + $0x68] sm:$0xf]
        %v5335 = vld [vmem:[#allocation3 + $0x6c] sm:$0xff]
        %v5336 = vld [vmem:[#allocation3 + $0x74] sm:$0xf]
        %v5337 = vld [vmem:[#allocation3 + $0x78] sm:$0xff]
        %v5338 = vld [vmem:[#allocation3 + $0x80] sm:$0xf]
        %v5339 = vld [vmem:[#allocation3 + $0x84] sm:$0xff]
        %v5340 = vld [vmem:[#allocation3 + $0x8c] sm:$0xf]
        %v5341 = vld [vmem:[#allocation3 + $0x90] sm:$0xff]
        %v5342 = vld [vmem:[#allocation3 + $0x98] sm:$0xf]
        %v5343 = vld [vmem:[#allocation3 + $0x9c] sm:$0xff]
        %v5344 = vld [vmem:[#allocation3 + $0xa4] sm:$0xf]
        %v5345 = vld [vmem:[#allocation3 + $0xa8] sm:$0xff]
        %v5346 = vld [vmem:[#allocation3 + $0xb0] sm:$0xf]
        %v5347 = vld [vmem:[#allocation3 + $0xb4] sm:$0xff]
        %v5348 = vld [vmem:[#allocation3 + $0xbc] sm:$0xf]
        %v5349 = vld [vmem:[#allocation3 + $0xc0] sm:$0xff]
        %v5350 = vld [vmem:[#allocation3 + $0xc8] sm:$0xf]
        %v5351 = vld [vmem:[#allocation3 + $0xcc] sm:$0xff]
        %v5352 = vld [vmem:[#allocation3 + $0xd4] sm:$0xf]
        %v5353 = vld [vmem:[#allocation3 + $0xd8] sm:$0xff]
        %v5354 = vld [vmem:[#allocation3 + $0xe0] sm:$0xf]
        %v5355 = vld [vmem:[#allocation3 + $0xe4] sm:$0xff]
        %v5356 = vld [vmem:[#allocation3 + $0xec] sm:$0xf]
        %v5357 = vld [vmem:[#allocation3 + $0xf0] sm:$0xff]
        %v5358 = vld [vmem:[#allocation3 + $0xf8] sm:$0xf]
        %v5359 = vld [vmem:[#allocation3 + $0xfc] sm:$0xff]
        %v5360 = vld [vmem:[#allocation3 + $0x104] sm:$0xf]
        %v5361 = vld [vmem:[#allocation3 + $0x108] sm:$0xff]
        %v5362 = vld [vmem:[#allocation3 + $0x110] sm:$0xf]
        %v5363 = vld [vmem:[#allocation3 + $0x114] sm:$0xff]
        %v5364 = vld [vmem:[#allocation3 + $0x11c] sm:$0xf]
        %v5365 = vld [vmem:[#allocation3 + $0x120] sm:$0xff]
        %v5366 = vld [vmem:[#allocation3 + $0x128] sm:$0xf]
        %v5367 = vld [vmem:[#allocation3 + $0x12c] sm:$0xff]
        %v5368 = vld [vmem:[#allocation3 + $0x134] sm:$0xf]
        %v5369 = vld [vmem:[#allocation3 + $0x138] sm:$0xff]
        %v5370 = vld [vmem:[#allocation3 + $0x140] sm:$0xf]
        %v5371 = vld [vmem:[#allocation3 + $0x144] sm:$0xff]
        %v5372 = vld [vmem:[#allocation3 + $0x14c] sm:$0xf]
        %v5373 = vld [vmem:[#allocation3 + $0x150] sm:$0xff]
        %v5374 = vld [vmem:[#allocation3 + $0x158] sm:$0xf]
        %v5375 = vld [vmem:[#allocation3 + $0x15c] sm:$0xff]
        %v5376 = vld [vmem:[#allocation3 + $0x164] sm:$0xf]
        %v5377 = vld [vmem:[#allocation3 + $0x168] sm:$0xff]
        %v5378 = vld [vmem:[#allocation3 + $0x170] sm:$0xf]
        %v5379 = vld [vmem:[#allocation3 + $0x174] sm:$0xff]
        %v5380 = vld [vmem:[#allocation3 + $0x17c] sm:$0xf]
        %v5381 = vld [vmem:[#allocation9 + $0x180] sm:$0xf]
        %v5382 = vld [vmem:[#allocation9 + $0x184] sm:$0xf]
        %v5383 = vld [vmem:[#allocation9 + $0x188] sm:$0xf]
        %v5384 = vld [vmem:[#allocation9 + $0x18c] sm:$0xf]
        %v5385 = vld [vmem:[#allocation9 + $0x190] sm:$0xf]
        %v5386 = vld [vmem:[#allocation9 + $0x194] sm:$0xf]
        %v5387 = vld [vmem:[#allocation9 + $0x198] sm:$0xf]
        %v5388 = vld [vmem:[#allocation9 + $0x19c] sm:$0xf]
        %v5389 = vld [vmem:[#allocation9 + $0x1a0] sm:$0xf]
        %v5390 = vld [vmem:[#allocation9 + $0x1a4] sm:$0xf]
        %v5391 = vld [vmem:[#allocation9 + $0x1a8] sm:$0xf]
        %v5392 = vld [vmem:[#allocation9 + $0x1ac] sm:$0xf]
        %v5393 = vld [vmem:[#allocation9 + $0x1b0] sm:$0xf]
        %v5394 = vld [vmem:[#allocation9 + $0x1b4] sm:$0xf]
        %v5395 = vld [vmem:[#allocation9 + $0x1b8] sm:$0xf]
        %v5396 = vld [vmem:[#allocation9 + $0x1bc] sm:$0xf]
        %v5397 = vld [vmem:[#allocation9 + $0x1c0] sm:$0xf]
        %v5398 = vld [vmem:[#allocation9 + $0x1c4] sm:$0xf]
        %v5399 = vld [vmem:[#allocation9 + $0x1c8] sm:$0xf]
        %v5400 = vld [vmem:[#allocation9 + $0x1cc] sm:$0xf]
        %v5401 = vld [vmem:[#allocation9 + $0x1d0] sm:$0xf]
        %v5402 = vld [vmem:[#allocation9 + $0x1d4] sm:$0xf]
        %v5403 = vld [vmem:[#allocation9 + $0x1d8] sm:$0xf]
        %v5404 = vld [vmem:[#allocation9 + $0x1dc] sm:$0xf]
        %v5405 = vld [vmem:[#allocation9 + $0x1e0] sm:$0xf]
        %v5406 = vld [vmem:[#allocation9 + $0x1e4] sm:$0xf]
        %v5407 = vld [vmem:[#allocation9 + $0x1e8] sm:$0xf]
        %v5408 = vld [vmem:[#allocation9 + $0x1ec] sm:$0xf]
        %v5409 = vld [vmem:[#allocation9 + $0x1f0] sm:$0xf]
        %v5410 = vld [vmem:[#allocation9 + $0x1f4] sm:$0xf]
        %v5411 = vld [vmem:[#allocation9 + $0x1f8] sm:$0xf]
        %v5412 = vld [vmem:[#allocation9 + $0x1fc] sm:$0xf]
        %v5413 = vld [vmem:[#allocation9 + $0x200] sm:$0xf]
        %v5414 = vld [vmem:[#allocation9 + $0x204] sm:$0xf]
        %v5415 = vld [vmem:[#allocation9 + $0x208] sm:$0xf]
        %v5416 = vld [vmem:[#allocation9 + $0x20c] sm:$0xf]
        %v5417 = vld [vmem:[#allocation9 + $0x210] sm:$0xf]
        %v5418 = vld [vmem:[#allocation9 + $0x214] sm:$0xf]
        %v5419 = vld [vmem:[#allocation9 + $0x218] sm:$0xf]
        %v5420 = vld [vmem:[#allocation9 + $0x21c] sm:$0xf]
        %v5421 = vld [vmem:[#allocation9 + $0x220] sm:$0xf]
        %v5422 = vld [vmem:[#allocation9 + $0x224] sm:$0xf]
        %v5423 = vld [vmem:[#allocation9 + $0x228] sm:$0xf]
        %v5424 = vld [vmem:[#allocation9 + $0x22c] sm:$0xf]
        %v5425 = vld [vmem:[#allocation9 + $0x230] sm:$0xf]
        %v5426 = vld [vmem:[#allocation9 + $0x234] sm:$0xf]
        %v5427 = vld [vmem:[#allocation9 + $0x238] sm:$0xf]
        %v5428 = vld [vmem:[#allocation9 + $0x23c] sm:$0xf]
        %v5493 = vunpack.c.l.b16 %v5317
        %v5494 = vunpack.c.h.b16 %v5317
        %v5495 = vunpack.c.l.b16 %v5318
        %v5496 = vunpack.c.l.b16 %v5319
        %v5497 = vunpack.c.h.b16 %v5319
        %v5498 = vunpack.c.l.b16 %v5320
        %v5499 = vunpack.c.l.b16 %v5321
        %v5500 = vunpack.c.h.b16 %v5321
        %v5501 = vunpack.c.l.b16 %v5322
        %v5502 = vunpack.c.l.b16 %v5323
        %v5503 = vunpack.c.h.b16 %v5323
        %v5504 = vunpack.c.l.b16 %v5324
        %v5505 = vunpack.c.l.b16 %v5325
        %v5506 = vunpack.c.h.b16 %v5325
        %v5507 = vunpack.c.l.b16 %v5326
        %v5508 = vunpack.c.l.b16 %v5327
        %v5509 = vunpack.c.h.b16 %v5327
        %v5510 = vunpack.c.l.b16 %v5328
        %v5511 = vunpack.c.l.b16 %v5329
        %v5512 = vunpack.c.h.b16 %v5329
        %v5513 = vunpack.c.l.b16 %v5330
        %v5514 = vunpack.c.l.b16 %v5331
        %v5515 = vunpack.c.h.b16 %v5331
        %v5516 = vunpack.c.l.b16 %v5332
        %v5517 = vunpack.c.l.b16 %v5333
        %v5518 = vunpack.c.h.b16 %v5333
        %v5519 = vunpack.c.l.b16 %v5334
        %v5520 = vunpack.c.l.b16 %v5335
        %v5521 = vunpack.c.h.b16 %v5335
        %v5522 = vunpack.c.l.b16 %v5336
        %v5523 = vunpack.c.l.b16 %v5337
        %v5524 = vunpack.c.h.b16 %v5337
        %v5525 = vunpack.c.l.b16 %v5338
        %v5526 = vunpack.c.l.b16 %v5339
        %v5527 = vunpack.c.h.b16 %v5339
        %v5528 = vunpack.c.l.b16 %v5340
        %v5529 = vunpack.c.l.b16 %v5341
        %v5530 = vunpack.c.h.b16 %v5341
        %v5531 = vunpack.c.l.b16 %v5342
        %v5532 = vunpack.c.l.b16 %v5343
        %v5533 = vunpack.c.h.b16 %v5343
        %v5534 = vunpack.c.l.b16 %v5344
        %v5535 = vunpack.c.l.b16 %v5345
        %v5536 = vunpack.c.h.b16 %v5345
        %v5537 = vunpack.c.l.b16 %v5346
        %v5538 = vunpack.c.l.b16 %v5347
        %v5539 = vunpack.c.h.b16 %v5347
        %v5540 = vunpack.c.l.b16 %v5348
        %v5541 = vunpack.c.l.b16 %v5349
        %v5542 = vunpack.c.h.b16 %v5349
        %v5543 = vunpack.c.l.b16 %v5350
        %v5544 = vunpack.c.l.b16 %v5351
        %v5545 = vunpack.c.h.b16 %v5351
        %v5546 = vunpack.c.l.b16 %v5352
        %v5547 = vunpack.c.l.b16 %v5353
        %v5548 = vunpack.c.h.b16 %v5353
        %v5549 = vunpack.c.l.b16 %v5354
        %v5550 = vunpack.c.l.b16 %v5355
        %v5551 = vunpack.c.h.b16 %v5355
        %v5552 = vunpack.c.l.b16 %v5356
        %v5553 = vunpack.c.l.b16 %v5357
        %v5554 = vunpack.c.h.b16 %v5357
        %v5555 = vunpack.c.l.b16 %v5358
        %v5556 = vunpack.c.l.b16 %v5359
        %v5557 = vunpack.c.h.b16 %v5359
        %v5558 = vunpack.c.l.b16 %v5360
        %v5559 = vunpack.c.l.b16 %v5361
        %v5560 = vunpack.c.h.b16 %v5361
        %v5561 = vunpack.c.l.b16 %v5362
        %v5562 = vunpack.c.l.b16 %v5363
        %v5563 = vunpack.c.h.b16 %v5363
        %v5564 = vunpack.c.l.b16 %v5364
        %v5565 = vunpack.c.l.b16 %v5365
        %v5566 = vunpack.c.h.b16 %v5365
        %v5567 = vunpack.c.l.b16 %v5366
        %v5568 = vunpack.c.l.b16 %v5367
        %v5569 = vunpack.c.h.b16 %v5367
        %v5570 = vunpack.c.l.b16 %v5368
        %v5571 = vunpack.c.l.b16 %v5369
        %v5572 = vunpack.c.h.b16 %v5369
        %v5573 = vunpack.c.l.b16 %v5370
        %v5574 = vunpack.c.l.b16 %v5371
        %v5575 = vunpack.c.h.b16 %v5371
        %v5576 = vunpack.c.l.b16 %v5372
        %v5577 = vunpack.c.l.b16 %v5373
        %v5578 = vunpack.c.h.b16 %v5373
        %v5579 = vunpack.c.l.b16 %v5374
        %v5580 = vunpack.c.l.b16 %v5375
        %v5581 = vunpack.c.h.b16 %v5375
        %v5582 = vunpack.c.l.b16 %v5376
        %v5583 = vunpack.c.l.b16 %v5377
        %v5584 = vunpack.c.h.b16 %v5377
        %v5585 = vunpack.c.l.b16 %v5378
        %v5586 = vunpack.c.l.b16 %v5379
        %v5587 = vunpack.c.h.b16 %v5379
        %v5588 = vunpack.c.l.b16 %v5380
        %v5589 = vpack.c.b16 %v5496, %v5493
        %v5590 = vpack.c.b16 %v5497, %v5494
        %v5591 = vpack.c.b16 %v5498, %v5495
        %v5592 = vpack.c.b16 %v5502, %v5499
        %v5593 = vpack.c.b16 %v5503, %v5500
        %v5594 = vpack.c.b16 %v5504, %v5501
        %v5595 = vpack.c.b16 %v5508, %v5505
        %v5596 = vpack.c.b16 %v5509, %v5506
        %v5597 = vpack.c.b16 %v5510, %v5507
        %v5598 = vpack.c.b16 %v5514, %v5511
        %v5599 = vpack.c.b16 %v5515, %v5512
        %v5600 = vpack.c.b16 %v5516, %v5513
        %v5601 = vpack.c.b16 %v5520, %v5517
        %v5602 = vpack.c.b16 %v5521, %v5518
        %v5603 = vpack.c.b16 %v5522, %v5519
        %v5604 = vpack.c.b16 %v5526, %v5523
        %v5605 = vpack.c.b16 %v5527, %v5524
        %v5606 = vpack.c.b16 %v5528, %v5525
        %v5607 = vpack.c.b16 %v5532, %v5529
        %v5608 = vpack.c.b16 %v5533, %v5530
        %v5609 = vpack.c.b16 %v5534, %v5531
        %v5610 = vpack.c.b16 %v5538, %v5535
        %v5611 = vpack.c.b16 %v5539, %v5536
        %v5612 = vpack.c.b16 %v5540, %v5537
        %v5613 = vpack.c.b16 %v5544, %v5541
        %v5614 = vpack.c.b16 %v5545, %v5542
        %v5615 = vpack.c.b16 %v5546, %v5543
        %v5616 = vpack.c.b16 %v5550, %v5547
        %v5617 = vpack.c.b16 %v5551, %v5548
        %v5618 = vpack.c.b16 %v5552, %v5549
        %v5619 = vpack.c.b16 %v5556, %v5553
        %v5620 = vpack.c.b16 %v5557, %v5554
        %v5621 = vpack.c.b16 %v5558, %v5555
        %v5622 = vpack.c.b16 %v5562, %v5559
        %v5623 = vpack.c.b16 %v5563, %v5560
        %v5624 = vpack.c.b16 %v5564, %v5561
        %v5625 = vpack.c.b16 %v5568, %v5565
        %v5626 = vpack.c.b16 %v5569, %v5566
        %v5627 = vpack.c.b16 %v5570, %v5567
        %v5628 = vpack.c.b16 %v5574, %v5571
        %v5629 = vpack.c.b16 %v5575, %v5572
        %v5630 = vpack.c.b16 %v5576, %v5573
        %v5631 = vpack.c.b16 %v5580, %v5577
        %v5632 = vpack.c.b16 %v5581, %v5578
        %v5633 = vpack.c.b16 %v5582, %v5579
        %v5634 = vpack.c.b16 %v5586, %v5583
        %v5635 = vpack.c.b16 %v5587, %v5584
        %v5636 = vpack.c.b16 %v5588, %v5585
        %v5733 = vunpack.c.l.b16 %v5381
        %v5734 = vunpack.c.l.b16 %v5382
        %v5735 = vunpack.c.l.b16 %v5383
        %v5736 = vunpack.c.l.b16 %v5384
        %v5737 = vunpack.c.l.b16 %v5385
        %v5738 = vunpack.c.l.b16 %v5386
        %v5739 = vunpack.c.l.b16 %v5387
        %v5740 = vunpack.c.l.b16 %v5388
        %v5741 = vunpack.c.l.b16 %v5389
        %v5742 = vunpack.c.l.b16 %v5390
        %v5743 = vunpack.c.l.b16 %v5391
        %v5744 = vunpack.c.l.b16 %v5392
        %v5745 = vunpack.c.l.b16 %v5393
        %v5746 = vunpack.c.l.b16 %v5394
        %v5747 = vunpack.c.l.b16 %v5395
        %v5748 = vunpack.c.l.b16 %v5396
        %v5749 = vunpack.c.l.b16 %v5397
        %v5750 = vunpack.c.l.b16 %v5398
        %v5751 = vunpack.c.l.b16 %v5399
        %v5752 = vunpack.c.l.b16 %v5400
        %v5753 = vunpack.c.l.b16 %v5401
        %v5754 = vunpack.c.l.b16 %v5402
        %v5755 = vunpack.c.l.b16 %v5403
        %v5756 = vunpack.c.l.b16 %v5404
        %v5757 = vunpack.c.l.b16 %v5405
        %v5758 = vunpack.c.l.b16 %v5406
        %v5759 = vunpack.c.l.b16 %v5407
        %v5760 = vunpack.c.l.b16 %v5408
        %v5761 = vunpack.c.l.b16 %v5409
        %v5762 = vunpack.c.l.b16 %v5410
        %v5763 = vunpack.c.l.b16 %v5411
        %v5764 = vunpack.c.l.b16 %v5412
        %v5765 = vunpack.c.l.b16 %v5413
        %v5766 = vunpack.c.l.b16 %v5414
        %v5767 = vunpack.c.l.b16 %v5415
        %v5768 = vunpack.c.l.b16 %v5416
        %v5769 = vunpack.c.l.b16 %v5417
        %v5770 = vunpack.c.l.b16 %v5418
        %v5771 = vunpack.c.l.b16 %v5419
        %v5772 = vunpack.c.l.b16 %v5420
        %v5773 = vunpack.c.l.b16 %v5421
        %v5774 = vunpack.c.l.b16 %v5422
        %v5775 = vunpack.c.l.b16 %v5423
        %v5776 = vunpack.c.l.b16 %v5424
        %v5777 = vunpack.c.l.b16 %v5425
        %v5778 = vunpack.c.l.b16 %v5426
        %v5779 = vunpack.c.l.b16 %v5427
        %v5780 = vunpack.c.l.b16 %v5428
        %v5781 = vpack.c.b16 %v5734, %v5733
        %v5782 = vpack.c.b16 %v5736, %v5735
        %v5783 = vpack.c.b16 %v5738, %v5737
        %v5784 = vpack.c.b16 %v5740, %v5739
        %v5785 = vpack.c.b16 %v5742, %v5741
        %v5786 = vpack.c.b16 %v5744, %v5743
        %v5787 = vpack.c.b16 %v5746, %v5745
        %v5788 = vpack.c.b16 %v5748, %v5747
        %v5789 = vpack.c.b16 %v5750, %v5749
        %v5790 = vpack.c.b16 %v5752, %v5751
        %v5791 = vpack.c.b16 %v5754, %v5753
        %v5792 = vpack.c.b16 %v5756, %v5755
        %v5793 = vpack.c.b16 %v5758, %v5757
        %v5794 = vpack.c.b16 %v5760, %v5759
        %v5795 = vpack.c.b16 %v5762, %v5761
        %v5796 = vpack.c.b16 %v5764, %v5763
        %v5797 = vpack.c.b16 %v5766, %v5765
        %v5798 = vpack.c.b16 %v5768, %v5767
        %v5799 = vpack.c.b16 %v5770, %v5769
        %v5800 = vpack.c.b16 %v5772, %v5771
        %v5801 = vpack.c.b16 %v5774, %v5773
        %v5802 = vpack.c.b16 %v5776, %v5775
        %v5803 = vpack.c.b16 %v5778, %v5777
        %v5804 = vpack.c.b16 %v5780, %v5779
        %5829 = vmatpush.bf16.msra.mxu0 %v5788
        %5830 = vmatpush.bf16.msra.mxu0 %v5787
        %5831 = vmatpush.bf16.msra.mxu0 %v5786
        %5832 = vmatpush.bf16.msra.mxu0 %v5785
        %5833 = vmatpush.bf16.msra.mxu0 %v5784
        %5834 = vmatpush.bf16.msra.mxu0 %v5783
        %5835 = vmatpush.bf16.msra.mxu0 %v5782
        %5836 = vmatpush.bf16.msra.mxu0 %v5781
        %5837 = vmatmul.bf16.gmra.mxu0 %v5589
        %v5838 = vpop.f32.mrf.mxu0
        %v5839 = vadd.f32 0.0, %v5838
        %v5840 = vpop.f32.mrf.mxu0
        %v5841 = vadd.f32 0.0, %v5840
        %5842 = vmatmul.bf16.gmra.mxu0 %v5592
        %v5843 = vpop.f32.mrf.mxu0
        %v5844 = vadd.f32 0.0, %v5843
        %v5845 = vpop.f32.mrf.mxu0
        %v5846 = vadd.f32 0.0, %v5845
        %5847 = vmatmul.bf16.gmra.mxu0 %v5595
        %v5848 = vpop.f32.mrf.mxu0
        %v5849 = vadd.f32 0.0, %v5848
        %v5850 = vpop.f32.mrf.mxu0
        %v5851 = vadd.f32 0.0, %v5850
        %5852 = vmatmul.bf16.gmra.mxu0 %v5598
        %v5853 = vpop.f32.mrf.mxu0
        %v5854 = vadd.f32 0.0, %v5853
        %v5855 = vpop.f32.mrf.mxu0
        %v5856 = vadd.f32 0.0, %v5855
        %5857 = vmatmul.bf16.gmra.mxu0 %v5601
        %v5858 = vpop.f32.mrf.mxu0
        %v5859 = vadd.f32 0.0, %v5858
        %v5860 = vpop.f32.mrf.mxu0
        %v5861 = vadd.f32 0.0, %v5860
        %5862 = vmatmul.bf16.gmra.mxu0 %v5604
        %v5863 = vpop.f32.mrf.mxu0
        %v5864 = vadd.f32 0.0, %v5863
        %v5865 = vpop.f32.mrf.mxu0
        %v5866 = vadd.f32 0.0, %v5865
        %5867 = vmatmul.bf16.gmra.mxu0 %v5607
        %v5868 = vpop.f32.mrf.mxu0
        %v5869 = vadd.f32 0.0, %v5868
        %v5870 = vpop.f32.mrf.mxu0
        %v5871 = vadd.f32 0.0, %v5870
        %5872 = vmatmul.bf16.gmra.mxu0 %v5610
        %v5873 = vpop.f32.mrf.mxu0
        %v5874 = vadd.f32 0.0, %v5873
        %v5875 = vpop.f32.mrf.mxu0
        %v5876 = vadd.f32 0.0, %v5875
        %5877 = vmatmul.bf16.gmra.mxu0 %v5613
        %v5878 = vpop.f32.mrf.mxu0
        %v5879 = vadd.f32 0.0, %v5878
        %v5880 = vpop.f32.mrf.mxu0
        %v5881 = vadd.f32 0.0, %v5880
        %5882 = vmatmul.bf16.gmra.mxu0 %v5616
        %v5883 = vpop.f32.mrf.mxu0
        %v5884 = vadd.f32 0.0, %v5883
        %v5885 = vpop.f32.mrf.mxu0
        %v5886 = vadd.f32 0.0, %v5885
        %5887 = vmatmul.bf16.gmra.mxu0 %v5619
        %v5888 = vpop.f32.mrf.mxu0
        %v5889 = vadd.f32 0.0, %v5888
        %v5890 = vpop.f32.mrf.mxu0
        %v5891 = vadd.f32 0.0, %v5890
        %5892 = vmatmul.bf16.gmra.mxu0 %v5622
        %v5893 = vpop.f32.mrf.mxu0
        %v5894 = vadd.f32 0.0, %v5893
        %v5895 = vpop.f32.mrf.mxu0
        %v5896 = vadd.f32 0.0, %v5895
        %5897 = vmatmul.bf16.gmra.mxu0 %v5625
        %v5898 = vpop.f32.mrf.mxu0
        %v5899 = vadd.f32 0.0, %v5898
        %v5900 = vpop.f32.mrf.mxu0
        %v5901 = vadd.f32 0.0, %v5900
        %5902 = vmatmul.bf16.gmra.mxu0 %v5628
        %v5903 = vpop.f32.mrf.mxu0
        %v5904 = vadd.f32 0.0, %v5903
        %v5905 = vpop.f32.mrf.mxu0
        %v5906 = vadd.f32 0.0, %v5905
        %5907 = vmatmul.bf16.gmra.mxu0 %v5631
        %v5908 = vpop.f32.mrf.mxu0
        %v5909 = vadd.f32 0.0, %v5908
        %v5910 = vpop.f32.mrf.mxu0
        %v5911 = vadd.f32 0.0, %v5910
        %5912 = vmatmul.bf16.gmra.mxu0 %v5634
        %v5913 = vpop.f32.mrf.mxu0
        %v5914 = vadd.f32 0.0, %v5913
        %v5915 = vpop.f32.mrf.mxu0
        %v5916 = vadd.f32 0.0, %v5915
        %5917 = vdwg.mxu0
        %5918 = vmatpush.bf16.msra.mxu0 %v5796
        %5919 = vmatpush.bf16.msra.mxu0 %v5795
        %5920 = vmatpush.bf16.msra.mxu0 %v5794
        %5921 = vmatpush.bf16.msra.mxu0 %v5793
        %5922 = vmatpush.bf16.msra.mxu0 %v5792
        %5923 = vmatpush.bf16.msra.mxu0 %v5791
        %5924 = vmatpush.bf16.msra.mxu0 %v5790
        %5925 = vmatpush.bf16.msra.mxu0 %v5789
        %5926 = vmatmul.bf16.gmra.mxu0 %v5590
        %v5927 = vpop.f32.mrf.mxu0
        %v5928 = vadd.f32 %v5839, %v5927
        %v5929 = vpop.f32.mrf.mxu0
        %v5930 = vadd.f32 %v5841, %v5929
        %5931 = vmatmul.bf16.gmra.mxu0 %v5593
        %v5932 = vpop.f32.mrf.mxu0
        %v5933 = vadd.f32 %v5844, %v5932
        %v5934 = vpop.f32.mrf.mxu0
        %v5935 = vadd.f32 %v5846, %v5934
        %5936 = vmatmul.bf16.gmra.mxu0 %v5596
        %v5937 = vpop.f32.mrf.mxu0
        %v5938 = vadd.f32 %v5849, %v5937
        %v5939 = vpop.f32.mrf.mxu0
        %v5940 = vadd.f32 %v5851, %v5939
        %5941 = vmatmul.bf16.gmra.mxu0 %v5599
        %v5942 = vpop.f32.mrf.mxu0
        %v5943 = vadd.f32 %v5854, %v5942
        %v5944 = vpop.f32.mrf.mxu0
        %v5945 = vadd.f32 %v5856, %v5944
        %5946 = vmatmul.bf16.gmra.mxu0 %v5602
        %v5947 = vpop.f32.mrf.mxu0
        %v5948 = vadd.f32 %v5859, %v5947
        %v5949 = vpop.f32.mrf.mxu0
        %v5950 = vadd.f32 %v5861, %v5949
        %5951 = vmatmul.bf16.gmra.mxu0 %v5605
        %v5952 = vpop.f32.mrf.mxu0
        %v5953 = vadd.f32 %v5864, %v5952
        %v5954 = vpop.f32.mrf.mxu0
        %v5955 = vadd.f32 %v5866, %v5954
        %5956 = vmatmul.bf16.gmra.mxu0 %v5608
        %v5957 = vpop.f32.mrf.mxu0
        %v5958 = vadd.f32 %v5869, %v5957
        %v5959 = vpop.f32.mrf.mxu0
        %v5960 = vadd.f32 %v5871, %v5959
        %5961 = vmatmul.bf16.gmra.mxu0 %v5611
        %v5962 = vpop.f32.mrf.mxu0
        %v5963 = vadd.f32 %v5874, %v5962
        %v5964 = vpop.f32.mrf.mxu0
        %v5965 = vadd.f32 %v5876, %v5964
        %5966 = vmatmul.bf16.gmra.mxu0 %v5614
        %v5967 = vpop.f32.mrf.mxu0
        %v5968 = vadd.f32 %v5879, %v5967
        %v5969 = vpop.f32.mrf.mxu0
        %v5970 = vadd.f32 %v5881, %v5969
        %5971 = vmatmul.bf16.gmra.mxu0 %v5617
        %v5972 = vpop.f32.mrf.mxu0
        %v5973 = vadd.f32 %v5884, %v5972
        %v5974 = vpop.f32.mrf.mxu0
        %v5975 = vadd.f32 %v5886, %v5974
        %5976 = vmatmul.bf16.gmra.mxu0 %v5620
        %v5977 = vpop.f32.mrf.mxu0
        %v5978 = vadd.f32 %v5889, %v5977
        %v5979 = vpop.f32.mrf.mxu0
        %v5980 = vadd.f32 %v5891, %v5979
        %5981 = vmatmul.bf16.gmra.mxu0 %v5623
        %v5982 = vpop.f32.mrf.mxu0
        %v5983 = vadd.f32 %v5894, %v5982
        %v5984 = vpop.f32.mrf.mxu0
        %v5985 = vadd.f32 %v5896, %v5984
        %5986 = vmatmul.bf16.gmra.mxu0 %v5626
        %v5987 = vpop.f32.mrf.mxu0
        %v5988 = vadd.f32 %v5899, %v5987
        %v5989 = vpop.f32.mrf.mxu0
        %v5990 = vadd.f32 %v5901, %v5989
        %5991 = vmatmul.bf16.gmra.mxu0 %v5629
        %v5992 = vpop.f32.mrf.mxu0
        %v5993 = vadd.f32 %v5904, %v5992
        %v5994 = vpop.f32.mrf.mxu0
        %v5995 = vadd.f32 %v5906, %v5994
        %5996 = vmatmul.bf16.gmra.mxu0 %v5632
        %v5997 = vpop.f32.mrf.mxu0
        %v5998 = vadd.f32 %v5909, %v5997
        %v5999 = vpop.f32.mrf.mxu0
        %v6000 = vadd.f32 %v5911, %v5999
        %6001 = vmatmul.bf16.gmra.mxu0 %v5635
        %v6002 = vpop.f32.mrf.mxu0
        %v6003 = vadd.f32 %v5914, %v6002
        %v6004 = vpop.f32.mrf.mxu0
        %v6005 = vadd.f32 %v5916, %v6004
        %6006 = vdwg.mxu0
        %6007 = vmatpush.bf16.msra.mxu0 %v5804
        %6008 = vmatpush.bf16.msra.mxu0 %v5803
        %6009 = vmatpush.bf16.msra.mxu0 %v5802
        %6010 = vmatpush.bf16.msra.mxu0 %v5801
        %6011 = vmatpush.bf16.msra.mxu0 %v5800
        %6012 = vmatpush.bf16.msra.mxu0 %v5799
        %6013 = vmatpush.bf16.msra.mxu0 %v5798
        %6014 = vmatpush.bf16.msra.mxu0 %v5797
        %6015 = vmatmul.bf16.gmra.mxu0 %v5591
        %v6016 = vpop.f32.mrf.mxu0
        %v6017 = vadd.f32 %v5928, %v6016
        %v6018 = vpop.f32.mrf.mxu0
        %v6019 = vadd.f32 %v5930, %v6018
        %6020 = vmatmul.bf16.gmra.mxu0 %v5594
        %v6021 = vpop.f32.mrf.mxu0
        %v6022 = vadd.f32 %v5933, %v6021
        %v6023 = vpop.f32.mrf.mxu0
        %v6024 = vadd.f32 %v5935, %v6023
        %6025 = vmatmul.bf16.gmra.mxu0 %v5597
        %v6026 = vpop.f32.mrf.mxu0
        %v6027 = vadd.f32 %v5938, %v6026
        %v6028 = vpop.f32.mrf.mxu0
        %v6029 = vadd.f32 %v5940, %v6028
        %6030 = vmatmul.bf16.gmra.mxu0 %v5600
        %v6031 = vpop.f32.mrf.mxu0
        %v6032 = vadd.f32 %v5943, %v6031
        %v6033 = vpop.f32.mrf.mxu0
        %v6034 = vadd.f32 %v5945, %v6033
        %6035 = vmatmul.bf16.gmra.mxu0 %v5603
        %v6036 = vpop.f32.mrf.mxu0
        %v6037 = vadd.f32 %v5948, %v6036
        %v6038 = vpop.f32.mrf.mxu0
        %v6039 = vadd.f32 %v5950, %v6038
        %6040 = vmatmul.bf16.gmra.mxu0 %v5606
        %v6041 = vpop.f32.mrf.mxu0
        %v6042 = vadd.f32 %v5953, %v6041
        %v6043 = vpop.f32.mrf.mxu0
        %v6044 = vadd.f32 %v5955, %v6043
        %6045 = vmatmul.bf16.gmra.mxu0 %v5609
        %v6046 = vpop.f32.mrf.mxu0
        %v6047 = vadd.f32 %v5958, %v6046
        %v6048 = vpop.f32.mrf.mxu0
        %v6049 = vadd.f32 %v5960, %v6048
        %6050 = vmatmul.bf16.gmra.mxu0 %v5612
        %v6051 = vpop.f32.mrf.mxu0
        %v6052 = vadd.f32 %v5963, %v6051
        %v6053 = vpop.f32.mrf.mxu0
        %v6054 = vadd.f32 %v5965, %v6053
        %6055 = vmatmul.bf16.gmra.mxu0 %v5615
        %v6056 = vpop.f32.mrf.mxu0
        %v6057 = vadd.f32 %v5968, %v6056
        %v6058 = vpop.f32.mrf.mxu0
        %v6059 = vadd.f32 %v5970, %v6058
        %6060 = vmatmul.bf16.gmra.mxu0 %v5618
        %v6061 = vpop.f32.mrf.mxu0
        %v6062 = vadd.f32 %v5973, %v6061
        %v6063 = vpop.f32.mrf.mxu0
        %v6064 = vadd.f32 %v5975, %v6063
        %6065 = vmatmul.bf16.gmra.mxu0 %v5621
        %v6066 = vpop.f32.mrf.mxu0
        %v6067 = vadd.f32 %v5978, %v6066
        %v6068 = vpop.f32.mrf.mxu0
        %v6069 = vadd.f32 %v5980, %v6068
        %6070 = vmatmul.bf16.gmra.mxu0 %v5624
        %v6071 = vpop.f32.mrf.mxu0
        %v6072 = vadd.f32 %v5983, %v6071
        %v6073 = vpop.f32.mrf.mxu0
        %v6074 = vadd.f32 %v5985, %v6073
        %6075 = vmatmul.bf16.gmra.mxu0 %v5627
        %v6076 = vpop.f32.mrf.mxu0
        %v6077 = vadd.f32 %v5988, %v6076
        %v6078 = vpop.f32.mrf.mxu0
        %v6079 = vadd.f32 %v5990, %v6078
        %6080 = vmatmul.bf16.gmra.mxu0 %v5630
        %v6081 = vpop.f32.mrf.mxu0
        %v6082 = vadd.f32 %v5993, %v6081
        %v6083 = vpop.f32.mrf.mxu0
        %v6084 = vadd.f32 %v5995, %v6083
        %6085 = vmatmul.bf16.gmra.mxu0 %v5633
        %v6086 = vpop.f32.mrf.mxu0
        %v6087 = vadd.f32 %v5998, %v6086
        %v6088 = vpop.f32.mrf.mxu0
        %v6089 = vadd.f32 %v6000, %v6088
        %6090 = vmatmul.bf16.gmra.mxu0 %v5636
        %v6091 = vpop.f32.mrf.mxu0
        %v6092 = vadd.f32 %v6003, %v6091
        %v6093 = vpop.f32.mrf.mxu0
        %v6094 = vadd.f32 %v6005, %v6093
        %6095 = vdwg.mxu0
        %v6096 = vadd.f32 %v4405, %v6017
        %v6097 = vadd.f32 %v4407, %v6019
        %v6098 = vadd.f32 %v4410, %v6022
        %v6099 = vadd.f32 %v4412, %v6024
        %v6100 = vadd.f32 %v4415, %v6027
        %v6101 = vadd.f32 %v4417, %v6029
        %v6102 = vadd.f32 %v4420, %v6032
        %v6103 = vadd.f32 %v4422, %v6034
        %v6104 = vadd.f32 %v4425, %v6037
        %v6105 = vadd.f32 %v4427, %v6039
        %v6106 = vadd.f32 %v4430, %v6042
        %v6107 = vadd.f32 %v4432, %v6044
        %v6108 = vadd.f32 %v4435, %v6047
        %v6109 = vadd.f32 %v4437, %v6049
        %v6110 = vadd.f32 %v4440, %v6052
        %v6111 = vadd.f32 %v4442, %v6054
        %v6112 = vadd.f32 %v4445, %v6057
        %v6113 = vadd.f32 %v4447, %v6059
        %v6114 = vadd.f32 %v4450, %v6062
        %v6115 = vadd.f32 %v4452, %v6064
        %v6116 = vadd.f32 %v4455, %v6067
        %v6117 = vadd.f32 %v4457, %v6069
        %v6118 = vadd.f32 %v4460, %v6072
        %v6119 = vadd.f32 %v4462, %v6074
        %v6120 = vadd.f32 %v4465, %v6077
        %v6121 = vadd.f32 %v4467, %v6079
        %v6122 = vadd.f32 %v4470, %v6082
        %v6123 = vadd.f32 %v4472, %v6084
        %v6124 = vadd.f32 %v4475, %v6087
        %v6125 = vadd.f32 %v4477, %v6089
        %v6126 = vadd.f32 %v4480, %v6092
        %v6127 = vadd.f32 %v4482, %v6094
        %v6128 = vld [vmem:[%s4] sm:$0x1]
        %v6130 = vperm.slane %v6128, 0
        %v6132 = vadd.f32 %v6096, %v6130
        %v6133 = vadd.f32 %v6097, %v6130
        %v6134 = vadd.f32 %v6098, %v6130
        %v6135 = vadd.f32 %v6099, %v6130
        %v6136 = vadd.f32 %v6100, %v6130
        %v6137 = vadd.f32 %v6101, %v6130
        %v6138 = vadd.f32 %v6102, %v6130
        %v6139 = vadd.f32 %v6103, %v6130
        %v6140 = vadd.f32 %v6104, %v6130
        %v6141 = vadd.f32 %v6105, %v6130
        %v6142 = vadd.f32 %v6106, %v6130
        %v6143 = vadd.f32 %v6107, %v6130
        %v6144 = vadd.f32 %v6108, %v6130
        %v6145 = vadd.f32 %v6109, %v6130
        %v6146 = vadd.f32 %v6110, %v6130
        %v6147 = vadd.f32 %v6111, %v6130
        %v6148 = vadd.f32 %v6112, %v6130
        %v6149 = vadd.f32 %v6113, %v6130
        %v6150 = vadd.f32 %v6114, %v6130
        %v6151 = vadd.f32 %v6115, %v6130
        %v6152 = vadd.f32 %v6116, %v6130
        %v6153 = vadd.f32 %v6117, %v6130
        %v6154 = vadd.f32 %v6118, %v6130
        %v6155 = vadd.f32 %v6119, %v6130
        %v6156 = vadd.f32 %v6120, %v6130
        %v6157 = vadd.f32 %v6121, %v6130
        %v6158 = vadd.f32 %v6122, %v6130
        %v6159 = vadd.f32 %v6123, %v6130
        %v6160 = vadd.f32 %v6124, %v6130
        %v6161 = vadd.f32 %v6125, %v6130
        %v6162 = vadd.f32 %v6126, %v6130
        %v6163 = vadd.f32 %v6127, %v6130
        %v6164 = vmax.f32 %v6132, 0.0
        %v6165 = vmax.f32 %v6133, 0.0
        %v6166 = vmax.f32 %v6134, 0.0
        %v6167 = vmax.f32 %v6135, 0.0
        %v6168 = vmax.f32 %v6136, 0.0
        %v6169 = vmax.f32 %v6137, 0.0
        %v6170 = vmax.f32 %v6138, 0.0
        %v6171 = vmax.f32 %v6139, 0.0
        %v6172 = vmax.f32 %v6140, 0.0
        %v6173 = vmax.f32 %v6141, 0.0
        %v6174 = vmax.f32 %v6142, 0.0
        %v6175 = vmax.f32 %v6143, 0.0
        %v6176 = vmax.f32 %v6144, 0.0
        %v6177 = vmax.f32 %v6145, 0.0
        %v6178 = vmax.f32 %v6146, 0.0
        %v6179 = vmax.f32 %v6147, 0.0
        %v6180 = vmax.f32 %v6148, 0.0
        %v6181 = vmax.f32 %v6149, 0.0
        %v6182 = vmax.f32 %v6150, 0.0
        %v6183 = vmax.f32 %v6151, 0.0
        %v6184 = vmax.f32 %v6152, 0.0
        %v6185 = vmax.f32 %v6153, 0.0
        %v6186 = vmax.f32 %v6154, 0.0
        %v6187 = vmax.f32 %v6155, 0.0
        %v6188 = vmax.f32 %v6156, 0.0
        %v6189 = vmax.f32 %v6157, 0.0
        %v6190 = vmax.f32 %v6158, 0.0
        %v6191 = vmax.f32 %v6159, 0.0
        %v6192 = vmax.f32 %v6160, 0.0
        %v6193 = vmax.f32 %v6161, 0.0
        %v6194 = vmax.f32 %v6162, 0.0
        %v6195 = vmax.f32 %v6163, 0.0
        %v6196 = vadd.f32 %v6164, %v6166
        %v6197 = vadd.f32 %v6165, %v6167
        %v6198 = vadd.f32 %v6168, %v6170
        %v6199 = vadd.f32 %v6169, %v6171
        %v6200 = vadd.f32 %v6172, %v6174
        %v6201 = vadd.f32 %v6173, %v6175
        %v6202 = vadd.f32 %v6176, %v6178
        %v6203 = vadd.f32 %v6177, %v6179
        %v6204 = vadd.f32 %v6180, %v6182
        %v6205 = vadd.f32 %v6181, %v6183
        %v6206 = vadd.f32 %v6184, %v6186
        %v6207 = vadd.f32 %v6185, %v6187
        %v6208 = vadd.f32 %v6188, %v6190
        %v6209 = vadd.f32 %v6189, %v6191
        %v6210 = vadd.f32 %v6192, %v6194
        %v6211 = vadd.f32 %v6193, %v6195
        %v6228 = vrot.slane %v6196, 2
        %v6229 = vrot.slane %v6196, 4
        %v6230 = vrot.slane %v6196, 6
        %v6231 = vrot.slane %v6197, 2
        %v6232 = vrot.slane %v6197, 4
        %v6233 = vrot.slane %v6197, 6
        %v6234 = vrot.slane %v6198, 2
        %v6235 = vrot.slane %v6198, 4
        %v6236 = vrot.slane %v6198, 6
        %v6237 = vrot.slane %v6199, 2
        %v6238 = vrot.slane %v6199, 4
        %v6239 = vrot.slane %v6199, 6
        %v6240 = vrot.slane %v6200, 2
        %v6241 = vrot.slane %v6200, 4
        %v6242 = vrot.slane %v6200, 6
        %v6243 = vrot.slane %v6201, 2
        %v6244 = vrot.slane %v6201, 4
        %v6245 = vrot.slane %v6201, 6
        %v6246 = vrot.slane %v6202, 2
        %v6247 = vrot.slane %v6202, 4
        %v6248 = vrot.slane %v6202, 6
        %v6249 = vrot.slane %v6203, 2
        %v6250 = vrot.slane %v6203, 4
        %v6251 = vrot.slane %v6203, 6
        %v6252 = vrot.slane %v6204, 2
        %v6253 = vrot.slane %v6204, 4
        %v6254 = vrot.slane %v6204, 6
        %v6255 = vrot.slane %v6205, 2
        %v6256 = vrot.slane %v6205, 4
        %v6257 = vrot.slane %v6205, 6
        %v6258 = vrot.slane %v6206, 2
        %v6259 = vrot.slane %v6206, 4
        %v6260 = vrot.slane %v6206, 6
        %v6261 = vrot.slane %v6207, 2
        %v6262 = vrot.slane %v6207, 4
        %v6263 = vrot.slane %v6207, 6
        %v6264 = vrot.slane %v6208, 2
        %v6265 = vrot.slane %v6208, 4
        %v6266 = vrot.slane %v6208, 6
        %v6267 = vrot.slane %v6209, 2
        %v6268 = vrot.slane %v6209, 4
        %v6269 = vrot.slane %v6209, 6
        %v6270 = vrot.slane %v6210, 2
        %v6271 = vrot.slane %v6210, 4
        %v6272 = vrot.slane %v6210, 6
        %v6273 = vrot.slane %v6211, 2
        %v6274 = vrot.slane %v6211, 4
        %v6275 = vrot.slane %v6211, 6
        %v6324 = vrot.slane %v6196, 7
        %v6325 = vrot.slane %v6324, 2
        %v6326 = vrot.slane %v6228, 7
        %v6327 = vrot.slane %v6326, 2
        %v6328 = vrot.slane %v6229, 7
        %v6329 = vrot.slane %v6328, 2
        %v6330 = vrot.slane %v6230, 7
        %v6331 = vrot.slane %v6330, 2
        %v6332 = vrot.slane %v6197, 7
        %v6333 = vrot.slane %v6332, 2
        %v6334 = vrot.slane %v6231, 7
        %v6335 = vrot.slane %v6334, 2
        %v6336 = vrot.slane %v6232, 7
        %v6337 = vrot.slane %v6336, 2
        %v6338 = vrot.slane %v6233, 7
        %v6339 = vrot.slane %v6338, 2
        %v6340 = vrot.slane %v6198, 7
        %v6341 = vrot.slane %v6340, 2
        %v6342 = vrot.slane %v6234, 7
        %v6343 = vrot.slane %v6342, 2
        %v6344 = vrot.slane %v6235, 7
        %v6345 = vrot.slane %v6344, 2
        %v6346 = vrot.slane %v6236, 7
        %v6347 = vrot.slane %v6346, 2
        %v6348 = vrot.slane %v6199, 7
        %v6349 = vrot.slane %v6348, 2
        %v6350 = vrot.slane %v6237, 7
        %v6351 = vrot.slane %v6350, 2
        %v6352 = vrot.slane %v6238, 7
        %v6353 = vrot.slane %v6352, 2
        %v6354 = vrot.slane %v6239, 7
        %v6355 = vrot.slane %v6354, 2
        %v6356 = vrot.slane %v6200, 7
        %v6357 = vrot.slane %v6356, 2
        %v6358 = vrot.slane %v6240, 7
        %v6359 = vrot.slane %v6358, 2
        %v6360 = vrot.slane %v6241, 7
        %v6361 = vrot.slane %v6360, 2
        %v6362 = vrot.slane %v6242, 7
        %v6363 = vrot.slane %v6362, 2
        %v6364 = vrot.slane %v6201, 7
        %v6365 = vrot.slane %v6364, 2
        %v6366 = vrot.slane %v6243, 7
        %v6367 = vrot.slane %v6366, 2
        %v6368 = vrot.slane %v6244, 7
        %v6369 = vrot.slane %v6368, 2
        %v6370 = vrot.slane %v6245, 7
        %v6371 = vrot.slane %v6370, 2
        %v6372 = vrot.slane %v6202, 7
        %v6373 = vrot.slane %v6372, 2
        %v6374 = vrot.slane %v6246, 7
        %v6375 = vrot.slane %v6374, 2
        %v6376 = vrot.slane %v6247, 7
        %v6377 = vrot.slane %v6376, 2
        %v6378 = vrot.slane %v6248, 7
        %v6379 = vrot.slane %v6378, 2
        %v6380 = vrot.slane %v6203, 7
        %v6381 = vrot.slane %v6380, 2
        %v6382 = vrot.slane %v6249, 7
        %v6383 = vrot.slane %v6382, 2
        %v6384 = vrot.slane %v6250, 7
        %v6385 = vrot.slane %v6384, 2
        %v6386 = vrot.slane %v6251, 7
        %v6387 = vrot.slane %v6386, 2
        %v6388 = vrot.slane %v6204, 7
        %v6389 = vrot.slane %v6388, 2
        %v6390 = vrot.slane %v6252, 7
        %v6391 = vrot.slane %v6390, 2
        %v6392 = vrot.slane %v6253, 7
        %v6393 = vrot.slane %v6392, 2
        %v6394 = vrot.slane %v6254, 7
        %v6395 = vrot.slane %v6394, 2
        %v6396 = vrot.slane %v6205, 7
        %v6397 = vrot.slane %v6396, 2
        %v6398 = vrot.slane %v6255, 7
        %v6399 = vrot.slane %v6398, 2
        %v6400 = vrot.slane %v6256, 7
        %v6401 = vrot.slane %v6400, 2
        %v6402 = vrot.slane %v6257, 7
        %v6403 = vrot.slane %v6402, 2
        %v6404 = vrot.slane %v6206, 7
        %v6405 = vrot.slane %v6404, 2
        %v6406 = vrot.slane %v6258, 7
        %v6407 = vrot.slane %v6406, 2
        %v6408 = vrot.slane %v6259, 7
        %v6409 = vrot.slane %v6408, 2
        %v6410 = vrot.slane %v6260, 7
        %v6411 = vrot.slane %v6410, 2
        %v6412 = vrot.slane %v6207, 7
        %v6413 = vrot.slane %v6412, 2
        %v6414 = vrot.slane %v6261, 7
        %v6415 = vrot.slane %v6414, 2
        %v6416 = vrot.slane %v6262, 7
        %v6417 = vrot.slane %v6416, 2
        %v6418 = vrot.slane %v6263, 7
        %v6419 = vrot.slane %v6418, 2
        %v6420 = vrot.slane %v6208, 7
        %v6421 = vrot.slane %v6420, 2
        %v6422 = vrot.slane %v6264, 7
        %v6423 = vrot.slane %v6422, 2
        %v6424 = vrot.slane %v6265, 7
        %v6425 = vrot.slane %v6424, 2
        %v6426 = vrot.slane %v6266, 7
        %v6427 = vrot.slane %v6426, 2
        %v6428 = vrot.slane %v6209, 7
        %v6429 = vrot.slane %v6428, 2
        %v6430 = vrot.slane %v6267, 7
        %v6431 = vrot.slane %v6430, 2
        %v6432 = vrot.slane %v6268, 7
        %v6433 = vrot.slane %v6432, 2
        %v6434 = vrot.slane %v6269, 7
        %v6435 = vrot.slane %v6434, 2
        %v6436 = vrot.slane %v6210, 7
        %v6437 = vrot.slane %v6436, 2
        %v6438 = vrot.slane %v6270, 7
        %v6439 = vrot.slane %v6438, 2
        %v6440 = vrot.slane %v6271, 7
        %v6441 = vrot.slane %v6440, 2
        %v6442 = vrot.slane %v6272, 7
        %v6443 = vrot.slane %v6442, 2
        %v6444 = vrot.slane %v6211, 7
        %v6445 = vrot.slane %v6444, 2
        %v6446 = vrot.slane %v6273, 7
        %v6447 = vrot.slane %v6446, 2
        %v6448 = vrot.slane %v6274, 7
        %v6449 = vrot.slane %v6448, 2
        %v6450 = vrot.slane %v6275, 7
        %v6451 = vrot.slane %v6450, 2
        %v6516 = vadd.f32 %v6196, %v6325
        %v6517 = vadd.f32 %v6228, %v6327
        %v6518 = vadd.f32 %v6229, %v6329
        %v6519 = vadd.f32 %v6230, %v6331
        %v6520 = vadd.f32 %v6197, %v6333
        %v6521 = vadd.f32 %v6231, %v6335
        %v6522 = vadd.f32 %v6232, %v6337
        %v6523 = vadd.f32 %v6233, %v6339
        %v6524 = vadd.f32 %v6198, %v6341
        %v6525 = vadd.f32 %v6234, %v6343
        %v6526 = vadd.f32 %v6235, %v6345
        %v6527 = vadd.f32 %v6236, %v6347
        %v6528 = vadd.f32 %v6199, %v6349
        %v6529 = vadd.f32 %v6237, %v6351
        %v6530 = vadd.f32 %v6238, %v6353
        %v6531 = vadd.f32 %v6239, %v6355
        %v6532 = vadd.f32 %v6200, %v6357
        %v6533 = vadd.f32 %v6240, %v6359
        %v6534 = vadd.f32 %v6241, %v6361
        %v6535 = vadd.f32 %v6242, %v6363
        %v6536 = vadd.f32 %v6201, %v6365
        %v6537 = vadd.f32 %v6243, %v6367
        %v6538 = vadd.f32 %v6244, %v6369
        %v6539 = vadd.f32 %v6245, %v6371
        %v6540 = vadd.f32 %v6202, %v6373
        %v6541 = vadd.f32 %v6246, %v6375
        %v6542 = vadd.f32 %v6247, %v6377
        %v6543 = vadd.f32 %v6248, %v6379
        %v6544 = vadd.f32 %v6203, %v6381
        %v6545 = vadd.f32 %v6249, %v6383
        %v6546 = vadd.f32 %v6250, %v6385
        %v6547 = vadd.f32 %v6251, %v6387
        %v6548 = vadd.f32 %v6204, %v6389
        %v6549 = vadd.f32 %v6252, %v6391
        %v6550 = vadd.f32 %v6253, %v6393
        %v6551 = vadd.f32 %v6254, %v6395
        %v6552 = vadd.f32 %v6205, %v6397
        %v6553 = vadd.f32 %v6255, %v6399
        %v6554 = vadd.f32 %v6256, %v6401
        %v6555 = vadd.f32 %v6257, %v6403
        %v6556 = vadd.f32 %v6206, %v6405
        %v6557 = vadd.f32 %v6258, %v6407
        %v6558 = vadd.f32 %v6259, %v6409
        %v6559 = vadd.f32 %v6260, %v6411
        %v6560 = vadd.f32 %v6207, %v6413
        %v6561 = vadd.f32 %v6261, %v6415
        %v6562 = vadd.f32 %v6262, %v6417
        %v6563 = vadd.f32 %v6263, %v6419
        %v6564 = vadd.f32 %v6208, %v6421
        %v6565 = vadd.f32 %v6264, %v6423
        %v6566 = vadd.f32 %v6265, %v6425
        %v6567 = vadd.f32 %v6266, %v6427
        %v6568 = vadd.f32 %v6209, %v6429
        %v6569 = vadd.f32 %v6267, %v6431
        %v6570 = vadd.f32 %v6268, %v6433
        %v6571 = vadd.f32 %v6269, %v6435
        %v6572 = vadd.f32 %v6210, %v6437
        %v6573 = vadd.f32 %v6270, %v6439
        %v6574 = vadd.f32 %v6271, %v6441
        %v6575 = vadd.f32 %v6272, %v6443
        %v6576 = vadd.f32 %v6211, %v6445
        %v6577 = vadd.f32 %v6273, %v6447
        %v6578 = vadd.f32 %v6274, %v6449
        %v6579 = vadd.f32 %v6275, %v6451
        %v6580 = vpack.c.bf16 %v6516, %v6516
        %v6581 = vpack.c.bf16 %v6517, %v6517
        %v6582 = vpack.c.bf16 %v6518, %v6518
        %v6583 = vpack.c.bf16 %v6519, %v6519
        %v6584 = vpack.c.bf16 %v6520, %v6520
        %v6585 = vpack.c.bf16 %v6521, %v6521
        %v6586 = vpack.c.bf16 %v6522, %v6522
        %v6587 = vpack.c.bf16 %v6523, %v6523
        %v6588 = vpack.c.bf16 %v6524, %v6524
        %v6589 = vpack.c.bf16 %v6525, %v6525
        %v6590 = vpack.c.bf16 %v6526, %v6526
        %v6591 = vpack.c.bf16 %v6527, %v6527
        %v6592 = vpack.c.bf16 %v6528, %v6528
        %v6593 = vpack.c.bf16 %v6529, %v6529
        %v6594 = vpack.c.bf16 %v6530, %v6530
        %v6595 = vpack.c.bf16 %v6531, %v6531
        %v6596 = vpack.c.bf16 %v6532, %v6532
        %v6597 = vpack.c.bf16 %v6533, %v6533
        %v6598 = vpack.c.bf16 %v6534, %v6534
        %v6599 = vpack.c.bf16 %v6535, %v6535
        %v6600 = vpack.c.bf16 %v6536, %v6536
        %v6601 = vpack.c.bf16 %v6537, %v6537
        %v6602 = vpack.c.bf16 %v6538, %v6538
        %v6603 = vpack.c.bf16 %v6539, %v6539
        %v6604 = vpack.c.bf16 %v6540, %v6540
        %v6605 = vpack.c.bf16 %v6541, %v6541
        %v6606 = vpack.c.bf16 %v6542, %v6542
        %v6607 = vpack.c.bf16 %v6543, %v6543
        %v6608 = vpack.c.bf16 %v6544, %v6544
        %v6609 = vpack.c.bf16 %v6545, %v6545
        %v6610 = vpack.c.bf16 %v6546, %v6546
        %v6611 = vpack.c.bf16 %v6547, %v6547
        %v6612 = vpack.c.bf16 %v6548, %v6548
        %v6613 = vpack.c.bf16 %v6549, %v6549
        %v6614 = vpack.c.bf16 %v6550, %v6550
        %v6615 = vpack.c.bf16 %v6551, %v6551
        %v6616 = vpack.c.bf16 %v6552, %v6552
        %v6617 = vpack.c.bf16 %v6553, %v6553
        %v6618 = vpack.c.bf16 %v6554, %v6554
        %v6619 = vpack.c.bf16 %v6555, %v6555
        %v6620 = vpack.c.bf16 %v6556, %v6556
        %v6621 = vpack.c.bf16 %v6557, %v6557
        %v6622 = vpack.c.bf16 %v6558, %v6558
        %v6623 = vpack.c.bf16 %v6559, %v6559
        %v6624 = vpack.c.bf16 %v6560, %v6560
        %v6625 = vpack.c.bf16 %v6561, %v6561
        %v6626 = vpack.c.bf16 %v6562, %v6562
        %v6627 = vpack.c.bf16 %v6563, %v6563
        %v6628 = vpack.c.bf16 %v6564, %v6564
        %v6629 = vpack.c.bf16 %v6565, %v6565
        %v6630 = vpack.c.bf16 %v6566, %v6566
        %v6631 = vpack.c.bf16 %v6567, %v6567
        %v6632 = vpack.c.bf16 %v6568, %v6568
        %v6633 = vpack.c.bf16 %v6569, %v6569
        %v6634 = vpack.c.bf16 %v6570, %v6570
        %v6635 = vpack.c.bf16 %v6571, %v6571
        %v6636 = vpack.c.bf16 %v6572, %v6572
        %v6637 = vpack.c.bf16 %v6573, %v6573
        %v6638 = vpack.c.bf16 %v6574, %v6574
        %v6639 = vpack.c.bf16 %v6575, %v6575
        %v6640 = vpack.c.bf16 %v6576, %v6576
        %v6641 = vpack.c.bf16 %v6577, %v6577
        %v6642 = vpack.c.bf16 %v6578, %v6578
        %v6643 = vpack.c.bf16 %v6579, %v6579
        %v6644 = vunpack.c.l.bf16 %v470
        %v6645 = vunpack.c.l.bf16 %v471
        %v6646 = vunpack.c.l.bf16 %v474
        %v6647 = vunpack.c.l.bf16 %v475
        %v6648 = vunpack.c.l.bf16 %v478
        %v6649 = vunpack.c.l.bf16 %v479
        %v6650 = vunpack.c.l.bf16 %v482
        %v6651 = vunpack.c.l.bf16 %v483
        %v6652 = vunpack.c.l.bf16 %v486
        %v6653 = vunpack.c.l.bf16 %v487
        %v6654 = vunpack.c.l.bf16 %v490
        %v6655 = vunpack.c.l.bf16 %v491
        %v6656 = vunpack.c.l.bf16 %v494
        %v6657 = vunpack.c.l.bf16 %v495
        %v6658 = vunpack.c.l.bf16 %v498
        %v6659 = vunpack.c.l.bf16 %v499
        %v6660 = vunpack.c.l.bf16 %v472
        %v6661 = vunpack.c.l.bf16 %v473
        %v6662 = vunpack.c.l.bf16 %v476
        %v6663 = vunpack.c.l.bf16 %v477
        %v6664 = vunpack.c.l.bf16 %v480
        %v6665 = vunpack.c.l.bf16 %v481
        %v6666 = vunpack.c.l.bf16 %v484
        %v6667 = vunpack.c.l.bf16 %v485
        %v6668 = vunpack.c.l.bf16 %v488
        %v6669 = vunpack.c.l.bf16 %v489
        %v6670 = vunpack.c.l.bf16 %v492
        %v6671 = vunpack.c.l.bf16 %v493
        %v6672 = vunpack.c.l.bf16 %v496
        %v6673 = vunpack.c.l.bf16 %v497
        %v6674 = vunpack.c.l.bf16 %v500
        %v6675 = vunpack.c.l.bf16 %v501
        %v6676 = vadd.f32 %v6644, %v6660
        %v6677 = vadd.f32 %v6645, %v6661
        %v6678 = vadd.f32 %v6646, %v6662
        %v6679 = vadd.f32 %v6647, %v6663
        %v6680 = vadd.f32 %v6648, %v6664
        %v6681 = vadd.f32 %v6649, %v6665
        %v6682 = vadd.f32 %v6650, %v6666
        %v6683 = vadd.f32 %v6651, %v6667
        %v6684 = vadd.f32 %v6652, %v6668
        %v6685 = vadd.f32 %v6653, %v6669
        %v6686 = vadd.f32 %v6654, %v6670
        %v6687 = vadd.f32 %v6655, %v6671
        %v6688 = vadd.f32 %v6656, %v6672
        %v6689 = vadd.f32 %v6657, %v6673
        %v6690 = vadd.f32 %v6658, %v6674
        %v6691 = vadd.f32 %v6659, %v6675
        %v6692 = vpack.c.bf16 %v6676, %v6676
        %v6693 = vpack.c.bf16 %v6677, %v6677
        %v6694 = vpack.c.bf16 %v6678, %v6678
        %v6695 = vpack.c.bf16 %v6679, %v6679
        %v6696 = vpack.c.bf16 %v6680, %v6680
        %v6697 = vpack.c.bf16 %v6681, %v6681
        %v6698 = vpack.c.bf16 %v6682, %v6682
        %v6699 = vpack.c.bf16 %v6683, %v6683
        %v6700 = vpack.c.bf16 %v6684, %v6684
        %v6701 = vpack.c.bf16 %v6685, %v6685
        %v6702 = vpack.c.bf16 %v6686, %v6686
        %v6703 = vpack.c.bf16 %v6687, %v6687
        %v6704 = vpack.c.bf16 %v6688, %v6688
        %v6705 = vpack.c.bf16 %v6689, %v6689
        %v6706 = vpack.c.bf16 %v6690, %v6690
        %v6707 = vpack.c.bf16 %v6691, %v6691
        %v6724 = vrot.slane %v6692, 3
        %v6725 = vrot.slane %v6693, 3
        %v6726 = vrot.slane %v6694, 3
        %v6727 = vrot.slane %v6695, 3
        %v6728 = vrot.slane %v6696, 3
        %v6729 = vrot.slane %v6697, 3
        %v6730 = vrot.slane %v6698, 3
        %v6731 = vrot.slane %v6699, 3
        %v6732 = vrot.slane %v6700, 3
        %v6733 = vrot.slane %v6701, 3
        %v6734 = vrot.slane %v6702, 3
        %v6735 = vrot.slane %v6703, 3
        %v6736 = vrot.slane %v6704, 3
        %v6737 = vrot.slane %v6705, 3
        %v6738 = vrot.slane %v6706, 3
        %v6739 = vrot.slane %v6707, 3
        %vm6740 = vcmask 1040384
        %v6743 = vsel %vm6740, %v6692, %v6724
        %vm6744 = vcmask 1041409
        %v6745 = vsel %vm6744, %v6692, %v6724
        %v6747 = vrot.slane %v6745, 1
        %vm6748 = vcmask 1042434
        %v6749 = vsel %vm6748, %v6692, %v6724
        %v6751 = vrot.slane %v6749, 2
        %vm6752 = vcmask 1043459
        %v6753 = vsel %vm6752, %v6692, %v6724
        %v6755 = vrot.slane %v6753, 3
        %v6758 = vsel %vm6740, %v6693, %v6725
        %v6759 = vsel %vm6744, %v6693, %v6725
        %v6761 = vrot.slane %v6759, 1
        %v6762 = vsel %vm6748, %v6693, %v6725
        %v6764 = vrot.slane %v6762, 2
        %v6765 = vsel %vm6752, %v6693, %v6725
        %v6767 = vrot.slane %v6765, 3
        %v6770 = vsel %vm6740, %v6694, %v6726
        %v6771 = vsel %vm6744, %v6694, %v6726
        %v6773 = vrot.slane %v6771, 1
        %v6774 = vsel %vm6748, %v6694, %v6726
        %v6776 = vrot.slane %v6774, 2
        %v6777 = vsel %vm6752, %v6694, %v6726
        %v6779 = vrot.slane %v6777, 3
        %v6782 = vsel %vm6740, %v6695, %v6727
        %v6783 = vsel %vm6744, %v6695, %v6727
        %v6785 = vrot.slane %v6783, 1
        %v6786 = vsel %vm6748, %v6695, %v6727
        %v6788 = vrot.slane %v6786, 2
        %v6789 = vsel %vm6752, %v6695, %v6727
        %v6791 = vrot.slane %v6789, 3
        %v6794 = vsel %vm6740, %v6696, %v6728
        %v6795 = vsel %vm6744, %v6696, %v6728
        %v6797 = vrot.slane %v6795, 1
        %v6798 = vsel %vm6748, %v6696, %v6728
        %v6800 = vrot.slane %v6798, 2
        %v6801 = vsel %vm6752, %v6696, %v6728
        %v6803 = vrot.slane %v6801, 3
        %v6806 = vsel %vm6740, %v6697, %v6729
        %v6807 = vsel %vm6744, %v6697, %v6729
        %v6809 = vrot.slane %v6807, 1
        %v6810 = vsel %vm6748, %v6697, %v6729
        %v6812 = vrot.slane %v6810, 2
        %v6813 = vsel %vm6752, %v6697, %v6729
        %v6815 = vrot.slane %v6813, 3
        %v6818 = vsel %vm6740, %v6698, %v6730
        %v6819 = vsel %vm6744, %v6698, %v6730
        %v6821 = vrot.slane %v6819, 1
        %v6822 = vsel %vm6748, %v6698, %v6730
        %v6824 = vrot.slane %v6822, 2
        %v6825 = vsel %vm6752, %v6698, %v6730
        %v6827 = vrot.slane %v6825, 3
        %v6830 = vsel %vm6740, %v6699, %v6731
        %v6831 = vsel %vm6744, %v6699, %v6731
        %v6833 = vrot.slane %v6831, 1
        %v6834 = vsel %vm6748, %v6699, %v6731
        %v6836 = vrot.slane %v6834, 2
        %v6837 = vsel %vm6752, %v6699, %v6731
        %v6839 = vrot.slane %v6837, 3
        %v6842 = vsel %vm6740, %v6700, %v6732
        %v6843 = vsel %vm6744, %v6700, %v6732
        %v6845 = vrot.slane %v6843, 1
        %v6846 = vsel %vm6748, %v6700, %v6732
        %v6848 = vrot.slane %v6846, 2
        %v6849 = vsel %vm6752, %v6700, %v6732
        %v6851 = vrot.slane %v6849, 3
        %v6854 = vsel %vm6740, %v6701, %v6733
        %v6855 = vsel %vm6744, %v6701, %v6733
        %v6857 = vrot.slane %v6855, 1
        %v6858 = vsel %vm6748, %v6701, %v6733
        %v6860 = vrot.slane %v6858, 2
        %v6861 = vsel %vm6752, %v6701, %v6733
        %v6863 = vrot.slane %v6861, 3
        %v6866 = vsel %vm6740, %v6702, %v6734
        %v6867 = vsel %vm6744, %v6702, %v6734
        %v6869 = vrot.slane %v6867, 1
        %v6870 = vsel %vm6748, %v6702, %v6734
        %v6872 = vrot.slane %v6870, 2
        %v6873 = vsel %vm6752, %v6702, %v6734
        %v6875 = vrot.slane %v6873, 3
        %v6878 = vsel %vm6740, %v6703, %v6735
        %v6879 = vsel %vm6744, %v6703, %v6735
        %v6881 = vrot.slane %v6879, 1
        %v6882 = vsel %vm6748, %v6703, %v6735
        %v6884 = vrot.slane %v6882, 2
        %v6885 = vsel %vm6752, %v6703, %v6735
        %v6887 = vrot.slane %v6885, 3
        %v6890 = vsel %vm6740, %v6704, %v6736
        %v6891 = vsel %vm6744, %v6704, %v6736
        %v6893 = vrot.slane %v6891, 1
        %v6894 = vsel %vm6748, %v6704, %v6736
        %v6896 = vrot.slane %v6894, 2
        %v6897 = vsel %vm6752, %v6704, %v6736
        %v6899 = vrot.slane %v6897, 3
        %v6902 = vsel %vm6740, %v6705, %v6737
        %v6903 = vsel %vm6744, %v6705, %v6737
        %v6905 = vrot.slane %v6903, 1
        %v6906 = vsel %vm6748, %v6705, %v6737
        %v6908 = vrot.slane %v6906, 2
        %v6909 = vsel %vm6752, %v6705, %v6737
        %v6911 = vrot.slane %v6909, 3
        %v6914 = vsel %vm6740, %v6706, %v6738
        %v6915 = vsel %vm6744, %v6706, %v6738
        %v6917 = vrot.slane %v6915, 1
        %v6918 = vsel %vm6748, %v6706, %v6738
        %v6920 = vrot.slane %v6918, 2
        %v6921 = vsel %vm6752, %v6706, %v6738
        %v6923 = vrot.slane %v6921, 3
        %v6926 = vsel %vm6740, %v6707, %v6739
        %v6927 = vsel %vm6744, %v6707, %v6739
        %v6929 = vrot.slane %v6927, 1
        %v6930 = vsel %vm6748, %v6707, %v6739
        %v6932 = vrot.slane %v6930, 2
        %v6933 = vsel %vm6752, %v6707, %v6739
        %v6935 = vrot.slane %v6933, 3
        %v7000 = vunpack.c.l.bf16 %v6743
        %v7001 = vunpack.c.l.bf16 %v6747
        %v7002 = vunpack.c.l.bf16 %v6751
        %v7003 = vunpack.c.l.bf16 %v6755
        %v7004 = vunpack.c.l.bf16 %v6758
        %v7005 = vunpack.c.l.bf16 %v6761
        %v7006 = vunpack.c.l.bf16 %v6764
        %v7007 = vunpack.c.l.bf16 %v6767
        %v7008 = vunpack.c.l.bf16 %v6770
        %v7009 = vunpack.c.l.bf16 %v6773
        %v7010 = vunpack.c.l.bf16 %v6776
        %v7011 = vunpack.c.l.bf16 %v6779
        %v7012 = vunpack.c.l.bf16 %v6782
        %v7013 = vunpack.c.l.bf16 %v6785
        %v7014 = vunpack.c.l.bf16 %v6788
        %v7015 = vunpack.c.l.bf16 %v6791
        %v7016 = vunpack.c.l.bf16 %v6794
        %v7017 = vunpack.c.l.bf16 %v6797
        %v7018 = vunpack.c.l.bf16 %v6800
        %v7019 = vunpack.c.l.bf16 %v6803
        %v7020 = vunpack.c.l.bf16 %v6806
        %v7021 = vunpack.c.l.bf16 %v6809
        %v7022 = vunpack.c.l.bf16 %v6812
        %v7023 = vunpack.c.l.bf16 %v6815
        %v7024 = vunpack.c.l.bf16 %v6818
        %v7025 = vunpack.c.l.bf16 %v6821
        %v7026 = vunpack.c.l.bf16 %v6824
        %v7027 = vunpack.c.l.bf16 %v6827
        %v7028 = vunpack.c.l.bf16 %v6830
        %v7029 = vunpack.c.l.bf16 %v6833
        %v7030 = vunpack.c.l.bf16 %v6836
        %v7031 = vunpack.c.l.bf16 %v6839
        %v7032 = vunpack.c.l.bf16 %v6842
        %v7033 = vunpack.c.l.bf16 %v6845
        %v7034 = vunpack.c.l.bf16 %v6848
        %v7035 = vunpack.c.l.bf16 %v6851
        %v7036 = vunpack.c.l.bf16 %v6854
        %v7037 = vunpack.c.l.bf16 %v6857
        %v7038 = vunpack.c.l.bf16 %v6860
        %v7039 = vunpack.c.l.bf16 %v6863
        %v7040 = vunpack.c.l.bf16 %v6866
        %v7041 = vunpack.c.l.bf16 %v6869
        %v7042 = vunpack.c.l.bf16 %v6872
        %v7043 = vunpack.c.l.bf16 %v6875
        %v7044 = vunpack.c.l.bf16 %v6878
        %v7045 = vunpack.c.l.bf16 %v6881
        %v7046 = vunpack.c.l.bf16 %v6884
        %v7047 = vunpack.c.l.bf16 %v6887
        %v7048 = vunpack.c.l.bf16 %v6890
        %v7049 = vunpack.c.l.bf16 %v6893
        %v7050 = vunpack.c.l.bf16 %v6896
        %v7051 = vunpack.c.l.bf16 %v6899
        %v7052 = vunpack.c.l.bf16 %v6902
        %v7053 = vunpack.c.l.bf16 %v6905
        %v7054 = vunpack.c.l.bf16 %v6908
        %v7055 = vunpack.c.l.bf16 %v6911
        %v7056 = vunpack.c.l.bf16 %v6914
        %v7057 = vunpack.c.l.bf16 %v6917
        %v7058 = vunpack.c.l.bf16 %v6920
        %v7059 = vunpack.c.l.bf16 %v6923
        %v7060 = vunpack.c.l.bf16 %v6926
        %v7061 = vunpack.c.l.bf16 %v6929
        %v7062 = vunpack.c.l.bf16 %v6932
        %v7063 = vunpack.c.l.bf16 %v6935
        %v7128 = vrot.slane %v7000, 7
        %v7129 = vrot.slane %v7128, 2
        %v7130 = vrot.slane %v7001, 7
        %v7131 = vrot.slane %v7130, 2
        %v7132 = vrot.slane %v7002, 7
        %v7133 = vrot.slane %v7132, 2
        %v7134 = vrot.slane %v7003, 7
        %v7135 = vrot.slane %v7134, 2
        %v7136 = vrot.slane %v7004, 7
        %v7137 = vrot.slane %v7136, 2
        %v7138 = vrot.slane %v7005, 7
        %v7139 = vrot.slane %v7138, 2
        %v7140 = vrot.slane %v7006, 7
        %v7141 = vrot.slane %v7140, 2
        %v7142 = vrot.slane %v7007, 7
        %v7143 = vrot.slane %v7142, 2
        %v7144 = vrot.slane %v7008, 7
        %v7145 = vrot.slane %v7144, 2
        %v7146 = vrot.slane %v7009, 7
        %v7147 = vrot.slane %v7146, 2
        %v7148 = vrot.slane %v7010, 7
        %v7149 = vrot.slane %v7148, 2
        %v7150 = vrot.slane %v7011, 7
        %v7151 = vrot.slane %v7150, 2
        %v7152 = vrot.slane %v7012, 7
        %v7153 = vrot.slane %v7152, 2
        %v7154 = vrot.slane %v7013, 7
        %v7155 = vrot.slane %v7154, 2
        %v7156 = vrot.slane %v7014, 7
        %v7157 = vrot.slane %v7156, 2
        %v7158 = vrot.slane %v7015, 7
        %v7159 = vrot.slane %v7158, 2
        %v7160 = vrot.slane %v7016, 7
        %v7161 = vrot.slane %v7160, 2
        %v7162 = vrot.slane %v7017, 7
        %v7163 = vrot.slane %v7162, 2
        %v7164 = vrot.slane %v7018, 7
        %v7165 = vrot.slane %v7164, 2
        %v7166 = vrot.slane %v7019, 7
        %v7167 = vrot.slane %v7166, 2
        %v7168 = vrot.slane %v7020, 7
        %v7169 = vrot.slane %v7168, 2
        %v7170 = vrot.slane %v7021, 7
        %v7171 = vrot.slane %v7170, 2
        %v7172 = vrot.slane %v7022, 7
        %v7173 = vrot.slane %v7172, 2
        %v7174 = vrot.slane %v7023, 7
        %v7175 = vrot.slane %v7174, 2
        %v7176 = vrot.slane %v7024, 7
        %v7177 = vrot.slane %v7176, 2
        %v7178 = vrot.slane %v7025, 7
        %v7179 = vrot.slane %v7178, 2
        %v7180 = vrot.slane %v7026, 7
        %v7181 = vrot.slane %v7180, 2
        %v7182 = vrot.slane %v7027, 7
        %v7183 = vrot.slane %v7182, 2
        %v7184 = vrot.slane %v7028, 7
        %v7185 = vrot.slane %v7184, 2
        %v7186 = vrot.slane %v7029, 7
        %v7187 = vrot.slane %v7186, 2
        %v7188 = vrot.slane %v7030, 7
        %v7189 = vrot.slane %v7188, 2
        %v7190 = vrot.slane %v7031, 7
        %v7191 = vrot.slane %v7190, 2
        %v7192 = vrot.slane %v7032, 7
        %v7193 = vrot.slane %v7192, 2
        %v7194 = vrot.slane %v7033, 7
        %v7195 = vrot.slane %v7194, 2
        %v7196 = vrot.slane %v7034, 7
        %v7197 = vrot.slane %v7196, 2
        %v7198 = vrot.slane %v7035, 7
        %v7199 = vrot.slane %v7198, 2
        %v7200 = vrot.slane %v7036, 7
        %v7201 = vrot.slane %v7200, 2
        %v7202 = vrot.slane %v7037, 7
        %v7203 = vrot.slane %v7202, 2
        %v7204 = vrot.slane %v7038, 7
        %v7205 = vrot.slane %v7204, 2
        %v7206 = vrot.slane %v7039, 7
        %v7207 = vrot.slane %v7206, 2
        %v7208 = vrot.slane %v7040, 7
        %v7209 = vrot.slane %v7208, 2
        %v7210 = vrot.slane %v7041, 7
        %v7211 = vrot.slane %v7210, 2
        %v7212 = vrot.slane %v7042, 7
        %v7213 = vrot.slane %v7212, 2
        %v7214 = vrot.slane %v7043, 7
        %v7215 = vrot.slane %v7214, 2
        %v7216 = vrot.slane %v7044, 7
        %v7217 = vrot.slane %v7216, 2
        %v7218 = vrot.slane %v7045, 7
        %v7219 = vrot.slane %v7218, 2
        %v7220 = vrot.slane %v7046, 7
        %v7221 = vrot.slane %v7220, 2
        %v7222 = vrot.slane %v7047, 7
        %v7223 = vrot.slane %v7222, 2
        %v7224 = vrot.slane %v7048, 7
        %v7225 = vrot.slane %v7224, 2
        %v7226 = vrot.slane %v7049, 7
        %v7227 = vrot.slane %v7226, 2
        %v7228 = vrot.slane %v7050, 7
        %v7229 = vrot.slane %v7228, 2
        %v7230 = vrot.slane %v7051, 7
        %v7231 = vrot.slane %v7230, 2
        %v7232 = vrot.slane %v7052, 7
        %v7233 = vrot.slane %v7232, 2
        %v7234 = vrot.slane %v7053, 7
        %v7235 = vrot.slane %v7234, 2
        %v7236 = vrot.slane %v7054, 7
        %v7237 = vrot.slane %v7236, 2
        %v7238 = vrot.slane %v7055, 7
        %v7239 = vrot.slane %v7238, 2
        %v7240 = vrot.slane %v7056, 7
        %v7241 = vrot.slane %v7240, 2
        %v7242 = vrot.slane %v7057, 7
        %v7243 = vrot.slane %v7242, 2
        %v7244 = vrot.slane %v7058, 7
        %v7245 = vrot.slane %v7244, 2
        %v7246 = vrot.slane %v7059, 7
        %v7247 = vrot.slane %v7246, 2
        %v7248 = vrot.slane %v7060, 7
        %v7249 = vrot.slane %v7248, 2
        %v7250 = vrot.slane %v7061, 7
        %v7251 = vrot.slane %v7250, 2
        %v7252 = vrot.slane %v7062, 7
        %v7253 = vrot.slane %v7252, 2
        %v7254 = vrot.slane %v7063, 7
        %v7255 = vrot.slane %v7254, 2
        %v7320 = vadd.f32 %v7000, %v7129
        %v7321 = vadd.f32 %v7001, %v7131
        %v7322 = vadd.f32 %v7002, %v7133
        %v7323 = vadd.f32 %v7003, %v7135
        %v7324 = vadd.f32 %v7004, %v7137
        %v7325 = vadd.f32 %v7005, %v7139
        %v7326 = vadd.f32 %v7006, %v7141
        %v7327 = vadd.f32 %v7007, %v7143
        %v7328 = vadd.f32 %v7008, %v7145
        %v7329 = vadd.f32 %v7009, %v7147
        %v7330 = vadd.f32 %v7010, %v7149
        %v7331 = vadd.f32 %v7011, %v7151
        %v7332 = vadd.f32 %v7012, %v7153
        %v7333 = vadd.f32 %v7013, %v7155
        %v7334 = vadd.f32 %v7014, %v7157
        %v7335 = vadd.f32 %v7015, %v7159
        %v7336 = vadd.f32 %v7016, %v7161
        %v7337 = vadd.f32 %v7017, %v7163
        %v7338 = vadd.f32 %v7018, %v7165
        %v7339 = vadd.f32 %v7019, %v7167
        %v7340 = vadd.f32 %v7020, %v7169
        %v7341 = vadd.f32 %v7021, %v7171
        %v7342 = vadd.f32 %v7022, %v7173
        %v7343 = vadd.f32 %v7023, %v7175
        %v7344 = vadd.f32 %v7024, %v7177
        %v7345 = vadd.f32 %v7025, %v7179
        %v7346 = vadd.f32 %v7026, %v7181
        %v7347 = vadd.f32 %v7027, %v7183
        %v7348 = vadd.f32 %v7028, %v7185
        %v7349 = vadd.f32 %v7029, %v7187
        %v7350 = vadd.f32 %v7030, %v7189
        %v7351 = vadd.f32 %v7031, %v7191
        %v7352 = vadd.f32 %v7032, %v7193
        %v7353 = vadd.f32 %v7033, %v7195
        %v7354 = vadd.f32 %v7034, %v7197
        %v7355 = vadd.f32 %v7035, %v7199
        %v7356 = vadd.f32 %v7036, %v7201
        %v7357 = vadd.f32 %v7037, %v7203
        %v7358 = vadd.f32 %v7038, %v7205
        %v7359 = vadd.f32 %v7039, %v7207
        %v7360 = vadd.f32 %v7040, %v7209
        %v7361 = vadd.f32 %v7041, %v7211
        %v7362 = vadd.f32 %v7042, %v7213
        %v7363 = vadd.f32 %v7043, %v7215
        %v7364 = vadd.f32 %v7044, %v7217
        %v7365 = vadd.f32 %v7045, %v7219
        %v7366 = vadd.f32 %v7046, %v7221
        %v7367 = vadd.f32 %v7047, %v7223
        %v7368 = vadd.f32 %v7048, %v7225
        %v7369 = vadd.f32 %v7049, %v7227
        %v7370 = vadd.f32 %v7050, %v7229
        %v7371 = vadd.f32 %v7051, %v7231
        %v7372 = vadd.f32 %v7052, %v7233
        %v7373 = vadd.f32 %v7053, %v7235
        %v7374 = vadd.f32 %v7054, %v7237
        %v7375 = vadd.f32 %v7055, %v7239
        %v7376 = vadd.f32 %v7056, %v7241
        %v7377 = vadd.f32 %v7057, %v7243
        %v7378 = vadd.f32 %v7058, %v7245
        %v7379 = vadd.f32 %v7059, %v7247
        %v7380 = vadd.f32 %v7060, %v7249
        %v7381 = vadd.f32 %v7061, %v7251
        %v7382 = vadd.f32 %v7062, %v7253
        %v7383 = vadd.f32 %v7063, %v7255
        %v7384 = vpack.c.bf16 %v7320, %v7320
        %v7385 = vpack.c.bf16 %v7321, %v7321
        %v7386 = vpack.c.bf16 %v7322, %v7322
        %v7387 = vpack.c.bf16 %v7323, %v7323
        %v7388 = vpack.c.bf16 %v7324, %v7324
        %v7389 = vpack.c.bf16 %v7325, %v7325
        %v7390 = vpack.c.bf16 %v7326, %v7326
        %v7391 = vpack.c.bf16 %v7327, %v7327
        %v7392 = vpack.c.bf16 %v7328, %v7328
        %v7393 = vpack.c.bf16 %v7329, %v7329
        %v7394 = vpack.c.bf16 %v7330, %v7330
        %v7395 = vpack.c.bf16 %v7331, %v7331
        %v7396 = vpack.c.bf16 %v7332, %v7332
        %v7397 = vpack.c.bf16 %v7333, %v7333
        %v7398 = vpack.c.bf16 %v7334, %v7334
        %v7399 = vpack.c.bf16 %v7335, %v7335
        %v7400 = vpack.c.bf16 %v7336, %v7336
        %v7401 = vpack.c.bf16 %v7337, %v7337
        %v7402 = vpack.c.bf16 %v7338, %v7338
        %v7403 = vpack.c.bf16 %v7339, %v7339
        %v7404 = vpack.c.bf16 %v7340, %v7340
        %v7405 = vpack.c.bf16 %v7341, %v7341
        %v7406 = vpack.c.bf16 %v7342, %v7342
        %v7407 = vpack.c.bf16 %v7343, %v7343
        %v7408 = vpack.c.bf16 %v7344, %v7344
        %v7409 = vpack.c.bf16 %v7345, %v7345
        %v7410 = vpack.c.bf16 %v7346, %v7346
        %v7411 = vpack.c.bf16 %v7347, %v7347
        %v7412 = vpack.c.bf16 %v7348, %v7348
        %v7413 = vpack.c.bf16 %v7349, %v7349
        %v7414 = vpack.c.bf16 %v7350, %v7350
        %v7415 = vpack.c.bf16 %v7351, %v7351
        %v7416 = vpack.c.bf16 %v7352, %v7352
        %v7417 = vpack.c.bf16 %v7353, %v7353
        %v7418 = vpack.c.bf16 %v7354, %v7354
        %v7419 = vpack.c.bf16 %v7355, %v7355
        %v7420 = vpack.c.bf16 %v7356, %v7356
        %v7421 = vpack.c.bf16 %v7357, %v7357
        %v7422 = vpack.c.bf16 %v7358, %v7358
        %v7423 = vpack.c.bf16 %v7359, %v7359
        %v7424 = vpack.c.bf16 %v7360, %v7360
        %v7425 = vpack.c.bf16 %v7361, %v7361
        %v7426 = vpack.c.bf16 %v7362, %v7362
        %v7427 = vpack.c.bf16 %v7363, %v7363
        %v7428 = vpack.c.bf16 %v7364, %v7364
        %v7429 = vpack.c.bf16 %v7365, %v7365
        %v7430 = vpack.c.bf16 %v7366, %v7366
        %v7431 = vpack.c.bf16 %v7367, %v7367
        %v7432 = vpack.c.bf16 %v7368, %v7368
        %v7433 = vpack.c.bf16 %v7369, %v7369
        %v7434 = vpack.c.bf16 %v7370, %v7370
        %v7435 = vpack.c.bf16 %v7371, %v7371
        %v7436 = vpack.c.bf16 %v7372, %v7372
        %v7437 = vpack.c.bf16 %v7373, %v7373
        %v7438 = vpack.c.bf16 %v7374, %v7374
        %v7439 = vpack.c.bf16 %v7375, %v7375
        %v7440 = vpack.c.bf16 %v7376, %v7376
        %v7441 = vpack.c.bf16 %v7377, %v7377
        %v7442 = vpack.c.bf16 %v7378, %v7378
        %v7443 = vpack.c.bf16 %v7379, %v7379
        %v7444 = vpack.c.bf16 %v7380, %v7380
        %v7445 = vpack.c.bf16 %v7381, %v7381
        %v7446 = vpack.c.bf16 %v7382, %v7382
        %v7447 = vpack.c.bf16 %v7383, %v7383
        %v7512 = vunpack.c.l.b16 %v6580
        %v7513 = vunpack.c.l.b16 %v6581
        %v7514 = vunpack.c.l.b16 %v6582
        %v7515 = vunpack.c.l.b16 %v6583
        %v7516 = vunpack.c.l.b16 %v6584
        %v7517 = vunpack.c.l.b16 %v6585
        %v7518 = vunpack.c.l.b16 %v6586
        %v7519 = vunpack.c.l.b16 %v6587
        %v7520 = vunpack.c.l.b16 %v6588
        %v7521 = vunpack.c.l.b16 %v6589
        %v7522 = vunpack.c.l.b16 %v6590
        %v7523 = vunpack.c.l.b16 %v6591
        %v7524 = vunpack.c.l.b16 %v6592
        %v7525 = vunpack.c.l.b16 %v6593
        %v7526 = vunpack.c.l.b16 %v6594
        %v7527 = vunpack.c.l.b16 %v6595
        %v7528 = vunpack.c.l.b16 %v6596
        %v7529 = vunpack.c.l.b16 %v6597
        %v7530 = vunpack.c.l.b16 %v6598
        %v7531 = vunpack.c.l.b16 %v6599
        %v7532 = vunpack.c.l.b16 %v6600
        %v7533 = vunpack.c.l.b16 %v6601
        %v7534 = vunpack.c.l.b16 %v6602
        %v7535 = vunpack.c.l.b16 %v6603
        %v7536 = vunpack.c.l.b16 %v6604
        %v7537 = vunpack.c.l.b16 %v6605
        %v7538 = vunpack.c.l.b16 %v6606
        %v7539 = vunpack.c.l.b16 %v6607
        %v7540 = vunpack.c.l.b16 %v6608
        %v7541 = vunpack.c.l.b16 %v6609
        %v7542 = vunpack.c.l.b16 %v6610
        %v7543 = vunpack.c.l.b16 %v6611
        %v7544 = vunpack.c.l.b16 %v6612
        %v7545 = vunpack.c.l.b16 %v6613
        %v7546 = vunpack.c.l.b16 %v6614
        %v7547 = vunpack.c.l.b16 %v6615
        %v7548 = vunpack.c.l.b16 %v6616
        %v7549 = vunpack.c.l.b16 %v6617
        %v7550 = vunpack.c.l.b16 %v6618
        %v7551 = vunpack.c.l.b16 %v6619
        %v7552 = vunpack.c.l.b16 %v6620
        %v7553 = vunpack.c.l.b16 %v6621
        %v7554 = vunpack.c.l.b16 %v6622
        %v7555 = vunpack.c.l.b16 %v6623
        %v7556 = vunpack.c.l.b16 %v6624
        %v7557 = vunpack.c.l.b16 %v6625
        %v7558 = vunpack.c.l.b16 %v6626
        %v7559 = vunpack.c.l.b16 %v6627
        %v7560 = vunpack.c.l.b16 %v6628
        %v7561 = vunpack.c.l.b16 %v6629
        %v7562 = vunpack.c.l.b16 %v6630
        %v7563 = vunpack.c.l.b16 %v6631
        %v7564 = vunpack.c.l.b16 %v6632
        %v7565 = vunpack.c.l.b16 %v6633
        %v7566 = vunpack.c.l.b16 %v6634
        %v7567 = vunpack.c.l.b16 %v6635
        %v7568 = vunpack.c.l.b16 %v6636
        %v7569 = vunpack.c.l.b16 %v6637
        %v7570 = vunpack.c.l.b16 %v6638
        %v7571 = vunpack.c.l.b16 %v6639
        %v7572 = vunpack.c.l.b16 %v6640
        %v7573 = vunpack.c.l.b16 %v6641
        %v7574 = vunpack.c.l.b16 %v6642
        %v7575 = vunpack.c.l.b16 %v6643
        %v7576 = vpack.c.b16 %v7512, %v7512
        %v7577 = vpack.c.b16 %v7513, %v7513
        %v7578 = vpack.c.b16 %v7514, %v7514
        %v7579 = vpack.c.b16 %v7515, %v7515
        %v7580 = vpack.c.b16 %v7516, %v7516
        %v7581 = vpack.c.b16 %v7517, %v7517
        %v7582 = vpack.c.b16 %v7518, %v7518
        %v7583 = vpack.c.b16 %v7519, %v7519
        %v7584 = vpack.c.b16 %v7520, %v7520
        %v7585 = vpack.c.b16 %v7521, %v7521
        %v7586 = vpack.c.b16 %v7522, %v7522
        %v7587 = vpack.c.b16 %v7523, %v7523
        %v7588 = vpack.c.b16 %v7524, %v7524
        %v7589 = vpack.c.b16 %v7525, %v7525
        %v7590 = vpack.c.b16 %v7526, %v7526
        %v7591 = vpack.c.b16 %v7527, %v7527
        %v7592 = vpack.c.b16 %v7528, %v7528
        %v7593 = vpack.c.b16 %v7529, %v7529
        %v7594 = vpack.c.b16 %v7530, %v7530
        %v7595 = vpack.c.b16 %v7531, %v7531
        %v7596 = vpack.c.b16 %v7532, %v7532
        %v7597 = vpack.c.b16 %v7533, %v7533
        %v7598 = vpack.c.b16 %v7534, %v7534
        %v7599 = vpack.c.b16 %v7535, %v7535
        %v7600 = vpack.c.b16 %v7536, %v7536
        %v7601 = vpack.c.b16 %v7537, %v7537
        %v7602 = vpack.c.b16 %v7538, %v7538
        %v7603 = vpack.c.b16 %v7539, %v7539
        %v7604 = vpack.c.b16 %v7540, %v7540
        %v7605 = vpack.c.b16 %v7541, %v7541
        %v7606 = vpack.c.b16 %v7542, %v7542
        %v7607 = vpack.c.b16 %v7543, %v7543
        %v7608 = vpack.c.b16 %v7544, %v7544
        %v7609 = vpack.c.b16 %v7545, %v7545
        %v7610 = vpack.c.b16 %v7546, %v7546
        %v7611 = vpack.c.b16 %v7547, %v7547
        %v7612 = vpack.c.b16 %v7548, %v7548
        %v7613 = vpack.c.b16 %v7549, %v7549
        %v7614 = vpack.c.b16 %v7550, %v7550
        %v7615 = vpack.c.b16 %v7551, %v7551
        %v7616 = vpack.c.b16 %v7552, %v7552
        %v7617 = vpack.c.b16 %v7553, %v7553
        %v7618 = vpack.c.b16 %v7554, %v7554
        %v7619 = vpack.c.b16 %v7555, %v7555
        %v7620 = vpack.c.b16 %v7556, %v7556
        %v7621 = vpack.c.b16 %v7557, %v7557
        %v7622 = vpack.c.b16 %v7558, %v7558
        %v7623 = vpack.c.b16 %v7559, %v7559
        %v7624 = vpack.c.b16 %v7560, %v7560
        %v7625 = vpack.c.b16 %v7561, %v7561
        %v7626 = vpack.c.b16 %v7562, %v7562
        %v7627 = vpack.c.b16 %v7563, %v7563
        %v7628 = vpack.c.b16 %v7564, %v7564
        %v7629 = vpack.c.b16 %v7565, %v7565
        %v7630 = vpack.c.b16 %v7566, %v7566
        %v7631 = vpack.c.b16 %v7567, %v7567
        %v7632 = vpack.c.b16 %v7568, %v7568
        %v7633 = vpack.c.b16 %v7569, %v7569
        %v7634 = vpack.c.b16 %v7570, %v7570
        %v7635 = vpack.c.b16 %v7571, %v7571
        %v7636 = vpack.c.b16 %v7572, %v7572
        %v7637 = vpack.c.b16 %v7573, %v7573
        %v7638 = vpack.c.b16 %v7574, %v7574
        %v7639 = vpack.c.b16 %v7575, %v7575
        %v7640 = vunpack.c.l.b16 %v7576
        %v7641 = vunpack.c.l.b16 %v7577
        %v7642 = vunpack.c.l.b16 %v7578
        %v7643 = vunpack.c.l.b16 %v7579
        %v7644 = vunpack.c.l.b16 %v7580
        %v7645 = vunpack.c.l.b16 %v7581
        %v7646 = vunpack.c.l.b16 %v7582
        %v7647 = vunpack.c.l.b16 %v7583
        %v7648 = vunpack.c.l.b16 %v7584
        %v7649 = vunpack.c.l.b16 %v7585
        %v7650 = vunpack.c.l.b16 %v7586
        %v7651 = vunpack.c.l.b16 %v7587
        %v7652 = vunpack.c.l.b16 %v7588
        %v7653 = vunpack.c.l.b16 %v7589
        %v7654 = vunpack.c.l.b16 %v7590
        %v7655 = vunpack.c.l.b16 %v7591
        %v7656 = vunpack.c.l.b16 %v7592
        %v7657 = vunpack.c.l.b16 %v7593
        %v7658 = vunpack.c.l.b16 %v7594
        %v7659 = vunpack.c.l.b16 %v7595
        %v7660 = vunpack.c.l.b16 %v7596
        %v7661 = vunpack.c.l.b16 %v7597
        %v7662 = vunpack.c.l.b16 %v7598
        %v7663 = vunpack.c.l.b16 %v7599
        %v7664 = vunpack.c.l.b16 %v7600
        %v7665 = vunpack.c.l.b16 %v7601
        %v7666 = vunpack.c.l.b16 %v7602
        %v7667 = vunpack.c.l.b16 %v7603
        %v7668 = vunpack.c.l.b16 %v7604
        %v7669 = vunpack.c.l.b16 %v7605
        %v7670 = vunpack.c.l.b16 %v7606
        %v7671 = vunpack.c.l.b16 %v7607
        %v7672 = vunpack.c.l.b16 %v7608
        %v7673 = vunpack.c.l.b16 %v7609
        %v7674 = vunpack.c.l.b16 %v7610
        %v7675 = vunpack.c.l.b16 %v7611
        %v7676 = vunpack.c.l.b16 %v7612
        %v7677 = vunpack.c.l.b16 %v7613
        %v7678 = vunpack.c.l.b16 %v7614
        %v7679 = vunpack.c.l.b16 %v7615
        %v7680 = vunpack.c.l.b16 %v7616
        %v7681 = vunpack.c.l.b16 %v7617
        %v7682 = vunpack.c.l.b16 %v7618
        %v7683 = vunpack.c.l.b16 %v7619
        %v7684 = vunpack.c.l.b16 %v7620
        %v7685 = vunpack.c.l.b16 %v7621
        %v7686 = vunpack.c.l.b16 %v7622
        %v7687 = vunpack.c.l.b16 %v7623
        %v7688 = vunpack.c.l.b16 %v7624
        %v7689 = vunpack.c.l.b16 %v7625
        %v7690 = vunpack.c.l.b16 %v7626
        %v7691 = vunpack.c.l.b16 %v7627
        %v7692 = vunpack.c.l.b16 %v7628
        %v7693 = vunpack.c.l.b16 %v7629
        %v7694 = vunpack.c.l.b16 %v7630
        %v7695 = vunpack.c.l.b16 %v7631
        %v7696 = vunpack.c.l.b16 %v7632
        %v7697 = vunpack.c.l.b16 %v7633
        %v7698 = vunpack.c.l.b16 %v7634
        %v7699 = vunpack.c.l.b16 %v7635
        %v7700 = vunpack.c.l.b16 %v7636
        %v7701 = vunpack.c.l.b16 %v7637
        %v7702 = vunpack.c.l.b16 %v7638
        %v7703 = vunpack.c.l.b16 %v7639
        %v7704 = vrot.slane %v7641, 7
        %v7705 = vsel %vm6744, %v7704, %v7640
        %v7706 = vrot.slane %v7642, 6
        %v7707 = vsel %vm6748, %v7706, %v7705
        %v7708 = vrot.slane %v7643, 5
        %v7709 = vsel %vm6752, %v7708, %v7707
        %v7710 = vrot.slane %v7644, 4
        %vm7711 = vcmask 1044484
        %v7712 = vsel %vm7711, %v7710, %v7709
        %v7713 = vrot.slane %v7645, 3
        %vm7714 = vcmask 1045509
        %v7715 = vsel %vm7714, %v7713, %v7712
        %v7716 = vrot.slane %v7646, 2
        %vm7717 = vcmask 1046534
        %v7718 = vsel %vm7717, %v7716, %v7715
        %v7719 = vrot.slane %v7647, 1
        %vm7720 = vcmask 1047559
        %v7721 = vsel %vm7720, %v7719, %v7718
        %v7722 = vrot.slane %v7649, 7
        %v7723 = vsel %vm6744, %v7722, %v7648
        %v7724 = vrot.slane %v7650, 6
        %v7725 = vsel %vm6748, %v7724, %v7723
        %v7726 = vrot.slane %v7651, 5
        %v7727 = vsel %vm6752, %v7726, %v7725
        %v7728 = vrot.slane %v7652, 4
        %v7729 = vsel %vm7711, %v7728, %v7727
        %v7730 = vrot.slane %v7653, 3
        %v7731 = vsel %vm7714, %v7730, %v7729
        %v7732 = vrot.slane %v7654, 2
        %v7733 = vsel %vm7717, %v7732, %v7731
        %v7734 = vrot.slane %v7655, 1
        %v7735 = vsel %vm7720, %v7734, %v7733
        %v7736 = vrot.slane %v7657, 7
        %v7737 = vsel %vm6744, %v7736, %v7656
        %v7738 = vrot.slane %v7658, 6
        %v7739 = vsel %vm6748, %v7738, %v7737
        %v7740 = vrot.slane %v7659, 5
        %v7741 = vsel %vm6752, %v7740, %v7739
        %v7742 = vrot.slane %v7660, 4
        %v7743 = vsel %vm7711, %v7742, %v7741
        %v7744 = vrot.slane %v7661, 3
        %v7745 = vsel %vm7714, %v7744, %v7743
        %v7746 = vrot.slane %v7662, 2
        %v7747 = vsel %vm7717, %v7746, %v7745
        %v7748 = vrot.slane %v7663, 1
        %v7749 = vsel %vm7720, %v7748, %v7747
        %v7750 = vrot.slane %v7665, 7
        %v7751 = vsel %vm6744, %v7750, %v7664
        %v7752 = vrot.slane %v7666, 6
        %v7753 = vsel %vm6748, %v7752, %v7751
        %v7754 = vrot.slane %v7667, 5
        %v7755 = vsel %vm6752, %v7754, %v7753
        %v7756 = vrot.slane %v7668, 4
        %v7757 = vsel %vm7711, %v7756, %v7755
        %v7758 = vrot.slane %v7669, 3
        %v7759 = vsel %vm7714, %v7758, %v7757
        %v7760 = vrot.slane %v7670, 2
        %v7761 = vsel %vm7717, %v7760, %v7759
        %v7762 = vrot.slane %v7671, 1
        %v7763 = vsel %vm7720, %v7762, %v7761
        %v7764 = vrot.slane %v7673, 7
        %v7765 = vsel %vm6744, %v7764, %v7672
        %v7766 = vrot.slane %v7674, 6
        %v7767 = vsel %vm6748, %v7766, %v7765
        %v7768 = vrot.slane %v7675, 5
        %v7769 = vsel %vm6752, %v7768, %v7767
        %v7770 = vrot.slane %v7676, 4
        %v7771 = vsel %vm7711, %v7770, %v7769
        %v7772 = vrot.slane %v7677, 3
        %v7773 = vsel %vm7714, %v7772, %v7771
        %v7774 = vrot.slane %v7678, 2
        %v7775 = vsel %vm7717, %v7774, %v7773
        %v7776 = vrot.slane %v7679, 1
        %v7777 = vsel %vm7720, %v7776, %v7775
        %v7778 = vrot.slane %v7681, 7
        %v7779 = vsel %vm6744, %v7778, %v7680
        %v7780 = vrot.slane %v7682, 6
        %v7781 = vsel %vm6748, %v7780, %v7779
        %v7782 = vrot.slane %v7683, 5
        %v7783 = vsel %vm6752, %v7782, %v7781
        %v7784 = vrot.slane %v7684, 4
        %v7785 = vsel %vm7711, %v7784, %v7783
        %v7786 = vrot.slane %v7685, 3
        %v7787 = vsel %vm7714, %v7786, %v7785
        %v7788 = vrot.slane %v7686, 2
        %v7789 = vsel %vm7717, %v7788, %v7787
        %v7790 = vrot.slane %v7687, 1
        %v7791 = vsel %vm7720, %v7790, %v7789
        %v7792 = vrot.slane %v7689, 7
        %v7793 = vsel %vm6744, %v7792, %v7688
        %v7794 = vrot.slane %v7690, 6
        %v7795 = vsel %vm6748, %v7794, %v7793
        %v7796 = vrot.slane %v7691, 5
        %v7797 = vsel %vm6752, %v7796, %v7795
        %v7798 = vrot.slane %v7692, 4
        %v7799 = vsel %vm7711, %v7798, %v7797
        %v7800 = vrot.slane %v7693, 3
        %v7801 = vsel %vm7714, %v7800, %v7799
        %v7802 = vrot.slane %v7694, 2
        %v7803 = vsel %vm7717, %v7802, %v7801
        %v7804 = vrot.slane %v7695, 1
        %v7805 = vsel %vm7720, %v7804, %v7803
        %v7806 = vrot.slane %v7697, 7
        %v7807 = vsel %vm6744, %v7806, %v7696
        %v7808 = vrot.slane %v7698, 6
        %v7809 = vsel %vm6748, %v7808, %v7807
        %v7810 = vrot.slane %v7699, 5
        %v7811 = vsel %vm6752, %v7810, %v7809
        %v7812 = vrot.slane %v7700, 4
        %v7813 = vsel %vm7711, %v7812, %v7811
        %v7814 = vrot.slane %v7701, 3
        %v7815 = vsel %vm7714, %v7814, %v7813
        %v7816 = vrot.slane %v7702, 2
        %v7817 = vsel %vm7717, %v7816, %v7815
        %v7818 = vrot.slane %v7703, 1
        %v7819 = vsel %vm7720, %v7818, %v7817
        %v7820 = vpack.c.b16 %v7735, %v7721
        %v7821 = vpack.c.b16 %v7763, %v7749
        %v7822 = vpack.c.b16 %v7791, %v7777
        %v7823 = vpack.c.b16 %v7819, %v7805
        %v7892 = vunpack.c.l.b16 %v7384
        %v7893 = vunpack.c.l.b16 %v7385
        %v7894 = vunpack.c.l.b16 %v7386
        %v7895 = vunpack.c.l.b16 %v7387
        %v7896 = vunpack.c.l.b16 %v7388
        %v7897 = vunpack.c.l.b16 %v7389
        %v7898 = vunpack.c.l.b16 %v7390
        %v7899 = vunpack.c.l.b16 %v7391
        %v7900 = vunpack.c.l.b16 %v7392
        %v7901 = vunpack.c.l.b16 %v7393
        %v7902 = vunpack.c.l.b16 %v7394
        %v7903 = vunpack.c.l.b16 %v7395
        %v7904 = vunpack.c.l.b16 %v7396
        %v7905 = vunpack.c.l.b16 %v7397
        %v7906 = vunpack.c.l.b16 %v7398
        %v7907 = vunpack.c.l.b16 %v7399
        %v7908 = vunpack.c.l.b16 %v7400
        %v7909 = vunpack.c.l.b16 %v7401
        %v7910 = vunpack.c.l.b16 %v7402
        %v7911 = vunpack.c.l.b16 %v7403
        %v7912 = vunpack.c.l.b16 %v7404
        %v7913 = vunpack.c.l.b16 %v7405
        %v7914 = vunpack.c.l.b16 %v7406
        %v7915 = vunpack.c.l.b16 %v7407
        %v7916 = vunpack.c.l.b16 %v7408
        %v7917 = vunpack.c.l.b16 %v7409
        %v7918 = vunpack.c.l.b16 %v7410
        %v7919 = vunpack.c.l.b16 %v7411
        %v7920 = vunpack.c.l.b16 %v7412
        %v7921 = vunpack.c.l.b16 %v7413
        %v7922 = vunpack.c.l.b16 %v7414
        %v7923 = vunpack.c.l.b16 %v7415
        %v7924 = vunpack.c.l.b16 %v7416
        %v7925 = vunpack.c.l.b16 %v7417
        %v7926 = vunpack.c.l.b16 %v7418
        %v7927 = vunpack.c.l.b16 %v7419
        %v7928 = vunpack.c.l.b16 %v7420
        %v7929 = vunpack.c.l.b16 %v7421
        %v7930 = vunpack.c.l.b16 %v7422
        %v7931 = vunpack.c.l.b16 %v7423
        %v7932 = vunpack.c.l.b16 %v7424
        %v7933 = vunpack.c.l.b16 %v7425
        %v7934 = vunpack.c.l.b16 %v7426
        %v7935 = vunpack.c.l.b16 %v7427
        %v7936 = vunpack.c.l.b16 %v7428
        %v7937 = vunpack.c.l.b16 %v7429
        %v7938 = vunpack.c.l.b16 %v7430
        %v7939 = vunpack.c.l.b16 %v7431
        %v7940 = vunpack.c.l.b16 %v7432
        %v7941 = vunpack.c.l.b16 %v7433
        %v7942 = vunpack.c.l.b16 %v7434
        %v7943 = vunpack.c.l.b16 %v7435
        %v7944 = vunpack.c.l.b16 %v7436
        %v7945 = vunpack.c.l.b16 %v7437
        %v7946 = vunpack.c.l.b16 %v7438
        %v7947 = vunpack.c.l.b16 %v7439
        %v7948 = vunpack.c.l.b16 %v7440
        %v7949 = vunpack.c.l.b16 %v7441
        %v7950 = vunpack.c.l.b16 %v7442
        %v7951 = vunpack.c.l.b16 %v7443
        %v7952 = vunpack.c.l.b16 %v7444
        %v7953 = vunpack.c.l.b16 %v7445
        %v7954 = vunpack.c.l.b16 %v7446
        %v7955 = vunpack.c.l.b16 %v7447
        %v7956 = vpack.c.b16 %v7892, %v7892
        %v7957 = vpack.c.b16 %v7893, %v7893
        %v7958 = vpack.c.b16 %v7894, %v7894
        %v7959 = vpack.c.b16 %v7895, %v7895
        %v7960 = vpack.c.b16 %v7896, %v7896
        %v7961 = vpack.c.b16 %v7897, %v7897
        %v7962 = vpack.c.b16 %v7898, %v7898
        %v7963 = vpack.c.b16 %v7899, %v7899
        %v7964 = vpack.c.b16 %v7900, %v7900
        %v7965 = vpack.c.b16 %v7901, %v7901
        %v7966 = vpack.c.b16 %v7902, %v7902
        %v7967 = vpack.c.b16 %v7903, %v7903
        %v7968 = vpack.c.b16 %v7904, %v7904
        %v7969 = vpack.c.b16 %v7905, %v7905
        %v7970 = vpack.c.b16 %v7906, %v7906
        %v7971 = vpack.c.b16 %v7907, %v7907
        %v7972 = vpack.c.b16 %v7908, %v7908
        %v7973 = vpack.c.b16 %v7909, %v7909
        %v7974 = vpack.c.b16 %v7910, %v7910
        %v7975 = vpack.c.b16 %v7911, %v7911
        %v7976 = vpack.c.b16 %v7912, %v7912
        %v7977 = vpack.c.b16 %v7913, %v7913
        %v7978 = vpack.c.b16 %v7914, %v7914
        %v7979 = vpack.c.b16 %v7915, %v7915
        %v7980 = vpack.c.b16 %v7916, %v7916
        %v7981 = vpack.c.b16 %v7917, %v7917
        %v7982 = vpack.c.b16 %v7918, %v7918
        %v7983 = vpack.c.b16 %v7919, %v7919
        %v7984 = vpack.c.b16 %v7920, %v7920
        %v7985 = vpack.c.b16 %v7921, %v7921
        %v7986 = vpack.c.b16 %v7922, %v7922
        %v7987 = vpack.c.b16 %v7923, %v7923
        %v7988 = vpack.c.b16 %v7924, %v7924
        %v7989 = vpack.c.b16 %v7925, %v7925
        %v7990 = vpack.c.b16 %v7926, %v7926
        %v7991 = vpack.c.b16 %v7927, %v7927
        %v7992 = vpack.c.b16 %v7928, %v7928
        %v7993 = vpack.c.b16 %v7929, %v7929
        %v7994 = vpack.c.b16 %v7930, %v7930
        %v7995 = vpack.c.b16 %v7931, %v7931
        %v7996 = vpack.c.b16 %v7932, %v7932
        %v7997 = vpack.c.b16 %v7933, %v7933
        %v7998 = vpack.c.b16 %v7934, %v7934
        %v7999 = vpack.c.b16 %v7935, %v7935
        %v8000 = vpack.c.b16 %v7936, %v7936
        %v8001 = vpack.c.b16 %v7937, %v7937
        %v8002 = vpack.c.b16 %v7938, %v7938
        %v8003 = vpack.c.b16 %v7939, %v7939
        %v8004 = vpack.c.b16 %v7940, %v7940
        %v8005 = vpack.c.b16 %v7941, %v7941
        %v8006 = vpack.c.b16 %v7942, %v7942
        %v8007 = vpack.c.b16 %v7943, %v7943
        %v8008 = vpack.c.b16 %v7944, %v7944
        %v8009 = vpack.c.b16 %v7945, %v7945
        %v8010 = vpack.c.b16 %v7946, %v7946
        %v8011 = vpack.c.b16 %v7947, %v7947
        %v8012 = vpack.c.b16 %v7948, %v7948
        %v8013 = vpack.c.b16 %v7949, %v7949
        %v8014 = vpack.c.b16 %v7950, %v7950
        %v8015 = vpack.c.b16 %v7951, %v7951
        %v8016 = vpack.c.b16 %v7952, %v7952
        %v8017 = vpack.c.b16 %v7953, %v7953
        %v8018 = vpack.c.b16 %v7954, %v7954
        %v8019 = vpack.c.b16 %v7955, %v7955
        %v8020 = vunpack.c.l.b16 %v7956
        %v8021 = vunpack.c.l.b16 %v7957
        %v8022 = vunpack.c.l.b16 %v7958
        %v8023 = vunpack.c.l.b16 %v7959
        %v8024 = vunpack.c.l.b16 %v7960
        %v8025 = vunpack.c.l.b16 %v7961
        %v8026 = vunpack.c.l.b16 %v7962
        %v8027 = vunpack.c.l.b16 %v7963
        %v8028 = vunpack.c.l.b16 %v7964
        %v8029 = vunpack.c.l.b16 %v7965
        %v8030 = vunpack.c.l.b16 %v7966
        %v8031 = vunpack.c.l.b16 %v7967
        %v8032 = vunpack.c.l.b16 %v7968
        %v8033 = vunpack.c.l.b16 %v7969
        %v8034 = vunpack.c.l.b16 %v7970
        %v8035 = vunpack.c.l.b16 %v7971
        %v8036 = vunpack.c.l.b16 %v7972
        %v8037 = vunpack.c.l.b16 %v7973
        %v8038 = vunpack.c.l.b16 %v7974
        %v8039 = vunpack.c.l.b16 %v7975
        %v8040 = vunpack.c.l.b16 %v7976
        %v8041 = vunpack.c.l.b16 %v7977
        %v8042 = vunpack.c.l.b16 %v7978
        %v8043 = vunpack.c.l.b16 %v7979
        %v8044 = vunpack.c.l.b16 %v7980
        %v8045 = vunpack.c.l.b16 %v7981
        %v8046 = vunpack.c.l.b16 %v7982
        %v8047 = vunpack.c.l.b16 %v7983
        %v8048 = vunpack.c.l.b16 %v7984
        %v8049 = vunpack.c.l.b16 %v7985
        %v8050 = vunpack.c.l.b16 %v7986
        %v8051 = vunpack.c.l.b16 %v7987
        %v8052 = vunpack.c.l.b16 %v7988
        %v8053 = vunpack.c.l.b16 %v7989
        %v8054 = vunpack.c.l.b16 %v7990
        %v8055 = vunpack.c.l.b16 %v7991
        %v8056 = vunpack.c.l.b16 %v7992
        %v8057 = vunpack.c.l.b16 %v7993
        %v8058 = vunpack.c.l.b16 %v7994
        %v8059 = vunpack.c.l.b16 %v7995
        %v8060 = vunpack.c.l.b16 %v7996
        %v8061 = vunpack.c.l.b16 %v7997
        %v8062 = vunpack.c.l.b16 %v7998
        %v8063 = vunpack.c.l.b16 %v7999
        %v8064 = vunpack.c.l.b16 %v8000
        %v8065 = vunpack.c.l.b16 %v8001
        %v8066 = vunpack.c.l.b16 %v8002
        %v8067 = vunpack.c.l.b16 %v8003
        %v8068 = vunpack.c.l.b16 %v8004
        %v8069 = vunpack.c.l.b16 %v8005
        %v8070 = vunpack.c.l.b16 %v8006
        %v8071 = vunpack.c.l.b16 %v8007
        %v8072 = vunpack.c.l.b16 %v8008
        %v8073 = vunpack.c.l.b16 %v8009
        %v8074 = vunpack.c.l.b16 %v8010
        %v8075 = vunpack.c.l.b16 %v8011
        %v8076 = vunpack.c.l.b16 %v8012
        %v8077 = vunpack.c.l.b16 %v8013
        %v8078 = vunpack.c.l.b16 %v8014
        %v8079 = vunpack.c.l.b16 %v8015
        %v8080 = vunpack.c.l.b16 %v8016
        %v8081 = vunpack.c.l.b16 %v8017
        %v8082 = vunpack.c.l.b16 %v8018
        %v8083 = vunpack.c.l.b16 %v8019
        %v8084 = vrot.slane %v8021, 7
        %v8085 = vsel %vm6744, %v8084, %v8020
        %v8086 = vrot.slane %v8022, 6
        %v8087 = vsel %vm6748, %v8086, %v8085
        %v8088 = vrot.slane %v8023, 5
        %v8089 = vsel %vm6752, %v8088, %v8087
        %v8090 = vrot.slane %v8024, 4
        %v8091 = vsel %vm7711, %v8090, %v8089
        %v8092 = vrot.slane %v8025, 3
        %v8093 = vsel %vm7714, %v8092, %v8091
        %v8094 = vrot.slane %v8026, 2
        %v8095 = vsel %vm7717, %v8094, %v8093
        %v8096 = vrot.slane %v8027, 1
        %v8097 = vsel %vm7720, %v8096, %v8095
        %v8098 = vrot.slane %v8029, 7
        %v8099 = vsel %vm6744, %v8098, %v8028
        %v8100 = vrot.slane %v8030, 6
        %v8101 = vsel %vm6748, %v8100, %v8099
        %v8102 = vrot.slane %v8031, 5
        %v8103 = vsel %vm6752, %v8102, %v8101
        %v8104 = vrot.slane %v8032, 4
        %v8105 = vsel %vm7711, %v8104, %v8103
        %v8106 = vrot.slane %v8033, 3
        %v8107 = vsel %vm7714, %v8106, %v8105
        %v8108 = vrot.slane %v8034, 2
        %v8109 = vsel %vm7717, %v8108, %v8107
        %v8110 = vrot.slane %v8035, 1
        %v8111 = vsel %vm7720, %v8110, %v8109
        %v8112 = vrot.slane %v8037, 7
        %v8113 = vsel %vm6744, %v8112, %v8036
        %v8114 = vrot.slane %v8038, 6
        %v8115 = vsel %vm6748, %v8114, %v8113
        %v8116 = vrot.slane %v8039, 5
        %v8117 = vsel %vm6752, %v8116, %v8115
        %v8118 = vrot.slane %v8040, 4
        %v8119 = vsel %vm7711, %v8118, %v8117
        %v8120 = vrot.slane %v8041, 3
        %v8121 = vsel %vm7714, %v8120, %v8119
        %v8122 = vrot.slane %v8042, 2
        %v8123 = vsel %vm7717, %v8122, %v8121
        %v8124 = vrot.slane %v8043, 1
        %v8125 = vsel %vm7720, %v8124, %v8123
        %v8126 = vrot.slane %v8045, 7
        %v8127 = vsel %vm6744, %v8126, %v8044
        %v8128 = vrot.slane %v8046, 6
        %v8129 = vsel %vm6748, %v8128, %v8127
        %v8130 = vrot.slane %v8047, 5
        %v8131 = vsel %vm6752, %v8130, %v8129
        %v8132 = vrot.slane %v8048, 4
        %v8133 = vsel %vm7711, %v8132, %v8131
        %v8134 = vrot.slane %v8049, 3
        %v8135 = vsel %vm7714, %v8134, %v8133
        %v8136 = vrot.slane %v8050, 2
        %v8137 = vsel %vm7717, %v8136, %v8135
        %v8138 = vrot.slane %v8051, 1
        %v8139 = vsel %vm7720, %v8138, %v8137
        %v8140 = vrot.slane %v8053, 7
        %v8141 = vsel %vm6744, %v8140, %v8052
        %v8142 = vrot.slane %v8054, 6
        %v8143 = vsel %vm6748, %v8142, %v8141
        %v8144 = vrot.slane %v8055, 5
        %v8145 = vsel %vm6752, %v8144, %v8143
        %v8146 = vrot.slane %v8056, 4
        %v8147 = vsel %vm7711, %v8146, %v8145
        %v8148 = vrot.slane %v8057, 3
        %v8149 = vsel %vm7714, %v8148, %v8147
        %v8150 = vrot.slane %v8058, 2
        %v8151 = vsel %vm7717, %v8150, %v8149
        %v8152 = vrot.slane %v8059, 1
        %v8153 = vsel %vm7720, %v8152, %v8151
        %v8154 = vrot.slane %v8061, 7
        %v8155 = vsel %vm6744, %v8154, %v8060
        %v8156 = vrot.slane %v8062, 6
        %v8157 = vsel %vm6748, %v8156, %v8155
        %v8158 = vrot.slane %v8063, 5
        %v8159 = vsel %vm6752, %v8158, %v8157
        %v8160 = vrot.slane %v8064, 4
        %v8161 = vsel %vm7711, %v8160, %v8159
        %v8162 = vrot.slane %v8065, 3
        %v8163 = vsel %vm7714, %v8162, %v8161
        %v8164 = vrot.slane %v8066, 2
        %v8165 = vsel %vm7717, %v8164, %v8163
        %v8166 = vrot.slane %v8067, 1
        %v8167 = vsel %vm7720, %v8166, %v8165
        %v8168 = vrot.slane %v8069, 7
        %v8169 = vsel %vm6744, %v8168, %v8068
        %v8170 = vrot.slane %v8070, 6
        %v8171 = vsel %vm6748, %v8170, %v8169
        %v8172 = vrot.slane %v8071, 5
        %v8173 = vsel %vm6752, %v8172, %v8171
        %v8174 = vrot.slane %v8072, 4
        %v8175 = vsel %vm7711, %v8174, %v8173
        %v8176 = vrot.slane %v8073, 3
        %v8177 = vsel %vm7714, %v8176, %v8175
        %v8178 = vrot.slane %v8074, 2
        %v8179 = vsel %vm7717, %v8178, %v8177
        %v8180 = vrot.slane %v8075, 1
        %v8181 = vsel %vm7720, %v8180, %v8179
        %v8182 = vrot.slane %v8077, 7
        %v8183 = vsel %vm6744, %v8182, %v8076
        %v8184 = vrot.slane %v8078, 6
        %v8185 = vsel %vm6748, %v8184, %v8183
        %v8186 = vrot.slane %v8079, 5
        %v8187 = vsel %vm6752, %v8186, %v8185
        %v8188 = vrot.slane %v8080, 4
        %v8189 = vsel %vm7711, %v8188, %v8187
        %v8190 = vrot.slane %v8081, 3
        %v8191 = vsel %vm7714, %v8190, %v8189
        %v8192 = vrot.slane %v8082, 2
        %v8193 = vsel %vm7717, %v8192, %v8191
        %v8194 = vrot.slane %v8083, 1
        %v8195 = vsel %vm7720, %v8194, %v8193
        %v8196 = vpack.c.b16 %v8111, %v8097
        %v8197 = vpack.c.b16 %v8139, %v8125
        %v8198 = vpack.c.b16 %v8167, %v8153
        %v8199 = vpack.c.b16 %v8195, %v8181
        %v8204 = vld [vmem:[#allocation10] sm:$0xf]
        %v8205 = vld [vmem:[#allocation10 + $0x4] sm:$0xf]
        %v8206 = vld [vmem:[#allocation10 + $0x8] sm:$0xf]
        %v8207 = vld [vmem:[#allocation10 + $0xc] sm:$0xf]
        %v8208 = vld [vmem:[#allocation10 + $0x10] sm:$0xf]
        %v8209 = vld [vmem:[#allocation10 + $0x14] sm:$0xf]
        %v8210 = vld [vmem:[#allocation10 + $0x18] sm:$0xf]
        %v8211 = vld [vmem:[#allocation10 + $0x1c] sm:$0xf]
        %v8212 = vld [vmem:[#allocation10 + $0x20] sm:$0xf]
        %v8213 = vld [vmem:[#allocation10 + $0x24] sm:$0xf]
        %v8214 = vld [vmem:[#allocation10 + $0x28] sm:$0xf]
        %v8215 = vld [vmem:[#allocation10 + $0x2c] sm:$0xf]
        %v8216 = vld [vmem:[#allocation10 + $0x30] sm:$0xf]
        %v8217 = vld [vmem:[#allocation10 + $0x34] sm:$0xf]
        %v8218 = vld [vmem:[#allocation10 + $0x38] sm:$0xf]
        %v8219 = vld [vmem:[#allocation10 + $0x3c] sm:$0xf]
        %v8220 = vld [vmem:[#allocation10 + $0x40] sm:$0xf]
        %v8221 = vld [vmem:[#allocation10 + $0x44] sm:$0xf]
        %v8222 = vld [vmem:[#allocation10 + $0x48] sm:$0xf]
        %v8223 = vld [vmem:[#allocation10 + $0x4c] sm:$0xf]
        %v8224 = vld [vmem:[#allocation10 + $0x50] sm:$0xf]
        %v8225 = vld [vmem:[#allocation10 + $0x54] sm:$0xf]
        %v8226 = vld [vmem:[#allocation10 + $0x58] sm:$0xf]
        %v8227 = vld [vmem:[#allocation10 + $0x5c] sm:$0xf]
        %v8228 = vld [vmem:[#allocation10 + $0x60] sm:$0xf]
        %v8229 = vld [vmem:[#allocation10 + $0x64] sm:$0xf]
        %v8230 = vld [vmem:[#allocation10 + $0x68] sm:$0xf]
        %v8231 = vld [vmem:[#allocation10 + $0x6c] sm:$0xf]
        %v8232 = vld [vmem:[#allocation10 + $0x70] sm:$0xf]
        %v8233 = vld [vmem:[#allocation10 + $0x74] sm:$0xf]
        %v8234 = vld [vmem:[#allocation10 + $0x78] sm:$0xf]
        %v8235 = vld [vmem:[#allocation10 + $0x7c] sm:$0xf]
        %v8236 = vld [vmem:[%s6] sm:$0x1]
        %v8238 = vperm.slane %v8236, 0
        %v8272 = vunpack.c.l.b16 %v8204
        %v8273 = vunpack.c.l.b16 %v8205
        %v8274 = vunpack.c.l.b16 %v8206
        %v8275 = vunpack.c.l.b16 %v8207
        %v8276 = vunpack.c.l.b16 %v8208
        %v8277 = vunpack.c.l.b16 %v8209
        %v8278 = vunpack.c.l.b16 %v8210
        %v8279 = vunpack.c.l.b16 %v8211
        %v8280 = vunpack.c.l.b16 %v8212
        %v8281 = vunpack.c.l.b16 %v8213
        %v8282 = vunpack.c.l.b16 %v8214
        %v8283 = vunpack.c.l.b16 %v8215
        %v8284 = vunpack.c.l.b16 %v8216
        %v8285 = vunpack.c.l.b16 %v8217
        %v8286 = vunpack.c.l.b16 %v8218
        %v8287 = vunpack.c.l.b16 %v8219
        %v8288 = vunpack.c.l.b16 %v8220
        %v8289 = vunpack.c.l.b16 %v8221
        %v8290 = vunpack.c.l.b16 %v8222
        %v8291 = vunpack.c.l.b16 %v8223
        %v8292 = vunpack.c.l.b16 %v8224
        %v8293 = vunpack.c.l.b16 %v8225
        %v8294 = vunpack.c.l.b16 %v8226
        %v8295 = vunpack.c.l.b16 %v8227
        %v8296 = vunpack.c.l.b16 %v8228
        %v8297 = vunpack.c.l.b16 %v8229
        %v8298 = vunpack.c.l.b16 %v8230
        %v8299 = vunpack.c.l.b16 %v8231
        %v8300 = vunpack.c.l.b16 %v8232
        %v8301 = vunpack.c.l.b16 %v8233
        %v8302 = vunpack.c.l.b16 %v8234
        %v8303 = vunpack.c.l.b16 %v8235
        %v8304 = vpack.c.b16 %v8273, %v8272
        %v8305 = vpack.c.b16 %v8275, %v8274
        %v8306 = vpack.c.b16 %v8277, %v8276
        %v8307 = vpack.c.b16 %v8279, %v8278
        %v8308 = vpack.c.b16 %v8281, %v8280
        %v8309 = vpack.c.b16 %v8283, %v8282
        %v8310 = vpack.c.b16 %v8285, %v8284
        %v8311 = vpack.c.b16 %v8287, %v8286
        %v8312 = vpack.c.b16 %v8289, %v8288
        %v8313 = vpack.c.b16 %v8291, %v8290
        %v8314 = vpack.c.b16 %v8293, %v8292
        %v8315 = vpack.c.b16 %v8295, %v8294
        %v8316 = vpack.c.b16 %v8297, %v8296
        %v8317 = vpack.c.b16 %v8299, %v8298
        %v8318 = vpack.c.b16 %v8301, %v8300
        %v8319 = vpack.c.b16 %v8303, %v8302
        %8336 = vmatpush.bf16.msra.mxu0 %v8311
        %8337 = vmatpush.bf16.msra.mxu0 %v8310
        %8338 = vmatpush.bf16.msra.mxu0 %v8309
        %8339 = vmatpush.bf16.msra.mxu0 %v8308
        %8340 = vmatpush.bf16.msra.mxu0 %v8307
        %8341 = vmatpush.bf16.msra.mxu0 %v8306
        %8342 = vmatpush.bf16.msra.mxu0 %v8305
        %8343 = vmatpush.bf16.msra.mxu0 %v8304
        %8344 = vmatmul.bf16.gmra.mxu0 %v7820
        %v8345 = vpop.f32.mrf.mxu0
        %v8346 = vadd.f32 %v8238, %v8345
        %v8347 = vpop.f32.mrf.mxu0
        %v8348 = vadd.f32 %v8238, %v8347
        %8349 = vmatmul.bf16.gmra.mxu0 %v7821
        %v8350 = vpop.f32.mrf.mxu0
        %v8351 = vadd.f32 %v8238, %v8350
        %v8352 = vpop.f32.mrf.mxu0
        %v8353 = vadd.f32 %v8238, %v8352
        %8354 = vmatmul.bf16.gmra.mxu0 %v7822
        %v8355 = vpop.f32.mrf.mxu0
        %v8356 = vadd.f32 %v8238, %v8355
        %v8357 = vpop.f32.mrf.mxu0
        %v8358 = vadd.f32 %v8238, %v8357
        %8359 = vmatmul.bf16.gmra.mxu0 %v7823
        %v8360 = vpop.f32.mrf.mxu0
        %v8361 = vadd.f32 %v8238, %v8360
        %v8362 = vpop.f32.mrf.mxu0
        %v8363 = vadd.f32 %v8238, %v8362
        %8364 = vdwg.mxu0
        %8365 = vmatpush.bf16.msra.mxu0 %v8319
        %8366 = vmatpush.bf16.msra.mxu0 %v8318
        %8367 = vmatpush.bf16.msra.mxu0 %v8317
        %8368 = vmatpush.bf16.msra.mxu0 %v8316
        %8369 = vmatpush.bf16.msra.mxu0 %v8315
        %8370 = vmatpush.bf16.msra.mxu0 %v8314
        %8371 = vmatpush.bf16.msra.mxu0 %v8313
        %8372 = vmatpush.bf16.msra.mxu0 %v8312
        %8373 = vmatmul.bf16.gmra.mxu0 %v8196
        %v8374 = vpop.f32.mrf.mxu0
        %v8375 = vadd.f32 %v8346, %v8374
        %v8376 = vpop.f32.mrf.mxu0
        %v8377 = vadd.f32 %v8348, %v8376
        %8378 = vmatmul.bf16.gmra.mxu0 %v8197
        %v8379 = vpop.f32.mrf.mxu0
        %v8380 = vadd.f32 %v8351, %v8379
        %v8381 = vpop.f32.mrf.mxu0
        %v8382 = vadd.f32 %v8353, %v8381
        %8383 = vmatmul.bf16.gmra.mxu0 %v8198
        %v8384 = vpop.f32.mrf.mxu0
        %v8385 = vadd.f32 %v8356, %v8384
        %v8386 = vpop.f32.mrf.mxu0
        %v8387 = vadd.f32 %v8358, %v8386
        %8388 = vmatmul.bf16.gmra.mxu0 %v8199
        %v8389 = vpop.f32.mrf.mxu0
        %v8390 = vadd.f32 %v8361, %v8389
        %v8391 = vpop.f32.mrf.mxu0
        %v8392 = vadd.f32 %v8363, %v8391
        %8393 = vdwg.mxu0
        %v8394 = vmax.f32 %v8375, 0.0
        %v8395 = vmax.f32 %v8377, 0.0
        %v8396 = vmax.f32 %v8380, 0.0
        %v8397 = vmax.f32 %v8382, 0.0
        %v8398 = vmax.f32 %v8385, 0.0
        %v8399 = vmax.f32 %v8387, 0.0
        %v8400 = vmax.f32 %v8390, 0.0
        %v8401 = vmax.f32 %v8392, 0.0
        %v8402 = vpack.c.bf16 %v8394, %v8394
        %v8403 = vpack.c.bf16 %v8395, %v8395
        %v8404 = vpack.c.bf16 %v8396, %v8396
        %v8405 = vpack.c.bf16 %v8397, %v8397
        %v8406 = vpack.c.bf16 %v8398, %v8398
        %v8407 = vpack.c.bf16 %v8399, %v8399
        %v8408 = vpack.c.bf16 %v8400, %v8400
        %v8409 = vpack.c.bf16 %v8401, %v8401
        %8410 = vst [vmem:[%s348] sm:$0xf] %v8402
        %8411 = vst [vmem:[%s348 + $0x4] sm:$0xf] %v8403
        %8412 = vst [vmem:[%s348 + $0x8] sm:$0xf] %v8404
        %8413 = vst [vmem:[%s348 + $0xc] sm:$0xf] %v8405
        %8414 = vst [vmem:[%s348 + $0x10] sm:$0xf] %v8406
        %8415 = vst [vmem:[%s348 + $0x14] sm:$0xf] %v8407
        %8416 = vst [vmem:[%s348 + $0x18] sm:$0xf] %v8408
        %8417 = vst [vmem:[%s348 + $0x1c] sm:$0xf] %v8409
        %s8418 = sand.u32 %s186, 1
        %s8419 = scalar_lea.sflag [#allocation6], %s8418
        %s8420 = sand.u32 %s186, 1
        %s8421 = smul.addr %s8420, 32
        %s8422 = scalar_lea.vmem [#allocation12], %s8421
        // Predicated region
        $region65: #{tpu_custom_call.1} parent=47 // pred_check
          %p8423 = pneg %p196
        $region66: #{tpu_custom_call.1} parent=47 // pred_check_branch
          %8425 = sbr.rel (%p8423) target = $region68
        $region67: #{tpu_custom_call.1} parent=47 // pred_region
          %8427 = vsyncadd %s8419, 0
          %s8428 = smul.addr %s26, 8
          %s8429 = smul.addr %s8428, 4
          %s8430 = scalar_lea.hbm %s7, %s8429
          %s8431 = sshll.u32 %s8422, 4
          %s8432 = int_to_ptr.vmem [resolvable:$true] %s8431
          %s8433 = sshll.u32 %s8430, 4
          %s8434 = int_to_ptr.hbm [resolvable:$true] %s8433
          %8439 = dma.vmem_to_hbm [thread:$0]  %s8432, 512, %s8434, %s8419, 64, 64, 4
        $region68: #{tpu_custom_call.1} parent=47 // pred_fallthru
          _
      $region48: #{tpu_custom_call.1} parent=5 // pred_fallthru
        _
      %p8440 = scmp.le.s32.totalorder 2, %s21
      // Predicated region
      $region69: #{tpu_custom_call.1} parent=5 // pred_check
        %p8441 = pneg %p8440
      $region70: #{tpu_custom_call.1} parent=5 // pred_check_branch
        %8443 = sbr.rel (%p8441) target = $region72
      $region71: #{tpu_custom_call.1} parent=5 // pred_region
        %s8444 = ssub.s32 %s21, 2
        // Predicated region
        $region73: #{tpu_custom_call.1} parent=71 // pred_check
          %p8445 = pneg %p202
        $region74: #{tpu_custom_call.1} parent=71 // pred_check_branch
          %8447 = sbr.rel (%p8445) target = $region76
        $region75: #{tpu_custom_call.1} parent=71 // pred_region
          %s8448 = sand.u32 %s187, 1
          %s8449 = scalar_lea.sflag [#allocation6], %s8448
          %s8450 = sand.u32 %s187, 1
          %s8451 = smul.addr %s8450, 32
          %s8452 = scalar_lea.vmem [#allocation12], %s8451
          %8454 = dma.done %s8449, 512
        $region76: #{tpu_custom_call.1} parent=71 // pred_fallthru
          _
      $region72: #{tpu_custom_call.1} parent=5 // pred_fallthru
        _
    $region6: #{tpu_custom_call.1} parent=1 // loop_footer
      %s25 = sadd.s32 1, %s21
    $region7: #{tpu_custom_call.1} parent=1 // loop_footer_branch
      %20 = sbr.rel target = $region3
    $region8: #{tpu_custom_call.1} parent=1 // loop_exit
      _
    %8455 = vsyncpa [#allocation5], 1
    %s8456 = scalar_lea.sflag [#allocation5], 1
    %8457 = vsyncpa %s8456, 1
    %8458 = vsyncpa [#allocation8], 1
    %8459 = vsyncpa [#allocation11], 1
    %8460 = vsyncpa [#allocation6], 1
    %s8461 = scalar_lea.sflag [#allocation6], 1
    %8462 = vsyncpa %s8461, 1

</llo_original>
